<compile_context>
chip_gen: v7x
topology: tpu7x:2x2x1
jax: 0.10.0
libtpu: 0.0.40
codegen_flags: <defaults>
</compile_context>

<pallas_src>
import functools

import numpy as np
import jax
import jax.numpy as jnp
from jax.experimental import pallas as pl
from jax.experimental.pallas import tpu as pltpu

LANE = 128  # lane width: all kernel outputs are padded to this


def _round_up(x, m):
    return (x + m - 1) // m * m


def _pad_axis(x, axis, size):
    pad = [(0, 0)] * x.ndim
    pad[axis] = (0, size - x.shape[axis])
    return jnp.pad(x, pad)


def _pick_tile(total, candidates):
    """Largest candidate tile that divides `total` and leaves >= 2 grid steps."""
    for t in candidates:
        if total % t == 0 and total // t >= 2:
            return t
    for t in candidates:
        if total % t == 0:
            return t
    return total


# --------------- fused conv + bias + ReLU + AvgPool2d(2,2) ------------------
#
# The wrapper supplies four "quarter" im2col arrays c_q, q = (di, dj) in
# {0,1}^2, each with rows ordered (b, i, j) over the *pooled* output grid:
#   c_q[row(b,i,j), :] = patch of x at output pixel (2i+di, 2j+dj).
# Pooling is then just the mean of the four ReLU'd conv results, row-aligned:
# pure VPU adds, no reshapes, no extra MXU work.

def _conv_relu_pool_kernel(c0_ref, c1_ref, c2_ref, c3_ref, w_ref, b_ref, o_ref):
    w = w_ref[...]
    b = b_ref[...]

    def act(c_ref):
        y = jnp.dot(c_ref[...], w, preferred_element_type=jnp.float32)
        return jnp.maximum(y + b, 0.0)            # f32 epilogue (v5e-safe)

    s = act(c0_ref) + act(c1_ref) + act(c2_ref) + act(c3_ref)
    o_ref[...] = (0.25 * s).astype(o_ref.dtype)   # single cast at the store


def conv_relu_pool(cols4, w_p, b_p, n_imgs, pooled_rows, imgs_per_block):
    """cols4: 4 x [n_imgs*R2, K] bf16 -> [n_imgs*R2, 128] bf16 pooled activations."""
    K = cols4[0].shape[1]
    Cp = w_p.shape[1]
    assert n_imgs % imgs_per_block == 0
    rows_blk = imgs_per_block * pooled_rows
    total_rows = n_imgs * pooled_rows
    grid = (n_imgs // imgs_per_block,)

    flops = 4 * 2 * total_rows * K * Cp + 4 * total_rows * Cp
    bytes_accessed = (4 * total_rows * K * 2 + K * Cp * 2 + Cp * 4
                      + total_rows * Cp * 2)

    cols_spec = pl.BlockSpec((rows_blk, K), lambda i: (i, 0))
    return pl.pallas_call(
        _conv_relu_pool_kernel,
        out_shape=jax.ShapeDtypeStruct((total_rows, Cp), jnp.bfloat16),
        grid=grid,
        in_specs=[cols_spec, cols_spec, cols_spec, cols_spec,
                  pl.BlockSpec((K, Cp), lambda i: (0, 0)),
                  pl.BlockSpec((1, Cp), lambda i: (0, 0))],
        out_specs=pl.BlockSpec((rows_blk, Cp), lambda i: (i, 0)),
        compiler_params=pltpu.CompilerParams(dimension_semantics=("parallel",)),
        cost_estimate=pl.CostEstimate(flops=int(flops), transcendentals=0,
                                      bytes_accessed=int(bytes_accessed)),
    )(*cols4, w_p, b_p)


# ----------------------- fused fc1 -> fc2 -> fc3 kernel ---------------------

def _fc_stack_kernel(x_ref, w1_ref, b1_ref, w2_ref, b2_ref, w3_ref, b3_ref, o_ref):
    h = jnp.dot(x_ref[...], w1_ref[...], preferred_element_type=jnp.float32)
    h = jnp.maximum(h + b1_ref[...], 0.0)
    # TODO(synk): nn.Dropout(0.5) is identity at inference (eval mode).
    h = jnp.dot(h.astype(jnp.bfloat16), w2_ref[...], preferred_element_type=jnp.float32)
    h = jnp.maximum(h + b2_ref[...], 0.0)
    h = jnp.dot(h.astype(jnp.bfloat16), w3_ref[...], preferred_element_type=jnp.float32)
    o_ref[...] = (h + b3_ref[...]).astype(o_ref.dtype)


def fc_stack(x, w1, b1, w2, b2, w3, b3, block_m):
    """x: [M, K] bf16 -> logits (padded) [M, 128] f32, all three FC layers fused."""
    M, K = x.shape
    assert M % block_m == 0
    grid = (M // block_m,)
    flops = 2 * M * (K * LANE + LANE * LANE + LANE * LANE)
    bytes_accessed = (x.size * 2 + (w1.size + w2.size + w3.size) * 2
                      + (b1.size + b2.size + b3.size) * 4 + M * LANE * 4)
    return pl.pallas_call(
        _fc_stack_kernel,
        out_shape=jax.ShapeDtypeStruct((M, LANE), jnp.float32),
        grid=grid,
        in_specs=[
            pl.BlockSpec((block_m, K), lambda i: (i, 0)),
            pl.BlockSpec((K, LANE), lambda i: (0, 0)),
            pl.BlockSpec((1, LANE), lambda i: (0, 0)),
            pl.BlockSpec((LANE, LANE), lambda i: (0, 0)),
            pl.BlockSpec((1, LANE), lambda i: (0, 0)),
            pl.BlockSpec((LANE, LANE), lambda i: (0, 0)),
            pl.BlockSpec((1, LANE), lambda i: (0, 0)),
        ],
        out_specs=pl.BlockSpec((block_m, LANE), lambda i: (i, 0)),
        compiler_params=pltpu.CompilerParams(dimension_semantics=("parallel",)),
        cost_estimate=pl.CostEstimate(flops=int(flops), transcendentals=0,
                                      bytes_accessed=int(bytes_accessed)),
    )(x, w1, b1, w2, b2, w3, b3)


# ------------------------------ glue (JAX) ----------------------------------

def _im2col_quarters(x_nhwc, k):
    """Valid kxk patches, feature order (kh, kw, cin), split into the four 2x2
    pooling quarters. Returns (4 arrays of [B*OH2*OW2, k*k*C], (OH2, OW2))."""
    B, H, W, C = x_nhwc.shape
    OH, OW = H - k + 1, W - k + 1
    taps = [x_nhwc[:, i:i + OH, j:j + OW, :] for i in range(k) for j in range(k)]
    p = jnp.stack(taps, axis=3).reshape(B, OH, OW, k * k * C)
    OH2, OW2 = OH // 2, OW // 2
    quarters = tuple(
        p[:, di::2, dj::2, :].reshape(B * OH2 * OW2, k * k * C)
        for di in range(2) for dj in range(2))
    return quarters, (OH2, OW2)


def _prep_conv_w(w_oikk, b):
    """torch [O,I,KH,KW] -> [(kh,kw,cin), 128] bf16 (O padded to 128) + f32 bias [1,128]."""
    O, I, KH, KW = w_oikk.shape
    wm = jnp.transpose(w_oikk, (2, 3, 1, 0)).reshape(KH * KW * I, O)
    wm = _pad_axis(wm, 1, LANE).astype(jnp.bfloat16)
    bp = _pad_axis(b.astype(jnp.float32), 0, LANE).reshape(1, LANE)
    return wm, bp


def _prep_fc1_w(fc1_w, b, c_real, oh, ow, k_pad):
    """Permute fc1 rows from torch (c,h,w) order to our (h,w,c) flatten order,
    keep only the real channels, pad K to `k_pad` and out to 128."""
    nout = fc1_w.shape[1]
    w = fc1_w.reshape(c_real, oh, ow, nout).transpose(1, 2, 0, 3)   # [h, w, c, out]
    w = w.reshape(oh * ow * c_real, nout)
    w = jnp.pad(w, ((0, k_pad - oh * ow * c_real), (0, LANE - nout))).astype(jnp.bfloat16)
    bp = _pad_axis(b.astype(jnp.float32), 0, LANE).reshape(1, LANE)
    return w, bp


def _prep_fc_w(w, b):
    """[in, out] -> zero-padded [128, 128] bf16 + f32 bias [1,128]."""
    wm = jnp.pad(w, ((0, LANE - w.shape[0]), (0, LANE - w.shape[1]))).astype(jnp.bfloat16)
    bp = _pad_axis(b.astype(jnp.float32), 0, LANE).reshape(1, LANE)
    return wm, bp


def lenet5_forward(x_nchw, params):
    B = x_nchw.shape[0]
    # Pad batch so every kernel grid has >= 2 steps (megacore / pipelining).
    Bp = max(_round_up(B, 8), 16)

    # bf16 cast BEFORE the single boundary NCHW -> NHWC transpose + batch pad.
    x = jnp.transpose(x_nchw.astype(jnp.bfloat16), (0, 2, 3, 1))
    if Bp != B:
        x = jnp.pad(x, ((0, Bp - B), (0, 0), (0, 0), (0, 0)))

    c1 = params["conv1_w"].shape[0]
    c2 = params["conv2_w"].shape[0]

    # conv1 + bias + ReLU + AvgPool2d(2,2), fused (VPU pooling).
    w1, b1 = _prep_conv_w(params["conv1_w"], params["conv1_b"])
    q1, (p1h, p1w) = _im2col_quarters(x, 5)                # 4 x [Bp*196, 75]
    tb1 = _pick_tile(Bp, (16, 8, 4, 2))                    # capped for v7x VMEM
    h1 = conv_relu_pool(q1, w1, b1, Bp, p1h * p1w, tb1)    # [Bp*196, 128] bf16
    h1 = h1.reshape(Bp, p1h, p1w, LANE)[:, :, :, :c1]      # [Bp, 14, 14, 6]

    # conv2 + bias + ReLU + AvgPool2d(2,2), fused.
    w2, b2 = _prep_conv_w(params["conv2_w"], params["conv2_b"])
    q2, (p2h, p2w) = _im2col_quarters(h1, 5)               # 4 x [Bp*25, 150]
    tb2 = _pick_tile(Bp, (64, 32, 16, 8))
    h2 = conv_relu_pool(q2, w2, b2, Bp, p2h * p2w, tb2)    # [Bp*25, 128] bf16

    # fc1 -> ReLU -> (dropout=id) -> fc2 -> ReLU -> (dropout=id) -> fc3, fused.
    # Keep only the 16 real channels before flatten (K = 400, padded to 512)
    # instead of feeding the 128-wide zero-padded activation into fc1.
    k_real = p2h * p2w * c2                                # 400
    k_pad = _round_up(k_real, LANE)                        # 512 (lane-dense)
    flat = h2.reshape(Bp, p2h * p2w, LANE)[:, :, :c2].reshape(Bp, k_real)
    flat = jnp.pad(flat, ((0, 0), (0, k_pad - k_real)))    # [Bp, 512] bf16
    w1f, b1f = _prep_fc1_w(params["fc1_w"], params["fc1_b"], c2, p2h, p2w, k_pad)
    w2f, b2f = _prep_fc_w(params["fc2_w"], params["fc2_b"])
    w3f, b3f = _prep_fc_w(params["fc3_w"], params["fc3_b"])
    tm = _pick_tile(Bp, (512, 256, 128, 64, 32, 16, 8))
    logits = fc_stack(flat, w1f, b1f, w2f, b2f, w3f, b3f, tm)   # [Bp, 128] f32

    n_classes = params["fc3_w"].shape[1]
    return logits[:B, :n_classes]


# ----------------------------- reference & init -----------------------------

def _reference_forward(x_nchw, params):
    """Pure-JAX (XLA) reference with the original layer semantics."""
    dn = ("NCHW", "OIHW", "NCHW")
    y = jax.lax.conv_general_dilated(x_nchw.astype(jnp.float32),
                                     params["conv1_w"], (1, 1), "VALID",
                                     dimension_numbers=dn)
    y = jax.nn.relu(y + params["conv1_b"][None, :, None, None])
    y = jax.lax.reduce_window(y, 0.0, jax.lax.add, (1, 1, 2, 2), (1, 1, 2, 2), "VALID") / 4.0
    y = jax.lax.conv_general_dilated(y, params["conv2_w"], (1, 1), "VALID",
                                     dimension_numbers=dn)
    y = jax.nn.relu(y + params["conv2_b"][None, :, None, None])
    y = jax.lax.reduce_window(y, 0.0, jax.lax.add, (1, 1, 2, 2), (1, 1, 2, 2), "VALID") / 4.0
    y = y.reshape(y.shape[0], -1)
    y = jax.nn.relu(y @ params["fc1_w"] + params["fc1_b"])
    y = jax.nn.relu(y @ params["fc2_w"] + params["fc2_b"])
    return y @ params["fc3_w"] + params["fc3_b"]


def init_params(key):
    ks = jax.random.split(key, 10)
    s = 0.1

    def n(k, shape):
        return (s * jax.random.normal(k, shape)).astype(jnp.float32)

    n_classes = 10  # CIFAR-10
    return {
        "conv1_w": n(ks[0], (6, 3, 5, 5)),    # torch layout [O, I, KH, KW]
        "conv1_b": n(ks[1], (6,)),
        "conv2_w": n(ks[2], (16, 6, 5, 5)),
        "conv2_b": n(ks[3], (16,)),
        "fc1_w":   n(ks[4], (400, 120)),      # stored as [in, out]
        "fc1_b":   n(ks[5], (120,)),
        "fc2_w":   n(ks[6], (120, 84)),
        "fc2_b":   n(ks[7], (84,)),
        "fc3_w":   n(ks[8], (84, n_classes)),
        "fc3_b":   n(ks[9], (10,)),
    }


if __name__ == "__main__":
    key = jax.random.PRNGKey(0)
    k_x, k_p = jax.random.split(key)
    # CIFAR-style input (LeNet5 fc1 expects 16*5*5, i.e. 32x32 spatial input).
    x = jax.random.normal(k_x, (2, 3, 32, 32), dtype=jnp.float32)
    params = init_params(k_p)

    fwd = jax.jit(lenet5_forward)
    out = jax.block_until_ready(fwd(x, params))

    assert out.shape == (2, 10)
    assert bool(jnp.all(jnp.isfinite(out)))

    # Loose tolerance: kernels use bf16 activations/weights with f32 accumulation.
    ref = _reference_forward(x, params)
    max_err = float(jnp.max(jnp.abs(out.astype(jnp.float32) - ref)))
    assert max_err < 5e-2, f"mismatch vs reference: {max_err}"

    print("KERNEL_OK")
</pallas_src>

<mosaic_0001>
module attributes {stable_mosaic.version = 11 : i64} {
  func.func @_conv_relu_pool_kernel(%arg0: i32, %arg1: memref<1568x75xbf16, #tpu.memory_space<vmem>>, %arg2: memref<1568x75xbf16, #tpu.memory_space<vmem>>, %arg3: memref<1568x75xbf16, #tpu.memory_space<vmem>>, %arg4: memref<1568x75xbf16, #tpu.memory_space<vmem>>, %arg5: memref<75x128xbf16, #tpu.memory_space<vmem>>, %arg6: memref<1x128xf32, #tpu.memory_space<vmem>>, %arg7: memref<1568x128xbf16, #tpu.memory_space<vmem>>) attributes {dimension_semantics = [#tpu.dimension_semantics<parallel>], iteration_bounds = array<i64: 2>, scalar_prefetch = 0 : i64, scratch_operands = 0 : i64, tpu.core_type = #tpu.core_type<tc>, window_params = [{transform_indices = @transform_0, window_bounds = array<i64: 1568, 75>}, {transform_indices = @transform_1, window_bounds = array<i64: 1568, 75>}, {transform_indices = @transform_2, window_bounds = array<i64: 1568, 75>}, {transform_indices = @transform_3, window_bounds = array<i64: 1568, 75>}, {pipeline_mode = #tpu.pipeline_mode<synchronous>, transform_indices = @transform_4, window_bounds = array<i64: 75, 128>}, {pipeline_mode = #tpu.pipeline_mode<synchronous>, transform_indices = @transform_5, window_bounds = array<i64: 1, 128>}, {transform_indices = @transform_6, window_bounds = array<i64: 1568, 128>}]} {
    %c0 = arith.constant 0 : index
    %c0_0 = arith.constant 0 : index
    %0 = vector.load %arg5[%c0, %c0_0] : memref<75x128xbf16, #tpu.memory_space<vmem>>, vector<75x128xbf16>
    %c0_1 = arith.constant 0 : index
    %c0_2 = arith.constant 0 : index
    %1 = vector.load %arg6[%c0_1, %c0_2] : memref<1x128xf32, #tpu.memory_space<vmem>>, vector<1x128xf32>
    %c0_3 = arith.constant 0 : index
    %c0_4 = arith.constant 0 : index
    %2 = vector.load %arg1[%c0_3, %c0_4] : memref<1568x75xbf16, #tpu.memory_space<vmem>>, vector<1568x75xbf16>
    %cst = arith.constant dense<0.000000e+00> : vector<1568x128xf32>
    %3 = tpu.matmul %2, %0, %cst {dimension_numbers = #tpu.dot_dimension_numbers<[1], [0], [0], [1], [0, 0, 1, 1], [], []>} : vector<1568x75xbf16>, vector<75x128xbf16>, vector<1568x128xf32> -> vector<1568x128xf32>
    %4 = vector.broadcast %1 : vector<1x128xf32> to vector<1568x128xf32>
    %5 = arith.addf %3, %4 : vector<1568x128xf32>
    %cst_5 = arith.constant 0.000000e+00 : f32
    %6 = vector.broadcast %cst_5 : f32 to vector<1568x128xf32>
    %7 = arith.maximumf %5, %6 : vector<1568x128xf32>
    %c0_6 = arith.constant 0 : index
    %c0_7 = arith.constant 0 : index
    %8 = vector.load %arg2[%c0_6, %c0_7] : memref<1568x75xbf16, #tpu.memory_space<vmem>>, vector<1568x75xbf16>
    %cst_8 = arith.constant dense<0.000000e+00> : vector<1568x128xf32>
    %9 = tpu.matmul %8, %0, %cst_8 {dimension_numbers = #tpu.dot_dimension_numbers<[1], [0], [0], [1], [0, 0, 1, 1], [], []>} : vector<1568x75xbf16>, vector<75x128xbf16>, vector<1568x128xf32> -> vector<1568x128xf32>
    %10 = vector.broadcast %1 : vector<1x128xf32> to vector<1568x128xf32>
    %11 = arith.addf %9, %10 : vector<1568x128xf32>
    %cst_9 = arith.constant 0.000000e+00 : f32
    %12 = vector.broadcast %cst_9 : f32 to vector<1568x128xf32>
    %13 = arith.maximumf %11, %12 : vector<1568x128xf32>
    %14 = arith.addf %7, %13 : vector<1568x128xf32>
    %c0_10 = arith.constant 0 : index
    %c0_11 = arith.constant 0 : index
    %15 = vector.load %arg3[%c0_10, %c0_11] : memref<1568x75xbf16, #tpu.memory_space<vmem>>, vector<1568x75xbf16>
    %cst_12 = arith.constant dense<0.000000e+00> : vector<1568x128xf32>
    %16 = tpu.matmul %15, %0, %cst_12 {dimension_numbers = #tpu.dot_dimension_numbers<[1], [0], [0], [1], [0, 0, 1, 1], [], []>} : vector<1568x75xbf16>, vector<75x128xbf16>, vector<1568x128xf32> -> vector<1568x128xf32>
    %17 = vector.broadcast %1 : vector<1x128xf32> to vector<1568x128xf32>
    %18 = arith.addf %16, %17 : vector<1568x128xf32>
    %cst_13 = arith.constant 0.000000e+00 : f32
    %19 = vector.broadcast %cst_13 : f32 to vector<1568x128xf32>
    %20 = arith.maximumf %18, %19 : vector<1568x128xf32>
    %21 = arith.addf %14, %20 : vector<1568x128xf32>
    %c0_14 = arith.constant 0 : index
    %c0_15 = arith.constant 0 : index
    %22 = vector.load %arg4[%c0_14, %c0_15] : memref<1568x75xbf16, #tpu.memory_space<vmem>>, vector<1568x75xbf16>
    %cst_16 = arith.constant dense<0.000000e+00> : vector<1568x128xf32>
    %23 = tpu.matmul %22, %0, %cst_16 {dimension_numbers = #tpu.dot_dimension_numbers<[1], [0], [0], [1], [0, 0, 1, 1], [], []>} : vector<1568x75xbf16>, vector<75x128xbf16>, vector<1568x128xf32> -> vector<1568x128xf32>
    %24 = vector.broadcast %1 : vector<1x128xf32> to vector<1568x128xf32>
    %25 = arith.addf %23, %24 : vector<1568x128xf32>
    %cst_17 = arith.constant 0.000000e+00 : f32
    %26 = vector.broadcast %cst_17 : f32 to vector<1568x128xf32>
    %27 = arith.maximumf %25, %26 : vector<1568x128xf32>
    %28 = arith.addf %21, %27 : vector<1568x128xf32>
    %cst_18 = arith.constant 2.500000e-01 : f32
    %29 = vector.broadcast %cst_18 : f32 to vector<1568x128xf32>
    %30 = arith.mulf %29, %28 : vector<1568x128xf32>
    %31 = arith.truncf %30 : vector<1568x128xf32> to vector<1568x128xbf16>
    %c0_19 = arith.constant 0 : index
    %c0_20 = arith.constant 0 : index
    %32 = vector.load %arg7[%c0_19, %c0_20] : memref<1568x128xbf16, #tpu.memory_space<vmem>>, vector<1568x128xbf16>
    tpu.vector_store %arg7[%c0_19, %c0_20], %31 {strides = array<i32>} : memref<1568x128xbf16, #tpu.memory_space<vmem>>, vector<1568x128xbf16>,
    return
  }
  func.func @transform_0(%arg0: i32) -> (i32, i32) {
    %c0_i32 = arith.constant 0 : i32
    %c0_i32_0 = arith.constant 0 : i32
    return %arg0, %c0_i32 : i32, i32
  }
  func.func @transform_1(%arg0: i32) -> (i32, i32) {
    %c0_i32 = arith.constant 0 : i32
    %c0_i32_0 = arith.constant 0 : i32
    return %arg0, %c0_i32 : i32, i32
  }
  func.func @transform_2(%arg0: i32) -> (i32, i32) {
    %c0_i32 = arith.constant 0 : i32
    %c0_i32_0 = arith.constant 0 : i32
    return %arg0, %c0_i32 : i32, i32
  }
  func.func @transform_3(%arg0: i32) -> (i32, i32) {
    %c0_i32 = arith.constant 0 : i32
    %c0_i32_0 = arith.constant 0 : i32
    return %arg0, %c0_i32 : i32, i32
  }
  func.func @transform_4(%arg0: i32) -> (i32, i32) {
    %c0_i32 = arith.constant 0 : i32
    %c0_i32_0 = arith.constant 0 : i32
    %c0_i32_1 = arith.constant 0 : i32
    return %c0_i32, %c0_i32_0 : i32, i32
  }
  func.func @transform_5(%arg0: i32) -> (i32, i32) {
    %c0_i32 = arith.constant 0 : i32
    %c0_i32_0 = arith.constant 0 : i32
    %c0_i32_1 = arith.constant 0 : i32
    return %c0_i32, %c0_i32_0 : i32, i32
  }
  func.func @transform_6(%arg0: i32) -> (i32, i32) {
    %c0_i32 = arith.constant 0 : i32
    %c0_i32_0 = arith.constant 0 : i32
    return %arg0, %c0_i32 : i32, i32
  }
}

module attributes {stable_mosaic.version = 11 : i64} {
  func.func @_conv_relu_pool_kernel(%arg0: i32, %arg1: memref<200x150xbf16, #tpu.memory_space<vmem>>, %arg2: memref<200x150xbf16, #tpu.memory_space<vmem>>, %arg3: memref<200x150xbf16, #tpu.memory_space<vmem>>, %arg4: memref<200x150xbf16, #tpu.memory_space<vmem>>, %arg5: memref<150x128xbf16, #tpu.memory_space<vmem>>, %arg6: memref<1x128xf32, #tpu.memory_space<vmem>>, %arg7: memref<200x128xbf16, #tpu.memory_space<vmem>>) attributes {dimension_semantics = [#tpu.dimension_semantics<parallel>], iteration_bounds = array<i64: 2>, scalar_prefetch = 0 : i64, scratch_operands = 0 : i64, tpu.core_type = #tpu.core_type<tc>, window_params = [{transform_indices = @transform_0, window_bounds = array<i64: 200, 150>}, {transform_indices = @transform_1, window_bounds = array<i64: 200, 150>}, {transform_indices = @transform_2, window_bounds = array<i64: 200, 150>}, {transform_indices = @transform_3, window_bounds = array<i64: 200, 150>}, {pipeline_mode = #tpu.pipeline_mode<synchronous>, transform_indices = @transform_4, window_bounds = array<i64: 150, 128>}, {pipeline_mode = #tpu.pipeline_mode<synchronous>, transform_indices = @transform_5, window_bounds = array<i64: 1, 128>}, {transform_indices = @transform_6, window_bounds = array<i64: 200, 128>}]} {
    %c0 = arith.constant 0 : index
    %c0_0 = arith.constant 0 : index
    %0 = vector.load %arg5[%c0, %c0_0] : memref<150x128xbf16, #tpu.memory_space<vmem>>, vector<150x128xbf16>
    %c0_1 = arith.constant 0 : index
    %c0_2 = arith.constant 0 : index
    %1 = vector.load %arg6[%c0_1, %c0_2] : memref<1x128xf32, #tpu.memory_space<vmem>>, vector<1x128xf32>
    %c0_3 = arith.constant 0 : index
    %c0_4 = arith.constant 0 : index
    %2 = vector.load %arg1[%c0_3, %c0_4] : memref<200x150xbf16, #tpu.memory_space<vmem>>, vector<200x150xbf16>
    %cst = arith.constant dense<0.000000e+00> : vector<200x128xf32>
    %3 = tpu.matmul %2, %0, %cst {dimension_numbers = #tpu.dot_dimension_numbers<[1], [0], [0], [1], [0, 0, 1, 1], [], []>} : vector<200x150xbf16>, vector<150x128xbf16>, vector<200x128xf32> -> vector<200x128xf32>
    %4 = vector.broadcast %1 : vector<1x128xf32> to vector<200x128xf32>
    %5 = arith.addf %3, %4 : vector<200x128xf32>
    %cst_5 = arith.constant 0.000000e+00 : f32
    %6 = vector.broadcast %cst_5 : f32 to vector<200x128xf32>
    %7 = arith.maximumf %5, %6 : vector<200x128xf32>
    %c0_6 = arith.constant 0 : index
    %c0_7 = arith.constant 0 : index
    %8 = vector.load %arg2[%c0_6, %c0_7] : memref<200x150xbf16, #tpu.memory_space<vmem>>, vector<200x150xbf16>
    %cst_8 = arith.constant dense<0.000000e+00> : vector<200x128xf32>
    %9 = tpu.matmul %8, %0, %cst_8 {dimension_numbers = #tpu.dot_dimension_numbers<[1], [0], [0], [1], [0, 0, 1, 1], [], []>} : vector<200x150xbf16>, vector<150x128xbf16>, vector<200x128xf32> -> vector<200x128xf32>
    %10 = vector.broadcast %1 : vector<1x128xf32> to vector<200x128xf32>
    %11 = arith.addf %9, %10 : vector<200x128xf32>
    %cst_9 = arith.constant 0.000000e+00 : f32
    %12 = vector.broadcast %cst_9 : f32 to vector<200x128xf32>
    %13 = arith.maximumf %11, %12 : vector<200x128xf32>
    %14 = arith.addf %7, %13 : vector<200x128xf32>
    %c0_10 = arith.constant 0 : index
    %c0_11 = arith.constant 0 : index
    %15 = vector.load %arg3[%c0_10, %c0_11] : memref<200x150xbf16, #tpu.memory_space<vmem>>, vector<200x150xbf16>
    %cst_12 = arith.constant dense<0.000000e+00> : vector<200x128xf32>
    %16 = tpu.matmul %15, %0, %cst_12 {dimension_numbers = #tpu.dot_dimension_numbers<[1], [0], [0], [1], [0, 0, 1, 1], [], []>} : vector<200x150xbf16>, vector<150x128xbf16>, vector<200x128xf32> -> vector<200x128xf32>
    %17 = vector.broadcast %1 : vector<1x128xf32> to vector<200x128xf32>
    %18 = arith.addf %16, %17 : vector<200x128xf32>
    %cst_13 = arith.constant 0.000000e+00 : f32
    %19 = vector.broadcast %cst_13 : f32 to vector<200x128xf32>
    %20 = arith.maximumf %18, %19 : vector<200x128xf32>
    %21 = arith.addf %14, %20 : vector<200x128xf32>
    %c0_14 = arith.constant 0 : index
    %c0_15 = arith.constant 0 : index
    %22 = vector.load %arg4[%c0_14, %c0_15] : memref<200x150xbf16, #tpu.memory_space<vmem>>, vector<200x150xbf16>
    %cst_16 = arith.constant dense<0.000000e+00> : vector<200x128xf32>
    %23 = tpu.matmul %22, %0, %cst_16 {dimension_numbers = #tpu.dot_dimension_numbers<[1], [0], [0], [1], [0, 0, 1, 1], [], []>} : vector<200x150xbf16>, vector<150x128xbf16>, vector<200x128xf32> -> vector<200x128xf32>
    %24 = vector.broadcast %1 : vector<1x128xf32> to vector<200x128xf32>
    %25 = arith.addf %23, %24 : vector<200x128xf32>
    %cst_17 = arith.constant 0.000000e+00 : f32
    %26 = vector.broadcast %cst_17 : f32 to vector<200x128xf32>
    %27 = arith.maximumf %25, %26 : vector<200x128xf32>
    %28 = arith.addf %21, %27 : vector<200x128xf32>
    %cst_18 = arith.constant 2.500000e-01 : f32
    %29 = vector.broadcast %cst_18 : f32 to vector<200x128xf32>
    %30 = arith.mulf %29, %28 : vector<200x128xf32>
    %31 = arith.truncf %30 : vector<200x128xf32> to vector<200x128xbf16>
    %c0_19 = arith.constant 0 : index
    %c0_20 = arith.constant 0 : index
    %32 = vector.load %arg7[%c0_19, %c0_20] : memref<200x128xbf16, #tpu.memory_space<vmem>>, vector<200x128xbf16>
    tpu.vector_store %arg7[%c0_19, %c0_20], %31 {strides = array<i32>} : memref<200x128xbf16, #tpu.memory_space<vmem>>, vector<200x128xbf16>,
    return
  }
  func.func @transform_0(%arg0: i32) -> (i32, i32) {
    %c0_i32 = arith.constant 0 : i32
    %c0_i32_0 = arith.constant 0 : i32
    return %arg0, %c0_i32 : i32, i32
  }
  func.func @transform_1(%arg0: i32) -> (i32, i32) {
    %c0_i32 = arith.constant 0 : i32
    %c0_i32_0 = arith.constant 0 : i32
    return %arg0, %c0_i32 : i32, i32
  }
  func.func @transform_2(%arg0: i32) -> (i32, i32) {
    %c0_i32 = arith.constant 0 : i32
    %c0_i32_0 = arith.constant 0 : i32
    return %arg0, %c0_i32 : i32, i32
  }
  func.func @transform_3(%arg0: i32) -> (i32, i32) {
    %c0_i32 = arith.constant 0 : i32
    %c0_i32_0 = arith.constant 0 : i32
    return %arg0, %c0_i32 : i32, i32
  }
  func.func @transform_4(%arg0: i32) -> (i32, i32) {
    %c0_i32 = arith.constant 0 : i32
    %c0_i32_0 = arith.constant 0 : i32
    %c0_i32_1 = arith.constant 0 : i32
    return %c0_i32, %c0_i32_0 : i32, i32
  }
  func.func @transform_5(%arg0: i32) -> (i32, i32) {
    %c0_i32 = arith.constant 0 : i32
    %c0_i32_0 = arith.constant 0 : i32
    %c0_i32_1 = arith.constant 0 : i32
    return %c0_i32, %c0_i32_0 : i32, i32
  }
  func.func @transform_6(%arg0: i32) -> (i32, i32) {
    %c0_i32 = arith.constant 0 : i32
    %c0_i32_0 = arith.constant 0 : i32
    return %arg0, %c0_i32 : i32, i32
  }
}

module attributes {stable_mosaic.version = 11 : i64} {
  func.func @_fc_stack_kernel(%arg0: i32, %arg1: memref<8x512xbf16, #tpu.memory_space<vmem>>, %arg2: memref<512x128xbf16, #tpu.memory_space<vmem>>, %arg3: memref<1x128xf32, #tpu.memory_space<vmem>>, %arg4: memref<128x128xbf16, #tpu.memory_space<vmem>>, %arg5: memref<1x128xf32, #tpu.memory_space<vmem>>, %arg6: memref<128x128xbf16, #tpu.memory_space<vmem>>, %arg7: memref<1x128xf32, #tpu.memory_space<vmem>>, %arg8: memref<8x128xf32, #tpu.memory_space<vmem>>) attributes {dimension_semantics = [#tpu.dimension_semantics<parallel>], iteration_bounds = array<i64: 2>, scalar_prefetch = 0 : i64, scratch_operands = 0 : i64, tpu.core_type = #tpu.core_type<tc>, window_params = [{transform_indices = @transform_0, window_bounds = array<i64: 8, 512>}, {pipeline_mode = #tpu.pipeline_mode<synchronous>, transform_indices = @transform_1, window_bounds = array<i64: 512, 128>}, {pipeline_mode = #tpu.pipeline_mode<synchronous>, transform_indices = @transform_2, window_bounds = array<i64: 1, 128>}, {pipeline_mode = #tpu.pipeline_mode<synchronous>, transform_indices = @transform_3, window_bounds = array<i64: 128, 128>}, {pipeline_mode = #tpu.pipeline_mode<synchronous>, transform_indices = @transform_4, window_bounds = array<i64: 1, 128>}, {pipeline_mode = #tpu.pipeline_mode<synchronous>, transform_indices = @transform_5, window_bounds = array<i64: 128, 128>}, {pipeline_mode = #tpu.pipeline_mode<synchronous>, transform_indices = @transform_6, window_bounds = array<i64: 1, 128>}, {transform_indices = @transform_7, window_bounds = array<i64: 8, 128>}]} {
    %c0 = arith.constant 0 : index
    %c0_0 = arith.constant 0 : index
    %0 = vector.load %arg1[%c0, %c0_0] : memref<8x512xbf16, #tpu.memory_space<vmem>>, vector<8x512xbf16>
    %c0_1 = arith.constant 0 : index
    %c0_2 = arith.constant 0 : index
    %1 = vector.load %arg2[%c0_1, %c0_2] : memref<512x128xbf16, #tpu.memory_space<vmem>>, vector<512x128xbf16>
    %cst = arith.constant dense<0.000000e+00> : vector<8x128xf32>
    %2 = tpu.matmul %0, %1, %cst {dimension_numbers = #tpu.dot_dimension_numbers<[1], [0], [0], [1], [0, 0, 1, 1], [], []>} : vector<8x512xbf16>, vector<512x128xbf16>, vector<8x128xf32> -> vector<8x128xf32>
    %c0_3 = arith.constant 0 : index
    %c0_4 = arith.constant 0 : index
    %3 = vector.load %arg3[%c0_3, %c0_4] : memref<1x128xf32, #tpu.memory_space<vmem>>, vector<1x128xf32>
    %4 = vector.broadcast %3 : vector<1x128xf32> to vector<8x128xf32>
    %5 = arith.addf %2, %4 : vector<8x128xf32>
    %cst_5 = arith.constant 0.000000e+00 : f32
    %6 = vector.broadcast %cst_5 : f32 to vector<8x128xf32>
    %7 = arith.maximumf %5, %6 : vector<8x128xf32>
    %8 = arith.truncf %7 : vector<8x128xf32> to vector<8x128xbf16>
    %c0_6 = arith.constant 0 : index
    %c0_7 = arith.constant 0 : index
    %9 = vector.load %arg4[%c0_6, %c0_7] : memref<128x128xbf16, #tpu.memory_space<vmem>>, vector<128x128xbf16>
    %cst_8 = arith.constant dense<0.000000e+00> : vector<8x128xf32>
    %10 = tpu.matmul %8, %9, %cst_8 {dimension_numbers = #tpu.dot_dimension_numbers<[1], [0], [0], [1], [0, 0, 1, 1], [], []>} : vector<8x128xbf16>, vector<128x128xbf16>, vector<8x128xf32> -> vector<8x128xf32>
    %c0_9 = arith.constant 0 : index
    %c0_10 = arith.constant 0 : index
    %11 = vector.load %arg5[%c0_9, %c0_10] : memref<1x128xf32, #tpu.memory_space<vmem>>, vector<1x128xf32>
    %12 = vector.broadcast %11 : vector<1x128xf32> to vector<8x128xf32>
    %13 = arith.addf %10, %12 : vector<8x128xf32>
    %cst_11 = arith.constant 0.000000e+00 : f32
    %14 = vector.broadcast %cst_11 : f32 to vector<8x128xf32>
    %15 = arith.maximumf %13, %14 : vector<8x128xf32>
    %16 = arith.truncf %15 : vector<8x128xf32> to vector<8x128xbf16>
    %c0_12 = arith.constant 0 : index
    %c0_13 = arith.constant 0 : index
    %17 = vector.load %arg6[%c0_12, %c0_13] : memref<128x128xbf16, #tpu.memory_space<vmem>>, vector<128x128xbf16>
    %cst_14 = arith.constant dense<0.000000e+00> : vector<8x128xf32>
    %18 = tpu.matmul %16, %17, %cst_14 {dimension_numbers = #tpu.dot_dimension_numbers<[1], [0], [0], [1], [0, 0, 1, 1], [], []>} : vector<8x128xbf16>, vector<128x128xbf16>, vector<8x128xf32> -> vector<8x128xf32>
    %c0_15 = arith.constant 0 : index
    %c0_16 = arith.constant 0 : index
    %19 = vector.load %arg7[%c0_15, %c0_16] : memref<1x128xf32, #tpu.memory_space<vmem>>, vector<1x128xf32>
    %20 = vector.broadcast %19 : vector<1x128xf32> to vector<8x128xf32>
    %21 = arith.addf %18, %20 : vector<8x128xf32>
    %c0_17 = arith.constant 0 : index
    %c0_18 = arith.constant 0 : index
    %22 = vector.load %arg8[%c0_17, %c0_18] : memref<8x128xf32, #tpu.memory_space<vmem>>, vector<8x128xf32>
    tpu.vector_store %arg8[%c0_17, %c0_18], %21 {strides = array<i32>} : memref<8x128xf32, #tpu.memory_space<vmem>>, vector<8x128xf32>,
    return
  }
  func.func @transform_0(%arg0: i32) -> (i32, i32) {
    %c0_i32 = arith.constant 0 : i32
    %c0_i32_0 = arith.constant 0 : i32
    return %arg0, %c0_i32 : i32, i32
  }
  func.func @transform_1(%arg0: i32) -> (i32, i32) {
    %c0_i32 = arith.constant 0 : i32
    %c0_i32_0 = arith.constant 0 : i32
    %c0_i32_1 = arith.constant 0 : i32
    return %c0_i32, %c0_i32_0 : i32, i32
  }
  func.func @transform_2(%arg0: i32) -> (i32, i32) {
    %c0_i32 = arith.constant 0 : i32
    %c0_i32_0 = arith.constant 0 : i32
    %c0_i32_1 = arith.constant 0 : i32
    return %c0_i32, %c0_i32_0 : i32, i32
  }
  func.func @transform_3(%arg0: i32) -> (i32, i32) {
    %c0_i32 = arith.constant 0 : i32
    %c0_i32_0 = arith.constant 0 : i32
    %c0_i32_1 = arith.constant 0 : i32
    return %c0_i32, %c0_i32_0 : i32, i32
  }
  func.func @transform_4(%arg0: i32) -> (i32, i32) {
    %c0_i32 = arith.constant 0 : i32
    %c0_i32_0 = arith.constant 0 : i32
    %c0_i32_1 = arith.constant 0 : i32
    return %c0_i32, %c0_i32_0 : i32, i32
  }
  func.func @transform_5(%arg0: i32) -> (i32, i32) {
    %c0_i32 = arith.constant 0 : i32
    %c0_i32_0 = arith.constant 0 : i32
    %c0_i32_1 = arith.constant 0 : i32
    return %c0_i32, %c0_i32_0 : i32, i32
  }
  func.func @transform_6(%arg0: i32) -> (i32, i32) {
    %c0_i32 = arith.constant 0 : i32
    %c0_i32_0 = arith.constant 0 : i32
    %c0_i32_1 = arith.constant 0 : i32
    return %c0_i32, %c0_i32_0 : i32, i32
  }
  func.func @transform_7(%arg0: i32) -> (i32, i32) {
    %c0_i32 = arith.constant 0 : i32
    %c0_i32_0 = arith.constant 0 : i32
    return %arg0, %c0_i32 : i32, i32
  }
}

</mosaic_0001>

<llo_original>
// kernel: lenet5_forward.3
$region0: #{lenet5_forward.3}
  #allocation0 [shape = 'u32[]', space=smem, size = 0x4, offset = 0x4, fixed_abs, tag = 'smem constant byte address 0x4 - core index']
  #allocation1 [shape = 'u32[144,128]{1,0:T(1,128)}', space=vmem, size = 0x12000, scoped, tag = 'internal scratch']
  %s0 = inlined_call_operand.vmem [shape: bf16[3136,75], index: 0, kind: input, shape index: {}]
  %s1 = inlined_call_operand.vmem [shape: bf16[3136,75], index: 1, kind: input, shape index: {}]
  %s2 = inlined_call_operand.vmem [shape: bf16[3136,75], index: 2, kind: input, shape index: {}]
  %s3 = inlined_call_operand.vmem [shape: bf16[3136,75], index: 3, kind: input, shape index: {}]
  %s4 = inlined_call_operand.vmem [shape: bf16[75,128], index: 4, kind: input, shape index: {}]
  %s5 = inlined_call_operand.vmem [shape: f32[1,128], index: 5, kind: input, shape index: {}]
  %s6 = inlined_call_operand.vmem [shape: bf16[3136,128], index: 6, kind: output, shape index: {}]
  %s7 = sld [smem:[#allocation0]]
  $region57: #{lenet5_forward.3} parent=0
    _
  %s9 = ssub.s32 1, %s7
  %s10 = scalar_select 0, %s9, %s7
  loop: start=0, step=1, limit=4
  $region2: #{lenet5_forward.3} parent=0 // loop_pre_header
    _
  $region3: #{lenet5_forward.3} parent=0 // loop_header
    %s12 = sphi 0, %s16
    %p13 = scmp.ge.s32.totalorder %s12, 4
    %s22 = sphi 0, %s24
    %s25 = sphi 0, %s22
    %s26 = sphi 0, %s25
    %s42 = sphi 0, %s26
    %s48 = sphi 0, %s50
    %s51 = sphi 0, %s48
    %s52 = sphi 0, %s51
    %s68 = sphi 0, %s52
    %s74 = sphi 0, %s76
    %s77 = sphi 0, %s74
    %s78 = sphi 0, %s77
    %s94 = sphi 0, %s78
    %s100 = sphi 0, %s102
    %s103 = sphi 0, %s100
    %s104 = sphi 0, %s103
    %s120 = sphi 0, %s104
    %s124 = sphi 0, %s124
    %s126 = sphi 0, %s124
    %s127 = sphi 0, %s126
    %s141 = sphi 0, %s127
    %s145 = sphi 0, %s145
    %s147 = sphi 0, %s145
    %s148 = sphi 0, %s147
    %s162 = sphi 0, %s148
    %s168 = sphi 0, %s170
    %s171 = sphi 0, %s168
    %s172 = sphi 0, %s171
    %s188 = sphi 0, %s172
  $region4: #{lenet5_forward.3} parent=0 // loop_header_branch
    %15 = sbr.rel (%p13) target = $region8
  $region5: #{lenet5_forward.3} parent=0 // loop_body
    %s17 = ssub.s32 %s12, 1
    %s18 = ssub.s32 %s12, 2
    %s19 = sadd.s32 %s12, 1
    %s20 = ssub.s32 %s12, %s19
    %p21 = scmp.eq.s32.totalorder %s20, 0
    %s23 = sadd.s32 %s22, 1
    %s24 = scalar_select %p21, %s22, %s23
    %p27 = pneg %p21
    %p28 = scmp.eq.s32.totalorder %s12, 1
    %p29 = por %p27, %p28
    %p30 = scmp.ne.s32.totalorder %s22, %s25
    %p31 = scmp.eq.s32.totalorder %s12, 0
    %p32 = por %p30, %p31
    %p33 = scmp.ne.s32.totalorder %s22, %s25
    %p34 = scmp.eq.s32.totalorder %s17, 1
    %p35 = por %p33, %p34
    %p36 = scmp.ne.s32.totalorder %s25, %s26
    %p37 = scmp.eq.s32.totalorder %s17, 0
    %p38 = por %p36, %p37
    %p39 = scmp.ne.s32.totalorder %s25, %s26
    %p40 = scmp.eq.s32.totalorder %s18, 1
    %p41 = por %p39, %p40
    %p43 = scmp.ne.s32.totalorder %s26, %s42
    %p44 = scmp.eq.s32.totalorder %s18, 0
    %p45 = por %p43, %p44
    %s46 = ssub.s32 %s12, %s19
    %p47 = scmp.eq.s32.totalorder %s46, 0
    %s49 = sadd.s32 %s48, 1
    %s50 = scalar_select %p47, %s48, %s49
    %p53 = pneg %p47
    %p54 = scmp.eq.s32.totalorder %s12, 1
    %p55 = por %p53, %p54
    %p56 = scmp.ne.s32.totalorder %s48, %s51
    %p57 = scmp.eq.s32.totalorder %s12, 0
    %p58 = por %p56, %p57
    %p59 = scmp.ne.s32.totalorder %s48, %s51
    %p60 = scmp.eq.s32.totalorder %s17, 1
    %p61 = por %p59, %p60
    %p62 = scmp.ne.s32.totalorder %s51, %s52
    %p63 = scmp.eq.s32.totalorder %s17, 0
    %p64 = por %p62, %p63
    %p65 = scmp.ne.s32.totalorder %s51, %s52
    %p66 = scmp.eq.s32.totalorder %s18, 1
    %p67 = por %p65, %p66
    %p69 = scmp.ne.s32.totalorder %s52, %s68
    %p70 = scmp.eq.s32.totalorder %s18, 0
    %p71 = por %p69, %p70
    %s72 = ssub.s32 %s12, %s19
    %p73 = scmp.eq.s32.totalorder %s72, 0
    %s75 = sadd.s32 %s74, 1
    %s76 = scalar_select %p73, %s74, %s75
    %p79 = pneg %p73
    %p80 = scmp.eq.s32.totalorder %s12, 1
    %p81 = por %p79, %p80
    %p82 = scmp.ne.s32.totalorder %s74, %s77
    %p83 = scmp.eq.s32.totalorder %s12, 0
    %p84 = por %p82, %p83
    %p85 = scmp.ne.s32.totalorder %s74, %s77
    %p86 = scmp.eq.s32.totalorder %s17, 1
    %p87 = por %p85, %p86
    %p88 = scmp.ne.s32.totalorder %s77, %s78
    %p89 = scmp.eq.s32.totalorder %s17, 0
    %p90 = por %p88, %p89
    %p91 = scmp.ne.s32.totalorder %s77, %s78
    %p92 = scmp.eq.s32.totalorder %s18, 1
    %p93 = por %p91, %p92
    %p95 = scmp.ne.s32.totalorder %s78, %s94
    %p96 = scmp.eq.s32.totalorder %s18, 0
    %p97 = por %p95, %p96
    %s98 = ssub.s32 %s12, %s19
    %p99 = scmp.eq.s32.totalorder %s98, 0
    %s101 = sadd.s32 %s100, 1
    %s102 = scalar_select %p99, %s100, %s101
    %p105 = pneg %p99
    %p106 = scmp.eq.s32.totalorder %s12, 1
    %p107 = por %p105, %p106
    %p108 = scmp.ne.s32.totalorder %s100, %s103
    %p109 = scmp.eq.s32.totalorder %s12, 0
    %p110 = por %p108, %p109
    %p111 = scmp.ne.s32.totalorder %s100, %s103
    %p112 = scmp.eq.s32.totalorder %s17, 1
    %p113 = por %p111, %p112
    %p114 = scmp.ne.s32.totalorder %s103, %s104
    %p115 = scmp.eq.s32.totalorder %s17, 0
    %p116 = por %p114, %p115
    %p117 = scmp.ne.s32.totalorder %s103, %s104
    %p118 = scmp.eq.s32.totalorder %s18, 1
    %p119 = por %p117, %p118
    %p121 = scmp.ne.s32.totalorder %s104, %s120
    %p122 = scmp.eq.s32.totalorder %s18, 0
    %p123 = por %p121, %p122
    %s125 = sadd.s32 %s124, 1
    %p128 = scmp.eq.s32.totalorder %s12, 1
    %p129 = scmp.ne.s32.totalorder %s124, %s126
    %p130 = scmp.eq.s32.totalorder %s12, 0
    %p131 = por %p129, %p130
    %p132 = scmp.ne.s32.totalorder %s124, %s126
    %p133 = scmp.eq.s32.totalorder %s17, 1
    %p134 = por %p132, %p133
    %p135 = scmp.ne.s32.totalorder %s126, %s127
    %p136 = scmp.eq.s32.totalorder %s17, 0
    %p137 = por %p135, %p136
    %p138 = scmp.ne.s32.totalorder %s126, %s127
    %p139 = scmp.eq.s32.totalorder %s18, 1
    %p140 = por %p138, %p139
    %p142 = scmp.ne.s32.totalorder %s127, %s141
    %p143 = scmp.eq.s32.totalorder %s18, 0
    %p144 = por %p142, %p143
    %s146 = sadd.s32 %s145, 1
    %p149 = scmp.eq.s32.totalorder %s12, 1
    %p150 = scmp.ne.s32.totalorder %s145, %s147
    %p151 = scmp.eq.s32.totalorder %s12, 0
    %p152 = por %p150, %p151
    %p153 = scmp.ne.s32.totalorder %s145, %s147
    %p154 = scmp.eq.s32.totalorder %s17, 1
    %p155 = por %p153, %p154
    %p156 = scmp.ne.s32.totalorder %s147, %s148
    %p157 = scmp.eq.s32.totalorder %s17, 0
    %p158 = por %p156, %p157
    %p159 = scmp.ne.s32.totalorder %s147, %s148
    %p160 = scmp.eq.s32.totalorder %s18, 1
    %p161 = por %p159, %p160
    %p163 = scmp.ne.s32.totalorder %s148, %s162
    %p164 = scmp.eq.s32.totalorder %s18, 0
    %p165 = por %p163, %p164
    %s166 = ssub.s32 %s12, %s19
    %p167 = scmp.eq.s32.totalorder %s166, 0
    %s169 = sadd.s32 %s168, 1
    %s170 = scalar_select %p167, %s168, %s169
    %p173 = pneg %p167
    %p174 = scmp.eq.s32.totalorder %s12, 1
    %p175 = por %p173, %p174
    %p176 = scmp.ne.s32.totalorder %s168, %s171
    %p177 = scmp.eq.s32.totalorder %s12, 0
    %p178 = por %p176, %p177
    %p179 = scmp.ne.s32.totalorder %s168, %s171
    %p180 = scmp.eq.s32.totalorder %s17, 1
    %p181 = por %p179, %p180
    %p182 = scmp.ne.s32.totalorder %s171, %s172
    %p183 = scmp.eq.s32.totalorder %s17, 0
    %p184 = por %p182, %p183
    %p185 = scmp.ne.s32.totalorder %s171, %s172
    %p186 = scmp.eq.s32.totalorder %s18, 1
    %p187 = por %p185, %p186
    %p189 = scmp.ne.s32.totalorder %s172, %s188
    %p190 = scmp.eq.s32.totalorder %s18, 0
    %p191 = por %p189, %p190
    %p192 = scmp.le.s32.totalorder 1, %s12
    %p193 = scmp.lt.s32.totalorder %s12, 3
    %p194 = pnand %p192, %p193
    %p195 = pneg %p194
    // Predicated region
    $region9: #{lenet5_forward.3} parent=5 // pred_check
      _
    $region10: #{lenet5_forward.3} parent=5 // pred_check_branch
      %197 = sbr.rel (%p194) target = $region12
    $region11: #{lenet5_forward.3} parent=5 // pred_region
      %s198 = ssub.s32 %s12, 1
      // Predicated region
      $region13: #{lenet5_forward.3} parent=11 // pred_check
        %p199 = pneg %p137
      $region14: #{lenet5_forward.3} parent=11 // pred_check_branch
        %201 = sbr.rel (%p199) target = $region16
      $region15: #{lenet5_forward.3} parent=11 // pred_region
        _
      $region16: #{lenet5_forward.3} parent=11 // pred_fallthru
        _
      // Predicated region
      $region17: #{lenet5_forward.3} parent=11 // pred_check
        %p202 = pneg %p158
      $region18: #{lenet5_forward.3} parent=11 // pred_check_branch
        %204 = sbr.rel (%p202) target = $region20
      $region19: #{lenet5_forward.3} parent=11 // pred_region
        _
      $region20: #{lenet5_forward.3} parent=11 // pred_fallthru
        _
    $region12: #{lenet5_forward.3} parent=5 // pred_fallthru
      _
    %p205 = scmp.lt.s32.totalorder %s12, 2
    // Predicated region
    $region21: #{lenet5_forward.3} parent=5 // pred_check
      %p206 = pneg %p205
    $region22: #{lenet5_forward.3} parent=5 // pred_check_branch
      %208 = sbr.rel (%p206) target = $region24
    $region23: #{lenet5_forward.3} parent=5 // pred_region
      // Predicated region
      $region25: #{lenet5_forward.3} parent=23 // pred_check
        %p209 = pneg %p32
      $region26: #{lenet5_forward.3} parent=23 // pred_check_branch
        %211 = sbr.rel (%p209) target = $region28
      $region27: #{lenet5_forward.3} parent=23 // pred_region
        %s212 = smul.u32 196, %s12
        %p213 = scmp.lt.s32.totalorder %s212, 391
        %s214 = scalar_select %p213, %s212, 391
        %s215 = smul.addr %s214, 4
        %s216 = scalar_lea.vmem %s0, %s215
        %s217 = smul.u32 196, %s12
      $region28: #{lenet5_forward.3} parent=23 // pred_fallthru
        _
      // Predicated region
      $region29: #{lenet5_forward.3} parent=23 // pred_check
        %p218 = pneg %p58
      $region30: #{lenet5_forward.3} parent=23 // pred_check_branch
        %220 = sbr.rel (%p218) target = $region32
      $region31: #{lenet5_forward.3} parent=23 // pred_region
        %s221 = smul.u32 196, %s12
        %p222 = scmp.lt.s32.totalorder %s221, 391
        %s223 = scalar_select %p222, %s221, 391
        %s224 = smul.addr %s223, 4
        %s225 = scalar_lea.vmem %s1, %s224
        %s226 = smul.u32 196, %s12
      $region32: #{lenet5_forward.3} parent=23 // pred_fallthru
        _
      // Predicated region
      $region33: #{lenet5_forward.3} parent=23 // pred_check
        %p227 = pneg %p84
      $region34: #{lenet5_forward.3} parent=23 // pred_check_branch
        %229 = sbr.rel (%p227) target = $region36
      $region35: #{lenet5_forward.3} parent=23 // pred_region
        %s230 = smul.u32 196, %s12
        %p231 = scmp.lt.s32.totalorder %s230, 391
        %s232 = scalar_select %p231, %s230, 391
        %s233 = smul.addr %s232, 4
        %s234 = scalar_lea.vmem %s2, %s233
        %s235 = smul.u32 196, %s12
      $region36: #{lenet5_forward.3} parent=23 // pred_fallthru
        _
      // Predicated region
      $region37: #{lenet5_forward.3} parent=23 // pred_check
        %p236 = pneg %p110
      $region38: #{lenet5_forward.3} parent=23 // pred_check_branch
        %238 = sbr.rel (%p236) target = $region40
      $region39: #{lenet5_forward.3} parent=23 // pred_region
        %s239 = smul.u32 196, %s12
        %p240 = scmp.lt.s32.totalorder %s239, 391
        %s241 = scalar_select %p240, %s239, 391
        %s242 = smul.addr %s241, 4
        %s243 = scalar_lea.vmem %s3, %s242
        %s244 = smul.u32 196, %s12
      $region40: #{lenet5_forward.3} parent=23 // pred_fallthru
        _
    $region24: #{lenet5_forward.3} parent=5 // pred_fallthru
      _
    %p245 = scmp.le.s32.totalorder 1, %s12
    %p246 = scmp.lt.s32.totalorder %s12, 3
    %p247 = pnand %p245, %p246
    %p248 = pneg %p247
    // Predicated region
    $region41: #{lenet5_forward.3} parent=5 // pred_check
      _
    $region42: #{lenet5_forward.3} parent=5 // pred_check_branch
      %250 = sbr.rel (%p247) target = $region44
    $region43: #{lenet5_forward.3} parent=5 // pred_region
      %s251 = ssub.s32 %s12, 1
      %s252 = smul.u32 196, %s17
      %p253 = scmp.lt.s32.totalorder %s252, 391
      %s254 = scalar_select %p253, %s252, 391
      %s255 = smul.addr %s254, 4
      %s256 = scalar_lea.vmem %s0, %s255
      %p257 = pneg %p38
      %p258 = pneg %p35
      %s259 = smul.u32 196, %s17
      %p260 = scmp.lt.s32.totalorder %s259, 391
      %s261 = scalar_select %p260, %s259, 391
      %s262 = smul.addr %s261, 4
      %s263 = scalar_lea.vmem %s1, %s262
      %p264 = pneg %p64
      %p265 = pneg %p61
      %s266 = smul.u32 196, %s17
      %p267 = scmp.lt.s32.totalorder %s266, 391
      %s268 = scalar_select %p267, %s266, 391
      %s269 = smul.addr %s268, 4
      %s270 = scalar_lea.vmem %s2, %s269
      %p271 = pneg %p90
      %p272 = pneg %p87
      %s273 = smul.u32 196, %s17
      %p274 = scmp.lt.s32.totalorder %s273, 391
      %s275 = scalar_select %p274, %s273, 391
      %s276 = smul.addr %s275, 4
      %s277 = scalar_lea.vmem %s3, %s276
      %p278 = pneg %p116
      %p279 = pneg %p113
      %p280 = pneg %p137
      %p281 = pneg %p134
      %p282 = pneg %p158
      %p283 = pneg %p155
      %p284 = pneg %p184
      %p285 = pneg %p181
      %s286 = smul.u32 196, %s17
      %p287 = scmp.lt.s32.totalorder %s286, 391
      %s288 = scalar_select %p287, %s286, 391
      %s289 = smul.addr %s288, 4
      %s290 = scalar_lea.vmem %s6, %s289
      %s291 = smul.u32 196, %s17
      %p292 = scmp.lt.s32.totalorder %s291, 391
      %s293 = scalar_select %p292, %s291, 391
      %s294 = smul.addr %s293, 4
      %s295 = scalar_lea.vmem %s0, %s294
      %s296 = smul.u32 196, %s17
      %s297 = smul.u32 196, %s17
      %p298 = scmp.lt.s32.totalorder %s297, 391
      %s299 = scalar_select %p298, %s297, 391
      %s300 = smul.addr %s299, 4
      %s301 = scalar_lea.vmem %s1, %s300
      %s302 = smul.u32 196, %s17
      %s303 = smul.u32 196, %s17
      %p304 = scmp.lt.s32.totalorder %s303, 391
      %s305 = scalar_select %p304, %s303, 391
      %s306 = smul.addr %s305, 4
      %s307 = scalar_lea.vmem %s2, %s306
      %s308 = smul.u32 196, %s17
      %s309 = smul.u32 196, %s17
      %p310 = scmp.lt.s32.totalorder %s309, 391
      %s311 = scalar_select %p310, %s309, 391
      %s312 = smul.addr %s311, 4
      %s313 = scalar_lea.vmem %s3, %s312
      %s314 = smul.u32 196, %s17
      %s315 = smul.u32 196, %s17
      %p316 = scmp.lt.s32.totalorder %s315, 391
      %s317 = scalar_select %p316, %s315, 391
      %s318 = smul.addr %s317, 4
      %s319 = scalar_lea.vmem %s6, %s318
      %s320 = smul.u32 196, %s17
      %v322 = vld [vmem:[%s4] sm:$0xf]
      %v323 = vld [vmem:[%s4 + $0x4] sm:$0xf]
      %v324 = vld [vmem:[%s4 + $0x8] sm:$0xf]
      %v325 = vld [vmem:[%s4 + $0xc] sm:$0xf]
      %v326 = vld [vmem:[%s4 + $0x10] sm:$0xf]
      %v327 = vld [vmem:[%s4 + $0x14] sm:$0xf]
      %v328 = vld [vmem:[%s4 + $0x18] sm:$0xf]
      %v329 = vld [vmem:[%s4 + $0x1c] sm:$0xf]
      %v330 = vld [vmem:[%s4 + $0x20] sm:$0xf]
      %v331 = vld [vmem:[%s4 + $0x24] sm:$0x3]
      %v332 = vld [vmem:[%s5] sm:$0x1]
      %v333 = vld [vmem:[%s295] sm:$0xf]
      %v334 = vld [vmem:[%s295 + $0x4] sm:$0xf]
      %v335 = vld [vmem:[%s295 + $0x8] sm:$0xf]
      %v336 = vld [vmem:[%s295 + $0xc] sm:$0xf]
      %v337 = vld [vmem:[%s295 + $0x10] sm:$0xf]
      %v338 = vld [vmem:[%s295 + $0x14] sm:$0xf]
      %v339 = vld [vmem:[%s295 + $0x18] sm:$0xf]
      %v340 = vld [vmem:[%s295 + $0x1c] sm:$0xf]
      %v341 = vld [vmem:[%s295 + $0x20] sm:$0xf]
      %v342 = vld [vmem:[%s295 + $0x24] sm:$0xf]
      %v343 = vld [vmem:[%s295 + $0x28] sm:$0xf]
      %v344 = vld [vmem:[%s295 + $0x2c] sm:$0xf]
      %v345 = vld [vmem:[%s295 + $0x30] sm:$0xf]
      %v346 = vld [vmem:[%s295 + $0x34] sm:$0xf]
      %v347 = vld [vmem:[%s295 + $0x38] sm:$0xf]
      %v348 = vld [vmem:[%s295 + $0x3c] sm:$0xf]
      %v349 = vld [vmem:[%s295 + $0x40] sm:$0xf]
      %v350 = vld [vmem:[%s295 + $0x44] sm:$0xf]
      %v351 = vld [vmem:[%s295 + $0x48] sm:$0xf]
      %v352 = vld [vmem:[%s295 + $0x4c] sm:$0xf]
      %v353 = vld [vmem:[%s295 + $0x50] sm:$0xf]
      %v354 = vld [vmem:[%s295 + $0x54] sm:$0xf]
      %v355 = vld [vmem:[%s295 + $0x58] sm:$0xf]
      %v356 = vld [vmem:[%s295 + $0x5c] sm:$0xf]
      %v357 = vld [vmem:[%s295 + $0x60] sm:$0xf]
      %v358 = vld [vmem:[%s295 + $0x64] sm:$0xf]
      %v359 = vld [vmem:[%s295 + $0x68] sm:$0xf]
      %v360 = vld [vmem:[%s295 + $0x6c] sm:$0xf]
      %v361 = vld [vmem:[%s295 + $0x70] sm:$0xf]
      %v362 = vld [vmem:[%s295 + $0x74] sm:$0xf]
      %v363 = vld [vmem:[%s295 + $0x78] sm:$0xf]
      %v364 = vld [vmem:[%s295 + $0x7c] sm:$0xf]
      %v365 = vld [vmem:[%s295 + $0x80] sm:$0xf]
      %v366 = vld [vmem:[%s295 + $0x84] sm:$0xf]
      %v367 = vld [vmem:[%s295 + $0x88] sm:$0xf]
      %v368 = vld [vmem:[%s295 + $0x8c] sm:$0xf]
      %v369 = vld [vmem:[%s295 + $0x90] sm:$0xf]
      %v370 = vld [vmem:[%s295 + $0x94] sm:$0xf]
      %v371 = vld [vmem:[%s295 + $0x98] sm:$0xf]
      %v372 = vld [vmem:[%s295 + $0x9c] sm:$0xf]
      %v373 = vld [vmem:[%s295 + $0xa0] sm:$0xf]
      %v374 = vld [vmem:[%s295 + $0xa4] sm:$0xf]
      %v375 = vld [vmem:[%s295 + $0xa8] sm:$0xf]
      %v376 = vld [vmem:[%s295 + $0xac] sm:$0xf]
      %v377 = vld [vmem:[%s295 + $0xb0] sm:$0xf]
      %v378 = vld [vmem:[%s295 + $0xb4] sm:$0xf]
      %v379 = vld [vmem:[%s295 + $0xb8] sm:$0xf]
      %v380 = vld [vmem:[%s295 + $0xbc] sm:$0xf]
      %v381 = vld [vmem:[%s295 + $0xc0] sm:$0xf]
      %v382 = vld [vmem:[%s295 + $0xc4] sm:$0xf]
      %v383 = vld [vmem:[%s295 + $0xc8] sm:$0xf]
      %v384 = vld [vmem:[%s295 + $0xcc] sm:$0xf]
      %v385 = vld [vmem:[%s295 + $0xd0] sm:$0xf]
      %v386 = vld [vmem:[%s295 + $0xd4] sm:$0xf]
      %v387 = vld [vmem:[%s295 + $0xd8] sm:$0xf]
      %v388 = vld [vmem:[%s295 + $0xdc] sm:$0xf]
      %v389 = vld [vmem:[%s295 + $0xe0] sm:$0xf]
      %v390 = vld [vmem:[%s295 + $0xe4] sm:$0xf]
      %v391 = vld [vmem:[%s295 + $0xe8] sm:$0xf]
      %v392 = vld [vmem:[%s295 + $0xec] sm:$0xf]
      %v393 = vld [vmem:[%s295 + $0xf0] sm:$0xf]
      %v394 = vld [vmem:[%s295 + $0xf4] sm:$0xf]
      %v395 = vld [vmem:[%s295 + $0xf8] sm:$0xf]
      %v396 = vld [vmem:[%s295 + $0xfc] sm:$0xf]
      %v397 = vld [vmem:[%s295 + $0x100] sm:$0xf]
      %v398 = vld [vmem:[%s295 + $0x104] sm:$0xf]
      %v399 = vld [vmem:[%s295 + $0x108] sm:$0xf]
      %v400 = vld [vmem:[%s295 + $0x10c] sm:$0xf]
      %v401 = vld [vmem:[%s295 + $0x110] sm:$0xf]
      %v402 = vld [vmem:[%s295 + $0x114] sm:$0xf]
      %v403 = vld [vmem:[%s295 + $0x118] sm:$0xf]
      %v404 = vld [vmem:[%s295 + $0x11c] sm:$0xf]
      %v405 = vld [vmem:[%s295 + $0x120] sm:$0xf]
      %v406 = vld [vmem:[%s295 + $0x124] sm:$0xf]
      %v407 = vld [vmem:[%s295 + $0x128] sm:$0xf]
      %v408 = vld [vmem:[%s295 + $0x12c] sm:$0xf]
      %v409 = vld [vmem:[%s295 + $0x130] sm:$0xf]
      %v410 = vld [vmem:[%s295 + $0x134] sm:$0xf]
      %v411 = vld [vmem:[%s295 + $0x138] sm:$0xf]
      %v412 = vld [vmem:[%s295 + $0x13c] sm:$0xf]
      %v413 = vld [vmem:[%s295 + $0x140] sm:$0xf]
      %v414 = vld [vmem:[%s295 + $0x144] sm:$0xf]
      %v415 = vld [vmem:[%s295 + $0x148] sm:$0xf]
      %v416 = vld [vmem:[%s295 + $0x14c] sm:$0xf]
      %v417 = vld [vmem:[%s295 + $0x150] sm:$0xf]
      %v418 = vld [vmem:[%s295 + $0x154] sm:$0xf]
      %v419 = vld [vmem:[%s295 + $0x158] sm:$0xf]
      %v420 = vld [vmem:[%s295 + $0x15c] sm:$0xf]
      %v421 = vld [vmem:[%s295 + $0x160] sm:$0xf]
      %v422 = vld [vmem:[%s295 + $0x164] sm:$0xf]
      %v423 = vld [vmem:[%s295 + $0x168] sm:$0xf]
      %v424 = vld [vmem:[%s295 + $0x16c] sm:$0xf]
      %v425 = vld [vmem:[%s295 + $0x170] sm:$0xf]
      %v426 = vld [vmem:[%s295 + $0x174] sm:$0xf]
      %v427 = vld [vmem:[%s295 + $0x178] sm:$0xf]
      %v428 = vld [vmem:[%s295 + $0x17c] sm:$0xf]
      %v429 = vld [vmem:[%s295 + $0x180] sm:$0xf]
      %v430 = vld [vmem:[%s295 + $0x184] sm:$0xf]
      %v431 = vld [vmem:[%s295 + $0x188] sm:$0xf]
      %v432 = vld [vmem:[%s295 + $0x18c] sm:$0xf]
      %v433 = vld [vmem:[%s295 + $0x190] sm:$0xf]
      %v434 = vld [vmem:[%s295 + $0x194] sm:$0xf]
      %v435 = vld [vmem:[%s295 + $0x198] sm:$0xf]
      %v436 = vld [vmem:[%s295 + $0x19c] sm:$0xf]
      %v437 = vld [vmem:[%s295 + $0x1a0] sm:$0xf]
      %v438 = vld [vmem:[%s295 + $0x1a4] sm:$0xf]
      %v439 = vld [vmem:[%s295 + $0x1a8] sm:$0xf]
      %v440 = vld [vmem:[%s295 + $0x1ac] sm:$0xf]
      %v441 = vld [vmem:[%s295 + $0x1b0] sm:$0xf]
      %v442 = vld [vmem:[%s295 + $0x1b4] sm:$0xf]
      %v443 = vld [vmem:[%s295 + $0x1b8] sm:$0xf]
      %v444 = vld [vmem:[%s295 + $0x1bc] sm:$0xf]
      %v445 = vld [vmem:[%s295 + $0x1c0] sm:$0xf]
      %v446 = vld [vmem:[%s295 + $0x1c4] sm:$0xf]
      %v447 = vld [vmem:[%s295 + $0x1c8] sm:$0xf]
      %v448 = vld [vmem:[%s295 + $0x1cc] sm:$0xf]
      %v449 = vld [vmem:[%s295 + $0x1d0] sm:$0xf]
      %v450 = vld [vmem:[%s295 + $0x1d4] sm:$0xf]
      %v451 = vld [vmem:[%s295 + $0x1d8] sm:$0xf]
      %v452 = vld [vmem:[%s295 + $0x1dc] sm:$0xf]
      %v453 = vld [vmem:[%s295 + $0x1e0] sm:$0xf]
      %v454 = vld [vmem:[%s295 + $0x1e4] sm:$0xf]
      %v455 = vld [vmem:[%s295 + $0x1e8] sm:$0xf]
      %v456 = vld [vmem:[%s295 + $0x1ec] sm:$0xf]
      %v457 = vld [vmem:[%s295 + $0x1f0] sm:$0xf]
      %v458 = vld [vmem:[%s295 + $0x1f4] sm:$0xf]
      %v459 = vld [vmem:[%s295 + $0x1f8] sm:$0xf]
      %v460 = vld [vmem:[%s295 + $0x1fc] sm:$0xf]
      %v461 = vld [vmem:[%s295 + $0x200] sm:$0xf]
      %v462 = vld [vmem:[%s295 + $0x204] sm:$0xf]
      %v463 = vld [vmem:[%s295 + $0x208] sm:$0xf]
      %v464 = vld [vmem:[%s295 + $0x20c] sm:$0xf]
      %v465 = vld [vmem:[%s295 + $0x210] sm:$0xf]
      %v466 = vld [vmem:[%s295 + $0x214] sm:$0xf]
      %v467 = vld [vmem:[%s295 + $0x218] sm:$0xf]
      %v468 = vld [vmem:[%s295 + $0x21c] sm:$0xf]
      %v469 = vld [vmem:[%s295 + $0x220] sm:$0xf]
      %v470 = vld [vmem:[%s295 + $0x224] sm:$0xf]
      %v471 = vld [vmem:[%s295 + $0x228] sm:$0xf]
      %v472 = vld [vmem:[%s295 + $0x22c] sm:$0xf]
      %v473 = vld [vmem:[%s295 + $0x230] sm:$0xf]
      %v474 = vld [vmem:[%s295 + $0x234] sm:$0xf]
      %v475 = vld [vmem:[%s295 + $0x238] sm:$0xf]
      %v476 = vld [vmem:[%s295 + $0x23c] sm:$0xf]
      %v477 = vld [vmem:[%s295 + $0x240] sm:$0xf]
      %v478 = vld [vmem:[%s295 + $0x244] sm:$0xf]
      %v479 = vld [vmem:[%s295 + $0x248] sm:$0xf]
      %v480 = vld [vmem:[%s295 + $0x24c] sm:$0xf]
      %v481 = vld [vmem:[%s295 + $0x250] sm:$0xf]
      %v482 = vld [vmem:[%s295 + $0x254] sm:$0xf]
      %v483 = vld [vmem:[%s295 + $0x258] sm:$0xf]
      %v484 = vld [vmem:[%s295 + $0x25c] sm:$0xf]
      %v485 = vld [vmem:[%s295 + $0x260] sm:$0xf]
      %v486 = vld [vmem:[%s295 + $0x264] sm:$0xf]
      %v487 = vld [vmem:[%s295 + $0x268] sm:$0xf]
      %v488 = vld [vmem:[%s295 + $0x26c] sm:$0xf]
      %v489 = vld [vmem:[%s295 + $0x270] sm:$0xf]
      %v490 = vld [vmem:[%s295 + $0x274] sm:$0xf]
      %v491 = vld [vmem:[%s295 + $0x278] sm:$0xf]
      %v492 = vld [vmem:[%s295 + $0x27c] sm:$0xf]
      %v493 = vld [vmem:[%s295 + $0x280] sm:$0xf]
      %v494 = vld [vmem:[%s295 + $0x284] sm:$0xf]
      %v495 = vld [vmem:[%s295 + $0x288] sm:$0xf]
      %v496 = vld [vmem:[%s295 + $0x28c] sm:$0xf]
      %v497 = vld [vmem:[%s295 + $0x290] sm:$0xf]
      %v498 = vld [vmem:[%s295 + $0x294] sm:$0xf]
      %v499 = vld [vmem:[%s295 + $0x298] sm:$0xf]
      %v500 = vld [vmem:[%s295 + $0x29c] sm:$0xf]
      %v501 = vld [vmem:[%s295 + $0x2a0] sm:$0xf]
      %v502 = vld [vmem:[%s295 + $0x2a4] sm:$0xf]
      %v503 = vld [vmem:[%s295 + $0x2a8] sm:$0xf]
      %v504 = vld [vmem:[%s295 + $0x2ac] sm:$0xf]
      %v505 = vld [vmem:[%s295 + $0x2b0] sm:$0xf]
      %v506 = vld [vmem:[%s295 + $0x2b4] sm:$0xf]
      %v507 = vld [vmem:[%s295 + $0x2b8] sm:$0xf]
      %v508 = vld [vmem:[%s295 + $0x2bc] sm:$0xf]
      %v509 = vld [vmem:[%s295 + $0x2c0] sm:$0xf]
      %v510 = vld [vmem:[%s295 + $0x2c4] sm:$0xf]
      %v511 = vld [vmem:[%s295 + $0x2c8] sm:$0xf]
      %v512 = vld [vmem:[%s295 + $0x2cc] sm:$0xf]
      %v513 = vld [vmem:[%s295 + $0x2d0] sm:$0xf]
      %v514 = vld [vmem:[%s295 + $0x2d4] sm:$0xf]
      %v515 = vld [vmem:[%s295 + $0x2d8] sm:$0xf]
      %v516 = vld [vmem:[%s295 + $0x2dc] sm:$0xf]
      %v517 = vld [vmem:[%s295 + $0x2e0] sm:$0xf]
      %v518 = vld [vmem:[%s295 + $0x2e4] sm:$0xf]
      %v519 = vld [vmem:[%s295 + $0x2e8] sm:$0xf]
      %v520 = vld [vmem:[%s295 + $0x2ec] sm:$0xf]
      %v521 = vld [vmem:[%s295 + $0x2f0] sm:$0xf]
      %v522 = vld [vmem:[%s295 + $0x2f4] sm:$0xf]
      %v523 = vld [vmem:[%s295 + $0x2f8] sm:$0xf]
      %v524 = vld [vmem:[%s295 + $0x2fc] sm:$0xf]
      %v525 = vld [vmem:[%s295 + $0x300] sm:$0xf]
      %v526 = vld [vmem:[%s295 + $0x304] sm:$0xf]
      %v527 = vld [vmem:[%s295 + $0x308] sm:$0xf]
      %v528 = vld [vmem:[%s295 + $0x30c] sm:$0xf]
      %v530 = vlaneseq
      %v531 = vshrl.u32 %v530, 7
      %v532 = vsub.s32 0, %v531
      %v533 = vrot.slane %v332, %v532
      %v731 = vunpack.c.l.b16 %v333
      %v732 = vunpack.c.l.b16 %v334
      %v733 = vunpack.c.l.b16 %v335
      %v734 = vunpack.c.l.b16 %v336
      %v735 = vunpack.c.l.b16 %v337
      %v736 = vunpack.c.l.b16 %v338
      %v737 = vunpack.c.l.b16 %v339
      %v738 = vunpack.c.l.b16 %v340
      %v739 = vunpack.c.l.b16 %v341
      %v740 = vunpack.c.l.b16 %v342
      %v741 = vunpack.c.l.b16 %v343
      %v742 = vunpack.c.l.b16 %v344
      %v743 = vunpack.c.l.b16 %v345
      %v744 = vunpack.c.l.b16 %v346
      %v745 = vunpack.c.l.b16 %v347
      %v746 = vunpack.c.l.b16 %v348
      %v747 = vunpack.c.l.b16 %v349
      %v748 = vunpack.c.l.b16 %v350
      %v749 = vunpack.c.l.b16 %v351
      %v750 = vunpack.c.l.b16 %v352
      %v751 = vunpack.c.l.b16 %v353
      %v752 = vunpack.c.l.b16 %v354
      %v753 = vunpack.c.l.b16 %v355
      %v754 = vunpack.c.l.b16 %v356
      %v755 = vunpack.c.l.b16 %v357
      %v756 = vunpack.c.l.b16 %v358
      %v757 = vunpack.c.l.b16 %v359
      %v758 = vunpack.c.l.b16 %v360
      %v759 = vunpack.c.l.b16 %v361
      %v760 = vunpack.c.l.b16 %v362
      %v761 = vunpack.c.l.b16 %v363
      %v762 = vunpack.c.l.b16 %v364
      %v763 = vunpack.c.l.b16 %v365
      %v764 = vunpack.c.l.b16 %v366
      %v765 = vunpack.c.l.b16 %v367
      %v766 = vunpack.c.l.b16 %v368
      %v767 = vunpack.c.l.b16 %v369
      %v768 = vunpack.c.l.b16 %v370
      %v769 = vunpack.c.l.b16 %v371
      %v770 = vunpack.c.l.b16 %v372
      %v771 = vunpack.c.l.b16 %v373
      %v772 = vunpack.c.l.b16 %v374
      %v773 = vunpack.c.l.b16 %v375
      %v774 = vunpack.c.l.b16 %v376
      %v775 = vunpack.c.l.b16 %v377
      %v776 = vunpack.c.l.b16 %v378
      %v777 = vunpack.c.l.b16 %v379
      %v778 = vunpack.c.l.b16 %v380
      %v779 = vunpack.c.l.b16 %v381
      %v780 = vunpack.c.l.b16 %v382
      %v781 = vunpack.c.l.b16 %v383
      %v782 = vunpack.c.l.b16 %v384
      %v783 = vunpack.c.l.b16 %v385
      %v784 = vunpack.c.l.b16 %v386
      %v785 = vunpack.c.l.b16 %v387
      %v786 = vunpack.c.l.b16 %v388
      %v787 = vunpack.c.l.b16 %v389
      %v788 = vunpack.c.l.b16 %v390
      %v789 = vunpack.c.l.b16 %v391
      %v790 = vunpack.c.l.b16 %v392
      %v791 = vunpack.c.l.b16 %v393
      %v792 = vunpack.c.l.b16 %v394
      %v793 = vunpack.c.l.b16 %v395
      %v794 = vunpack.c.l.b16 %v396
      %v795 = vunpack.c.l.b16 %v397
      %v796 = vunpack.c.l.b16 %v398
      %v797 = vunpack.c.l.b16 %v399
      %v798 = vunpack.c.l.b16 %v400
      %v799 = vunpack.c.l.b16 %v401
      %v800 = vunpack.c.l.b16 %v402
      %v801 = vunpack.c.l.b16 %v403
      %v802 = vunpack.c.l.b16 %v404
      %v803 = vunpack.c.l.b16 %v405
      %v804 = vunpack.c.l.b16 %v406
      %v805 = vunpack.c.l.b16 %v407
      %v806 = vunpack.c.l.b16 %v408
      %v807 = vunpack.c.l.b16 %v409
      %v808 = vunpack.c.l.b16 %v410
      %v809 = vunpack.c.l.b16 %v411
      %v810 = vunpack.c.l.b16 %v412
      %v811 = vunpack.c.l.b16 %v413
      %v812 = vunpack.c.l.b16 %v414
      %v813 = vunpack.c.l.b16 %v415
      %v814 = vunpack.c.l.b16 %v416
      %v815 = vunpack.c.l.b16 %v417
      %v816 = vunpack.c.l.b16 %v418
      %v817 = vunpack.c.l.b16 %v419
      %v818 = vunpack.c.l.b16 %v420
      %v819 = vunpack.c.l.b16 %v421
      %v820 = vunpack.c.l.b16 %v422
      %v821 = vunpack.c.l.b16 %v423
      %v822 = vunpack.c.l.b16 %v424
      %v823 = vunpack.c.l.b16 %v425
      %v824 = vunpack.c.l.b16 %v426
      %v825 = vunpack.c.l.b16 %v427
      %v826 = vunpack.c.l.b16 %v428
      %v827 = vunpack.c.l.b16 %v429
      %v828 = vunpack.c.l.b16 %v430
      %v829 = vunpack.c.l.b16 %v431
      %v830 = vunpack.c.l.b16 %v432
      %v831 = vunpack.c.l.b16 %v433
      %v832 = vunpack.c.l.b16 %v434
      %v833 = vunpack.c.l.b16 %v435
      %v834 = vunpack.c.l.b16 %v436
      %v835 = vunpack.c.l.b16 %v437
      %v836 = vunpack.c.l.b16 %v438
      %v837 = vunpack.c.l.b16 %v439
      %v838 = vunpack.c.l.b16 %v440
      %v839 = vunpack.c.l.b16 %v441
      %v840 = vunpack.c.l.b16 %v442
      %v841 = vunpack.c.l.b16 %v443
      %v842 = vunpack.c.l.b16 %v444
      %v843 = vunpack.c.l.b16 %v445
      %v844 = vunpack.c.l.b16 %v446
      %v845 = vunpack.c.l.b16 %v447
      %v846 = vunpack.c.l.b16 %v448
      %v847 = vunpack.c.l.b16 %v449
      %v848 = vunpack.c.l.b16 %v450
      %v849 = vunpack.c.l.b16 %v451
      %v850 = vunpack.c.l.b16 %v452
      %v851 = vunpack.c.l.b16 %v453
      %v852 = vunpack.c.l.b16 %v454
      %v853 = vunpack.c.l.b16 %v455
      %v854 = vunpack.c.l.b16 %v456
      %v855 = vunpack.c.l.b16 %v457
      %v856 = vunpack.c.l.b16 %v458
      %v857 = vunpack.c.l.b16 %v459
      %v858 = vunpack.c.l.b16 %v460
      %v859 = vunpack.c.l.b16 %v461
      %v860 = vunpack.c.l.b16 %v462
      %v861 = vunpack.c.l.b16 %v463
      %v862 = vunpack.c.l.b16 %v464
      %v863 = vunpack.c.l.b16 %v465
      %v864 = vunpack.c.l.b16 %v466
      %v865 = vunpack.c.l.b16 %v467
      %v866 = vunpack.c.l.b16 %v468
      %v867 = vunpack.c.l.b16 %v469
      %v868 = vunpack.c.l.b16 %v470
      %v869 = vunpack.c.l.b16 %v471
      %v870 = vunpack.c.l.b16 %v472
      %v871 = vunpack.c.l.b16 %v473
      %v872 = vunpack.c.l.b16 %v474
      %v873 = vunpack.c.l.b16 %v475
      %v874 = vunpack.c.l.b16 %v476
      %v875 = vunpack.c.l.b16 %v477
      %v876 = vunpack.c.l.b16 %v478
      %v877 = vunpack.c.l.b16 %v479
      %v878 = vunpack.c.l.b16 %v480
      %v879 = vunpack.c.l.b16 %v481
      %v880 = vunpack.c.l.b16 %v482
      %v881 = vunpack.c.l.b16 %v483
      %v882 = vunpack.c.l.b16 %v484
      %v883 = vunpack.c.l.b16 %v485
      %v884 = vunpack.c.l.b16 %v486
      %v885 = vunpack.c.l.b16 %v487
      %v886 = vunpack.c.l.b16 %v488
      %v887 = vunpack.c.l.b16 %v489
      %v888 = vunpack.c.l.b16 %v490
      %v889 = vunpack.c.l.b16 %v491
      %v890 = vunpack.c.l.b16 %v492
      %v891 = vunpack.c.l.b16 %v493
      %v892 = vunpack.c.l.b16 %v494
      %v893 = vunpack.c.l.b16 %v495
      %v894 = vunpack.c.l.b16 %v496
      %v895 = vunpack.c.l.b16 %v497
      %v896 = vunpack.c.l.b16 %v498
      %v897 = vunpack.c.l.b16 %v499
      %v898 = vunpack.c.l.b16 %v500
      %v899 = vunpack.c.l.b16 %v501
      %v900 = vunpack.c.l.b16 %v502
      %v901 = vunpack.c.l.b16 %v503
      %v902 = vunpack.c.l.b16 %v504
      %v903 = vunpack.c.l.b16 %v505
      %v904 = vunpack.c.l.b16 %v506
      %v905 = vunpack.c.l.b16 %v507
      %v906 = vunpack.c.l.b16 %v508
      %v907 = vunpack.c.l.b16 %v509
      %v908 = vunpack.c.l.b16 %v510
      %v909 = vunpack.c.l.b16 %v511
      %v910 = vunpack.c.l.b16 %v512
      %v911 = vunpack.c.l.b16 %v513
      %v912 = vunpack.c.l.b16 %v514
      %v913 = vunpack.c.l.b16 %v515
      %v914 = vunpack.c.l.b16 %v516
      %v915 = vunpack.c.l.b16 %v517
      %v916 = vunpack.c.l.b16 %v518
      %v917 = vunpack.c.l.b16 %v519
      %v918 = vunpack.c.l.b16 %v520
      %v919 = vunpack.c.l.b16 %v521
      %v920 = vunpack.c.l.b16 %v522
      %v921 = vunpack.c.l.b16 %v523
      %v922 = vunpack.c.l.b16 %v524
      %v923 = vunpack.c.l.b16 %v525
      %v924 = vunpack.c.l.b16 %v526
      %v925 = vunpack.c.l.b16 %v527
      %v926 = vunpack.c.l.b16 %v528
      %v927 = vpack.c.b16 %v732, %v731
      %v928 = vpack.c.b16 %v734, %v733
      %v929 = vpack.c.b16 %v736, %v735
      %v930 = vpack.c.b16 %v738, %v737
      %v931 = vpack.c.b16 %v740, %v739
      %v932 = vpack.c.b16 %v742, %v741
      %v933 = vpack.c.b16 %v744, %v743
      %v934 = vpack.c.b16 %v746, %v745
      %v935 = vpack.c.b16 %v748, %v747
      %v936 = vpack.c.b16 %v750, %v749
      %v937 = vpack.c.b16 %v752, %v751
      %v938 = vpack.c.b16 %v754, %v753
      %v939 = vpack.c.b16 %v756, %v755
      %v940 = vpack.c.b16 %v758, %v757
      %v941 = vpack.c.b16 %v760, %v759
      %v942 = vpack.c.b16 %v762, %v761
      %v943 = vpack.c.b16 %v764, %v763
      %v944 = vpack.c.b16 %v766, %v765
      %v945 = vpack.c.b16 %v768, %v767
      %v946 = vpack.c.b16 %v770, %v769
      %v947 = vpack.c.b16 %v772, %v771
      %v948 = vpack.c.b16 %v774, %v773
      %v949 = vpack.c.b16 %v776, %v775
      %v950 = vpack.c.b16 %v778, %v777
      %v951 = vpack.c.b16 %v780, %v779
      %v952 = vpack.c.b16 %v782, %v781
      %v953 = vpack.c.b16 %v784, %v783
      %v954 = vpack.c.b16 %v786, %v785
      %v955 = vpack.c.b16 %v788, %v787
      %v956 = vpack.c.b16 %v790, %v789
      %v957 = vpack.c.b16 %v792, %v791
      %v958 = vpack.c.b16 %v794, %v793
      %v959 = vpack.c.b16 %v796, %v795
      %v960 = vpack.c.b16 %v798, %v797
      %v961 = vpack.c.b16 %v800, %v799
      %v962 = vpack.c.b16 %v802, %v801
      %v963 = vpack.c.b16 %v804, %v803
      %v964 = vpack.c.b16 %v806, %v805
      %v965 = vpack.c.b16 %v808, %v807
      %v966 = vpack.c.b16 %v810, %v809
      %v967 = vpack.c.b16 %v812, %v811
      %v968 = vpack.c.b16 %v814, %v813
      %v969 = vpack.c.b16 %v816, %v815
      %v970 = vpack.c.b16 %v818, %v817
      %v971 = vpack.c.b16 %v820, %v819
      %v972 = vpack.c.b16 %v822, %v821
      %v973 = vpack.c.b16 %v824, %v823
      %v974 = vpack.c.b16 %v826, %v825
      %v975 = vpack.c.b16 %v828, %v827
      %v976 = vpack.c.b16 %v830, %v829
      %v977 = vpack.c.b16 %v832, %v831
      %v978 = vpack.c.b16 %v834, %v833
      %v979 = vpack.c.b16 %v836, %v835
      %v980 = vpack.c.b16 %v838, %v837
      %v981 = vpack.c.b16 %v840, %v839
      %v982 = vpack.c.b16 %v842, %v841
      %v983 = vpack.c.b16 %v844, %v843
      %v984 = vpack.c.b16 %v846, %v845
      %v985 = vpack.c.b16 %v848, %v847
      %v986 = vpack.c.b16 %v850, %v849
      %v987 = vpack.c.b16 %v852, %v851
      %v988 = vpack.c.b16 %v854, %v853
      %v989 = vpack.c.b16 %v856, %v855
      %v990 = vpack.c.b16 %v858, %v857
      %v991 = vpack.c.b16 %v860, %v859
      %v992 = vpack.c.b16 %v862, %v861
      %v993 = vpack.c.b16 %v864, %v863
      %v994 = vpack.c.b16 %v866, %v865
      %v995 = vpack.c.b16 %v868, %v867
      %v996 = vpack.c.b16 %v870, %v869
      %v997 = vpack.c.b16 %v872, %v871
      %v998 = vpack.c.b16 %v874, %v873
      %v999 = vpack.c.b16 %v876, %v875
      %v1000 = vpack.c.b16 %v878, %v877
      %v1001 = vpack.c.b16 %v880, %v879
      %v1002 = vpack.c.b16 %v882, %v881
      %v1003 = vpack.c.b16 %v884, %v883
      %v1004 = vpack.c.b16 %v886, %v885
      %v1005 = vpack.c.b16 %v888, %v887
      %v1006 = vpack.c.b16 %v890, %v889
      %v1007 = vpack.c.b16 %v892, %v891
      %v1008 = vpack.c.b16 %v894, %v893
      %v1009 = vpack.c.b16 %v896, %v895
      %v1010 = vpack.c.b16 %v898, %v897
      %v1011 = vpack.c.b16 %v900, %v899
      %v1012 = vpack.c.b16 %v902, %v901
      %v1013 = vpack.c.b16 %v904, %v903
      %v1014 = vpack.c.b16 %v906, %v905
      %v1015 = vpack.c.b16 %v908, %v907
      %v1016 = vpack.c.b16 %v910, %v909
      %v1017 = vpack.c.b16 %v912, %v911
      %v1018 = vpack.c.b16 %v914, %v913
      %v1019 = vpack.c.b16 %v916, %v915
      %v1020 = vpack.c.b16 %v918, %v917
      %v1021 = vpack.c.b16 %v920, %v919
      %v1022 = vpack.c.b16 %v922, %v921
      %v1023 = vpack.c.b16 %v924, %v923
      %v1024 = vpack.c.b16 %v926, %v925
      %v1035 = vunpack.c.l.b16 %v322
      %v1036 = vunpack.c.l.b16 %v323
      %v1037 = vunpack.c.l.b16 %v324
      %v1038 = vunpack.c.l.b16 %v325
      %v1039 = vunpack.c.l.b16 %v326
      %v1040 = vunpack.c.l.b16 %v327
      %v1041 = vunpack.c.l.b16 %v328
      %v1042 = vunpack.c.l.b16 %v329
      %v1043 = vunpack.c.l.b16 %v330
      %v1044 = vunpack.c.l.b16 %v331
      %v1045 = vpack.c.b16 %v1036, %v1035
      %v1046 = vpack.c.b16 %v1038, %v1037
      %v1047 = vpack.c.b16 %v1040, %v1039
      %v1048 = vpack.c.b16 %v1042, %v1041
      %v1049 = vpack.c.b16 %v1044, %v1043
      %vm1054 = vcmask 613376
      %v1056 = vsel %vm1054, %v927, 0
      %v1059 = vsel %vm1054, %v928, 0
      %v1062 = vsel %vm1054, %v929, 0
      %v1065 = vsel %vm1054, %v930, 0
      %v1068 = vsel %vm1054, %v931, 0
      %v1071 = vsel %vm1054, %v932, 0
      %v1074 = vsel %vm1054, %v933, 0
      %v1077 = vsel %vm1054, %v934, 0
      %v1080 = vsel %vm1054, %v935, 0
      %v1083 = vsel %vm1054, %v936, 0
      %v1086 = vsel %vm1054, %v937, 0
      %v1089 = vsel %vm1054, %v938, 0
      %v1092 = vsel %vm1054, %v939, 0
      %v1095 = vsel %vm1054, %v940, 0
      %v1098 = vsel %vm1054, %v941, 0
      %v1101 = vsel %vm1054, %v942, 0
      %v1104 = vsel %vm1054, %v943, 0
      %v1107 = vsel %vm1054, %v944, 0
      %v1110 = vsel %vm1054, %v945, 0
      %v1113 = vsel %vm1054, %v946, 0
      %v1116 = vsel %vm1054, %v947, 0
      %v1119 = vsel %vm1054, %v948, 0
      %v1122 = vsel %vm1054, %v949, 0
      %v1125 = vsel %vm1054, %v950, 0
      %v1128 = vsel %vm1054, %v951, 0
      %v1131 = vsel %vm1054, %v952, 0
      %v1134 = vsel %vm1054, %v953, 0
      %v1137 = vsel %vm1054, %v954, 0
      %v1140 = vsel %vm1054, %v955, 0
      %v1143 = vsel %vm1054, %v956, 0
      %v1146 = vsel %vm1054, %v957, 0
      %v1149 = vsel %vm1054, %v958, 0
      %v1152 = vsel %vm1054, %v959, 0
      %v1155 = vsel %vm1054, %v960, 0
      %v1158 = vsel %vm1054, %v961, 0
      %v1161 = vsel %vm1054, %v962, 0
      %v1164 = vsel %vm1054, %v963, 0
      %v1167 = vsel %vm1054, %v964, 0
      %v1170 = vsel %vm1054, %v965, 0
      %v1173 = vsel %vm1054, %v966, 0
      %v1176 = vsel %vm1054, %v967, 0
      %v1179 = vsel %vm1054, %v968, 0
      %v1182 = vsel %vm1054, %v969, 0
      %v1185 = vsel %vm1054, %v970, 0
      %v1188 = vsel %vm1054, %v971, 0
      %v1191 = vsel %vm1054, %v972, 0
      %v1194 = vsel %vm1054, %v973, 0
      %v1197 = vsel %vm1054, %v974, 0
      %v1200 = vsel %vm1054, %v975, 0
      %v1203 = vsel %vm1054, %v976, 0
      %v1206 = vsel %vm1054, %v977, 0
      %v1209 = vsel %vm1054, %v978, 0
      %v1212 = vsel %vm1054, %v979, 0
      %v1215 = vsel %vm1054, %v980, 0
      %v1218 = vsel %vm1054, %v981, 0
      %v1221 = vsel %vm1054, %v982, 0
      %v1224 = vsel %vm1054, %v983, 0
      %v1227 = vsel %vm1054, %v984, 0
      %v1230 = vsel %vm1054, %v985, 0
      %v1233 = vsel %vm1054, %v986, 0
      %v1236 = vsel %vm1054, %v987, 0
      %v1239 = vsel %vm1054, %v988, 0
      %v1242 = vsel %vm1054, %v989, 0
      %v1245 = vsel %vm1054, %v990, 0
      %v1248 = vsel %vm1054, %v991, 0
      %v1251 = vsel %vm1054, %v992, 0
      %v1254 = vsel %vm1054, %v993, 0
      %v1257 = vsel %vm1054, %v994, 0
      %v1260 = vsel %vm1054, %v995, 0
      %v1263 = vsel %vm1054, %v996, 0
      %v1266 = vsel %vm1054, %v997, 0
      %v1269 = vsel %vm1054, %v998, 0
      %v1272 = vsel %vm1054, %v999, 0
      %v1275 = vsel %vm1054, %v1000, 0
      %v1278 = vsel %vm1054, %v1001, 0
      %v1281 = vsel %vm1054, %v1002, 0
      %v1284 = vsel %vm1054, %v1003, 0
      %v1287 = vsel %vm1054, %v1004, 0
      %v1290 = vsel %vm1054, %v1005, 0
      %v1293 = vsel %vm1054, %v1006, 0
      %v1296 = vsel %vm1054, %v1007, 0
      %v1299 = vsel %vm1054, %v1008, 0
      %v1302 = vsel %vm1054, %v1009, 0
      %v1305 = vsel %vm1054, %v1010, 0
      %v1308 = vsel %vm1054, %v1011, 0
      %v1311 = vsel %vm1054, %v1012, 0
      %v1314 = vsel %vm1054, %v1013, 0
      %v1317 = vsel %vm1054, %v1014, 0
      %v1320 = vsel %vm1054, %v1015, 0
      %v1323 = vsel %vm1054, %v1016, 0
      %v1326 = vsel %vm1054, %v1017, 0
      %v1329 = vsel %vm1054, %v1018, 0
      %v1332 = vsel %vm1054, %v1019, 0
      %v1335 = vsel %vm1054, %v1020, 0
      %v1338 = vsel %vm1054, %v1021, 0
      %v1341 = vsel %vm1054, %v1022, 0
      %v1344 = vsel %vm1054, %v1023, 0
      %v1347 = vsel %vm1054, %v1024, 0
      %vm1349 = vcmask 1044480
      %vm1350 = vcmask 1045504
      %v1351 = vsel %vm1349, 4294967295, 65535
      %v1352 = vsel %vm1350, %v1351, 0
      %v1354 = vand.u32 %v1049, %v1352
      %1356 = vmatprep.subr.bf16.mxu0 0
      %1357 = vmatpush1.bf16.msra.mxu0 %v1045
      %1358 = vmatprep.subr.bf16.mxu0 0
      %1359 = vmatpush1.bf16.msra.mxu0 %v1046
      %1360 = vmatprep.subr.bf16.mxu0 0
      %1361 = vmatpush1.bf16.msra.mxu0 %v1047
      %1362 = vmatprep.subr.bf16.mxu0 0
      %1363 = vmatpush1.bf16.msra.mxu0 %v1048
      %1364 = vmatprep.subr.bf16.mxu0 0
      %1365 = vmatpush1.bf16.msra.mxu0 %v1354
      %1366 = vmatprep.subr.bf16.mxu0 0
      %1367 = vmatpush1.bf16.msra.mxu0 0
      %1368 = vmatprep.subr.bf16.mxu0 0
      %1369 = vmatpush1.bf16.msra.mxu0 0
      %1370 = vmatprep.subr.bf16.mxu0 0
      %1371 = vmatpush1.bf16.msra.mxu0 0
      %1372 = vmatprep.subr.bf16.mxu0 0
      %1373 = vmatpush1.bf16.msra.mxu0 0
      %1374 = vmatprep.subr.bf16.mxu0 0
      %1375 = vmatpush1.bf16.msra.mxu0 0
      %1376 = vmatprep.subr.bf16.mxu0 0
      %1377 = vmatpush1.bf16.msra.mxu0 0
      %1378 = vmatprep.subr.bf16.mxu0 0
      %1379 = vmatpush1.bf16.msra.mxu0 0
      %1380 = vmatprep.subr.bf16.mxu0 0
      %1381 = vmatpush1.bf16.msra.mxu0 0
      %1382 = vmatprep.subr.bf16.mxu0 0
      %1383 = vmatpush1.bf16.msra.mxu0 0
      %1384 = vmatprep.subr.bf16.mxu0 0
      %1385 = vmatpush1.bf16.msra.mxu0 0
      %1386 = vmatprep.subr.bf16.mxu0 0
      %1387 = vmatpush1.bf16.msra.mxu0 0
      %1388 = vmatprep.mubr.bf16.mxu0 0
      %1389 = vmatmul.mubr.bf16.gmra.mrb[0].mxu0 %v1056
      %v1390 = vpop.f32.mrb[0].mxu0
      %v1391 = vadd.f32 %v533, %v1390
      %v1392 = vpop.f32.mrb[0].mxu0
      %v1393 = vpop.f32.mrb[0].mxu0
      %v1394 = vadd.f32 %v533, %v1393
      %v1395 = vpop.f32.mrb[0].mxu0
      %1396 = vmatprep.mubr.bf16.mxu0 0
      %1397 = vmatmul.mubr.bf16.gmra.mrb[0].mxu0 %v1059
      %v1398 = vpop.f32.mrb[0].mxu0
      %v1399 = vadd.f32 %v533, %v1398
      %v1400 = vpop.f32.mrb[0].mxu0
      %v1401 = vpop.f32.mrb[0].mxu0
      %v1402 = vadd.f32 %v533, %v1401
      %v1403 = vpop.f32.mrb[0].mxu0
      %1404 = vmatprep.mubr.bf16.mxu0 0
      %1405 = vmatmul.mubr.bf16.gmra.mrb[0].mxu0 %v1062
      %v1406 = vpop.f32.mrb[0].mxu0
      %v1407 = vadd.f32 %v533, %v1406
      %v1408 = vpop.f32.mrb[0].mxu0
      %v1409 = vpop.f32.mrb[0].mxu0
      %v1410 = vadd.f32 %v533, %v1409
      %v1411 = vpop.f32.mrb[0].mxu0
      %1412 = vmatprep.mubr.bf16.mxu0 0
      %1413 = vmatmul.mubr.bf16.gmra.mrb[0].mxu0 %v1065
      %v1414 = vpop.f32.mrb[0].mxu0
      %v1415 = vadd.f32 %v533, %v1414
      %v1416 = vpop.f32.mrb[0].mxu0
      %v1417 = vpop.f32.mrb[0].mxu0
      %v1418 = vadd.f32 %v533, %v1417
      %v1419 = vpop.f32.mrb[0].mxu0
      %1420 = vmatprep.mubr.bf16.mxu0 0
      %1421 = vmatmul.mubr.bf16.gmra.mrb[0].mxu0 %v1068
      %v1422 = vpop.f32.mrb[0].mxu0
      %v1423 = vadd.f32 %v533, %v1422
      %v1424 = vpop.f32.mrb[0].mxu0
      %v1425 = vpop.f32.mrb[0].mxu0
      %v1426 = vadd.f32 %v533, %v1425
      %v1427 = vpop.f32.mrb[0].mxu0
      %1428 = vmatprep.mubr.bf16.mxu0 0
      %1429 = vmatmul.mubr.bf16.gmra.mrb[0].mxu0 %v1071
      %v1430 = vpop.f32.mrb[0].mxu0
      %v1431 = vadd.f32 %v533, %v1430
      %v1432 = vpop.f32.mrb[0].mxu0
      %v1433 = vpop.f32.mrb[0].mxu0
      %v1434 = vadd.f32 %v533, %v1433
      %v1435 = vpop.f32.mrb[0].mxu0
      %1436 = vmatprep.mubr.bf16.mxu0 0
      %1437 = vmatmul.mubr.bf16.gmra.mrb[0].mxu0 %v1074
      %v1438 = vpop.f32.mrb[0].mxu0
      %v1439 = vadd.f32 %v533, %v1438
      %v1440 = vpop.f32.mrb[0].mxu0
      %v1441 = vpop.f32.mrb[0].mxu0
      %v1442 = vadd.f32 %v533, %v1441
      %v1443 = vpop.f32.mrb[0].mxu0
      %1444 = vmatprep.mubr.bf16.mxu0 0
      %1445 = vmatmul.mubr.bf16.gmra.mrb[0].mxu0 %v1077
      %v1446 = vpop.f32.mrb[0].mxu0
      %v1447 = vadd.f32 %v533, %v1446
      %v1448 = vpop.f32.mrb[0].mxu0
      %v1449 = vpop.f32.mrb[0].mxu0
      %v1450 = vadd.f32 %v533, %v1449
      %v1451 = vpop.f32.mrb[0].mxu0
      %1452 = vmatprep.mubr.bf16.mxu0 0
      %1453 = vmatmul.mubr.bf16.gmra.mrb[0].mxu0 %v1080
      %v1454 = vpop.f32.mrb[0].mxu0
      %v1455 = vadd.f32 %v533, %v1454
      %v1456 = vpop.f32.mrb[0].mxu0
      %v1457 = vpop.f32.mrb[0].mxu0
      %v1458 = vadd.f32 %v533, %v1457
      %v1459 = vpop.f32.mrb[0].mxu0
      %1460 = vmatprep.mubr.bf16.mxu0 0
      %1461 = vmatmul.mubr.bf16.gmra.mrb[0].mxu0 %v1083
      %v1462 = vpop.f32.mrb[0].mxu0
      %v1463 = vadd.f32 %v533, %v1462
      %v1464 = vpop.f32.mrb[0].mxu0
      %v1465 = vpop.f32.mrb[0].mxu0
      %v1466 = vadd.f32 %v533, %v1465
      %v1467 = vpop.f32.mrb[0].mxu0
      %1468 = vmatprep.mubr.bf16.mxu0 0
      %1469 = vmatmul.mubr.bf16.gmra.mrb[0].mxu0 %v1086
      %v1470 = vpop.f32.mrb[0].mxu0
      %v1471 = vadd.f32 %v533, %v1470
      %v1472 = vpop.f32.mrb[0].mxu0
      %v1473 = vpop.f32.mrb[0].mxu0
      %v1474 = vadd.f32 %v533, %v1473
      %v1475 = vpop.f32.mrb[0].mxu0
      %1476 = vmatprep.mubr.bf16.mxu0 0
      %1477 = vmatmul.mubr.bf16.gmra.mrb[0].mxu0 %v1089
      %v1478 = vpop.f32.mrb[0].mxu0
      %v1479 = vadd.f32 %v533, %v1478
      %v1480 = vpop.f32.mrb[0].mxu0
      %v1481 = vpop.f32.mrb[0].mxu0
      %v1482 = vadd.f32 %v533, %v1481
      %v1483 = vpop.f32.mrb[0].mxu0
      %1484 = vmatprep.mubr.bf16.mxu0 0
      %1485 = vmatmul.mubr.bf16.gmra.mrb[0].mxu0 %v1092
      %v1486 = vpop.f32.mrb[0].mxu0
      %v1487 = vadd.f32 %v533, %v1486
      %v1488 = vpop.f32.mrb[0].mxu0
      %v1489 = vpop.f32.mrb[0].mxu0
      %v1490 = vadd.f32 %v533, %v1489
      %v1491 = vpop.f32.mrb[0].mxu0
      %1492 = vmatprep.mubr.bf16.mxu0 0
      %1493 = vmatmul.mubr.bf16.gmra.mrb[0].mxu0 %v1095
      %v1494 = vpop.f32.mrb[0].mxu0
      %v1495 = vadd.f32 %v533, %v1494
      %v1496 = vpop.f32.mrb[0].mxu0
      %v1497 = vpop.f32.mrb[0].mxu0
      %v1498 = vadd.f32 %v533, %v1497
      %v1499 = vpop.f32.mrb[0].mxu0
      %1500 = vmatprep.mubr.bf16.mxu0 0
      %1501 = vmatmul.mubr.bf16.gmra.mrb[0].mxu0 %v1098
      %v1502 = vpop.f32.mrb[0].mxu0
      %v1503 = vadd.f32 %v533, %v1502
      %v1504 = vpop.f32.mrb[0].mxu0
      %v1505 = vpop.f32.mrb[0].mxu0
      %v1506 = vadd.f32 %v533, %v1505
      %v1507 = vpop.f32.mrb[0].mxu0
      %1508 = vmatprep.mubr.bf16.mxu0 0
      %1509 = vmatmul.mubr.bf16.gmra.mrb[0].mxu0 %v1101
      %v1510 = vpop.f32.mrb[0].mxu0
      %v1511 = vadd.f32 %v533, %v1510
      %v1512 = vpop.f32.mrb[0].mxu0
      %v1513 = vpop.f32.mrb[0].mxu0
      %v1514 = vadd.f32 %v533, %v1513
      %v1515 = vpop.f32.mrb[0].mxu0
      %1516 = vmatprep.mubr.bf16.mxu0 0
      %1517 = vmatmul.mubr.bf16.gmra.mrb[0].mxu0 %v1104
      %v1518 = vpop.f32.mrb[0].mxu0
      %v1519 = vadd.f32 %v533, %v1518
      %v1520 = vpop.f32.mrb[0].mxu0
      %v1521 = vpop.f32.mrb[0].mxu0
      %v1522 = vadd.f32 %v533, %v1521
      %v1523 = vpop.f32.mrb[0].mxu0
      %1524 = vmatprep.mubr.bf16.mxu0 0
      %1525 = vmatmul.mubr.bf16.gmra.mrb[0].mxu0 %v1107
      %v1526 = vpop.f32.mrb[0].mxu0
      %v1527 = vadd.f32 %v533, %v1526
      %v1528 = vpop.f32.mrb[0].mxu0
      %v1529 = vpop.f32.mrb[0].mxu0
      %v1530 = vadd.f32 %v533, %v1529
      %v1531 = vpop.f32.mrb[0].mxu0
      %1532 = vmatprep.mubr.bf16.mxu0 0
      %1533 = vmatmul.mubr.bf16.gmra.mrb[0].mxu0 %v1110
      %v1534 = vpop.f32.mrb[0].mxu0
      %v1535 = vadd.f32 %v533, %v1534
      %v1536 = vpop.f32.mrb[0].mxu0
      %v1537 = vpop.f32.mrb[0].mxu0
      %v1538 = vadd.f32 %v533, %v1537
      %v1539 = vpop.f32.mrb[0].mxu0
      %1540 = vmatprep.mubr.bf16.mxu0 0
      %1541 = vmatmul.mubr.bf16.gmra.mrb[0].mxu0 %v1113
      %v1542 = vpop.f32.mrb[0].mxu0
      %v1543 = vadd.f32 %v533, %v1542
      %v1544 = vpop.f32.mrb[0].mxu0
      %v1545 = vpop.f32.mrb[0].mxu0
      %v1546 = vadd.f32 %v533, %v1545
      %v1547 = vpop.f32.mrb[0].mxu0
      %1548 = vmatprep.mubr.bf16.mxu0 0
      %1549 = vmatmul.mubr.bf16.gmra.mrb[0].mxu0 %v1116
      %v1550 = vpop.f32.mrb[0].mxu0
      %v1551 = vadd.f32 %v533, %v1550
      %v1552 = vpop.f32.mrb[0].mxu0
      %v1553 = vpop.f32.mrb[0].mxu0
      %v1554 = vadd.f32 %v533, %v1553
      %v1555 = vpop.f32.mrb[0].mxu0
      %1556 = vmatprep.mubr.bf16.mxu0 0
      %1557 = vmatmul.mubr.bf16.gmra.mrb[0].mxu0 %v1119
      %v1558 = vpop.f32.mrb[0].mxu0
      %v1559 = vadd.f32 %v533, %v1558
      %v1560 = vpop.f32.mrb[0].mxu0
      %v1561 = vpop.f32.mrb[0].mxu0
      %v1562 = vadd.f32 %v533, %v1561
      %v1563 = vpop.f32.mrb[0].mxu0
      %1564 = vmatprep.mubr.bf16.mxu0 0
      %1565 = vmatmul.mubr.bf16.gmra.mrb[0].mxu0 %v1122
      %v1566 = vpop.f32.mrb[0].mxu0
      %v1567 = vadd.f32 %v533, %v1566
      %v1568 = vpop.f32.mrb[0].mxu0
      %v1569 = vpop.f32.mrb[0].mxu0
      %v1570 = vadd.f32 %v533, %v1569
      %v1571 = vpop.f32.mrb[0].mxu0
      %1572 = vmatprep.mubr.bf16.mxu0 0
      %1573 = vmatmul.mubr.bf16.gmra.mrb[0].mxu0 %v1125
      %v1574 = vpop.f32.mrb[0].mxu0
      %v1575 = vadd.f32 %v533, %v1574
      %v1576 = vpop.f32.mrb[0].mxu0
      %v1577 = vpop.f32.mrb[0].mxu0
      %v1578 = vadd.f32 %v533, %v1577
      %v1579 = vpop.f32.mrb[0].mxu0
      %1580 = vmatprep.mubr.bf16.mxu0 0
      %1581 = vmatmul.mubr.bf16.gmra.mrb[0].mxu0 %v1128
      %v1582 = vpop.f32.mrb[0].mxu0
      %v1583 = vadd.f32 %v533, %v1582
      %v1584 = vpop.f32.mrb[0].mxu0
      %v1585 = vpop.f32.mrb[0].mxu0
      %v1586 = vadd.f32 %v533, %v1585
      %v1587 = vpop.f32.mrb[0].mxu0
      %1588 = vmatprep.mubr.bf16.mxu0 0
      %1589 = vmatmul.mubr.bf16.gmra.mrb[0].mxu0 %v1131
      %v1590 = vpop.f32.mrb[0].mxu0
      %v1591 = vadd.f32 %v533, %v1590
      %v1592 = vpop.f32.mrb[0].mxu0
      %v1593 = vpop.f32.mrb[0].mxu0
      %v1594 = vadd.f32 %v533, %v1593
      %v1595 = vpop.f32.mrb[0].mxu0
      %1596 = vmatprep.mubr.bf16.mxu0 0
      %1597 = vmatmul.mubr.bf16.gmra.mrb[0].mxu0 %v1134
      %v1598 = vpop.f32.mrb[0].mxu0
      %v1599 = vadd.f32 %v533, %v1598
      %v1600 = vpop.f32.mrb[0].mxu0
      %v1601 = vpop.f32.mrb[0].mxu0
      %v1602 = vadd.f32 %v533, %v1601
      %v1603 = vpop.f32.mrb[0].mxu0
      %1604 = vmatprep.mubr.bf16.mxu0 0
      %1605 = vmatmul.mubr.bf16.gmra.mrb[0].mxu0 %v1137
      %v1606 = vpop.f32.mrb[0].mxu0
      %v1607 = vadd.f32 %v533, %v1606
      %v1608 = vpop.f32.mrb[0].mxu0
      %v1609 = vpop.f32.mrb[0].mxu0
      %v1610 = vadd.f32 %v533, %v1609
      %v1611 = vpop.f32.mrb[0].mxu0
      %1612 = vmatprep.mubr.bf16.mxu0 0
      %1613 = vmatmul.mubr.bf16.gmra.mrb[0].mxu0 %v1140
      %v1614 = vpop.f32.mrb[0].mxu0
      %v1615 = vadd.f32 %v533, %v1614
      %v1616 = vpop.f32.mrb[0].mxu0
      %v1617 = vpop.f32.mrb[0].mxu0
      %v1618 = vadd.f32 %v533, %v1617
      %v1619 = vpop.f32.mrb[0].mxu0
      %1620 = vmatprep.mubr.bf16.mxu0 0
      %1621 = vmatmul.mubr.bf16.gmra.mrb[0].mxu0 %v1143
      %v1622 = vpop.f32.mrb[0].mxu0
      %v1623 = vadd.f32 %v533, %v1622
      %v1624 = vpop.f32.mrb[0].mxu0
      %v1625 = vpop.f32.mrb[0].mxu0
      %v1626 = vadd.f32 %v533, %v1625
      %v1627 = vpop.f32.mrb[0].mxu0
      %1628 = vmatprep.mubr.bf16.mxu0 0
      %1629 = vmatmul.mubr.bf16.gmra.mrb[0].mxu0 %v1146
      %v1630 = vpop.f32.mrb[0].mxu0
      %v1631 = vadd.f32 %v533, %v1630
      %v1632 = vpop.f32.mrb[0].mxu0
      %v1633 = vpop.f32.mrb[0].mxu0
      %v1634 = vadd.f32 %v533, %v1633
      %v1635 = vpop.f32.mrb[0].mxu0
      %1636 = vmatprep.mubr.bf16.mxu0 0
      %1637 = vmatmul.mubr.bf16.gmra.mrb[0].mxu0 %v1149
      %v1638 = vpop.f32.mrb[0].mxu0
      %v1639 = vadd.f32 %v533, %v1638
      %v1640 = vpop.f32.mrb[0].mxu0
      %v1641 = vpop.f32.mrb[0].mxu0
      %v1642 = vadd.f32 %v533, %v1641
      %v1643 = vpop.f32.mrb[0].mxu0
      %1644 = vmatprep.mubr.bf16.mxu0 0
      %1645 = vmatmul.mubr.bf16.gmra.mrb[0].mxu0 %v1152
      %v1646 = vpop.f32.mrb[0].mxu0
      %v1647 = vadd.f32 %v533, %v1646
      %v1648 = vpop.f32.mrb[0].mxu0
      %v1649 = vpop.f32.mrb[0].mxu0
      %v1650 = vadd.f32 %v533, %v1649
      %v1651 = vpop.f32.mrb[0].mxu0
      %1652 = vmatprep.mubr.bf16.mxu0 0
      %1653 = vmatmul.mubr.bf16.gmra.mrb[0].mxu0 %v1155
      %v1654 = vpop.f32.mrb[0].mxu0
      %v1655 = vadd.f32 %v533, %v1654
      %v1656 = vpop.f32.mrb[0].mxu0
      %v1657 = vpop.f32.mrb[0].mxu0
      %v1658 = vadd.f32 %v533, %v1657
      %v1659 = vpop.f32.mrb[0].mxu0
      %1660 = vmatprep.mubr.bf16.mxu0 0
      %1661 = vmatmul.mubr.bf16.gmra.mrb[0].mxu0 %v1158
      %v1662 = vpop.f32.mrb[0].mxu0
      %v1663 = vadd.f32 %v533, %v1662
      %v1664 = vpop.f32.mrb[0].mxu0
      %v1665 = vpop.f32.mrb[0].mxu0
      %v1666 = vadd.f32 %v533, %v1665
      %v1667 = vpop.f32.mrb[0].mxu0
      %1668 = vmatprep.mubr.bf16.mxu0 0
      %1669 = vmatmul.mubr.bf16.gmra.mrb[0].mxu0 %v1161
      %v1670 = vpop.f32.mrb[0].mxu0
      %v1671 = vadd.f32 %v533, %v1670
      %v1672 = vpop.f32.mrb[0].mxu0
      %v1673 = vpop.f32.mrb[0].mxu0
      %v1674 = vadd.f32 %v533, %v1673
      %v1675 = vpop.f32.mrb[0].mxu0
      %1676 = vmatprep.mubr.bf16.mxu0 0
      %1677 = vmatmul.mubr.bf16.gmra.mrb[0].mxu0 %v1164
      %v1678 = vpop.f32.mrb[0].mxu0
      %v1679 = vadd.f32 %v533, %v1678
      %v1680 = vpop.f32.mrb[0].mxu0
      %v1681 = vpop.f32.mrb[0].mxu0
      %v1682 = vadd.f32 %v533, %v1681
      %v1683 = vpop.f32.mrb[0].mxu0
      %1684 = vmatprep.mubr.bf16.mxu0 0
      %1685 = vmatmul.mubr.bf16.gmra.mrb[0].mxu0 %v1167
      %v1686 = vpop.f32.mrb[0].mxu0
      %v1687 = vadd.f32 %v533, %v1686
      %v1688 = vpop.f32.mrb[0].mxu0
      %v1689 = vpop.f32.mrb[0].mxu0
      %v1690 = vadd.f32 %v533, %v1689
      %v1691 = vpop.f32.mrb[0].mxu0
      %1692 = vmatprep.mubr.bf16.mxu0 0
      %1693 = vmatmul.mubr.bf16.gmra.mrb[0].mxu0 %v1170
      %v1694 = vpop.f32.mrb[0].mxu0
      %v1695 = vadd.f32 %v533, %v1694
      %v1696 = vpop.f32.mrb[0].mxu0
      %v1697 = vpop.f32.mrb[0].mxu0
      %v1698 = vadd.f32 %v533, %v1697
      %v1699 = vpop.f32.mrb[0].mxu0
      %1700 = vmatprep.mubr.bf16.mxu0 0
      %1701 = vmatmul.mubr.bf16.gmra.mrb[0].mxu0 %v1173
      %v1702 = vpop.f32.mrb[0].mxu0
      %v1703 = vadd.f32 %v533, %v1702
      %v1704 = vpop.f32.mrb[0].mxu0
      %v1705 = vpop.f32.mrb[0].mxu0
      %v1706 = vadd.f32 %v533, %v1705
      %v1707 = vpop.f32.mrb[0].mxu0
      %1708 = vmatprep.mubr.bf16.mxu0 0
      %1709 = vmatmul.mubr.bf16.gmra.mrb[0].mxu0 %v1176
      %v1710 = vpop.f32.mrb[0].mxu0
      %v1711 = vadd.f32 %v533, %v1710
      %v1712 = vpop.f32.mrb[0].mxu0
      %v1713 = vpop.f32.mrb[0].mxu0
      %v1714 = vadd.f32 %v533, %v1713
      %v1715 = vpop.f32.mrb[0].mxu0
      %1716 = vmatprep.mubr.bf16.mxu0 0
      %1717 = vmatmul.mubr.bf16.gmra.mrb[0].mxu0 %v1179
      %v1718 = vpop.f32.mrb[0].mxu0
      %v1719 = vadd.f32 %v533, %v1718
      %v1720 = vpop.f32.mrb[0].mxu0
      %v1721 = vpop.f32.mrb[0].mxu0
      %v1722 = vadd.f32 %v533, %v1721
      %v1723 = vpop.f32.mrb[0].mxu0
      %1724 = vmatprep.mubr.bf16.mxu0 0
      %1725 = vmatmul.mubr.bf16.gmra.mrb[0].mxu0 %v1182
      %v1726 = vpop.f32.mrb[0].mxu0
      %v1727 = vadd.f32 %v533, %v1726
      %v1728 = vpop.f32.mrb[0].mxu0
      %v1729 = vpop.f32.mrb[0].mxu0
      %v1730 = vadd.f32 %v533, %v1729
      %v1731 = vpop.f32.mrb[0].mxu0
      %1732 = vmatprep.mubr.bf16.mxu0 0
      %1733 = vmatmul.mubr.bf16.gmra.mrb[0].mxu0 %v1185
      %v1734 = vpop.f32.mrb[0].mxu0
      %v1735 = vadd.f32 %v533, %v1734
      %v1736 = vpop.f32.mrb[0].mxu0
      %v1737 = vpop.f32.mrb[0].mxu0
      %v1738 = vadd.f32 %v533, %v1737
      %v1739 = vpop.f32.mrb[0].mxu0
      %1740 = vmatprep.mubr.bf16.mxu0 0
      %1741 = vmatmul.mubr.bf16.gmra.mrb[0].mxu0 %v1188
      %v1742 = vpop.f32.mrb[0].mxu0
      %v1743 = vadd.f32 %v533, %v1742
      %v1744 = vpop.f32.mrb[0].mxu0
      %v1745 = vpop.f32.mrb[0].mxu0
      %v1746 = vadd.f32 %v533, %v1745
      %v1747 = vpop.f32.mrb[0].mxu0
      %1748 = vmatprep.mubr.bf16.mxu0 0
      %1749 = vmatmul.mubr.bf16.gmra.mrb[0].mxu0 %v1191
      %v1750 = vpop.f32.mrb[0].mxu0
      %v1751 = vadd.f32 %v533, %v1750
      %v1752 = vpop.f32.mrb[0].mxu0
      %v1753 = vpop.f32.mrb[0].mxu0
      %v1754 = vadd.f32 %v533, %v1753
      %v1755 = vpop.f32.mrb[0].mxu0
      %1756 = vmatprep.mubr.bf16.mxu0 0
      %1757 = vmatmul.mubr.bf16.gmra.mrb[0].mxu0 %v1194
      %v1758 = vpop.f32.mrb[0].mxu0
      %v1759 = vadd.f32 %v533, %v1758
      %v1760 = vpop.f32.mrb[0].mxu0
      %v1761 = vpop.f32.mrb[0].mxu0
      %v1762 = vadd.f32 %v533, %v1761
      %v1763 = vpop.f32.mrb[0].mxu0
      %1764 = vmatprep.mubr.bf16.mxu0 0
      %1765 = vmatmul.mubr.bf16.gmra.mrb[0].mxu0 %v1197
      %v1766 = vpop.f32.mrb[0].mxu0
      %v1767 = vadd.f32 %v533, %v1766
      %v1768 = vpop.f32.mrb[0].mxu0
      %v1769 = vpop.f32.mrb[0].mxu0
      %v1770 = vadd.f32 %v533, %v1769
      %v1771 = vpop.f32.mrb[0].mxu0
      %1772 = vmatprep.mubr.bf16.mxu0 0
      %1773 = vmatmul.mubr.bf16.gmra.mrb[0].mxu0 %v1200
      %v1774 = vpop.f32.mrb[0].mxu0
      %v1775 = vadd.f32 %v533, %v1774
      %v1776 = vpop.f32.mrb[0].mxu0
      %v1777 = vpop.f32.mrb[0].mxu0
      %v1778 = vadd.f32 %v533, %v1777
      %v1779 = vpop.f32.mrb[0].mxu0
      %1780 = vmatprep.mubr.bf16.mxu0 0
      %1781 = vmatmul.mubr.bf16.gmra.mrb[0].mxu0 %v1203
      %v1782 = vpop.f32.mrb[0].mxu0
      %v1783 = vadd.f32 %v533, %v1782
      %v1784 = vpop.f32.mrb[0].mxu0
      %v1785 = vpop.f32.mrb[0].mxu0
      %v1786 = vadd.f32 %v533, %v1785
      %v1787 = vpop.f32.mrb[0].mxu0
      %1788 = vmatprep.mubr.bf16.mxu0 0
      %1789 = vmatmul.mubr.bf16.gmra.mrb[0].mxu0 %v1206
      %v1790 = vpop.f32.mrb[0].mxu0
      %v1791 = vadd.f32 %v533, %v1790
      %v1792 = vpop.f32.mrb[0].mxu0
      %v1793 = vpop.f32.mrb[0].mxu0
      %v1794 = vadd.f32 %v533, %v1793
      %v1795 = vpop.f32.mrb[0].mxu0
      %1796 = vmatprep.mubr.bf16.mxu0 0
      %1797 = vmatmul.mubr.bf16.gmra.mrb[0].mxu0 %v1209
      %v1798 = vpop.f32.mrb[0].mxu0
      %v1799 = vadd.f32 %v533, %v1798
      %v1800 = vpop.f32.mrb[0].mxu0
      %v1801 = vpop.f32.mrb[0].mxu0
      %v1802 = vadd.f32 %v533, %v1801
      %v1803 = vpop.f32.mrb[0].mxu0
      %1804 = vmatprep.mubr.bf16.mxu0 0
      %1805 = vmatmul.mubr.bf16.gmra.mrb[0].mxu0 %v1212
      %v1806 = vpop.f32.mrb[0].mxu0
      %v1807 = vadd.f32 %v533, %v1806
      %v1808 = vpop.f32.mrb[0].mxu0
      %v1809 = vpop.f32.mrb[0].mxu0
      %v1810 = vadd.f32 %v533, %v1809
      %v1811 = vpop.f32.mrb[0].mxu0
      %1812 = vmatprep.mubr.bf16.mxu0 0
      %1813 = vmatmul.mubr.bf16.gmra.mrb[0].mxu0 %v1215
      %v1814 = vpop.f32.mrb[0].mxu0
      %v1815 = vadd.f32 %v533, %v1814
      %v1816 = vpop.f32.mrb[0].mxu0
      %v1817 = vpop.f32.mrb[0].mxu0
      %v1818 = vadd.f32 %v533, %v1817
      %v1819 = vpop.f32.mrb[0].mxu0
      %1820 = vmatprep.mubr.bf16.mxu0 0
      %1821 = vmatmul.mubr.bf16.gmra.mrb[0].mxu0 %v1218
      %v1822 = vpop.f32.mrb[0].mxu0
      %v1823 = vadd.f32 %v533, %v1822
      %v1824 = vpop.f32.mrb[0].mxu0
      %v1825 = vpop.f32.mrb[0].mxu0
      %v1826 = vadd.f32 %v533, %v1825
      %v1827 = vpop.f32.mrb[0].mxu0
      %1828 = vmatprep.mubr.bf16.mxu0 0
      %1829 = vmatmul.mubr.bf16.gmra.mrb[0].mxu0 %v1221
      %v1830 = vpop.f32.mrb[0].mxu0
      %v1831 = vadd.f32 %v533, %v1830
      %v1832 = vpop.f32.mrb[0].mxu0
      %v1833 = vpop.f32.mrb[0].mxu0
      %v1834 = vadd.f32 %v533, %v1833
      %v1835 = vpop.f32.mrb[0].mxu0
      %1836 = vmatprep.mubr.bf16.mxu0 0
      %1837 = vmatmul.mubr.bf16.gmra.mrb[0].mxu0 %v1224
      %v1838 = vpop.f32.mrb[0].mxu0
      %v1839 = vadd.f32 %v533, %v1838
      %v1840 = vpop.f32.mrb[0].mxu0
      %v1841 = vpop.f32.mrb[0].mxu0
      %v1842 = vadd.f32 %v533, %v1841
      %v1843 = vpop.f32.mrb[0].mxu0
      %1844 = vmatprep.mubr.bf16.mxu0 0
      %1845 = vmatmul.mubr.bf16.gmra.mrb[0].mxu0 %v1227
      %v1846 = vpop.f32.mrb[0].mxu0
      %v1847 = vadd.f32 %v533, %v1846
      %v1848 = vpop.f32.mrb[0].mxu0
      %v1849 = vpop.f32.mrb[0].mxu0
      %v1850 = vadd.f32 %v533, %v1849
      %v1851 = vpop.f32.mrb[0].mxu0
      %1852 = vmatprep.mubr.bf16.mxu0 0
      %1853 = vmatmul.mubr.bf16.gmra.mrb[0].mxu0 %v1230
      %v1854 = vpop.f32.mrb[0].mxu0
      %v1855 = vadd.f32 %v533, %v1854
      %v1856 = vpop.f32.mrb[0].mxu0
      %v1857 = vpop.f32.mrb[0].mxu0
      %v1858 = vadd.f32 %v533, %v1857
      %v1859 = vpop.f32.mrb[0].mxu0
      %1860 = vmatprep.mubr.bf16.mxu0 0
      %1861 = vmatmul.mubr.bf16.gmra.mrb[0].mxu0 %v1233
      %v1862 = vpop.f32.mrb[0].mxu0
      %v1863 = vadd.f32 %v533, %v1862
      %v1864 = vpop.f32.mrb[0].mxu0
      %v1865 = vpop.f32.mrb[0].mxu0
      %v1866 = vadd.f32 %v533, %v1865
      %v1867 = vpop.f32.mrb[0].mxu0
      %1868 = vmatprep.mubr.bf16.mxu0 0
      %1869 = vmatmul.mubr.bf16.gmra.mrb[0].mxu0 %v1236
      %v1870 = vpop.f32.mrb[0].mxu0
      %v1871 = vadd.f32 %v533, %v1870
      %v1872 = vpop.f32.mrb[0].mxu0
      %v1873 = vpop.f32.mrb[0].mxu0
      %v1874 = vadd.f32 %v533, %v1873
      %v1875 = vpop.f32.mrb[0].mxu0
      %1876 = vmatprep.mubr.bf16.mxu0 0
      %1877 = vmatmul.mubr.bf16.gmra.mrb[0].mxu0 %v1239
      %v1878 = vpop.f32.mrb[0].mxu0
      %v1879 = vadd.f32 %v533, %v1878
      %v1880 = vpop.f32.mrb[0].mxu0
      %v1881 = vpop.f32.mrb[0].mxu0
      %v1882 = vadd.f32 %v533, %v1881
      %v1883 = vpop.f32.mrb[0].mxu0
      %1884 = vmatprep.mubr.bf16.mxu0 0
      %1885 = vmatmul.mubr.bf16.gmra.mrb[0].mxu0 %v1242
      %v1886 = vpop.f32.mrb[0].mxu0
      %v1887 = vadd.f32 %v533, %v1886
      %v1888 = vpop.f32.mrb[0].mxu0
      %v1889 = vpop.f32.mrb[0].mxu0
      %v1890 = vadd.f32 %v533, %v1889
      %v1891 = vpop.f32.mrb[0].mxu0
      %1892 = vmatprep.mubr.bf16.mxu0 0
      %1893 = vmatmul.mubr.bf16.gmra.mrb[0].mxu0 %v1245
      %v1894 = vpop.f32.mrb[0].mxu0
      %v1895 = vadd.f32 %v533, %v1894
      %v1896 = vpop.f32.mrb[0].mxu0
      %v1897 = vpop.f32.mrb[0].mxu0
      %v1898 = vadd.f32 %v533, %v1897
      %v1899 = vpop.f32.mrb[0].mxu0
      %1900 = vmatprep.mubr.bf16.mxu0 0
      %1901 = vmatmul.mubr.bf16.gmra.mrb[0].mxu0 %v1248
      %v1902 = vpop.f32.mrb[0].mxu0
      %v1903 = vadd.f32 %v533, %v1902
      %v1904 = vpop.f32.mrb[0].mxu0
      %v1905 = vpop.f32.mrb[0].mxu0
      %v1906 = vadd.f32 %v533, %v1905
      %v1907 = vpop.f32.mrb[0].mxu0
      %1908 = vmatprep.mubr.bf16.mxu0 0
      %1909 = vmatmul.mubr.bf16.gmra.mrb[0].mxu0 %v1251
      %v1910 = vpop.f32.mrb[0].mxu0
      %v1911 = vadd.f32 %v533, %v1910
      %v1912 = vpop.f32.mrb[0].mxu0
      %v1913 = vpop.f32.mrb[0].mxu0
      %v1914 = vadd.f32 %v533, %v1913
      %v1915 = vpop.f32.mrb[0].mxu0
      %1916 = vmatprep.mubr.bf16.mxu0 0
      %1917 = vmatmul.mubr.bf16.gmra.mrb[0].mxu0 %v1254
      %v1918 = vpop.f32.mrb[0].mxu0
      %v1919 = vadd.f32 %v533, %v1918
      %v1920 = vpop.f32.mrb[0].mxu0
      %v1921 = vpop.f32.mrb[0].mxu0
      %v1922 = vadd.f32 %v533, %v1921
      %v1923 = vpop.f32.mrb[0].mxu0
      %1924 = vmatprep.mubr.bf16.mxu0 0
      %1925 = vmatmul.mubr.bf16.gmra.mrb[0].mxu0 %v1257
      %v1926 = vpop.f32.mrb[0].mxu0
      %v1927 = vadd.f32 %v533, %v1926
      %v1928 = vpop.f32.mrb[0].mxu0
      %v1929 = vpop.f32.mrb[0].mxu0
      %v1930 = vadd.f32 %v533, %v1929
      %v1931 = vpop.f32.mrb[0].mxu0
      %1932 = vmatprep.mubr.bf16.mxu0 0
      %1933 = vmatmul.mubr.bf16.gmra.mrb[0].mxu0 %v1260
      %v1934 = vpop.f32.mrb[0].mxu0
      %v1935 = vadd.f32 %v533, %v1934
      %v1936 = vpop.f32.mrb[0].mxu0
      %v1937 = vpop.f32.mrb[0].mxu0
      %v1938 = vadd.f32 %v533, %v1937
      %v1939 = vpop.f32.mrb[0].mxu0
      %1940 = vmatprep.mubr.bf16.mxu0 0
      %1941 = vmatmul.mubr.bf16.gmra.mrb[0].mxu0 %v1263
      %v1942 = vpop.f32.mrb[0].mxu0
      %v1943 = vadd.f32 %v533, %v1942
      %v1944 = vpop.f32.mrb[0].mxu0
      %v1945 = vpop.f32.mrb[0].mxu0
      %v1946 = vadd.f32 %v533, %v1945
      %v1947 = vpop.f32.mrb[0].mxu0
      %1948 = vmatprep.mubr.bf16.mxu0 0
      %1949 = vmatmul.mubr.bf16.gmra.mrb[0].mxu0 %v1266
      %v1950 = vpop.f32.mrb[0].mxu0
      %v1951 = vadd.f32 %v533, %v1950
      %v1952 = vpop.f32.mrb[0].mxu0
      %v1953 = vpop.f32.mrb[0].mxu0
      %v1954 = vadd.f32 %v533, %v1953
      %v1955 = vpop.f32.mrb[0].mxu0
      %1956 = vmatprep.mubr.bf16.mxu0 0
      %1957 = vmatmul.mubr.bf16.gmra.mrb[0].mxu0 %v1269
      %v1958 = vpop.f32.mrb[0].mxu0
      %v1959 = vadd.f32 %v533, %v1958
      %v1960 = vpop.f32.mrb[0].mxu0
      %v1961 = vpop.f32.mrb[0].mxu0
      %v1962 = vadd.f32 %v533, %v1961
      %v1963 = vpop.f32.mrb[0].mxu0
      %1964 = vmatprep.mubr.bf16.mxu0 0
      %1965 = vmatmul.mubr.bf16.gmra.mrb[0].mxu0 %v1272
      %v1966 = vpop.f32.mrb[0].mxu0
      %v1967 = vadd.f32 %v533, %v1966
      %v1968 = vpop.f32.mrb[0].mxu0
      %v1969 = vpop.f32.mrb[0].mxu0
      %v1970 = vadd.f32 %v533, %v1969
      %v1971 = vpop.f32.mrb[0].mxu0
      %1972 = vmatprep.mubr.bf16.mxu0 0
      %1973 = vmatmul.mubr.bf16.gmra.mrb[0].mxu0 %v1275
      %v1974 = vpop.f32.mrb[0].mxu0
      %v1975 = vadd.f32 %v533, %v1974
      %v1976 = vpop.f32.mrb[0].mxu0
      %v1977 = vpop.f32.mrb[0].mxu0
      %v1978 = vadd.f32 %v533, %v1977
      %v1979 = vpop.f32.mrb[0].mxu0
      %1980 = vmatprep.mubr.bf16.mxu0 0
      %1981 = vmatmul.mubr.bf16.gmra.mrb[0].mxu0 %v1278
      %v1982 = vpop.f32.mrb[0].mxu0
      %v1983 = vadd.f32 %v533, %v1982
      %v1984 = vpop.f32.mrb[0].mxu0
      %v1985 = vpop.f32.mrb[0].mxu0
      %v1986 = vadd.f32 %v533, %v1985
      %v1987 = vpop.f32.mrb[0].mxu0
      %1988 = vmatprep.mubr.bf16.mxu0 0
      %1989 = vmatmul.mubr.bf16.gmra.mrb[0].mxu0 %v1281
      %v1990 = vpop.f32.mrb[0].mxu0
      %v1991 = vadd.f32 %v533, %v1990
      %v1992 = vpop.f32.mrb[0].mxu0
      %v1993 = vpop.f32.mrb[0].mxu0
      %v1994 = vadd.f32 %v533, %v1993
      %v1995 = vpop.f32.mrb[0].mxu0
      %1996 = vmatprep.mubr.bf16.mxu0 0
      %1997 = vmatmul.mubr.bf16.gmra.mrb[0].mxu0 %v1284
      %v1998 = vpop.f32.mrb[0].mxu0
      %v1999 = vadd.f32 %v533, %v1998
      %v2000 = vpop.f32.mrb[0].mxu0
      %v2001 = vpop.f32.mrb[0].mxu0
      %v2002 = vadd.f32 %v533, %v2001
      %v2003 = vpop.f32.mrb[0].mxu0
      %2004 = vmatprep.mubr.bf16.mxu0 0
      %2005 = vmatmul.mubr.bf16.gmra.mrb[0].mxu0 %v1287
      %v2006 = vpop.f32.mrb[0].mxu0
      %v2007 = vadd.f32 %v533, %v2006
      %v2008 = vpop.f32.mrb[0].mxu0
      %v2009 = vpop.f32.mrb[0].mxu0
      %v2010 = vadd.f32 %v533, %v2009
      %v2011 = vpop.f32.mrb[0].mxu0
      %2012 = vmatprep.mubr.bf16.mxu0 0
      %2013 = vmatmul.mubr.bf16.gmra.mrb[0].mxu0 %v1290
      %v2014 = vpop.f32.mrb[0].mxu0
      %v2015 = vadd.f32 %v533, %v2014
      %v2016 = vpop.f32.mrb[0].mxu0
      %v2017 = vpop.f32.mrb[0].mxu0
      %v2018 = vadd.f32 %v533, %v2017
      %v2019 = vpop.f32.mrb[0].mxu0
      %2020 = vmatprep.mubr.bf16.mxu0 0
      %2021 = vmatmul.mubr.bf16.gmra.mrb[0].mxu0 %v1293
      %v2022 = vpop.f32.mrb[0].mxu0
      %v2023 = vadd.f32 %v533, %v2022
      %v2024 = vpop.f32.mrb[0].mxu0
      %v2025 = vpop.f32.mrb[0].mxu0
      %v2026 = vadd.f32 %v533, %v2025
      %v2027 = vpop.f32.mrb[0].mxu0
      %2028 = vmatprep.mubr.bf16.mxu0 0
      %2029 = vmatmul.mubr.bf16.gmra.mrb[0].mxu0 %v1296
      %v2030 = vpop.f32.mrb[0].mxu0
      %v2031 = vadd.f32 %v533, %v2030
      %v2032 = vpop.f32.mrb[0].mxu0
      %v2033 = vpop.f32.mrb[0].mxu0
      %v2034 = vadd.f32 %v533, %v2033
      %v2035 = vpop.f32.mrb[0].mxu0
      %2036 = vmatprep.mubr.bf16.mxu0 0
      %2037 = vmatmul.mubr.bf16.gmra.mrb[0].mxu0 %v1299
      %v2038 = vpop.f32.mrb[0].mxu0
      %v2039 = vadd.f32 %v533, %v2038
      %v2040 = vpop.f32.mrb[0].mxu0
      %v2041 = vpop.f32.mrb[0].mxu0
      %v2042 = vadd.f32 %v533, %v2041
      %v2043 = vpop.f32.mrb[0].mxu0
      %2044 = vmatprep.mubr.bf16.mxu0 0
      %2045 = vmatmul.mubr.bf16.gmra.mrb[0].mxu0 %v1302
      %v2046 = vpop.f32.mrb[0].mxu0
      %v2047 = vadd.f32 %v533, %v2046
      %v2048 = vpop.f32.mrb[0].mxu0
      %v2049 = vpop.f32.mrb[0].mxu0
      %v2050 = vadd.f32 %v533, %v2049
      %v2051 = vpop.f32.mrb[0].mxu0
      %2052 = vmatprep.mubr.bf16.mxu0 0
      %2053 = vmatmul.mubr.bf16.gmra.mrb[0].mxu0 %v1305
      %v2054 = vpop.f32.mrb[0].mxu0
      %v2055 = vadd.f32 %v533, %v2054
      %v2056 = vpop.f32.mrb[0].mxu0
      %v2057 = vpop.f32.mrb[0].mxu0
      %v2058 = vadd.f32 %v533, %v2057
      %v2059 = vpop.f32.mrb[0].mxu0
      %2060 = vmatprep.mubr.bf16.mxu0 0
      %2061 = vmatmul.mubr.bf16.gmra.mrb[0].mxu0 %v1308
      %v2062 = vpop.f32.mrb[0].mxu0
      %v2063 = vadd.f32 %v533, %v2062
      %v2064 = vpop.f32.mrb[0].mxu0
      %v2065 = vpop.f32.mrb[0].mxu0
      %v2066 = vadd.f32 %v533, %v2065
      %v2067 = vpop.f32.mrb[0].mxu0
      %2068 = vmatprep.mubr.bf16.mxu0 0
      %2069 = vmatmul.mubr.bf16.gmra.mrb[0].mxu0 %v1311
      %v2070 = vpop.f32.mrb[0].mxu0
      %v2071 = vadd.f32 %v533, %v2070
      %v2072 = vpop.f32.mrb[0].mxu0
      %v2073 = vpop.f32.mrb[0].mxu0
      %v2074 = vadd.f32 %v533, %v2073
      %v2075 = vpop.f32.mrb[0].mxu0
      %2076 = vmatprep.mubr.bf16.mxu0 0
      %2077 = vmatmul.mubr.bf16.gmra.mrb[0].mxu0 %v1314
      %v2078 = vpop.f32.mrb[0].mxu0
      %v2079 = vadd.f32 %v533, %v2078
      %v2080 = vpop.f32.mrb[0].mxu0
      %v2081 = vpop.f32.mrb[0].mxu0
      %v2082 = vadd.f32 %v533, %v2081
      %v2083 = vpop.f32.mrb[0].mxu0
      %2084 = vmatprep.mubr.bf16.mxu0 0
      %2085 = vmatmul.mubr.bf16.gmra.mrb[0].mxu0 %v1317
      %v2086 = vpop.f32.mrb[0].mxu0
      %v2087 = vadd.f32 %v533, %v2086
      %v2088 = vpop.f32.mrb[0].mxu0
      %v2089 = vpop.f32.mrb[0].mxu0
      %v2090 = vadd.f32 %v533, %v2089
      %v2091 = vpop.f32.mrb[0].mxu0
      %2092 = vmatprep.mubr.bf16.mxu0 0
      %2093 = vmatmul.mubr.bf16.gmra.mrb[0].mxu0 %v1320
      %v2094 = vpop.f32.mrb[0].mxu0
      %v2095 = vadd.f32 %v533, %v2094
      %v2096 = vpop.f32.mrb[0].mxu0
      %v2097 = vpop.f32.mrb[0].mxu0
      %v2098 = vadd.f32 %v533, %v2097
      %v2099 = vpop.f32.mrb[0].mxu0
      %2100 = vmatprep.mubr.bf16.mxu0 0
      %2101 = vmatmul.mubr.bf16.gmra.mrb[0].mxu0 %v1323
      %v2102 = vpop.f32.mrb[0].mxu0
      %v2103 = vadd.f32 %v533, %v2102
      %v2104 = vpop.f32.mrb[0].mxu0
      %v2105 = vpop.f32.mrb[0].mxu0
      %v2106 = vadd.f32 %v533, %v2105
      %v2107 = vpop.f32.mrb[0].mxu0
      %2108 = vmatprep.mubr.bf16.mxu0 0
      %2109 = vmatmul.mubr.bf16.gmra.mrb[0].mxu0 %v1326
      %v2110 = vpop.f32.mrb[0].mxu0
      %v2111 = vadd.f32 %v533, %v2110
      %v2112 = vpop.f32.mrb[0].mxu0
      %v2113 = vpop.f32.mrb[0].mxu0
      %v2114 = vadd.f32 %v533, %v2113
      %v2115 = vpop.f32.mrb[0].mxu0
      %2116 = vmatprep.mubr.bf16.mxu0 0
      %2117 = vmatmul.mubr.bf16.gmra.mrb[0].mxu0 %v1329
      %v2118 = vpop.f32.mrb[0].mxu0
      %v2119 = vadd.f32 %v533, %v2118
      %v2120 = vpop.f32.mrb[0].mxu0
      %v2121 = vpop.f32.mrb[0].mxu0
      %v2122 = vadd.f32 %v533, %v2121
      %v2123 = vpop.f32.mrb[0].mxu0
      %2124 = vmatprep.mubr.bf16.mxu0 0
      %2125 = vmatmul.mubr.bf16.gmra.mrb[0].mxu0 %v1332
      %v2126 = vpop.f32.mrb[0].mxu0
      %v2127 = vadd.f32 %v533, %v2126
      %v2128 = vpop.f32.mrb[0].mxu0
      %v2129 = vpop.f32.mrb[0].mxu0
      %v2130 = vadd.f32 %v533, %v2129
      %v2131 = vpop.f32.mrb[0].mxu0
      %2132 = vmatprep.mubr.bf16.mxu0 0
      %2133 = vmatmul.mubr.bf16.gmra.mrb[0].mxu0 %v1335
      %v2134 = vpop.f32.mrb[0].mxu0
      %v2135 = vadd.f32 %v533, %v2134
      %v2136 = vpop.f32.mrb[0].mxu0
      %v2137 = vpop.f32.mrb[0].mxu0
      %v2138 = vadd.f32 %v533, %v2137
      %v2139 = vpop.f32.mrb[0].mxu0
      %2140 = vmatprep.mubr.bf16.mxu0 0
      %2141 = vmatmul.mubr.bf16.gmra.mrb[0].mxu0 %v1338
      %v2142 = vpop.f32.mrb[0].mxu0
      %v2143 = vadd.f32 %v533, %v2142
      %v2144 = vpop.f32.mrb[0].mxu0
      %v2145 = vpop.f32.mrb[0].mxu0
      %v2146 = vadd.f32 %v533, %v2145
      %v2147 = vpop.f32.mrb[0].mxu0
      %2148 = vmatprep.mubr.bf16.mxu0 0
      %2149 = vmatmul.mubr.bf16.gmra.mrb[0].mxu0 %v1341
      %v2150 = vpop.f32.mrb[0].mxu0
      %v2151 = vadd.f32 %v533, %v2150
      %v2152 = vpop.f32.mrb[0].mxu0
      %v2153 = vpop.f32.mrb[0].mxu0
      %v2154 = vadd.f32 %v533, %v2153
      %v2155 = vpop.f32.mrb[0].mxu0
      %2156 = vmatprep.mubr.bf16.mxu0 0
      %2157 = vmatmul.mubr.bf16.gmra.mrb[0].mxu0 %v1344
      %v2158 = vpop.f32.mrb[0].mxu0
      %v2159 = vadd.f32 %v533, %v2158
      %v2160 = vpop.f32.mrb[0].mxu0
      %v2161 = vpop.f32.mrb[0].mxu0
      %v2162 = vadd.f32 %v533, %v2161
      %v2163 = vpop.f32.mrb[0].mxu0
      %2164 = vmatprep.mubr.bf16.mxu0 0
      %2165 = vmatmul.mubr.bf16.gmra.mrb[0].mxu0 %v1347
      %v2166 = vpop.f32.mrb[0].mxu0
      %v2167 = vadd.f32 %v533, %v2166
      %v2168 = vpop.f32.mrb[0].mxu0
      %v2169 = vpop.f32.mrb[0].mxu0
      %v2170 = vadd.f32 %v533, %v2169
      %v2171 = vpop.f32.mrb[0].mxu0
      %2172 = vdwg.mxu0
      %v2173 = vmax.f32 %v1391, 0.0
      %v2174 = vmax.f32 %v1394, 0.0
      %v2175 = vmax.f32 %v1399, 0.0
      %v2176 = vmax.f32 %v1402, 0.0
      %v2177 = vmax.f32 %v1407, 0.0
      %v2178 = vmax.f32 %v1410, 0.0
      %v2179 = vmax.f32 %v1415, 0.0
      %v2180 = vmax.f32 %v1418, 0.0
      %v2181 = vmax.f32 %v1423, 0.0
      %v2182 = vmax.f32 %v1426, 0.0
      %v2183 = vmax.f32 %v1431, 0.0
      %v2184 = vmax.f32 %v1434, 0.0
      %v2185 = vmax.f32 %v1439, 0.0
      %v2186 = vmax.f32 %v1442, 0.0
      %v2187 = vmax.f32 %v1447, 0.0
      %v2188 = vmax.f32 %v1450, 0.0
      %v2189 = vmax.f32 %v1455, 0.0
      %v2190 = vmax.f32 %v1458, 0.0
      %v2191 = vmax.f32 %v1463, 0.0
      %v2192 = vmax.f32 %v1466, 0.0
      %v2193 = vmax.f32 %v1471, 0.0
      %v2194 = vmax.f32 %v1474, 0.0
      %v2195 = vmax.f32 %v1479, 0.0
      %v2196 = vmax.f32 %v1482, 0.0
      %v2197 = vmax.f32 %v1487, 0.0
      %v2198 = vmax.f32 %v1490, 0.0
      %v2199 = vmax.f32 %v1495, 0.0
      %v2200 = vmax.f32 %v1498, 0.0
      %v2201 = vmax.f32 %v1503, 0.0
      %v2202 = vmax.f32 %v1506, 0.0
      %v2203 = vmax.f32 %v1511, 0.0
      %v2204 = vmax.f32 %v1514, 0.0
      %v2205 = vmax.f32 %v1519, 0.0
      %v2206 = vmax.f32 %v1522, 0.0
      %v2207 = vmax.f32 %v1527, 0.0
      %v2208 = vmax.f32 %v1530, 0.0
      %v2209 = vmax.f32 %v1535, 0.0
      %v2210 = vmax.f32 %v1538, 0.0
      %v2211 = vmax.f32 %v1543, 0.0
      %v2212 = vmax.f32 %v1546, 0.0
      %v2213 = vmax.f32 %v1551, 0.0
      %v2214 = vmax.f32 %v1554, 0.0
      %v2215 = vmax.f32 %v1559, 0.0
      %v2216 = vmax.f32 %v1562, 0.0
      %v2217 = vmax.f32 %v1567, 0.0
      %v2218 = vmax.f32 %v1570, 0.0
      %v2219 = vmax.f32 %v1575, 0.0
      %v2220 = vmax.f32 %v1578, 0.0
      %v2221 = vmax.f32 %v1583, 0.0
      %v2222 = vmax.f32 %v1586, 0.0
      %v2223 = vmax.f32 %v1591, 0.0
      %v2224 = vmax.f32 %v1594, 0.0
      %v2225 = vmax.f32 %v1599, 0.0
      %v2226 = vmax.f32 %v1602, 0.0
      %v2227 = vmax.f32 %v1607, 0.0
      %v2228 = vmax.f32 %v1610, 0.0
      %v2229 = vmax.f32 %v1615, 0.0
      %v2230 = vmax.f32 %v1618, 0.0
      %v2231 = vmax.f32 %v1623, 0.0
      %v2232 = vmax.f32 %v1626, 0.0
      %v2233 = vmax.f32 %v1631, 0.0
      %v2234 = vmax.f32 %v1634, 0.0
      %v2235 = vmax.f32 %v1639, 0.0
      %v2236 = vmax.f32 %v1642, 0.0
      %v2237 = vmax.f32 %v1647, 0.0
      %v2238 = vmax.f32 %v1650, 0.0
      %v2239 = vmax.f32 %v1655, 0.0
      %v2240 = vmax.f32 %v1658, 0.0
      %v2241 = vmax.f32 %v1663, 0.0
      %v2242 = vmax.f32 %v1666, 0.0
      %v2243 = vmax.f32 %v1671, 0.0
      %v2244 = vmax.f32 %v1674, 0.0
      %v2245 = vmax.f32 %v1679, 0.0
      %v2246 = vmax.f32 %v1682, 0.0
      %v2247 = vmax.f32 %v1687, 0.0
      %v2248 = vmax.f32 %v1690, 0.0
      %v2249 = vmax.f32 %v1695, 0.0
      %v2250 = vmax.f32 %v1698, 0.0
      %v2251 = vmax.f32 %v1703, 0.0
      %v2252 = vmax.f32 %v1706, 0.0
      %v2253 = vmax.f32 %v1711, 0.0
      %v2254 = vmax.f32 %v1714, 0.0
      %v2255 = vmax.f32 %v1719, 0.0
      %v2256 = vmax.f32 %v1722, 0.0
      %v2257 = vmax.f32 %v1727, 0.0
      %v2258 = vmax.f32 %v1730, 0.0
      %v2259 = vmax.f32 %v1735, 0.0
      %v2260 = vmax.f32 %v1738, 0.0
      %v2261 = vmax.f32 %v1743, 0.0
      %v2262 = vmax.f32 %v1746, 0.0
      %v2263 = vmax.f32 %v1751, 0.0
      %v2264 = vmax.f32 %v1754, 0.0
      %v2265 = vmax.f32 %v1759, 0.0
      %v2266 = vmax.f32 %v1762, 0.0
      %v2267 = vmax.f32 %v1767, 0.0
      %v2268 = vmax.f32 %v1770, 0.0
      %v2269 = vmax.f32 %v1775, 0.0
      %v2270 = vmax.f32 %v1778, 0.0
      %v2271 = vmax.f32 %v1783, 0.0
      %v2272 = vmax.f32 %v1786, 0.0
      %v2273 = vmax.f32 %v1791, 0.0
      %v2274 = vmax.f32 %v1794, 0.0
      %v2275 = vmax.f32 %v1799, 0.0
      %v2276 = vmax.f32 %v1802, 0.0
      %v2277 = vmax.f32 %v1807, 0.0
      %v2278 = vmax.f32 %v1810, 0.0
      %v2279 = vmax.f32 %v1815, 0.0
      %v2280 = vmax.f32 %v1818, 0.0
      %v2281 = vmax.f32 %v1823, 0.0
      %v2282 = vmax.f32 %v1826, 0.0
      %v2283 = vmax.f32 %v1831, 0.0
      %v2284 = vmax.f32 %v1834, 0.0
      %v2285 = vmax.f32 %v1839, 0.0
      %v2286 = vmax.f32 %v1842, 0.0
      %v2287 = vmax.f32 %v1847, 0.0
      %v2288 = vmax.f32 %v1850, 0.0
      %v2289 = vmax.f32 %v1855, 0.0
      %v2290 = vmax.f32 %v1858, 0.0
      %v2291 = vmax.f32 %v1863, 0.0
      %v2292 = vmax.f32 %v1866, 0.0
      %v2293 = vmax.f32 %v1871, 0.0
      %v2294 = vmax.f32 %v1874, 0.0
      %v2295 = vmax.f32 %v1879, 0.0
      %v2296 = vmax.f32 %v1882, 0.0
      %v2297 = vmax.f32 %v1887, 0.0
      %v2298 = vmax.f32 %v1890, 0.0
      %v2299 = vmax.f32 %v1895, 0.0
      %v2300 = vmax.f32 %v1898, 0.0
      %v2301 = vmax.f32 %v1903, 0.0
      %v2302 = vmax.f32 %v1906, 0.0
      %v2303 = vmax.f32 %v1911, 0.0
      %v2304 = vmax.f32 %v1914, 0.0
      %v2305 = vmax.f32 %v1919, 0.0
      %v2306 = vmax.f32 %v1922, 0.0
      %v2307 = vmax.f32 %v1927, 0.0
      %v2308 = vmax.f32 %v1930, 0.0
      %v2309 = vmax.f32 %v1935, 0.0
      %v2310 = vmax.f32 %v1938, 0.0
      %v2311 = vmax.f32 %v1943, 0.0
      %v2312 = vmax.f32 %v1946, 0.0
      %v2313 = vmax.f32 %v1951, 0.0
      %v2314 = vmax.f32 %v1954, 0.0
      %v2315 = vmax.f32 %v1959, 0.0
      %v2316 = vmax.f32 %v1962, 0.0
      %v2317 = vmax.f32 %v1967, 0.0
      %v2318 = vmax.f32 %v1970, 0.0
      %v2319 = vmax.f32 %v1975, 0.0
      %v2320 = vmax.f32 %v1978, 0.0
      %v2321 = vmax.f32 %v1983, 0.0
      %v2322 = vmax.f32 %v1986, 0.0
      %v2323 = vmax.f32 %v1991, 0.0
      %v2324 = vmax.f32 %v1994, 0.0
      %v2325 = vmax.f32 %v1999, 0.0
      %v2326 = vmax.f32 %v2002, 0.0
      %v2327 = vmax.f32 %v2007, 0.0
      %v2328 = vmax.f32 %v2010, 0.0
      %v2329 = vmax.f32 %v2015, 0.0
      %v2330 = vmax.f32 %v2018, 0.0
      %v2331 = vmax.f32 %v2023, 0.0
      %v2332 = vmax.f32 %v2026, 0.0
      %v2333 = vmax.f32 %v2031, 0.0
      %v2334 = vmax.f32 %v2034, 0.0
      %v2335 = vmax.f32 %v2039, 0.0
      %v2336 = vmax.f32 %v2042, 0.0
      %v2337 = vmax.f32 %v2047, 0.0
      %v2338 = vmax.f32 %v2050, 0.0
      %v2339 = vmax.f32 %v2055, 0.0
      %v2340 = vmax.f32 %v2058, 0.0
      %v2341 = vmax.f32 %v2063, 0.0
      %v2342 = vmax.f32 %v2066, 0.0
      %v2343 = vmax.f32 %v2071, 0.0
      %v2344 = vmax.f32 %v2074, 0.0
      %v2345 = vmax.f32 %v2079, 0.0
      %v2346 = vmax.f32 %v2082, 0.0
      %v2347 = vmax.f32 %v2087, 0.0
      %v2348 = vmax.f32 %v2090, 0.0
      %v2349 = vmax.f32 %v2095, 0.0
      %v2350 = vmax.f32 %v2098, 0.0
      %v2351 = vmax.f32 %v2103, 0.0
      %v2352 = vmax.f32 %v2106, 0.0
      %v2353 = vmax.f32 %v2111, 0.0
      %v2354 = vmax.f32 %v2114, 0.0
      %v2355 = vmax.f32 %v2119, 0.0
      %v2356 = vmax.f32 %v2122, 0.0
      %v2357 = vmax.f32 %v2127, 0.0
      %v2358 = vmax.f32 %v2130, 0.0
      %v2359 = vmax.f32 %v2135, 0.0
      %v2360 = vmax.f32 %v2138, 0.0
      %v2361 = vmax.f32 %v2143, 0.0
      %v2362 = vmax.f32 %v2146, 0.0
      %v2363 = vmax.f32 %v2151, 0.0
      %v2364 = vmax.f32 %v2154, 0.0
      %v2365 = vmax.f32 %v2159, 0.0
      %v2366 = vmax.f32 %v2162, 0.0
      %v2367 = vmax.f32 %v2167, 0.0
      %v2368 = vmax.f32 %v2170, 0.0
      %v2369 = vld [vmem:[%s301] sm:$0xf]
      %v2370 = vld [vmem:[%s301 + $0x4] sm:$0xf]
      %v2371 = vld [vmem:[%s301 + $0x8] sm:$0xf]
      %v2372 = vld [vmem:[%s301 + $0xc] sm:$0xf]
      %v2373 = vld [vmem:[%s301 + $0x10] sm:$0xf]
      %v2374 = vld [vmem:[%s301 + $0x14] sm:$0xf]
      %v2375 = vld [vmem:[%s301 + $0x18] sm:$0xf]
      %v2376 = vld [vmem:[%s301 + $0x1c] sm:$0xf]
      %v2377 = vld [vmem:[%s301 + $0x20] sm:$0xf]
      %v2378 = vld [vmem:[%s301 + $0x24] sm:$0xf]
      %v2379 = vld [vmem:[%s301 + $0x28] sm:$0xf]
      %v2380 = vld [vmem:[%s301 + $0x2c] sm:$0xf]
      %v2381 = vld [vmem:[%s301 + $0x30] sm:$0xf]
      %v2382 = vld [vmem:[%s301 + $0x34] sm:$0xf]
      %v2383 = vld [vmem:[%s301 + $0x38] sm:$0xf]
      %v2384 = vld [vmem:[%s301 + $0x3c] sm:$0xf]
      %v2385 = vld [vmem:[%s301 + $0x40] sm:$0xf]
      %v2386 = vld [vmem:[%s301 + $0x44] sm:$0xf]
      %v2387 = vld [vmem:[%s301 + $0x48] sm:$0xf]
      %v2388 = vld [vmem:[%s301 + $0x4c] sm:$0xf]
      %v2389 = vld [vmem:[%s301 + $0x50] sm:$0xf]
      %v2390 = vld [vmem:[%s301 + $0x54] sm:$0xf]
      %v2391 = vld [vmem:[%s301 + $0x58] sm:$0xf]
      %v2392 = vld [vmem:[%s301 + $0x5c] sm:$0xf]
      %v2393 = vld [vmem:[%s301 + $0x60] sm:$0xf]
      %v2394 = vld [vmem:[%s301 + $0x64] sm:$0xf]
      %v2395 = vld [vmem:[%s301 + $0x68] sm:$0xf]
      %v2396 = vld [vmem:[%s301 + $0x6c] sm:$0xf]
      %v2397 = vld [vmem:[%s301 + $0x70] sm:$0xf]
      %v2398 = vld [vmem:[%s301 + $0x74] sm:$0xf]
      %v2399 = vld [vmem:[%s301 + $0x78] sm:$0xf]
      %v2400 = vld [vmem:[%s301 + $0x7c] sm:$0xf]
      %v2401 = vld [vmem:[%s301 + $0x80] sm:$0xf]
      %v2402 = vld [vmem:[%s301 + $0x84] sm:$0xf]
      %v2403 = vld [vmem:[%s301 + $0x88] sm:$0xf]
      %v2404 = vld [vmem:[%s301 + $0x8c] sm:$0xf]
      %v2405 = vld [vmem:[%s301 + $0x90] sm:$0xf]
      %v2406 = vld [vmem:[%s301 + $0x94] sm:$0xf]
      %v2407 = vld [vmem:[%s301 + $0x98] sm:$0xf]
      %v2408 = vld [vmem:[%s301 + $0x9c] sm:$0xf]
      %v2409 = vld [vmem:[%s301 + $0xa0] sm:$0xf]
      %v2410 = vld [vmem:[%s301 + $0xa4] sm:$0xf]
      %v2411 = vld [vmem:[%s301 + $0xa8] sm:$0xf]
      %v2412 = vld [vmem:[%s301 + $0xac] sm:$0xf]
      %v2413 = vld [vmem:[%s301 + $0xb0] sm:$0xf]
      %v2414 = vld [vmem:[%s301 + $0xb4] sm:$0xf]
      %v2415 = vld [vmem:[%s301 + $0xb8] sm:$0xf]
      %v2416 = vld [vmem:[%s301 + $0xbc] sm:$0xf]
      %v2417 = vld [vmem:[%s301 + $0xc0] sm:$0xf]
      %v2418 = vld [vmem:[%s301 + $0xc4] sm:$0xf]
      %v2419 = vld [vmem:[%s301 + $0xc8] sm:$0xf]
      %v2420 = vld [vmem:[%s301 + $0xcc] sm:$0xf]
      %v2421 = vld [vmem:[%s301 + $0xd0] sm:$0xf]
      %v2422 = vld [vmem:[%s301 + $0xd4] sm:$0xf]
      %v2423 = vld [vmem:[%s301 + $0xd8] sm:$0xf]
      %v2424 = vld [vmem:[%s301 + $0xdc] sm:$0xf]
      %v2425 = vld [vmem:[%s301 + $0xe0] sm:$0xf]
      %v2426 = vld [vmem:[%s301 + $0xe4] sm:$0xf]
      %v2427 = vld [vmem:[%s301 + $0xe8] sm:$0xf]
      %v2428 = vld [vmem:[%s301 + $0xec] sm:$0xf]
      %v2429 = vld [vmem:[%s301 + $0xf0] sm:$0xf]
      %v2430 = vld [vmem:[%s301 + $0xf4] sm:$0xf]
      %v2431 = vld [vmem:[%s301 + $0xf8] sm:$0xf]
      %v2432 = vld [vmem:[%s301 + $0xfc] sm:$0xf]
      %v2433 = vld [vmem:[%s301 + $0x100] sm:$0xf]
      %v2434 = vld [vmem:[%s301 + $0x104] sm:$0xf]
      %v2435 = vld [vmem:[%s301 + $0x108] sm:$0xf]
      %v2436 = vld [vmem:[%s301 + $0x10c] sm:$0xf]
      %v2437 = vld [vmem:[%s301 + $0x110] sm:$0xf]
      %v2438 = vld [vmem:[%s301 + $0x114] sm:$0xf]
      %v2439 = vld [vmem:[%s301 + $0x118] sm:$0xf]
      %v2440 = vld [vmem:[%s301 + $0x11c] sm:$0xf]
      %v2441 = vld [vmem:[%s301 + $0x120] sm:$0xf]
      %v2442 = vld [vmem:[%s301 + $0x124] sm:$0xf]
      %v2443 = vld [vmem:[%s301 + $0x128] sm:$0xf]
      %v2444 = vld [vmem:[%s301 + $0x12c] sm:$0xf]
      %v2445 = vld [vmem:[%s301 + $0x130] sm:$0xf]
      %v2446 = vld [vmem:[%s301 + $0x134] sm:$0xf]
      %v2447 = vld [vmem:[%s301 + $0x138] sm:$0xf]
      %v2448 = vld [vmem:[%s301 + $0x13c] sm:$0xf]
      %v2449 = vld [vmem:[%s301 + $0x140] sm:$0xf]
      %v2450 = vld [vmem:[%s301 + $0x144] sm:$0xf]
      %v2451 = vld [vmem:[%s301 + $0x148] sm:$0xf]
      %v2452 = vld [vmem:[%s301 + $0x14c] sm:$0xf]
      %v2453 = vld [vmem:[%s301 + $0x150] sm:$0xf]
      %v2454 = vld [vmem:[%s301 + $0x154] sm:$0xf]
      %v2455 = vld [vmem:[%s301 + $0x158] sm:$0xf]
      %v2456 = vld [vmem:[%s301 + $0x15c] sm:$0xf]
      %v2457 = vld [vmem:[%s301 + $0x160] sm:$0xf]
      %v2458 = vld [vmem:[%s301 + $0x164] sm:$0xf]
      %v2459 = vld [vmem:[%s301 + $0x168] sm:$0xf]
      %v2460 = vld [vmem:[%s301 + $0x16c] sm:$0xf]
      %v2461 = vld [vmem:[%s301 + $0x170] sm:$0xf]
      %v2462 = vld [vmem:[%s301 + $0x174] sm:$0xf]
      %v2463 = vld [vmem:[%s301 + $0x178] sm:$0xf]
      %v2464 = vld [vmem:[%s301 + $0x17c] sm:$0xf]
      %v2465 = vld [vmem:[%s301 + $0x180] sm:$0xf]
      %v2466 = vld [vmem:[%s301 + $0x184] sm:$0xf]
      %v2467 = vld [vmem:[%s301 + $0x188] sm:$0xf]
      %v2468 = vld [vmem:[%s301 + $0x18c] sm:$0xf]
      %v2469 = vld [vmem:[%s301 + $0x190] sm:$0xf]
      %v2470 = vld [vmem:[%s301 + $0x194] sm:$0xf]
      %v2471 = vld [vmem:[%s301 + $0x198] sm:$0xf]
      %v2472 = vld [vmem:[%s301 + $0x19c] sm:$0xf]
      %v2473 = vld [vmem:[%s301 + $0x1a0] sm:$0xf]
      %v2474 = vld [vmem:[%s301 + $0x1a4] sm:$0xf]
      %v2475 = vld [vmem:[%s301 + $0x1a8] sm:$0xf]
      %v2476 = vld [vmem:[%s301 + $0x1ac] sm:$0xf]
      %v2477 = vld [vmem:[%s301 + $0x1b0] sm:$0xf]
      %v2478 = vld [vmem:[%s301 + $0x1b4] sm:$0xf]
      %v2479 = vld [vmem:[%s301 + $0x1b8] sm:$0xf]
      %v2480 = vld [vmem:[%s301 + $0x1bc] sm:$0xf]
      %v2481 = vld [vmem:[%s301 + $0x1c0] sm:$0xf]
      %v2482 = vld [vmem:[%s301 + $0x1c4] sm:$0xf]
      %v2483 = vld [vmem:[%s301 + $0x1c8] sm:$0xf]
      %v2484 = vld [vmem:[%s301 + $0x1cc] sm:$0xf]
      %v2485 = vld [vmem:[%s301 + $0x1d0] sm:$0xf]
      %v2486 = vld [vmem:[%s301 + $0x1d4] sm:$0xf]
      %v2487 = vld [vmem:[%s301 + $0x1d8] sm:$0xf]
      %v2488 = vld [vmem:[%s301 + $0x1dc] sm:$0xf]
      %v2489 = vld [vmem:[%s301 + $0x1e0] sm:$0xf]
      %v2490 = vld [vmem:[%s301 + $0x1e4] sm:$0xf]
      %v2491 = vld [vmem:[%s301 + $0x1e8] sm:$0xf]
      %v2492 = vld [vmem:[%s301 + $0x1ec] sm:$0xf]
      %v2493 = vld [vmem:[%s301 + $0x1f0] sm:$0xf]
      %v2494 = vld [vmem:[%s301 + $0x1f4] sm:$0xf]
      %v2495 = vld [vmem:[%s301 + $0x1f8] sm:$0xf]
      %v2496 = vld [vmem:[%s301 + $0x1fc] sm:$0xf]
      %v2497 = vld [vmem:[%s301 + $0x200] sm:$0xf]
      %v2498 = vld [vmem:[%s301 + $0x204] sm:$0xf]
      %v2499 = vld [vmem:[%s301 + $0x208] sm:$0xf]
      %v2500 = vld [vmem:[%s301 + $0x20c] sm:$0xf]
      %v2501 = vld [vmem:[%s301 + $0x210] sm:$0xf]
      %v2502 = vld [vmem:[%s301 + $0x214] sm:$0xf]
      %v2503 = vld [vmem:[%s301 + $0x218] sm:$0xf]
      %v2504 = vld [vmem:[%s301 + $0x21c] sm:$0xf]
      %v2505 = vld [vmem:[%s301 + $0x220] sm:$0xf]
      %v2506 = vld [vmem:[%s301 + $0x224] sm:$0xf]
      %v2507 = vld [vmem:[%s301 + $0x228] sm:$0xf]
      %v2508 = vld [vmem:[%s301 + $0x22c] sm:$0xf]
      %v2509 = vld [vmem:[%s301 + $0x230] sm:$0xf]
      %v2510 = vld [vmem:[%s301 + $0x234] sm:$0xf]
      %v2511 = vld [vmem:[%s301 + $0x238] sm:$0xf]
      %v2512 = vld [vmem:[%s301 + $0x23c] sm:$0xf]
      %v2513 = vld [vmem:[%s301 + $0x240] sm:$0xf]
      %v2514 = vld [vmem:[%s301 + $0x244] sm:$0xf]
      %v2515 = vld [vmem:[%s301 + $0x248] sm:$0xf]
      %v2516 = vld [vmem:[%s301 + $0x24c] sm:$0xf]
      %v2517 = vld [vmem:[%s301 + $0x250] sm:$0xf]
      %v2518 = vld [vmem:[%s301 + $0x254] sm:$0xf]
      %v2519 = vld [vmem:[%s301 + $0x258] sm:$0xf]
      %v2520 = vld [vmem:[%s301 + $0x25c] sm:$0xf]
      %v2521 = vld [vmem:[%s301 + $0x260] sm:$0xf]
      %v2522 = vld [vmem:[%s301 + $0x264] sm:$0xf]
      %v2523 = vld [vmem:[%s301 + $0x268] sm:$0xf]
      %v2524 = vld [vmem:[%s301 + $0x26c] sm:$0xf]
      %v2525 = vld [vmem:[%s301 + $0x270] sm:$0xf]
      %v2526 = vld [vmem:[%s301 + $0x274] sm:$0xf]
      %v2527 = vld [vmem:[%s301 + $0x278] sm:$0xf]
      %v2528 = vld [vmem:[%s301 + $0x27c] sm:$0xf]
      %v2529 = vld [vmem:[%s301 + $0x280] sm:$0xf]
      %v2530 = vld [vmem:[%s301 + $0x284] sm:$0xf]
      %v2531 = vld [vmem:[%s301 + $0x288] sm:$0xf]
      %v2532 = vld [vmem:[%s301 + $0x28c] sm:$0xf]
      %v2533 = vld [vmem:[%s301 + $0x290] sm:$0xf]
      %v2534 = vld [vmem:[%s301 + $0x294] sm:$0xf]
      %v2535 = vld [vmem:[%s301 + $0x298] sm:$0xf]
      %v2536 = vld [vmem:[%s301 + $0x29c] sm:$0xf]
      %v2537 = vld [vmem:[%s301 + $0x2a0] sm:$0xf]
      %v2538 = vld [vmem:[%s301 + $0x2a4] sm:$0xf]
      %v2539 = vld [vmem:[%s301 + $0x2a8] sm:$0xf]
      %v2540 = vld [vmem:[%s301 + $0x2ac] sm:$0xf]
      %v2541 = vld [vmem:[%s301 + $0x2b0] sm:$0xf]
      %v2542 = vld [vmem:[%s301 + $0x2b4] sm:$0xf]
      %v2543 = vld [vmem:[%s301 + $0x2b8] sm:$0xf]
      %v2544 = vld [vmem:[%s301 + $0x2bc] sm:$0xf]
      %v2545 = vld [vmem:[%s301 + $0x2c0] sm:$0xf]
      %v2546 = vld [vmem:[%s301 + $0x2c4] sm:$0xf]
      %v2547 = vld [vmem:[%s301 + $0x2c8] sm:$0xf]
      %v2548 = vld [vmem:[%s301 + $0x2cc] sm:$0xf]
      %v2549 = vld [vmem:[%s301 + $0x2d0] sm:$0xf]
      %v2550 = vld [vmem:[%s301 + $0x2d4] sm:$0xf]
      %v2551 = vld [vmem:[%s301 + $0x2d8] sm:$0xf]
      %v2552 = vld [vmem:[%s301 + $0x2dc] sm:$0xf]
      %v2553 = vld [vmem:[%s301 + $0x2e0] sm:$0xf]
      %v2554 = vld [vmem:[%s301 + $0x2e4] sm:$0xf]
      %v2555 = vld [vmem:[%s301 + $0x2e8] sm:$0xf]
      %v2556 = vld [vmem:[%s301 + $0x2ec] sm:$0xf]
      %v2557 = vld [vmem:[%s301 + $0x2f0] sm:$0xf]
      %v2558 = vld [vmem:[%s301 + $0x2f4] sm:$0xf]
      %v2559 = vld [vmem:[%s301 + $0x2f8] sm:$0xf]
      %v2560 = vld [vmem:[%s301 + $0x2fc] sm:$0xf]
      %v2561 = vld [vmem:[%s301 + $0x300] sm:$0xf]
      %v2562 = vld [vmem:[%s301 + $0x304] sm:$0xf]
      %v2563 = vld [vmem:[%s301 + $0x308] sm:$0xf]
      %v2564 = vld [vmem:[%s301 + $0x30c] sm:$0xf]
      %v2761 = vunpack.c.l.b16 %v2369
      %v2762 = vunpack.c.l.b16 %v2370
      %v2763 = vunpack.c.l.b16 %v2371
      %v2764 = vunpack.c.l.b16 %v2372
      %v2765 = vunpack.c.l.b16 %v2373
      %v2766 = vunpack.c.l.b16 %v2374
      %v2767 = vunpack.c.l.b16 %v2375
      %v2768 = vunpack.c.l.b16 %v2376
      %v2769 = vunpack.c.l.b16 %v2377
      %v2770 = vunpack.c.l.b16 %v2378
      %v2771 = vunpack.c.l.b16 %v2379
      %v2772 = vunpack.c.l.b16 %v2380
      %v2773 = vunpack.c.l.b16 %v2381
      %v2774 = vunpack.c.l.b16 %v2382
      %v2775 = vunpack.c.l.b16 %v2383
      %v2776 = vunpack.c.l.b16 %v2384
      %v2777 = vunpack.c.l.b16 %v2385
      %v2778 = vunpack.c.l.b16 %v2386
      %v2779 = vunpack.c.l.b16 %v2387
      %v2780 = vunpack.c.l.b16 %v2388
      %v2781 = vunpack.c.l.b16 %v2389
      %v2782 = vunpack.c.l.b16 %v2390
      %v2783 = vunpack.c.l.b16 %v2391
      %v2784 = vunpack.c.l.b16 %v2392
      %v2785 = vunpack.c.l.b16 %v2393
      %v2786 = vunpack.c.l.b16 %v2394
      %v2787 = vunpack.c.l.b16 %v2395
      %v2788 = vunpack.c.l.b16 %v2396
      %v2789 = vunpack.c.l.b16 %v2397
      %v2790 = vunpack.c.l.b16 %v2398
      %v2791 = vunpack.c.l.b16 %v2399
      %v2792 = vunpack.c.l.b16 %v2400
      %v2793 = vunpack.c.l.b16 %v2401
      %v2794 = vunpack.c.l.b16 %v2402
      %v2795 = vunpack.c.l.b16 %v2403
      %v2796 = vunpack.c.l.b16 %v2404
      %v2797 = vunpack.c.l.b16 %v2405
      %v2798 = vunpack.c.l.b16 %v2406
      %v2799 = vunpack.c.l.b16 %v2407
      %v2800 = vunpack.c.l.b16 %v2408
      %v2801 = vunpack.c.l.b16 %v2409
      %v2802 = vunpack.c.l.b16 %v2410
      %v2803 = vunpack.c.l.b16 %v2411
      %v2804 = vunpack.c.l.b16 %v2412
      %v2805 = vunpack.c.l.b16 %v2413
      %v2806 = vunpack.c.l.b16 %v2414
      %v2807 = vunpack.c.l.b16 %v2415
      %v2808 = vunpack.c.l.b16 %v2416
      %v2809 = vunpack.c.l.b16 %v2417
      %v2810 = vunpack.c.l.b16 %v2418
      %v2811 = vunpack.c.l.b16 %v2419
      %v2812 = vunpack.c.l.b16 %v2420
      %v2813 = vunpack.c.l.b16 %v2421
      %v2814 = vunpack.c.l.b16 %v2422
      %v2815 = vunpack.c.l.b16 %v2423
      %v2816 = vunpack.c.l.b16 %v2424
      %v2817 = vunpack.c.l.b16 %v2425
      %v2818 = vunpack.c.l.b16 %v2426
      %v2819 = vunpack.c.l.b16 %v2427
      %v2820 = vunpack.c.l.b16 %v2428
      %v2821 = vunpack.c.l.b16 %v2429
      %v2822 = vunpack.c.l.b16 %v2430
      %v2823 = vunpack.c.l.b16 %v2431
      %v2824 = vunpack.c.l.b16 %v2432
      %v2825 = vunpack.c.l.b16 %v2433
      %v2826 = vunpack.c.l.b16 %v2434
      %v2827 = vunpack.c.l.b16 %v2435
      %v2828 = vunpack.c.l.b16 %v2436
      %v2829 = vunpack.c.l.b16 %v2437
      %v2830 = vunpack.c.l.b16 %v2438
      %v2831 = vunpack.c.l.b16 %v2439
      %v2832 = vunpack.c.l.b16 %v2440
      %v2833 = vunpack.c.l.b16 %v2441
      %v2834 = vunpack.c.l.b16 %v2442
      %v2835 = vunpack.c.l.b16 %v2443
      %v2836 = vunpack.c.l.b16 %v2444
      %v2837 = vunpack.c.l.b16 %v2445
      %v2838 = vunpack.c.l.b16 %v2446
      %v2839 = vunpack.c.l.b16 %v2447
      %v2840 = vunpack.c.l.b16 %v2448
      %v2841 = vunpack.c.l.b16 %v2449
      %v2842 = vunpack.c.l.b16 %v2450
      %v2843 = vunpack.c.l.b16 %v2451
      %v2844 = vunpack.c.l.b16 %v2452
      %v2845 = vunpack.c.l.b16 %v2453
      %v2846 = vunpack.c.l.b16 %v2454
      %v2847 = vunpack.c.l.b16 %v2455
      %v2848 = vunpack.c.l.b16 %v2456
      %v2849 = vunpack.c.l.b16 %v2457
      %v2850 = vunpack.c.l.b16 %v2458
      %v2851 = vunpack.c.l.b16 %v2459
      %v2852 = vunpack.c.l.b16 %v2460
      %v2853 = vunpack.c.l.b16 %v2461
      %v2854 = vunpack.c.l.b16 %v2462
      %v2855 = vunpack.c.l.b16 %v2463
      %v2856 = vunpack.c.l.b16 %v2464
      %v2857 = vunpack.c.l.b16 %v2465
      %v2858 = vunpack.c.l.b16 %v2466
      %v2859 = vunpack.c.l.b16 %v2467
      %v2860 = vunpack.c.l.b16 %v2468
      %v2861 = vunpack.c.l.b16 %v2469
      %v2862 = vunpack.c.l.b16 %v2470
      %v2863 = vunpack.c.l.b16 %v2471
      %v2864 = vunpack.c.l.b16 %v2472
      %v2865 = vunpack.c.l.b16 %v2473
      %v2866 = vunpack.c.l.b16 %v2474
      %v2867 = vunpack.c.l.b16 %v2475
      %v2868 = vunpack.c.l.b16 %v2476
      %v2869 = vunpack.c.l.b16 %v2477
      %v2870 = vunpack.c.l.b16 %v2478
      %v2871 = vunpack.c.l.b16 %v2479
      %v2872 = vunpack.c.l.b16 %v2480
      %v2873 = vunpack.c.l.b16 %v2481
      %v2874 = vunpack.c.l.b16 %v2482
      %v2875 = vunpack.c.l.b16 %v2483
      %v2876 = vunpack.c.l.b16 %v2484
      %v2877 = vunpack.c.l.b16 %v2485
      %v2878 = vunpack.c.l.b16 %v2486
      %v2879 = vunpack.c.l.b16 %v2487
      %v2880 = vunpack.c.l.b16 %v2488
      %v2881 = vunpack.c.l.b16 %v2489
      %v2882 = vunpack.c.l.b16 %v2490
      %v2883 = vunpack.c.l.b16 %v2491
      %v2884 = vunpack.c.l.b16 %v2492
      %v2885 = vunpack.c.l.b16 %v2493
      %v2886 = vunpack.c.l.b16 %v2494
      %v2887 = vunpack.c.l.b16 %v2495
      %v2888 = vunpack.c.l.b16 %v2496
      %v2889 = vunpack.c.l.b16 %v2497
      %v2890 = vunpack.c.l.b16 %v2498
      %v2891 = vunpack.c.l.b16 %v2499
      %v2892 = vunpack.c.l.b16 %v2500
      %v2893 = vunpack.c.l.b16 %v2501
      %v2894 = vunpack.c.l.b16 %v2502
      %v2895 = vunpack.c.l.b16 %v2503
      %v2896 = vunpack.c.l.b16 %v2504
      %v2897 = vunpack.c.l.b16 %v2505
      %v2898 = vunpack.c.l.b16 %v2506
      %v2899 = vunpack.c.l.b16 %v2507
      %v2900 = vunpack.c.l.b16 %v2508
      %v2901 = vunpack.c.l.b16 %v2509
      %v2902 = vunpack.c.l.b16 %v2510
      %v2903 = vunpack.c.l.b16 %v2511
      %v2904 = vunpack.c.l.b16 %v2512
      %v2905 = vunpack.c.l.b16 %v2513
      %v2906 = vunpack.c.l.b16 %v2514
      %v2907 = vunpack.c.l.b16 %v2515
      %v2908 = vunpack.c.l.b16 %v2516
      %v2909 = vunpack.c.l.b16 %v2517
      %v2910 = vunpack.c.l.b16 %v2518
      %v2911 = vunpack.c.l.b16 %v2519
      %v2912 = vunpack.c.l.b16 %v2520
      %v2913 = vunpack.c.l.b16 %v2521
      %v2914 = vunpack.c.l.b16 %v2522
      %v2915 = vunpack.c.l.b16 %v2523
      %v2916 = vunpack.c.l.b16 %v2524
      %v2917 = vunpack.c.l.b16 %v2525
      %v2918 = vunpack.c.l.b16 %v2526
      %v2919 = vunpack.c.l.b16 %v2527
      %v2920 = vunpack.c.l.b16 %v2528
      %v2921 = vunpack.c.l.b16 %v2529
      %v2922 = vunpack.c.l.b16 %v2530
      %v2923 = vunpack.c.l.b16 %v2531
      %v2924 = vunpack.c.l.b16 %v2532
      %v2925 = vunpack.c.l.b16 %v2533
      %v2926 = vunpack.c.l.b16 %v2534
      %v2927 = vunpack.c.l.b16 %v2535
      %v2928 = vunpack.c.l.b16 %v2536
      %v2929 = vunpack.c.l.b16 %v2537
      %v2930 = vunpack.c.l.b16 %v2538
      %v2931 = vunpack.c.l.b16 %v2539
      %v2932 = vunpack.c.l.b16 %v2540
      %v2933 = vunpack.c.l.b16 %v2541
      %v2934 = vunpack.c.l.b16 %v2542
      %v2935 = vunpack.c.l.b16 %v2543
      %v2936 = vunpack.c.l.b16 %v2544
      %v2937 = vunpack.c.l.b16 %v2545
      %v2938 = vunpack.c.l.b16 %v2546
      %v2939 = vunpack.c.l.b16 %v2547
      %v2940 = vunpack.c.l.b16 %v2548
      %v2941 = vunpack.c.l.b16 %v2549
      %v2942 = vunpack.c.l.b16 %v2550
      %v2943 = vunpack.c.l.b16 %v2551
      %v2944 = vunpack.c.l.b16 %v2552
      %v2945 = vunpack.c.l.b16 %v2553
      %v2946 = vunpack.c.l.b16 %v2554
      %v2947 = vunpack.c.l.b16 %v2555
      %v2948 = vunpack.c.l.b16 %v2556
      %v2949 = vunpack.c.l.b16 %v2557
      %v2950 = vunpack.c.l.b16 %v2558
      %v2951 = vunpack.c.l.b16 %v2559
      %v2952 = vunpack.c.l.b16 %v2560
      %v2953 = vunpack.c.l.b16 %v2561
      %v2954 = vunpack.c.l.b16 %v2562
      %v2955 = vunpack.c.l.b16 %v2563
      %v2956 = vunpack.c.l.b16 %v2564
      %v2957 = vpack.c.b16 %v2762, %v2761
      %v2958 = vpack.c.b16 %v2764, %v2763
      %v2959 = vpack.c.b16 %v2766, %v2765
      %v2960 = vpack.c.b16 %v2768, %v2767
      %v2961 = vpack.c.b16 %v2770, %v2769
      %v2962 = vpack.c.b16 %v2772, %v2771
      %v2963 = vpack.c.b16 %v2774, %v2773
      %v2964 = vpack.c.b16 %v2776, %v2775
      %v2965 = vpack.c.b16 %v2778, %v2777
      %v2966 = vpack.c.b16 %v2780, %v2779
      %v2967 = vpack.c.b16 %v2782, %v2781
      %v2968 = vpack.c.b16 %v2784, %v2783
      %v2969 = vpack.c.b16 %v2786, %v2785
      %v2970 = vpack.c.b16 %v2788, %v2787
      %v2971 = vpack.c.b16 %v2790, %v2789
      %v2972 = vpack.c.b16 %v2792, %v2791
      %v2973 = vpack.c.b16 %v2794, %v2793
      %v2974 = vpack.c.b16 %v2796, %v2795
      %v2975 = vpack.c.b16 %v2798, %v2797
      %v2976 = vpack.c.b16 %v2800, %v2799
      %v2977 = vpack.c.b16 %v2802, %v2801
      %v2978 = vpack.c.b16 %v2804, %v2803
      %v2979 = vpack.c.b16 %v2806, %v2805
      %v2980 = vpack.c.b16 %v2808, %v2807
      %v2981 = vpack.c.b16 %v2810, %v2809
      %v2982 = vpack.c.b16 %v2812, %v2811
      %v2983 = vpack.c.b16 %v2814, %v2813
      %v2984 = vpack.c.b16 %v2816, %v2815
      %v2985 = vpack.c.b16 %v2818, %v2817
      %v2986 = vpack.c.b16 %v2820, %v2819
      %v2987 = vpack.c.b16 %v2822, %v2821
      %v2988 = vpack.c.b16 %v2824, %v2823
      %v2989 = vpack.c.b16 %v2826, %v2825
      %v2990 = vpack.c.b16 %v2828, %v2827
      %v2991 = vpack.c.b16 %v2830, %v2829
      %v2992 = vpack.c.b16 %v2832, %v2831
      %v2993 = vpack.c.b16 %v2834, %v2833
      %v2994 = vpack.c.b16 %v2836, %v2835
      %v2995 = vpack.c.b16 %v2838, %v2837
      %v2996 = vpack.c.b16 %v2840, %v2839
      %v2997 = vpack.c.b16 %v2842, %v2841
      %v2998 = vpack.c.b16 %v2844, %v2843
      %v2999 = vpack.c.b16 %v2846, %v2845
      %v3000 = vpack.c.b16 %v2848, %v2847
      %v3001 = vpack.c.b16 %v2850, %v2849
      %v3002 = vpack.c.b16 %v2852, %v2851
      %v3003 = vpack.c.b16 %v2854, %v2853
      %v3004 = vpack.c.b16 %v2856, %v2855
      %v3005 = vpack.c.b16 %v2858, %v2857
      %v3006 = vpack.c.b16 %v2860, %v2859
      %v3007 = vpack.c.b16 %v2862, %v2861
      %v3008 = vpack.c.b16 %v2864, %v2863
      %v3009 = vpack.c.b16 %v2866, %v2865
      %v3010 = vpack.c.b16 %v2868, %v2867
      %v3011 = vpack.c.b16 %v2870, %v2869
      %v3012 = vpack.c.b16 %v2872, %v2871
      %v3013 = vpack.c.b16 %v2874, %v2873
      %v3014 = vpack.c.b16 %v2876, %v2875
      %v3015 = vpack.c.b16 %v2878, %v2877
      %v3016 = vpack.c.b16 %v2880, %v2879
      %v3017 = vpack.c.b16 %v2882, %v2881
      %v3018 = vpack.c.b16 %v2884, %v2883
      %v3019 = vpack.c.b16 %v2886, %v2885
      %v3020 = vpack.c.b16 %v2888, %v2887
      %v3021 = vpack.c.b16 %v2890, %v2889
      %v3022 = vpack.c.b16 %v2892, %v2891
      %v3023 = vpack.c.b16 %v2894, %v2893
      %v3024 = vpack.c.b16 %v2896, %v2895
      %v3025 = vpack.c.b16 %v2898, %v2897
      %v3026 = vpack.c.b16 %v2900, %v2899
      %v3027 = vpack.c.b16 %v2902, %v2901
      %v3028 = vpack.c.b16 %v2904, %v2903
      %v3029 = vpack.c.b16 %v2906, %v2905
      %v3030 = vpack.c.b16 %v2908, %v2907
      %v3031 = vpack.c.b16 %v2910, %v2909
      %v3032 = vpack.c.b16 %v2912, %v2911
      %v3033 = vpack.c.b16 %v2914, %v2913
      %v3034 = vpack.c.b16 %v2916, %v2915
      %v3035 = vpack.c.b16 %v2918, %v2917
      %v3036 = vpack.c.b16 %v2920, %v2919
      %v3037 = vpack.c.b16 %v2922, %v2921
      %v3038 = vpack.c.b16 %v2924, %v2923
      %v3039 = vpack.c.b16 %v2926, %v2925
      %v3040 = vpack.c.b16 %v2928, %v2927
      %v3041 = vpack.c.b16 %v2930, %v2929
      %v3042 = vpack.c.b16 %v2932, %v2931
      %v3043 = vpack.c.b16 %v2934, %v2933
      %v3044 = vpack.c.b16 %v2936, %v2935
      %v3045 = vpack.c.b16 %v2938, %v2937
      %v3046 = vpack.c.b16 %v2940, %v2939
      %v3047 = vpack.c.b16 %v2942, %v2941
      %v3048 = vpack.c.b16 %v2944, %v2943
      %v3049 = vpack.c.b16 %v2946, %v2945
      %v3050 = vpack.c.b16 %v2948, %v2947
      %v3051 = vpack.c.b16 %v2950, %v2949
      %v3052 = vpack.c.b16 %v2952, %v2951
      %v3053 = vpack.c.b16 %v2954, %v2953
      %v3054 = vpack.c.b16 %v2956, %v2955
      %v3056 = vsel %vm1054, %v2957, 0
      %v3059 = vsel %vm1054, %v2958, 0
      %v3062 = vsel %vm1054, %v2959, 0
      %v3065 = vsel %vm1054, %v2960, 0
      %v3068 = vsel %vm1054, %v2961, 0
      %v3071 = vsel %vm1054, %v2962, 0
      %v3074 = vsel %vm1054, %v2963, 0
      %v3077 = vsel %vm1054, %v2964, 0
      %v3080 = vsel %vm1054, %v2965, 0
      %v3083 = vsel %vm1054, %v2966, 0
      %v3086 = vsel %vm1054, %v2967, 0
      %v3089 = vsel %vm1054, %v2968, 0
      %v3092 = vsel %vm1054, %v2969, 0
      %v3095 = vsel %vm1054, %v2970, 0
      %v3098 = vsel %vm1054, %v2971, 0
      %v3101 = vsel %vm1054, %v2972, 0
      %v3104 = vsel %vm1054, %v2973, 0
      %v3107 = vsel %vm1054, %v2974, 0
      %v3110 = vsel %vm1054, %v2975, 0
      %v3113 = vsel %vm1054, %v2976, 0
      %v3116 = vsel %vm1054, %v2977, 0
      %v3119 = vsel %vm1054, %v2978, 0
      %v3122 = vsel %vm1054, %v2979, 0
      %v3125 = vsel %vm1054, %v2980, 0
      %v3128 = vsel %vm1054, %v2981, 0
      %v3131 = vsel %vm1054, %v2982, 0
      %v3134 = vsel %vm1054, %v2983, 0
      %v3137 = vsel %vm1054, %v2984, 0
      %v3140 = vsel %vm1054, %v2985, 0
      %v3143 = vsel %vm1054, %v2986, 0
      %v3146 = vsel %vm1054, %v2987, 0
      %v3149 = vsel %vm1054, %v2988, 0
      %v3152 = vsel %vm1054, %v2989, 0
      %v3155 = vsel %vm1054, %v2990, 0
      %v3158 = vsel %vm1054, %v2991, 0
      %v3161 = vsel %vm1054, %v2992, 0
      %v3164 = vsel %vm1054, %v2993, 0
      %v3167 = vsel %vm1054, %v2994, 0
      %v3170 = vsel %vm1054, %v2995, 0
      %v3173 = vsel %vm1054, %v2996, 0
      %v3176 = vsel %vm1054, %v2997, 0
      %v3179 = vsel %vm1054, %v2998, 0
      %v3182 = vsel %vm1054, %v2999, 0
      %v3185 = vsel %vm1054, %v3000, 0
      %v3188 = vsel %vm1054, %v3001, 0
      %v3191 = vsel %vm1054, %v3002, 0
      %v3194 = vsel %vm1054, %v3003, 0
      %v3197 = vsel %vm1054, %v3004, 0
      %v3200 = vsel %vm1054, %v3005, 0
      %v3203 = vsel %vm1054, %v3006, 0
      %v3206 = vsel %vm1054, %v3007, 0
      %v3209 = vsel %vm1054, %v3008, 0
      %v3212 = vsel %vm1054, %v3009, 0
      %v3215 = vsel %vm1054, %v3010, 0
      %v3218 = vsel %vm1054, %v3011, 0
      %v3221 = vsel %vm1054, %v3012, 0
      %v3224 = vsel %vm1054, %v3013, 0
      %v3227 = vsel %vm1054, %v3014, 0
      %v3230 = vsel %vm1054, %v3015, 0
      %v3233 = vsel %vm1054, %v3016, 0
      %v3236 = vsel %vm1054, %v3017, 0
      %v3239 = vsel %vm1054, %v3018, 0
      %v3242 = vsel %vm1054, %v3019, 0
      %v3245 = vsel %vm1054, %v3020, 0
      %v3248 = vsel %vm1054, %v3021, 0
      %v3251 = vsel %vm1054, %v3022, 0
      %v3254 = vsel %vm1054, %v3023, 0
      %v3257 = vsel %vm1054, %v3024, 0
      %v3260 = vsel %vm1054, %v3025, 0
      %v3263 = vsel %vm1054, %v3026, 0
      %v3266 = vsel %vm1054, %v3027, 0
      %v3269 = vsel %vm1054, %v3028, 0
      %v3272 = vsel %vm1054, %v3029, 0
      %v3275 = vsel %vm1054, %v3030, 0
      %v3278 = vsel %vm1054, %v3031, 0
      %v3281 = vsel %vm1054, %v3032, 0
      %v3284 = vsel %vm1054, %v3033, 0
      %v3287 = vsel %vm1054, %v3034, 0
      %v3290 = vsel %vm1054, %v3035, 0
      %v3293 = vsel %vm1054, %v3036, 0
      %v3296 = vsel %vm1054, %v3037, 0
      %v3299 = vsel %vm1054, %v3038, 0
      %v3302 = vsel %vm1054, %v3039, 0
      %v3305 = vsel %vm1054, %v3040, 0
      %v3308 = vsel %vm1054, %v3041, 0
      %v3311 = vsel %vm1054, %v3042, 0
      %v3314 = vsel %vm1054, %v3043, 0
      %v3317 = vsel %vm1054, %v3044, 0
      %v3320 = vsel %vm1054, %v3045, 0
      %v3323 = vsel %vm1054, %v3046, 0
      %v3326 = vsel %vm1054, %v3047, 0
      %v3329 = vsel %vm1054, %v3048, 0
      %v3332 = vsel %vm1054, %v3049, 0
      %v3335 = vsel %vm1054, %v3050, 0
      %v3338 = vsel %vm1054, %v3051, 0
      %v3341 = vsel %vm1054, %v3052, 0
      %v3344 = vsel %vm1054, %v3053, 0
      %v3347 = vsel %vm1054, %v3054, 0
      %3349 = vmatprep.subr.bf16.mxu0 0
      %3350 = vmatpush1.bf16.msra.mxu0 %v1045
      %3351 = vmatprep.subr.bf16.mxu0 0
      %3352 = vmatpush1.bf16.msra.mxu0 %v1046
      %3353 = vmatprep.subr.bf16.mxu0 0
      %3354 = vmatpush1.bf16.msra.mxu0 %v1047
      %3355 = vmatprep.subr.bf16.mxu0 0
      %3356 = vmatpush1.bf16.msra.mxu0 %v1048
      %3357 = vmatprep.subr.bf16.mxu0 0
      %3358 = vmatpush1.bf16.msra.mxu0 %v1354
      %3359 = vmatprep.subr.bf16.mxu0 0
      %3360 = vmatpush1.bf16.msra.mxu0 0
      %3361 = vmatprep.subr.bf16.mxu0 0
      %3362 = vmatpush1.bf16.msra.mxu0 0
      %3363 = vmatprep.subr.bf16.mxu0 0
      %3364 = vmatpush1.bf16.msra.mxu0 0
      %3365 = vmatprep.subr.bf16.mxu0 0
      %3366 = vmatpush1.bf16.msra.mxu0 0
      %3367 = vmatprep.subr.bf16.mxu0 0
      %3368 = vmatpush1.bf16.msra.mxu0 0
      %3369 = vmatprep.subr.bf16.mxu0 0
      %3370 = vmatpush1.bf16.msra.mxu0 0
      %3371 = vmatprep.subr.bf16.mxu0 0
      %3372 = vmatpush1.bf16.msra.mxu0 0
      %3373 = vmatprep.subr.bf16.mxu0 0
      %3374 = vmatpush1.bf16.msra.mxu0 0
      %3375 = vmatprep.subr.bf16.mxu0 0
      %3376 = vmatpush1.bf16.msra.mxu0 0
      %3377 = vmatprep.subr.bf16.mxu0 0
      %3378 = vmatpush1.bf16.msra.mxu0 0
      %3379 = vmatprep.subr.bf16.mxu0 0
      %3380 = vmatpush1.bf16.msra.mxu0 0
      %3381 = vmatprep.mubr.bf16.mxu0 0
      %3382 = vmatmul.mubr.bf16.gmra.mrb[0].mxu0 %v3056
      %v3383 = vpop.f32.mrb[0].mxu0
      %v3384 = vadd.f32 %v533, %v3383
      %v3385 = vpop.f32.mrb[0].mxu0
      %v3386 = vpop.f32.mrb[0].mxu0
      %v3387 = vadd.f32 %v533, %v3386
      %v3388 = vpop.f32.mrb[0].mxu0
      %3389 = vmatprep.mubr.bf16.mxu0 0
      %3390 = vmatmul.mubr.bf16.gmra.mrb[0].mxu0 %v3059
      %v3391 = vpop.f32.mrb[0].mxu0
      %v3392 = vadd.f32 %v533, %v3391
      %v3393 = vpop.f32.mrb[0].mxu0
      %v3394 = vpop.f32.mrb[0].mxu0
      %v3395 = vadd.f32 %v533, %v3394
      %v3396 = vpop.f32.mrb[0].mxu0
      %3397 = vmatprep.mubr.bf16.mxu0 0
      %3398 = vmatmul.mubr.bf16.gmra.mrb[0].mxu0 %v3062
      %v3399 = vpop.f32.mrb[0].mxu0
      %v3400 = vadd.f32 %v533, %v3399
      %v3401 = vpop.f32.mrb[0].mxu0
      %v3402 = vpop.f32.mrb[0].mxu0
      %v3403 = vadd.f32 %v533, %v3402
      %v3404 = vpop.f32.mrb[0].mxu0
      %3405 = vmatprep.mubr.bf16.mxu0 0
      %3406 = vmatmul.mubr.bf16.gmra.mrb[0].mxu0 %v3065
      %v3407 = vpop.f32.mrb[0].mxu0
      %v3408 = vadd.f32 %v533, %v3407
      %v3409 = vpop.f32.mrb[0].mxu0
      %v3410 = vpop.f32.mrb[0].mxu0
      %v3411 = vadd.f32 %v533, %v3410
      %v3412 = vpop.f32.mrb[0].mxu0
      %3413 = vmatprep.mubr.bf16.mxu0 0
      %3414 = vmatmul.mubr.bf16.gmra.mrb[0].mxu0 %v3068
      %v3415 = vpop.f32.mrb[0].mxu0
      %v3416 = vadd.f32 %v533, %v3415
      %v3417 = vpop.f32.mrb[0].mxu0
      %v3418 = vpop.f32.mrb[0].mxu0
      %v3419 = vadd.f32 %v533, %v3418
      %v3420 = vpop.f32.mrb[0].mxu0
      %3421 = vmatprep.mubr.bf16.mxu0 0
      %3422 = vmatmul.mubr.bf16.gmra.mrb[0].mxu0 %v3071
      %v3423 = vpop.f32.mrb[0].mxu0
      %v3424 = vadd.f32 %v533, %v3423
      %v3425 = vpop.f32.mrb[0].mxu0
      %v3426 = vpop.f32.mrb[0].mxu0
      %v3427 = vadd.f32 %v533, %v3426
      %v3428 = vpop.f32.mrb[0].mxu0
      %3429 = vmatprep.mubr.bf16.mxu0 0
      %3430 = vmatmul.mubr.bf16.gmra.mrb[0].mxu0 %v3074
      %v3431 = vpop.f32.mrb[0].mxu0
      %v3432 = vadd.f32 %v533, %v3431
      %v3433 = vpop.f32.mrb[0].mxu0
      %v3434 = vpop.f32.mrb[0].mxu0
      %v3435 = vadd.f32 %v533, %v3434
      %v3436 = vpop.f32.mrb[0].mxu0
      %3437 = vmatprep.mubr.bf16.mxu0 0
      %3438 = vmatmul.mubr.bf16.gmra.mrb[0].mxu0 %v3077
      %v3439 = vpop.f32.mrb[0].mxu0
      %v3440 = vadd.f32 %v533, %v3439
      %v3441 = vpop.f32.mrb[0].mxu0
      %v3442 = vpop.f32.mrb[0].mxu0
      %v3443 = vadd.f32 %v533, %v3442
      %v3444 = vpop.f32.mrb[0].mxu0
      %3445 = vmatprep.mubr.bf16.mxu0 0
      %3446 = vmatmul.mubr.bf16.gmra.mrb[0].mxu0 %v3080
      %v3447 = vpop.f32.mrb[0].mxu0
      %v3448 = vadd.f32 %v533, %v3447
      %v3449 = vpop.f32.mrb[0].mxu0
      %v3450 = vpop.f32.mrb[0].mxu0
      %v3451 = vadd.f32 %v533, %v3450
      %v3452 = vpop.f32.mrb[0].mxu0
      %3453 = vmatprep.mubr.bf16.mxu0 0
      %3454 = vmatmul.mubr.bf16.gmra.mrb[0].mxu0 %v3083
      %v3455 = vpop.f32.mrb[0].mxu0
      %v3456 = vadd.f32 %v533, %v3455
      %v3457 = vpop.f32.mrb[0].mxu0
      %v3458 = vpop.f32.mrb[0].mxu0
      %v3459 = vadd.f32 %v533, %v3458
      %v3460 = vpop.f32.mrb[0].mxu0
      %3461 = vmatprep.mubr.bf16.mxu0 0
      %3462 = vmatmul.mubr.bf16.gmra.mrb[0].mxu0 %v3086
      %v3463 = vpop.f32.mrb[0].mxu0
      %v3464 = vadd.f32 %v533, %v3463
      %v3465 = vpop.f32.mrb[0].mxu0
      %v3466 = vpop.f32.mrb[0].mxu0
      %v3467 = vadd.f32 %v533, %v3466
      %v3468 = vpop.f32.mrb[0].mxu0
      %3469 = vmatprep.mubr.bf16.mxu0 0
      %3470 = vmatmul.mubr.bf16.gmra.mrb[0].mxu0 %v3089
      %v3471 = vpop.f32.mrb[0].mxu0
      %v3472 = vadd.f32 %v533, %v3471
      %v3473 = vpop.f32.mrb[0].mxu0
      %v3474 = vpop.f32.mrb[0].mxu0
      %v3475 = vadd.f32 %v533, %v3474
      %v3476 = vpop.f32.mrb[0].mxu0
      %3477 = vmatprep.mubr.bf16.mxu0 0
      %3478 = vmatmul.mubr.bf16.gmra.mrb[0].mxu0 %v3092
      %v3479 = vpop.f32.mrb[0].mxu0
      %v3480 = vadd.f32 %v533, %v3479
      %v3481 = vpop.f32.mrb[0].mxu0
      %v3482 = vpop.f32.mrb[0].mxu0
      %v3483 = vadd.f32 %v533, %v3482
      %v3484 = vpop.f32.mrb[0].mxu0
      %3485 = vmatprep.mubr.bf16.mxu0 0
      %3486 = vmatmul.mubr.bf16.gmra.mrb[0].mxu0 %v3095
      %v3487 = vpop.f32.mrb[0].mxu0
      %v3488 = vadd.f32 %v533, %v3487
      %v3489 = vpop.f32.mrb[0].mxu0
      %v3490 = vpop.f32.mrb[0].mxu0
      %v3491 = vadd.f32 %v533, %v3490
      %v3492 = vpop.f32.mrb[0].mxu0
      %3493 = vmatprep.mubr.bf16.mxu0 0
      %3494 = vmatmul.mubr.bf16.gmra.mrb[0].mxu0 %v3098
      %v3495 = vpop.f32.mrb[0].mxu0
      %v3496 = vadd.f32 %v533, %v3495
      %v3497 = vpop.f32.mrb[0].mxu0
      %v3498 = vpop.f32.mrb[0].mxu0
      %v3499 = vadd.f32 %v533, %v3498
      %v3500 = vpop.f32.mrb[0].mxu0
      %3501 = vmatprep.mubr.bf16.mxu0 0
      %3502 = vmatmul.mubr.bf16.gmra.mrb[0].mxu0 %v3101
      %v3503 = vpop.f32.mrb[0].mxu0
      %v3504 = vadd.f32 %v533, %v3503
      %v3505 = vpop.f32.mrb[0].mxu0
      %v3506 = vpop.f32.mrb[0].mxu0
      %v3507 = vadd.f32 %v533, %v3506
      %v3508 = vpop.f32.mrb[0].mxu0
      %3509 = vmatprep.mubr.bf16.mxu0 0
      %3510 = vmatmul.mubr.bf16.gmra.mrb[0].mxu0 %v3104
      %v3511 = vpop.f32.mrb[0].mxu0
      %v3512 = vadd.f32 %v533, %v3511
      %v3513 = vpop.f32.mrb[0].mxu0
      %v3514 = vpop.f32.mrb[0].mxu0
      %v3515 = vadd.f32 %v533, %v3514
      %v3516 = vpop.f32.mrb[0].mxu0
      %3517 = vmatprep.mubr.bf16.mxu0 0
      %3518 = vmatmul.mubr.bf16.gmra.mrb[0].mxu0 %v3107
      %v3519 = vpop.f32.mrb[0].mxu0
      %v3520 = vadd.f32 %v533, %v3519
      %v3521 = vpop.f32.mrb[0].mxu0
      %v3522 = vpop.f32.mrb[0].mxu0
      %v3523 = vadd.f32 %v533, %v3522
      %v3524 = vpop.f32.mrb[0].mxu0
      %3525 = vmatprep.mubr.bf16.mxu0 0
      %3526 = vmatmul.mubr.bf16.gmra.mrb[0].mxu0 %v3110
      %v3527 = vpop.f32.mrb[0].mxu0
      %v3528 = vadd.f32 %v533, %v3527
      %v3529 = vpop.f32.mrb[0].mxu0
      %v3530 = vpop.f32.mrb[0].mxu0
      %v3531 = vadd.f32 %v533, %v3530
      %v3532 = vpop.f32.mrb[0].mxu0
      %3533 = vmatprep.mubr.bf16.mxu0 0
      %3534 = vmatmul.mubr.bf16.gmra.mrb[0].mxu0 %v3113
      %v3535 = vpop.f32.mrb[0].mxu0
      %v3536 = vadd.f32 %v533, %v3535
      %v3537 = vpop.f32.mrb[0].mxu0
      %v3538 = vpop.f32.mrb[0].mxu0
      %v3539 = vadd.f32 %v533, %v3538
      %v3540 = vpop.f32.mrb[0].mxu0
      %3541 = vmatprep.mubr.bf16.mxu0 0
      %3542 = vmatmul.mubr.bf16.gmra.mrb[0].mxu0 %v3116
      %v3543 = vpop.f32.mrb[0].mxu0
      %v3544 = vadd.f32 %v533, %v3543
      %v3545 = vpop.f32.mrb[0].mxu0
      %v3546 = vpop.f32.mrb[0].mxu0
      %v3547 = vadd.f32 %v533, %v3546
      %v3548 = vpop.f32.mrb[0].mxu0
      %3549 = vmatprep.mubr.bf16.mxu0 0
      %3550 = vmatmul.mubr.bf16.gmra.mrb[0].mxu0 %v3119
      %v3551 = vpop.f32.mrb[0].mxu0
      %v3552 = vadd.f32 %v533, %v3551
      %v3553 = vpop.f32.mrb[0].mxu0
      %v3554 = vpop.f32.mrb[0].mxu0
      %v3555 = vadd.f32 %v533, %v3554
      %v3556 = vpop.f32.mrb[0].mxu0
      %3557 = vmatprep.mubr.bf16.mxu0 0
      %3558 = vmatmul.mubr.bf16.gmra.mrb[0].mxu0 %v3122
      %v3559 = vpop.f32.mrb[0].mxu0
      %v3560 = vadd.f32 %v533, %v3559
      %v3561 = vpop.f32.mrb[0].mxu0
      %v3562 = vpop.f32.mrb[0].mxu0
      %v3563 = vadd.f32 %v533, %v3562
      %v3564 = vpop.f32.mrb[0].mxu0
      %3565 = vmatprep.mubr.bf16.mxu0 0
      %3566 = vmatmul.mubr.bf16.gmra.mrb[0].mxu0 %v3125
      %v3567 = vpop.f32.mrb[0].mxu0
      %v3568 = vadd.f32 %v533, %v3567
      %v3569 = vpop.f32.mrb[0].mxu0
      %v3570 = vpop.f32.mrb[0].mxu0
      %v3571 = vadd.f32 %v533, %v3570
      %v3572 = vpop.f32.mrb[0].mxu0
      %3573 = vmatprep.mubr.bf16.mxu0 0
      %3574 = vmatmul.mubr.bf16.gmra.mrb[0].mxu0 %v3128
      %v3575 = vpop.f32.mrb[0].mxu0
      %v3576 = vadd.f32 %v533, %v3575
      %v3577 = vpop.f32.mrb[0].mxu0
      %v3578 = vpop.f32.mrb[0].mxu0
      %v3579 = vadd.f32 %v533, %v3578
      %v3580 = vpop.f32.mrb[0].mxu0
      %3581 = vmatprep.mubr.bf16.mxu0 0
      %3582 = vmatmul.mubr.bf16.gmra.mrb[0].mxu0 %v3131
      %v3583 = vpop.f32.mrb[0].mxu0
      %v3584 = vadd.f32 %v533, %v3583
      %v3585 = vpop.f32.mrb[0].mxu0
      %v3586 = vpop.f32.mrb[0].mxu0
      %v3587 = vadd.f32 %v533, %v3586
      %v3588 = vpop.f32.mrb[0].mxu0
      %3589 = vmatprep.mubr.bf16.mxu0 0
      %3590 = vmatmul.mubr.bf16.gmra.mrb[0].mxu0 %v3134
      %v3591 = vpop.f32.mrb[0].mxu0
      %v3592 = vadd.f32 %v533, %v3591
      %v3593 = vpop.f32.mrb[0].mxu0
      %v3594 = vpop.f32.mrb[0].mxu0
      %v3595 = vadd.f32 %v533, %v3594
      %v3596 = vpop.f32.mrb[0].mxu0
      %3597 = vmatprep.mubr.bf16.mxu0 0
      %3598 = vmatmul.mubr.bf16.gmra.mrb[0].mxu0 %v3137
      %v3599 = vpop.f32.mrb[0].mxu0
      %v3600 = vadd.f32 %v533, %v3599
      %v3601 = vpop.f32.mrb[0].mxu0
      %v3602 = vpop.f32.mrb[0].mxu0
      %v3603 = vadd.f32 %v533, %v3602
      %v3604 = vpop.f32.mrb[0].mxu0
      %3605 = vmatprep.mubr.bf16.mxu0 0
      %3606 = vmatmul.mubr.bf16.gmra.mrb[0].mxu0 %v3140
      %v3607 = vpop.f32.mrb[0].mxu0
      %v3608 = vadd.f32 %v533, %v3607
      %v3609 = vpop.f32.mrb[0].mxu0
      %v3610 = vpop.f32.mrb[0].mxu0
      %v3611 = vadd.f32 %v533, %v3610
      %v3612 = vpop.f32.mrb[0].mxu0
      %3613 = vmatprep.mubr.bf16.mxu0 0
      %3614 = vmatmul.mubr.bf16.gmra.mrb[0].mxu0 %v3143
      %v3615 = vpop.f32.mrb[0].mxu0
      %v3616 = vadd.f32 %v533, %v3615
      %v3617 = vpop.f32.mrb[0].mxu0
      %v3618 = vpop.f32.mrb[0].mxu0
      %v3619 = vadd.f32 %v533, %v3618
      %v3620 = vpop.f32.mrb[0].mxu0
      %3621 = vmatprep.mubr.bf16.mxu0 0
      %3622 = vmatmul.mubr.bf16.gmra.mrb[0].mxu0 %v3146
      %v3623 = vpop.f32.mrb[0].mxu0
      %v3624 = vadd.f32 %v533, %v3623
      %v3625 = vpop.f32.mrb[0].mxu0
      %v3626 = vpop.f32.mrb[0].mxu0
      %v3627 = vadd.f32 %v533, %v3626
      %v3628 = vpop.f32.mrb[0].mxu0
      %3629 = vmatprep.mubr.bf16.mxu0 0
      %3630 = vmatmul.mubr.bf16.gmra.mrb[0].mxu0 %v3149
      %v3631 = vpop.f32.mrb[0].mxu0
      %v3632 = vadd.f32 %v533, %v3631
      %v3633 = vpop.f32.mrb[0].mxu0
      %v3634 = vpop.f32.mrb[0].mxu0
      %v3635 = vadd.f32 %v533, %v3634
      %v3636 = vpop.f32.mrb[0].mxu0
      %3637 = vmatprep.mubr.bf16.mxu0 0
      %3638 = vmatmul.mubr.bf16.gmra.mrb[0].mxu0 %v3152
      %v3639 = vpop.f32.mrb[0].mxu0
      %v3640 = vadd.f32 %v533, %v3639
      %v3641 = vpop.f32.mrb[0].mxu0
      %v3642 = vpop.f32.mrb[0].mxu0
      %v3643 = vadd.f32 %v533, %v3642
      %v3644 = vpop.f32.mrb[0].mxu0
      %3645 = vmatprep.mubr.bf16.mxu0 0
      %3646 = vmatmul.mubr.bf16.gmra.mrb[0].mxu0 %v3155
      %v3647 = vpop.f32.mrb[0].mxu0
      %v3648 = vadd.f32 %v533, %v3647
      %v3649 = vpop.f32.mrb[0].mxu0
      %v3650 = vpop.f32.mrb[0].mxu0
      %v3651 = vadd.f32 %v533, %v3650
      %v3652 = vpop.f32.mrb[0].mxu0
      %3653 = vmatprep.mubr.bf16.mxu0 0
      %3654 = vmatmul.mubr.bf16.gmra.mrb[0].mxu0 %v3158
      %v3655 = vpop.f32.mrb[0].mxu0
      %v3656 = vadd.f32 %v533, %v3655
      %v3657 = vpop.f32.mrb[0].mxu0
      %v3658 = vpop.f32.mrb[0].mxu0
      %v3659 = vadd.f32 %v533, %v3658
      %v3660 = vpop.f32.mrb[0].mxu0
      %3661 = vmatprep.mubr.bf16.mxu0 0
      %3662 = vmatmul.mubr.bf16.gmra.mrb[0].mxu0 %v3161
      %v3663 = vpop.f32.mrb[0].mxu0
      %v3664 = vadd.f32 %v533, %v3663
      %v3665 = vpop.f32.mrb[0].mxu0
      %v3666 = vpop.f32.mrb[0].mxu0
      %v3667 = vadd.f32 %v533, %v3666
      %v3668 = vpop.f32.mrb[0].mxu0
      %3669 = vmatprep.mubr.bf16.mxu0 0
      %3670 = vmatmul.mubr.bf16.gmra.mrb[0].mxu0 %v3164
      %v3671 = vpop.f32.mrb[0].mxu0
      %v3672 = vadd.f32 %v533, %v3671
      %v3673 = vpop.f32.mrb[0].mxu0
      %v3674 = vpop.f32.mrb[0].mxu0
      %v3675 = vadd.f32 %v533, %v3674
      %v3676 = vpop.f32.mrb[0].mxu0
      %3677 = vmatprep.mubr.bf16.mxu0 0
      %3678 = vmatmul.mubr.bf16.gmra.mrb[0].mxu0 %v3167
      %v3679 = vpop.f32.mrb[0].mxu0
      %v3680 = vadd.f32 %v533, %v3679
      %v3681 = vpop.f32.mrb[0].mxu0
      %v3682 = vpop.f32.mrb[0].mxu0
      %v3683 = vadd.f32 %v533, %v3682
      %v3684 = vpop.f32.mrb[0].mxu0
      %3685 = vmatprep.mubr.bf16.mxu0 0
      %3686 = vmatmul.mubr.bf16.gmra.mrb[0].mxu0 %v3170
      %v3687 = vpop.f32.mrb[0].mxu0
      %v3688 = vadd.f32 %v533, %v3687
      %v3689 = vpop.f32.mrb[0].mxu0
      %v3690 = vpop.f32.mrb[0].mxu0
      %v3691 = vadd.f32 %v533, %v3690
      %v3692 = vpop.f32.mrb[0].mxu0
      %3693 = vmatprep.mubr.bf16.mxu0 0
      %3694 = vmatmul.mubr.bf16.gmra.mrb[0].mxu0 %v3173
      %v3695 = vpop.f32.mrb[0].mxu0
      %v3696 = vadd.f32 %v533, %v3695
      %v3697 = vpop.f32.mrb[0].mxu0
      %v3698 = vpop.f32.mrb[0].mxu0
      %v3699 = vadd.f32 %v533, %v3698
      %v3700 = vpop.f32.mrb[0].mxu0
      %3701 = vmatprep.mubr.bf16.mxu0 0
      %3702 = vmatmul.mubr.bf16.gmra.mrb[0].mxu0 %v3176
      %v3703 = vpop.f32.mrb[0].mxu0
      %v3704 = vadd.f32 %v533, %v3703
      %v3705 = vpop.f32.mrb[0].mxu0
      %v3706 = vpop.f32.mrb[0].mxu0
      %v3707 = vadd.f32 %v533, %v3706
      %v3708 = vpop.f32.mrb[0].mxu0
      %3709 = vmatprep.mubr.bf16.mxu0 0
      %3710 = vmatmul.mubr.bf16.gmra.mrb[0].mxu0 %v3179
      %v3711 = vpop.f32.mrb[0].mxu0
      %v3712 = vadd.f32 %v533, %v3711
      %v3713 = vpop.f32.mrb[0].mxu0
      %v3714 = vpop.f32.mrb[0].mxu0
      %v3715 = vadd.f32 %v533, %v3714
      %v3716 = vpop.f32.mrb[0].mxu0
      %3717 = vmatprep.mubr.bf16.mxu0 0
      %3718 = vmatmul.mubr.bf16.gmra.mrb[0].mxu0 %v3182
      %v3719 = vpop.f32.mrb[0].mxu0
      %v3720 = vadd.f32 %v533, %v3719
      %v3721 = vpop.f32.mrb[0].mxu0
      %v3722 = vpop.f32.mrb[0].mxu0
      %v3723 = vadd.f32 %v533, %v3722
      %v3724 = vpop.f32.mrb[0].mxu0
      %3725 = vmatprep.mubr.bf16.mxu0 0
      %3726 = vmatmul.mubr.bf16.gmra.mrb[0].mxu0 %v3185
      %v3727 = vpop.f32.mrb[0].mxu0
      %v3728 = vadd.f32 %v533, %v3727
      %v3729 = vpop.f32.mrb[0].mxu0
      %v3730 = vpop.f32.mrb[0].mxu0
      %v3731 = vadd.f32 %v533, %v3730
      %v3732 = vpop.f32.mrb[0].mxu0
      %3733 = vmatprep.mubr.bf16.mxu0 0
      %3734 = vmatmul.mubr.bf16.gmra.mrb[0].mxu0 %v3188
      %v3735 = vpop.f32.mrb[0].mxu0
      %v3736 = vadd.f32 %v533, %v3735
      %v3737 = vpop.f32.mrb[0].mxu0
      %v3738 = vpop.f32.mrb[0].mxu0
      %v3739 = vadd.f32 %v533, %v3738
      %v3740 = vpop.f32.mrb[0].mxu0
      %3741 = vmatprep.mubr.bf16.mxu0 0
      %3742 = vmatmul.mubr.bf16.gmra.mrb[0].mxu0 %v3191
      %v3743 = vpop.f32.mrb[0].mxu0
      %v3744 = vadd.f32 %v533, %v3743
      %v3745 = vpop.f32.mrb[0].mxu0
      %v3746 = vpop.f32.mrb[0].mxu0
      %v3747 = vadd.f32 %v533, %v3746
      %v3748 = vpop.f32.mrb[0].mxu0
      %3749 = vmatprep.mubr.bf16.mxu0 0
      %3750 = vmatmul.mubr.bf16.gmra.mrb[0].mxu0 %v3194
      %v3751 = vpop.f32.mrb[0].mxu0
      %v3752 = vadd.f32 %v533, %v3751
      %v3753 = vpop.f32.mrb[0].mxu0
      %v3754 = vpop.f32.mrb[0].mxu0
      %v3755 = vadd.f32 %v533, %v3754
      %v3756 = vpop.f32.mrb[0].mxu0
      %3757 = vmatprep.mubr.bf16.mxu0 0
      %3758 = vmatmul.mubr.bf16.gmra.mrb[0].mxu0 %v3197
      %v3759 = vpop.f32.mrb[0].mxu0
      %v3760 = vadd.f32 %v533, %v3759
      %v3761 = vpop.f32.mrb[0].mxu0
      %v3762 = vpop.f32.mrb[0].mxu0
      %v3763 = vadd.f32 %v533, %v3762
      %v3764 = vpop.f32.mrb[0].mxu0
      %3765 = vmatprep.mubr.bf16.mxu0 0
      %3766 = vmatmul.mubr.bf16.gmra.mrb[0].mxu0 %v3200
      %v3767 = vpop.f32.mrb[0].mxu0
      %v3768 = vadd.f32 %v533, %v3767
      %v3769 = vpop.f32.mrb[0].mxu0
      %v3770 = vpop.f32.mrb[0].mxu0
      %v3771 = vadd.f32 %v533, %v3770
      %v3772 = vpop.f32.mrb[0].mxu0
      %3773 = vmatprep.mubr.bf16.mxu0 0
      %3774 = vmatmul.mubr.bf16.gmra.mrb[0].mxu0 %v3203
      %v3775 = vpop.f32.mrb[0].mxu0
      %v3776 = vadd.f32 %v533, %v3775
      %v3777 = vpop.f32.mrb[0].mxu0
      %v3778 = vpop.f32.mrb[0].mxu0
      %v3779 = vadd.f32 %v533, %v3778
      %v3780 = vpop.f32.mrb[0].mxu0
      %3781 = vmatprep.mubr.bf16.mxu0 0
      %3782 = vmatmul.mubr.bf16.gmra.mrb[0].mxu0 %v3206
      %v3783 = vpop.f32.mrb[0].mxu0
      %v3784 = vadd.f32 %v533, %v3783
      %v3785 = vpop.f32.mrb[0].mxu0
      %v3786 = vpop.f32.mrb[0].mxu0
      %v3787 = vadd.f32 %v533, %v3786
      %v3788 = vpop.f32.mrb[0].mxu0
      %3789 = vmatprep.mubr.bf16.mxu0 0
      %3790 = vmatmul.mubr.bf16.gmra.mrb[0].mxu0 %v3209
      %v3791 = vpop.f32.mrb[0].mxu0
      %v3792 = vadd.f32 %v533, %v3791
      %v3793 = vpop.f32.mrb[0].mxu0
      %v3794 = vpop.f32.mrb[0].mxu0
      %v3795 = vadd.f32 %v533, %v3794
      %v3796 = vpop.f32.mrb[0].mxu0
      %3797 = vmatprep.mubr.bf16.mxu0 0
      %3798 = vmatmul.mubr.bf16.gmra.mrb[0].mxu0 %v3212
      %v3799 = vpop.f32.mrb[0].mxu0
      %v3800 = vadd.f32 %v533, %v3799
      %v3801 = vpop.f32.mrb[0].mxu0
      %v3802 = vpop.f32.mrb[0].mxu0
      %v3803 = vadd.f32 %v533, %v3802
      %v3804 = vpop.f32.mrb[0].mxu0
      %3805 = vmatprep.mubr.bf16.mxu0 0
      %3806 = vmatmul.mubr.bf16.gmra.mrb[0].mxu0 %v3215
      %v3807 = vpop.f32.mrb[0].mxu0
      %v3808 = vadd.f32 %v533, %v3807
      %v3809 = vpop.f32.mrb[0].mxu0
      %v3810 = vpop.f32.mrb[0].mxu0
      %v3811 = vadd.f32 %v533, %v3810
      %v3812 = vpop.f32.mrb[0].mxu0
      %3813 = vmatprep.mubr.bf16.mxu0 0
      %3814 = vmatmul.mubr.bf16.gmra.mrb[0].mxu0 %v3218
      %v3815 = vpop.f32.mrb[0].mxu0
      %v3816 = vadd.f32 %v533, %v3815
      %v3817 = vpop.f32.mrb[0].mxu0
      %v3818 = vpop.f32.mrb[0].mxu0
      %v3819 = vadd.f32 %v533, %v3818
      %v3820 = vpop.f32.mrb[0].mxu0
      %3821 = vmatprep.mubr.bf16.mxu0 0
      %3822 = vmatmul.mubr.bf16.gmra.mrb[0].mxu0 %v3221
      %v3823 = vpop.f32.mrb[0].mxu0
      %v3824 = vadd.f32 %v533, %v3823
      %v3825 = vpop.f32.mrb[0].mxu0
      %v3826 = vpop.f32.mrb[0].mxu0
      %v3827 = vadd.f32 %v533, %v3826
      %v3828 = vpop.f32.mrb[0].mxu0
      %3829 = vmatprep.mubr.bf16.mxu0 0
      %3830 = vmatmul.mubr.bf16.gmra.mrb[0].mxu0 %v3224
      %v3831 = vpop.f32.mrb[0].mxu0
      %v3832 = vadd.f32 %v533, %v3831
      %v3833 = vpop.f32.mrb[0].mxu0
      %v3834 = vpop.f32.mrb[0].mxu0
      %v3835 = vadd.f32 %v533, %v3834
      %v3836 = vpop.f32.mrb[0].mxu0
      %3837 = vmatprep.mubr.bf16.mxu0 0
      %3838 = vmatmul.mubr.bf16.gmra.mrb[0].mxu0 %v3227
      %v3839 = vpop.f32.mrb[0].mxu0
      %v3840 = vadd.f32 %v533, %v3839
      %v3841 = vpop.f32.mrb[0].mxu0
      %v3842 = vpop.f32.mrb[0].mxu0
      %v3843 = vadd.f32 %v533, %v3842
      %v3844 = vpop.f32.mrb[0].mxu0
      %3845 = vmatprep.mubr.bf16.mxu0 0
      %3846 = vmatmul.mubr.bf16.gmra.mrb[0].mxu0 %v3230
      %v3847 = vpop.f32.mrb[0].mxu0
      %v3848 = vadd.f32 %v533, %v3847
      %v3849 = vpop.f32.mrb[0].mxu0
      %v3850 = vpop.f32.mrb[0].mxu0
      %v3851 = vadd.f32 %v533, %v3850
      %v3852 = vpop.f32.mrb[0].mxu0
      %3853 = vmatprep.mubr.bf16.mxu0 0
      %3854 = vmatmul.mubr.bf16.gmra.mrb[0].mxu0 %v3233
      %v3855 = vpop.f32.mrb[0].mxu0
      %v3856 = vadd.f32 %v533, %v3855
      %v3857 = vpop.f32.mrb[0].mxu0
      %v3858 = vpop.f32.mrb[0].mxu0
      %v3859 = vadd.f32 %v533, %v3858
      %v3860 = vpop.f32.mrb[0].mxu0
      %3861 = vmatprep.mubr.bf16.mxu0 0
      %3862 = vmatmul.mubr.bf16.gmra.mrb[0].mxu0 %v3236
      %v3863 = vpop.f32.mrb[0].mxu0
      %v3864 = vadd.f32 %v533, %v3863
      %v3865 = vpop.f32.mrb[0].mxu0
      %v3866 = vpop.f32.mrb[0].mxu0
      %v3867 = vadd.f32 %v533, %v3866
      %v3868 = vpop.f32.mrb[0].mxu0
      %3869 = vmatprep.mubr.bf16.mxu0 0
      %3870 = vmatmul.mubr.bf16.gmra.mrb[0].mxu0 %v3239
      %v3871 = vpop.f32.mrb[0].mxu0
      %v3872 = vadd.f32 %v533, %v3871
      %v3873 = vpop.f32.mrb[0].mxu0
      %v3874 = vpop.f32.mrb[0].mxu0
      %v3875 = vadd.f32 %v533, %v3874
      %v3876 = vpop.f32.mrb[0].mxu0
      %3877 = vmatprep.mubr.bf16.mxu0 0
      %3878 = vmatmul.mubr.bf16.gmra.mrb[0].mxu0 %v3242
      %v3879 = vpop.f32.mrb[0].mxu0
      %v3880 = vadd.f32 %v533, %v3879
      %v3881 = vpop.f32.mrb[0].mxu0
      %v3882 = vpop.f32.mrb[0].mxu0
      %v3883 = vadd.f32 %v533, %v3882
      %v3884 = vpop.f32.mrb[0].mxu0
      %3885 = vmatprep.mubr.bf16.mxu0 0
      %3886 = vmatmul.mubr.bf16.gmra.mrb[0].mxu0 %v3245
      %v3887 = vpop.f32.mrb[0].mxu0
      %v3888 = vadd.f32 %v533, %v3887
      %v3889 = vpop.f32.mrb[0].mxu0
      %v3890 = vpop.f32.mrb[0].mxu0
      %v3891 = vadd.f32 %v533, %v3890
      %v3892 = vpop.f32.mrb[0].mxu0
      %3893 = vmatprep.mubr.bf16.mxu0 0
      %3894 = vmatmul.mubr.bf16.gmra.mrb[0].mxu0 %v3248
      %v3895 = vpop.f32.mrb[0].mxu0
      %v3896 = vadd.f32 %v533, %v3895
      %v3897 = vpop.f32.mrb[0].mxu0
      %v3898 = vpop.f32.mrb[0].mxu0
      %v3899 = vadd.f32 %v533, %v3898
      %v3900 = vpop.f32.mrb[0].mxu0
      %3901 = vmatprep.mubr.bf16.mxu0 0
      %3902 = vmatmul.mubr.bf16.gmra.mrb[0].mxu0 %v3251
      %v3903 = vpop.f32.mrb[0].mxu0
      %v3904 = vadd.f32 %v533, %v3903
      %v3905 = vpop.f32.mrb[0].mxu0
      %v3906 = vpop.f32.mrb[0].mxu0
      %v3907 = vadd.f32 %v533, %v3906
      %v3908 = vpop.f32.mrb[0].mxu0
      %3909 = vmatprep.mubr.bf16.mxu0 0
      %3910 = vmatmul.mubr.bf16.gmra.mrb[0].mxu0 %v3254
      %v3911 = vpop.f32.mrb[0].mxu0
      %v3912 = vadd.f32 %v533, %v3911
      %v3913 = vpop.f32.mrb[0].mxu0
      %v3914 = vpop.f32.mrb[0].mxu0
      %v3915 = vadd.f32 %v533, %v3914
      %v3916 = vpop.f32.mrb[0].mxu0
      %3917 = vmatprep.mubr.bf16.mxu0 0
      %3918 = vmatmul.mubr.bf16.gmra.mrb[0].mxu0 %v3257
      %v3919 = vpop.f32.mrb[0].mxu0
      %v3920 = vadd.f32 %v533, %v3919
      %v3921 = vpop.f32.mrb[0].mxu0
      %v3922 = vpop.f32.mrb[0].mxu0
      %v3923 = vadd.f32 %v533, %v3922
      %v3924 = vpop.f32.mrb[0].mxu0
      %3925 = vmatprep.mubr.bf16.mxu0 0
      %3926 = vmatmul.mubr.bf16.gmra.mrb[0].mxu0 %v3260
      %v3927 = vpop.f32.mrb[0].mxu0
      %v3928 = vadd.f32 %v533, %v3927
      %v3929 = vpop.f32.mrb[0].mxu0
      %v3930 = vpop.f32.mrb[0].mxu0
      %v3931 = vadd.f32 %v533, %v3930
      %v3932 = vpop.f32.mrb[0].mxu0
      %3933 = vmatprep.mubr.bf16.mxu0 0
      %3934 = vmatmul.mubr.bf16.gmra.mrb[0].mxu0 %v3263
      %v3935 = vpop.f32.mrb[0].mxu0
      %v3936 = vadd.f32 %v533, %v3935
      %v3937 = vpop.f32.mrb[0].mxu0
      %v3938 = vpop.f32.mrb[0].mxu0
      %v3939 = vadd.f32 %v533, %v3938
      %v3940 = vpop.f32.mrb[0].mxu0
      %3941 = vmatprep.mubr.bf16.mxu0 0
      %3942 = vmatmul.mubr.bf16.gmra.mrb[0].mxu0 %v3266
      %v3943 = vpop.f32.mrb[0].mxu0
      %v3944 = vadd.f32 %v533, %v3943
      %v3945 = vpop.f32.mrb[0].mxu0
      %v3946 = vpop.f32.mrb[0].mxu0
      %v3947 = vadd.f32 %v533, %v3946
      %v3948 = vpop.f32.mrb[0].mxu0
      %3949 = vmatprep.mubr.bf16.mxu0 0
      %3950 = vmatmul.mubr.bf16.gmra.mrb[0].mxu0 %v3269
      %v3951 = vpop.f32.mrb[0].mxu0
      %v3952 = vadd.f32 %v533, %v3951
      %v3953 = vpop.f32.mrb[0].mxu0
      %v3954 = vpop.f32.mrb[0].mxu0
      %v3955 = vadd.f32 %v533, %v3954
      %v3956 = vpop.f32.mrb[0].mxu0
      %3957 = vmatprep.mubr.bf16.mxu0 0
      %3958 = vmatmul.mubr.bf16.gmra.mrb[0].mxu0 %v3272
      %v3959 = vpop.f32.mrb[0].mxu0
      %v3960 = vadd.f32 %v533, %v3959
      %v3961 = vpop.f32.mrb[0].mxu0
      %v3962 = vpop.f32.mrb[0].mxu0
      %v3963 = vadd.f32 %v533, %v3962
      %v3964 = vpop.f32.mrb[0].mxu0
      %3965 = vmatprep.mubr.bf16.mxu0 0
      %3966 = vmatmul.mubr.bf16.gmra.mrb[0].mxu0 %v3275
      %v3967 = vpop.f32.mrb[0].mxu0
      %v3968 = vadd.f32 %v533, %v3967
      %v3969 = vpop.f32.mrb[0].mxu0
      %v3970 = vpop.f32.mrb[0].mxu0
      %v3971 = vadd.f32 %v533, %v3970
      %v3972 = vpop.f32.mrb[0].mxu0
      %3973 = vmatprep.mubr.bf16.mxu0 0
      %3974 = vmatmul.mubr.bf16.gmra.mrb[0].mxu0 %v3278
      %v3975 = vpop.f32.mrb[0].mxu0
      %v3976 = vadd.f32 %v533, %v3975
      %v3977 = vpop.f32.mrb[0].mxu0
      %v3978 = vpop.f32.mrb[0].mxu0
      %v3979 = vadd.f32 %v533, %v3978
      %v3980 = vpop.f32.mrb[0].mxu0
      %3981 = vmatprep.mubr.bf16.mxu0 0
      %3982 = vmatmul.mubr.bf16.gmra.mrb[0].mxu0 %v3281
      %v3983 = vpop.f32.mrb[0].mxu0
      %v3984 = vadd.f32 %v533, %v3983
      %v3985 = vpop.f32.mrb[0].mxu0
      %v3986 = vpop.f32.mrb[0].mxu0
      %v3987 = vadd.f32 %v533, %v3986
      %v3988 = vpop.f32.mrb[0].mxu0
      %3989 = vmatprep.mubr.bf16.mxu0 0
      %3990 = vmatmul.mubr.bf16.gmra.mrb[0].mxu0 %v3284
      %v3991 = vpop.f32.mrb[0].mxu0
      %v3992 = vadd.f32 %v533, %v3991
      %v3993 = vpop.f32.mrb[0].mxu0
      %v3994 = vpop.f32.mrb[0].mxu0
      %v3995 = vadd.f32 %v533, %v3994
      %v3996 = vpop.f32.mrb[0].mxu0
      %3997 = vmatprep.mubr.bf16.mxu0 0
      %3998 = vmatmul.mubr.bf16.gmra.mrb[0].mxu0 %v3287
      %v3999 = vpop.f32.mrb[0].mxu0
      %v4000 = vadd.f32 %v533, %v3999
      %v4001 = vpop.f32.mrb[0].mxu0
      %v4002 = vpop.f32.mrb[0].mxu0
      %v4003 = vadd.f32 %v533, %v4002
      %v4004 = vpop.f32.mrb[0].mxu0
      %4005 = vmatprep.mubr.bf16.mxu0 0
      %4006 = vmatmul.mubr.bf16.gmra.mrb[0].mxu0 %v3290
      %v4007 = vpop.f32.mrb[0].mxu0
      %v4008 = vadd.f32 %v533, %v4007
      %v4009 = vpop.f32.mrb[0].mxu0
      %v4010 = vpop.f32.mrb[0].mxu0
      %v4011 = vadd.f32 %v533, %v4010
      %v4012 = vpop.f32.mrb[0].mxu0
      %4013 = vmatprep.mubr.bf16.mxu0 0
      %4014 = vmatmul.mubr.bf16.gmra.mrb[0].mxu0 %v3293
      %v4015 = vpop.f32.mrb[0].mxu0
      %v4016 = vadd.f32 %v533, %v4015
      %v4017 = vpop.f32.mrb[0].mxu0
      %v4018 = vpop.f32.mrb[0].mxu0
      %v4019 = vadd.f32 %v533, %v4018
      %v4020 = vpop.f32.mrb[0].mxu0
      %4021 = vmatprep.mubr.bf16.mxu0 0
      %4022 = vmatmul.mubr.bf16.gmra.mrb[0].mxu0 %v3296
      %v4023 = vpop.f32.mrb[0].mxu0
      %v4024 = vadd.f32 %v533, %v4023
      %v4025 = vpop.f32.mrb[0].mxu0
      %v4026 = vpop.f32.mrb[0].mxu0
      %v4027 = vadd.f32 %v533, %v4026
      %v4028 = vpop.f32.mrb[0].mxu0
      %4029 = vmatprep.mubr.bf16.mxu0 0
      %4030 = vmatmul.mubr.bf16.gmra.mrb[0].mxu0 %v3299
      %v4031 = vpop.f32.mrb[0].mxu0
      %v4032 = vadd.f32 %v533, %v4031
      %v4033 = vpop.f32.mrb[0].mxu0
      %v4034 = vpop.f32.mrb[0].mxu0
      %v4035 = vadd.f32 %v533, %v4034
      %v4036 = vpop.f32.mrb[0].mxu0
      %4037 = vmatprep.mubr.bf16.mxu0 0
      %4038 = vmatmul.mubr.bf16.gmra.mrb[0].mxu0 %v3302
      %v4039 = vpop.f32.mrb[0].mxu0
      %v4040 = vadd.f32 %v533, %v4039
      %v4041 = vpop.f32.mrb[0].mxu0
      %v4042 = vpop.f32.mrb[0].mxu0
      %v4043 = vadd.f32 %v533, %v4042
      %v4044 = vpop.f32.mrb[0].mxu0
      %4045 = vmatprep.mubr.bf16.mxu0 0
      %4046 = vmatmul.mubr.bf16.gmra.mrb[0].mxu0 %v3305
      %v4047 = vpop.f32.mrb[0].mxu0
      %v4048 = vadd.f32 %v533, %v4047
      %v4049 = vpop.f32.mrb[0].mxu0
      %v4050 = vpop.f32.mrb[0].mxu0
      %v4051 = vadd.f32 %v533, %v4050
      %v4052 = vpop.f32.mrb[0].mxu0
      %4053 = vmatprep.mubr.bf16.mxu0 0
      %4054 = vmatmul.mubr.bf16.gmra.mrb[0].mxu0 %v3308
      %v4055 = vpop.f32.mrb[0].mxu0
      %v4056 = vadd.f32 %v533, %v4055
      %v4057 = vpop.f32.mrb[0].mxu0
      %v4058 = vpop.f32.mrb[0].mxu0
      %v4059 = vadd.f32 %v533, %v4058
      %v4060 = vpop.f32.mrb[0].mxu0
      %4061 = vmatprep.mubr.bf16.mxu0 0
      %4062 = vmatmul.mubr.bf16.gmra.mrb[0].mxu0 %v3311
      %v4063 = vpop.f32.mrb[0].mxu0
      %v4064 = vadd.f32 %v533, %v4063
      %v4065 = vpop.f32.mrb[0].mxu0
      %v4066 = vpop.f32.mrb[0].mxu0
      %v4067 = vadd.f32 %v533, %v4066
      %v4068 = vpop.f32.mrb[0].mxu0
      %4069 = vmatprep.mubr.bf16.mxu0 0
      %4070 = vmatmul.mubr.bf16.gmra.mrb[0].mxu0 %v3314
      %v4071 = vpop.f32.mrb[0].mxu0
      %v4072 = vadd.f32 %v533, %v4071
      %v4073 = vpop.f32.mrb[0].mxu0
      %v4074 = vpop.f32.mrb[0].mxu0
      %v4075 = vadd.f32 %v533, %v4074
      %v4076 = vpop.f32.mrb[0].mxu0
      %4077 = vmatprep.mubr.bf16.mxu0 0
      %4078 = vmatmul.mubr.bf16.gmra.mrb[0].mxu0 %v3317
      %v4079 = vpop.f32.mrb[0].mxu0
      %v4080 = vadd.f32 %v533, %v4079
      %v4081 = vpop.f32.mrb[0].mxu0
      %v4082 = vpop.f32.mrb[0].mxu0
      %v4083 = vadd.f32 %v533, %v4082
      %v4084 = vpop.f32.mrb[0].mxu0
      %4085 = vmatprep.mubr.bf16.mxu0 0
      %4086 = vmatmul.mubr.bf16.gmra.mrb[0].mxu0 %v3320
      %v4087 = vpop.f32.mrb[0].mxu0
      %v4088 = vadd.f32 %v533, %v4087
      %v4089 = vpop.f32.mrb[0].mxu0
      %v4090 = vpop.f32.mrb[0].mxu0
      %v4091 = vadd.f32 %v533, %v4090
      %v4092 = vpop.f32.mrb[0].mxu0
      %4093 = vmatprep.mubr.bf16.mxu0 0
      %4094 = vmatmul.mubr.bf16.gmra.mrb[0].mxu0 %v3323
      %v4095 = vpop.f32.mrb[0].mxu0
      %v4096 = vadd.f32 %v533, %v4095
      %v4097 = vpop.f32.mrb[0].mxu0
      %v4098 = vpop.f32.mrb[0].mxu0
      %v4099 = vadd.f32 %v533, %v4098
      %v4100 = vpop.f32.mrb[0].mxu0
      %4101 = vmatprep.mubr.bf16.mxu0 0
      %4102 = vmatmul.mubr.bf16.gmra.mrb[0].mxu0 %v3326
      %v4103 = vpop.f32.mrb[0].mxu0
      %v4104 = vadd.f32 %v533, %v4103
      %v4105 = vpop.f32.mrb[0].mxu0
      %v4106 = vpop.f32.mrb[0].mxu0
      %v4107 = vadd.f32 %v533, %v4106
      %v4108 = vpop.f32.mrb[0].mxu0
      %4109 = vmatprep.mubr.bf16.mxu0 0
      %4110 = vmatmul.mubr.bf16.gmra.mrb[0].mxu0 %v3329
      %v4111 = vpop.f32.mrb[0].mxu0
      %v4112 = vadd.f32 %v533, %v4111
      %v4113 = vpop.f32.mrb[0].mxu0
      %v4114 = vpop.f32.mrb[0].mxu0
      %v4115 = vadd.f32 %v533, %v4114
      %v4116 = vpop.f32.mrb[0].mxu0
      %4117 = vmatprep.mubr.bf16.mxu0 0
      %4118 = vmatmul.mubr.bf16.gmra.mrb[0].mxu0 %v3332
      %v4119 = vpop.f32.mrb[0].mxu0
      %v4120 = vadd.f32 %v533, %v4119
      %v4121 = vpop.f32.mrb[0].mxu0
      %v4122 = vpop.f32.mrb[0].mxu0
      %v4123 = vadd.f32 %v533, %v4122
      %v4124 = vpop.f32.mrb[0].mxu0
      %4125 = vmatprep.mubr.bf16.mxu0 0
      %4126 = vmatmul.mubr.bf16.gmra.mrb[0].mxu0 %v3335
      %v4127 = vpop.f32.mrb[0].mxu0
      %v4128 = vadd.f32 %v533, %v4127
      %v4129 = vpop.f32.mrb[0].mxu0
      %v4130 = vpop.f32.mrb[0].mxu0
      %v4131 = vadd.f32 %v533, %v4130
      %v4132 = vpop.f32.mrb[0].mxu0
      %4133 = vmatprep.mubr.bf16.mxu0 0
      %4134 = vmatmul.mubr.bf16.gmra.mrb[0].mxu0 %v3338
      %v4135 = vpop.f32.mrb[0].mxu0
      %v4136 = vadd.f32 %v533, %v4135
      %v4137 = vpop.f32.mrb[0].mxu0
      %v4138 = vpop.f32.mrb[0].mxu0
      %v4139 = vadd.f32 %v533, %v4138
      %v4140 = vpop.f32.mrb[0].mxu0
      %4141 = vmatprep.mubr.bf16.mxu0 0
      %4142 = vmatmul.mubr.bf16.gmra.mrb[0].mxu0 %v3341
      %v4143 = vpop.f32.mrb[0].mxu0
      %v4144 = vadd.f32 %v533, %v4143
      %v4145 = vpop.f32.mrb[0].mxu0
      %v4146 = vpop.f32.mrb[0].mxu0
      %v4147 = vadd.f32 %v533, %v4146
      %v4148 = vpop.f32.mrb[0].mxu0
      %4149 = vmatprep.mubr.bf16.mxu0 0
      %4150 = vmatmul.mubr.bf16.gmra.mrb[0].mxu0 %v3344
      %v4151 = vpop.f32.mrb[0].mxu0
      %v4152 = vadd.f32 %v533, %v4151
      %v4153 = vpop.f32.mrb[0].mxu0
      %v4154 = vpop.f32.mrb[0].mxu0
      %v4155 = vadd.f32 %v533, %v4154
      %v4156 = vpop.f32.mrb[0].mxu0
      %4157 = vmatprep.mubr.bf16.mxu0 0
      %4158 = vmatmul.mubr.bf16.gmra.mrb[0].mxu0 %v3347
      %v4159 = vpop.f32.mrb[0].mxu0
      %v4160 = vadd.f32 %v533, %v4159
      %v4161 = vpop.f32.mrb[0].mxu0
      %v4162 = vpop.f32.mrb[0].mxu0
      %v4163 = vadd.f32 %v533, %v4162
      %v4164 = vpop.f32.mrb[0].mxu0
      %4165 = vdwg.mxu0
      %v4166 = vmax.f32 %v3384, 0.0
      %v4167 = vmax.f32 %v3387, 0.0
      %v4168 = vmax.f32 %v3392, 0.0
      %v4169 = vmax.f32 %v3395, 0.0
      %v4170 = vmax.f32 %v3400, 0.0
      %v4171 = vmax.f32 %v3403, 0.0
      %v4172 = vmax.f32 %v3408, 0.0
      %v4173 = vmax.f32 %v3411, 0.0
      %v4174 = vmax.f32 %v3416, 0.0
      %v4175 = vmax.f32 %v3419, 0.0
      %v4176 = vmax.f32 %v3424, 0.0
      %v4177 = vmax.f32 %v3427, 0.0
      %v4178 = vmax.f32 %v3432, 0.0
      %v4179 = vmax.f32 %v3435, 0.0
      %v4180 = vmax.f32 %v3440, 0.0
      %v4181 = vmax.f32 %v3443, 0.0
      %v4182 = vmax.f32 %v3448, 0.0
      %v4183 = vmax.f32 %v3451, 0.0
      %v4184 = vmax.f32 %v3456, 0.0
      %v4185 = vmax.f32 %v3459, 0.0
      %v4186 = vmax.f32 %v3464, 0.0
      %v4187 = vmax.f32 %v3467, 0.0
      %v4188 = vmax.f32 %v3472, 0.0
      %v4189 = vmax.f32 %v3475, 0.0
      %v4190 = vmax.f32 %v3480, 0.0
      %v4191 = vmax.f32 %v3483, 0.0
      %v4192 = vmax.f32 %v3488, 0.0
      %v4193 = vmax.f32 %v3491, 0.0
      %v4194 = vmax.f32 %v3496, 0.0
      %v4195 = vmax.f32 %v3499, 0.0
      %v4196 = vmax.f32 %v3504, 0.0
      %v4197 = vmax.f32 %v3507, 0.0
      %v4198 = vmax.f32 %v3512, 0.0
      %v4199 = vmax.f32 %v3515, 0.0
      %v4200 = vmax.f32 %v3520, 0.0
      %v4201 = vmax.f32 %v3523, 0.0
      %v4202 = vmax.f32 %v3528, 0.0
      %v4203 = vmax.f32 %v3531, 0.0
      %v4204 = vmax.f32 %v3536, 0.0
      %v4205 = vmax.f32 %v3539, 0.0
      %v4206 = vmax.f32 %v3544, 0.0
      %v4207 = vmax.f32 %v3547, 0.0
      %v4208 = vmax.f32 %v3552, 0.0
      %v4209 = vmax.f32 %v3555, 0.0
      %v4210 = vmax.f32 %v3560, 0.0
      %v4211 = vmax.f32 %v3563, 0.0
      %v4212 = vmax.f32 %v3568, 0.0
      %v4213 = vmax.f32 %v3571, 0.0
      %v4214 = vmax.f32 %v3576, 0.0
      %v4215 = vmax.f32 %v3579, 0.0
      %v4216 = vmax.f32 %v3584, 0.0
      %v4217 = vmax.f32 %v3587, 0.0
      %v4218 = vmax.f32 %v3592, 0.0
      %v4219 = vmax.f32 %v3595, 0.0
      %v4220 = vmax.f32 %v3600, 0.0
      %v4221 = vmax.f32 %v3603, 0.0
      %v4222 = vmax.f32 %v3608, 0.0
      %v4223 = vmax.f32 %v3611, 0.0
      %v4224 = vmax.f32 %v3616, 0.0
      %v4225 = vmax.f32 %v3619, 0.0
      %v4226 = vmax.f32 %v3624, 0.0
      %v4227 = vmax.f32 %v3627, 0.0
      %v4228 = vmax.f32 %v3632, 0.0
      %v4229 = vmax.f32 %v3635, 0.0
      %v4230 = vmax.f32 %v3640, 0.0
      %v4231 = vmax.f32 %v3643, 0.0
      %v4232 = vmax.f32 %v3648, 0.0
      %v4233 = vmax.f32 %v3651, 0.0
      %v4234 = vmax.f32 %v3656, 0.0
      %v4235 = vmax.f32 %v3659, 0.0
      %v4236 = vmax.f32 %v3664, 0.0
      %v4237 = vmax.f32 %v3667, 0.0
      %v4238 = vmax.f32 %v3672, 0.0
      %v4239 = vmax.f32 %v3675, 0.0
      %v4240 = vmax.f32 %v3680, 0.0
      %v4241 = vmax.f32 %v3683, 0.0
      %v4242 = vmax.f32 %v3688, 0.0
      %v4243 = vmax.f32 %v3691, 0.0
      %v4244 = vmax.f32 %v3696, 0.0
      %v4245 = vmax.f32 %v3699, 0.0
      %v4246 = vmax.f32 %v3704, 0.0
      %v4247 = vmax.f32 %v3707, 0.0
      %v4248 = vmax.f32 %v3712, 0.0
      %v4249 = vmax.f32 %v3715, 0.0
      %v4250 = vmax.f32 %v3720, 0.0
      %v4251 = vmax.f32 %v3723, 0.0
      %v4252 = vmax.f32 %v3728, 0.0
      %v4253 = vmax.f32 %v3731, 0.0
      %v4254 = vmax.f32 %v3736, 0.0
      %v4255 = vmax.f32 %v3739, 0.0
      %v4256 = vmax.f32 %v3744, 0.0
      %v4257 = vmax.f32 %v3747, 0.0
      %v4258 = vmax.f32 %v3752, 0.0
      %v4259 = vmax.f32 %v3755, 0.0
      %v4260 = vmax.f32 %v3760, 0.0
      %v4261 = vmax.f32 %v3763, 0.0
      %v4262 = vmax.f32 %v3768, 0.0
      %v4263 = vmax.f32 %v3771, 0.0
      %v4264 = vmax.f32 %v3776, 0.0
      %v4265 = vmax.f32 %v3779, 0.0
      %v4266 = vmax.f32 %v3784, 0.0
      %v4267 = vmax.f32 %v3787, 0.0
      %v4268 = vmax.f32 %v3792, 0.0
      %v4269 = vmax.f32 %v3795, 0.0
      %v4270 = vmax.f32 %v3800, 0.0
      %v4271 = vmax.f32 %v3803, 0.0
      %v4272 = vmax.f32 %v3808, 0.0
      %v4273 = vmax.f32 %v3811, 0.0
      %v4274 = vmax.f32 %v3816, 0.0
      %v4275 = vmax.f32 %v3819, 0.0
      %v4276 = vmax.f32 %v3824, 0.0
      %v4277 = vmax.f32 %v3827, 0.0
      %v4278 = vmax.f32 %v3832, 0.0
      %v4279 = vmax.f32 %v3835, 0.0
      %v4280 = vmax.f32 %v3840, 0.0
      %v4281 = vmax.f32 %v3843, 0.0
      %v4282 = vmax.f32 %v3848, 0.0
      %v4283 = vmax.f32 %v3851, 0.0
      %v4284 = vmax.f32 %v3856, 0.0
      %v4285 = vmax.f32 %v3859, 0.0
      %v4286 = vmax.f32 %v3864, 0.0
      %v4287 = vmax.f32 %v3867, 0.0
      %v4288 = vmax.f32 %v3872, 0.0
      %v4289 = vmax.f32 %v3875, 0.0
      %v4290 = vmax.f32 %v3880, 0.0
      %v4291 = vmax.f32 %v3883, 0.0
      %v4292 = vmax.f32 %v3888, 0.0
      %v4293 = vmax.f32 %v3891, 0.0
      %v4294 = vmax.f32 %v3896, 0.0
      %v4295 = vmax.f32 %v3899, 0.0
      %v4296 = vmax.f32 %v3904, 0.0
      %v4297 = vmax.f32 %v3907, 0.0
      %v4298 = vmax.f32 %v3912, 0.0
      %v4299 = vmax.f32 %v3915, 0.0
      %v4300 = vmax.f32 %v3920, 0.0
      %v4301 = vmax.f32 %v3923, 0.0
      %v4302 = vmax.f32 %v3928, 0.0
      %v4303 = vmax.f32 %v3931, 0.0
      %v4304 = vmax.f32 %v3936, 0.0
      %v4305 = vmax.f32 %v3939, 0.0
      %v4306 = vmax.f32 %v3944, 0.0
      %v4307 = vmax.f32 %v3947, 0.0
      %v4308 = vmax.f32 %v3952, 0.0
      %v4309 = vmax.f32 %v3955, 0.0
      %v4310 = vmax.f32 %v3960, 0.0
      %v4311 = vmax.f32 %v3963, 0.0
      %v4312 = vmax.f32 %v3968, 0.0
      %v4313 = vmax.f32 %v3971, 0.0
      %v4314 = vmax.f32 %v3976, 0.0
      %v4315 = vmax.f32 %v3979, 0.0
      %v4316 = vmax.f32 %v3984, 0.0
      %v4317 = vmax.f32 %v3987, 0.0
      %v4318 = vmax.f32 %v3992, 0.0
      %v4319 = vmax.f32 %v3995, 0.0
      %v4320 = vmax.f32 %v4000, 0.0
      %v4321 = vmax.f32 %v4003, 0.0
      %v4322 = vmax.f32 %v4008, 0.0
      %v4323 = vmax.f32 %v4011, 0.0
      %v4324 = vmax.f32 %v4016, 0.0
      %v4325 = vmax.f32 %v4019, 0.0
      %v4326 = vmax.f32 %v4024, 0.0
      %v4327 = vmax.f32 %v4027, 0.0
      %v4328 = vmax.f32 %v4032, 0.0
      %v4329 = vmax.f32 %v4035, 0.0
      %v4330 = vmax.f32 %v4040, 0.0
      %v4331 = vmax.f32 %v4043, 0.0
      %v4332 = vmax.f32 %v4048, 0.0
      %v4333 = vmax.f32 %v4051, 0.0
      %v4334 = vmax.f32 %v4056, 0.0
      %v4335 = vmax.f32 %v4059, 0.0
      %v4336 = vmax.f32 %v4064, 0.0
      %v4337 = vmax.f32 %v4067, 0.0
      %v4338 = vmax.f32 %v4072, 0.0
      %v4339 = vmax.f32 %v4075, 0.0
      %v4340 = vmax.f32 %v4080, 0.0
      %v4341 = vmax.f32 %v4083, 0.0
      %v4342 = vmax.f32 %v4088, 0.0
      %v4343 = vmax.f32 %v4091, 0.0
      %v4344 = vmax.f32 %v4096, 0.0
      %v4345 = vmax.f32 %v4099, 0.0
      %v4346 = vmax.f32 %v4104, 0.0
      %v4347 = vmax.f32 %v4107, 0.0
      %v4348 = vmax.f32 %v4112, 0.0
      %v4349 = vmax.f32 %v4115, 0.0
      %v4350 = vmax.f32 %v4120, 0.0
      %v4351 = vmax.f32 %v4123, 0.0
      %v4352 = vmax.f32 %v4128, 0.0
      %v4353 = vmax.f32 %v4131, 0.0
      %v4354 = vmax.f32 %v4136, 0.0
      %v4355 = vmax.f32 %v4139, 0.0
      %v4356 = vmax.f32 %v4144, 0.0
      %v4357 = vmax.f32 %v4147, 0.0
      %v4358 = vmax.f32 %v4152, 0.0
      %v4359 = vmax.f32 %v4155, 0.0
      %v4360 = vmax.f32 %v4160, 0.0
      %v4361 = vmax.f32 %v4163, 0.0
      %v4362 = vadd.f32 %v2173, %v4166
      %v4363 = vadd.f32 %v2174, %v4167
      %v4364 = vadd.f32 %v2175, %v4168
      %v4365 = vadd.f32 %v2176, %v4169
      %v4366 = vadd.f32 %v2177, %v4170
      %v4367 = vadd.f32 %v2178, %v4171
      %v4368 = vadd.f32 %v2179, %v4172
      %v4369 = vadd.f32 %v2180, %v4173
      %v4370 = vadd.f32 %v2181, %v4174
      %v4371 = vadd.f32 %v2182, %v4175
      %v4372 = vadd.f32 %v2183, %v4176
      %v4373 = vadd.f32 %v2184, %v4177
      %v4374 = vadd.f32 %v2185, %v4178
      %v4375 = vadd.f32 %v2186, %v4179
      %v4376 = vadd.f32 %v2187, %v4180
      %v4377 = vadd.f32 %v2188, %v4181
      %v4378 = vadd.f32 %v2189, %v4182
      %v4379 = vadd.f32 %v2190, %v4183
      %v4380 = vadd.f32 %v2191, %v4184
      %v4381 = vadd.f32 %v2192, %v4185
      %v4382 = vadd.f32 %v2193, %v4186
      %v4383 = vadd.f32 %v2194, %v4187
      %v4384 = vadd.f32 %v2195, %v4188
      %v4385 = vadd.f32 %v2196, %v4189
      %v4386 = vadd.f32 %v2197, %v4190
      %v4387 = vadd.f32 %v2198, %v4191
      %v4388 = vadd.f32 %v2199, %v4192
      %v4389 = vadd.f32 %v2200, %v4193
      %v4390 = vadd.f32 %v2201, %v4194
      %v4391 = vadd.f32 %v2202, %v4195
      %v4392 = vadd.f32 %v2203, %v4196
      %v4393 = vadd.f32 %v2204, %v4197
      %v4394 = vadd.f32 %v2205, %v4198
      %v4395 = vadd.f32 %v2206, %v4199
      %v4396 = vadd.f32 %v2207, %v4200
      %v4397 = vadd.f32 %v2208, %v4201
      %v4398 = vadd.f32 %v2209, %v4202
      %v4399 = vadd.f32 %v2210, %v4203
      %v4400 = vadd.f32 %v2211, %v4204
      %v4401 = vadd.f32 %v2212, %v4205
      %v4402 = vadd.f32 %v2213, %v4206
      %v4403 = vadd.f32 %v2214, %v4207
      %v4404 = vadd.f32 %v2215, %v4208
      %v4405 = vadd.f32 %v2216, %v4209
      %v4406 = vadd.f32 %v2217, %v4210
      %v4407 = vadd.f32 %v2218, %v4211
      %v4408 = vadd.f32 %v2219, %v4212
      %v4409 = vadd.f32 %v2220, %v4213
      %v4410 = vadd.f32 %v2221, %v4214
      %v4411 = vadd.f32 %v2222, %v4215
      %v4412 = vadd.f32 %v2223, %v4216
      %v4413 = vadd.f32 %v2224, %v4217
      %v4414 = vadd.f32 %v2225, %v4218
      %v4415 = vadd.f32 %v2226, %v4219
      %v4416 = vadd.f32 %v2227, %v4220
      %v4417 = vadd.f32 %v2228, %v4221
      %v4418 = vadd.f32 %v2229, %v4222
      %v4419 = vadd.f32 %v2230, %v4223
      %v4420 = vadd.f32 %v2231, %v4224
      %v4421 = vadd.f32 %v2232, %v4225
      %v4422 = vadd.f32 %v2233, %v4226
      %v4423 = vadd.f32 %v2234, %v4227
      %v4424 = vadd.f32 %v2235, %v4228
      %v4425 = vadd.f32 %v2236, %v4229
      %v4426 = vadd.f32 %v2237, %v4230
      %v4427 = vadd.f32 %v2238, %v4231
      %v4428 = vadd.f32 %v2239, %v4232
      %v4429 = vadd.f32 %v2240, %v4233
      %v4430 = vadd.f32 %v2241, %v4234
      %v4431 = vadd.f32 %v2242, %v4235
      %v4432 = vadd.f32 %v2243, %v4236
      %v4433 = vadd.f32 %v2244, %v4237
      %v4434 = vadd.f32 %v2245, %v4238
      %v4435 = vadd.f32 %v2246, %v4239
      %v4436 = vadd.f32 %v2247, %v4240
      %v4437 = vadd.f32 %v2248, %v4241
      %v4438 = vadd.f32 %v2249, %v4242
      %v4439 = vadd.f32 %v2250, %v4243
      %v4440 = vadd.f32 %v2251, %v4244
      %v4441 = vadd.f32 %v2252, %v4245
      %v4442 = vadd.f32 %v2253, %v4246
      %v4443 = vadd.f32 %v2254, %v4247
      %v4444 = vadd.f32 %v2255, %v4248
      %v4445 = vadd.f32 %v2256, %v4249
      %v4446 = vadd.f32 %v2257, %v4250
      %v4447 = vadd.f32 %v2258, %v4251
      %v4448 = vadd.f32 %v2259, %v4252
      %v4449 = vadd.f32 %v2260, %v4253
      %v4450 = vadd.f32 %v2261, %v4254
      %v4451 = vadd.f32 %v2262, %v4255
      %v4452 = vadd.f32 %v2263, %v4256
      %v4453 = vadd.f32 %v2264, %v4257
      %v4454 = vadd.f32 %v2265, %v4258
      %v4455 = vadd.f32 %v2266, %v4259
      %v4456 = vadd.f32 %v2267, %v4260
      %v4457 = vadd.f32 %v2268, %v4261
      %v4458 = vadd.f32 %v2269, %v4262
      %v4459 = vadd.f32 %v2270, %v4263
      %v4460 = vadd.f32 %v2271, %v4264
      %v4461 = vadd.f32 %v2272, %v4265
      %v4462 = vadd.f32 %v2273, %v4266
      %v4463 = vadd.f32 %v2274, %v4267
      %v4464 = vadd.f32 %v2275, %v4268
      %v4465 = vadd.f32 %v2276, %v4269
      %v4466 = vadd.f32 %v2277, %v4270
      %v4467 = vadd.f32 %v2278, %v4271
      %v4468 = vadd.f32 %v2279, %v4272
      %v4469 = vadd.f32 %v2280, %v4273
      %v4470 = vadd.f32 %v2281, %v4274
      %v4471 = vadd.f32 %v2282, %v4275
      %v4472 = vadd.f32 %v2283, %v4276
      %v4473 = vadd.f32 %v2284, %v4277
      %v4474 = vadd.f32 %v2285, %v4278
      %v4475 = vadd.f32 %v2286, %v4279
      %v4476 = vadd.f32 %v2287, %v4280
      %v4477 = vadd.f32 %v2288, %v4281
      %v4478 = vadd.f32 %v2289, %v4282
      %v4479 = vadd.f32 %v2290, %v4283
      %v4480 = vadd.f32 %v2291, %v4284
      %v4481 = vadd.f32 %v2292, %v4285
      %v4482 = vadd.f32 %v2293, %v4286
      %v4483 = vadd.f32 %v2294, %v4287
      %v4484 = vadd.f32 %v2295, %v4288
      %v4485 = vadd.f32 %v2296, %v4289
      %v4486 = vadd.f32 %v2297, %v4290
      %v4487 = vadd.f32 %v2298, %v4291
      %v4488 = vadd.f32 %v2299, %v4292
      %v4489 = vadd.f32 %v2300, %v4293
      %v4490 = vadd.f32 %v2301, %v4294
      %v4491 = vadd.f32 %v2302, %v4295
      %v4492 = vadd.f32 %v2303, %v4296
      %v4493 = vadd.f32 %v2304, %v4297
      %v4494 = vadd.f32 %v2305, %v4298
      %v4495 = vadd.f32 %v2306, %v4299
      %v4496 = vadd.f32 %v2307, %v4300
      %v4497 = vadd.f32 %v2308, %v4301
      %v4498 = vadd.f32 %v2309, %v4302
      %v4499 = vadd.f32 %v2310, %v4303
      %v4500 = vadd.f32 %v2311, %v4304
      %v4501 = vadd.f32 %v2312, %v4305
      %v4502 = vadd.f32 %v2313, %v4306
      %v4503 = vadd.f32 %v2314, %v4307
      %v4504 = vadd.f32 %v2315, %v4308
      %v4505 = vadd.f32 %v2316, %v4309
      %v4506 = vadd.f32 %v2317, %v4310
      %v4507 = vadd.f32 %v2318, %v4311
      %v4508 = vadd.f32 %v2319, %v4312
      %v4509 = vadd.f32 %v2320, %v4313
      %v4510 = vadd.f32 %v2321, %v4314
      %v4511 = vadd.f32 %v2322, %v4315
      %v4512 = vadd.f32 %v2323, %v4316
      %v4513 = vadd.f32 %v2324, %v4317
      %v4514 = vadd.f32 %v2325, %v4318
      %v4515 = vadd.f32 %v2326, %v4319
      %v4516 = vadd.f32 %v2327, %v4320
      %v4517 = vadd.f32 %v2328, %v4321
      %v4518 = vadd.f32 %v2329, %v4322
      %v4519 = vadd.f32 %v2330, %v4323
      %v4520 = vadd.f32 %v2331, %v4324
      %v4521 = vadd.f32 %v2332, %v4325
      %v4522 = vadd.f32 %v2333, %v4326
      %v4523 = vadd.f32 %v2334, %v4327
      %v4524 = vadd.f32 %v2335, %v4328
      %v4525 = vadd.f32 %v2336, %v4329
      %v4526 = vadd.f32 %v2337, %v4330
      %v4527 = vadd.f32 %v2338, %v4331
      %v4528 = vadd.f32 %v2339, %v4332
      %v4529 = vadd.f32 %v2340, %v4333
      %v4530 = vadd.f32 %v2341, %v4334
      %v4531 = vadd.f32 %v2342, %v4335
      %v4532 = vadd.f32 %v2343, %v4336
      %v4533 = vadd.f32 %v2344, %v4337
      %v4534 = vadd.f32 %v2345, %v4338
      %v4535 = vadd.f32 %v2346, %v4339
      %v4536 = vadd.f32 %v2347, %v4340
      %v4537 = vadd.f32 %v2348, %v4341
      %v4538 = vadd.f32 %v2349, %v4342
      %v4539 = vadd.f32 %v2350, %v4343
      %v4540 = vadd.f32 %v2351, %v4344
      %v4541 = vadd.f32 %v2352, %v4345
      %v4542 = vadd.f32 %v2353, %v4346
      %v4543 = vadd.f32 %v2354, %v4347
      %v4544 = vadd.f32 %v2355, %v4348
      %v4545 = vadd.f32 %v2356, %v4349
      %v4546 = vadd.f32 %v2357, %v4350
      %v4547 = vadd.f32 %v2358, %v4351
      %v4548 = vadd.f32 %v2359, %v4352
      %v4549 = vadd.f32 %v2360, %v4353
      %v4550 = vadd.f32 %v2361, %v4354
      %v4551 = vadd.f32 %v2362, %v4355
      %v4552 = vadd.f32 %v2363, %v4356
      %v4553 = vadd.f32 %v2364, %v4357
      %v4554 = vadd.f32 %v2365, %v4358
      %v4555 = vadd.f32 %v2366, %v4359
      %v4556 = vadd.f32 %v2367, %v4360
      %v4557 = vadd.f32 %v2368, %v4361
      %v4558 = vld [vmem:[%s307] sm:$0xf]
      %v4559 = vld [vmem:[%s307 + $0x4] sm:$0xf]
      %v4560 = vld [vmem:[%s307 + $0x8] sm:$0xf]
      %v4561 = vld [vmem:[%s307 + $0xc] sm:$0xf]
      %v4562 = vld [vmem:[%s307 + $0x10] sm:$0xf]
      %v4563 = vld [vmem:[%s307 + $0x14] sm:$0xf]
      %v4564 = vld [vmem:[%s307 + $0x18] sm:$0xf]
      %v4565 = vld [vmem:[%s307 + $0x1c] sm:$0xf]
      %v4566 = vld [vmem:[%s307 + $0x20] sm:$0xf]
      %v4567 = vld [vmem:[%s307 + $0x24] sm:$0xf]
      %v4568 = vld [vmem:[%s307 + $0x28] sm:$0xf]
      %v4569 = vld [vmem:[%s307 + $0x2c] sm:$0xf]
      %v4570 = vld [vmem:[%s307 + $0x30] sm:$0xf]
      %v4571 = vld [vmem:[%s307 + $0x34] sm:$0xf]
      %v4572 = vld [vmem:[%s307 + $0x38] sm:$0xf]
      %v4573 = vld [vmem:[%s307 + $0x3c] sm:$0xf]
      %v4574 = vld [vmem:[%s307 + $0x40] sm:$0xf]
      %v4575 = vld [vmem:[%s307 + $0x44] sm:$0xf]
      %v4576 = vld [vmem:[%s307 + $0x48] sm:$0xf]
      %v4577 = vld [vmem:[%s307 + $0x4c] sm:$0xf]
      %v4578 = vld [vmem:[%s307 + $0x50] sm:$0xf]
      %v4579 = vld [vmem:[%s307 + $0x54] sm:$0xf]
      %v4580 = vld [vmem:[%s307 + $0x58] sm:$0xf]
      %v4581 = vld [vmem:[%s307 + $0x5c] sm:$0xf]
      %v4582 = vld [vmem:[%s307 + $0x60] sm:$0xf]
      %v4583 = vld [vmem:[%s307 + $0x64] sm:$0xf]
      %v4584 = vld [vmem:[%s307 + $0x68] sm:$0xf]
      %v4585 = vld [vmem:[%s307 + $0x6c] sm:$0xf]
      %v4586 = vld [vmem:[%s307 + $0x70] sm:$0xf]
      %v4587 = vld [vmem:[%s307 + $0x74] sm:$0xf]
      %v4588 = vld [vmem:[%s307 + $0x78] sm:$0xf]
      %v4589 = vld [vmem:[%s307 + $0x7c] sm:$0xf]
      %v4590 = vld [vmem:[%s307 + $0x80] sm:$0xf]
      %v4591 = vld [vmem:[%s307 + $0x84] sm:$0xf]
      %v4592 = vld [vmem:[%s307 + $0x88] sm:$0xf]
      %v4593 = vld [vmem:[%s307 + $0x8c] sm:$0xf]
      %v4594 = vld [vmem:[%s307 + $0x90] sm:$0xf]
      %v4595 = vld [vmem:[%s307 + $0x94] sm:$0xf]
      %v4596 = vld [vmem:[%s307 + $0x98] sm:$0xf]
      %v4597 = vld [vmem:[%s307 + $0x9c] sm:$0xf]
      %v4598 = vld [vmem:[%s307 + $0xa0] sm:$0xf]
      %v4599 = vld [vmem:[%s307 + $0xa4] sm:$0xf]
      %v4600 = vld [vmem:[%s307 + $0xa8] sm:$0xf]
      %v4601 = vld [vmem:[%s307 + $0xac] sm:$0xf]
      %v4602 = vld [vmem:[%s307 + $0xb0] sm:$0xf]
      %v4603 = vld [vmem:[%s307 + $0xb4] sm:$0xf]
      %v4604 = vld [vmem:[%s307 + $0xb8] sm:$0xf]
      %v4605 = vld [vmem:[%s307 + $0xbc] sm:$0xf]
      %v4606 = vld [vmem:[%s307 + $0xc0] sm:$0xf]
      %v4607 = vld [vmem:[%s307 + $0xc4] sm:$0xf]
      %v4608 = vld [vmem:[%s307 + $0xc8] sm:$0xf]
      %v4609 = vld [vmem:[%s307 + $0xcc] sm:$0xf]
      %v4610 = vld [vmem:[%s307 + $0xd0] sm:$0xf]
      %v4611 = vld [vmem:[%s307 + $0xd4] sm:$0xf]
      %v4612 = vld [vmem:[%s307 + $0xd8] sm:$0xf]
      %v4613 = vld [vmem:[%s307 + $0xdc] sm:$0xf]
      %v4614 = vld [vmem:[%s307 + $0xe0] sm:$0xf]
      %v4615 = vld [vmem:[%s307 + $0xe4] sm:$0xf]
      %v4616 = vld [vmem:[%s307 + $0xe8] sm:$0xf]
      %v4617 = vld [vmem:[%s307 + $0xec] sm:$0xf]
      %v4618 = vld [vmem:[%s307 + $0xf0] sm:$0xf]
      %v4619 = vld [vmem:[%s307 + $0xf4] sm:$0xf]
      %v4620 = vld [vmem:[%s307 + $0xf8] sm:$0xf]
      %v4621 = vld [vmem:[%s307 + $0xfc] sm:$0xf]
      %v4622 = vld [vmem:[%s307 + $0x100] sm:$0xf]
      %v4623 = vld [vmem:[%s307 + $0x104] sm:$0xf]
      %v4624 = vld [vmem:[%s307 + $0x108] sm:$0xf]
      %v4625 = vld [vmem:[%s307 + $0x10c] sm:$0xf]
      %v4626 = vld [vmem:[%s307 + $0x110] sm:$0xf]
      %v4627 = vld [vmem:[%s307 + $0x114] sm:$0xf]
      %v4628 = vld [vmem:[%s307 + $0x118] sm:$0xf]
      %v4629 = vld [vmem:[%s307 + $0x11c] sm:$0xf]
      %v4630 = vld [vmem:[%s307 + $0x120] sm:$0xf]
      %v4631 = vld [vmem:[%s307 + $0x124] sm:$0xf]
      %v4632 = vld [vmem:[%s307 + $0x128] sm:$0xf]
      %v4633 = vld [vmem:[%s307 + $0x12c] sm:$0xf]
      %v4634 = vld [vmem:[%s307 + $0x130] sm:$0xf]
      %v4635 = vld [vmem:[%s307 + $0x134] sm:$0xf]
      %v4636 = vld [vmem:[%s307 + $0x138] sm:$0xf]
      %v4637 = vld [vmem:[%s307 + $0x13c] sm:$0xf]
      %v4638 = vld [vmem:[%s307 + $0x140] sm:$0xf]
      %v4639 = vld [vmem:[%s307 + $0x144] sm:$0xf]
      %v4640 = vld [vmem:[%s307 + $0x148] sm:$0xf]
      %v4641 = vld [vmem:[%s307 + $0x14c] sm:$0xf]
      %v4642 = vld [vmem:[%s307 + $0x150] sm:$0xf]
      %v4643 = vld [vmem:[%s307 + $0x154] sm:$0xf]
      %v4644 = vld [vmem:[%s307 + $0x158] sm:$0xf]
      %v4645 = vld [vmem:[%s307 + $0x15c] sm:$0xf]
      %v4646 = vld [vmem:[%s307 + $0x160] sm:$0xf]
      %v4647 = vld [vmem:[%s307 + $0x164] sm:$0xf]
      %v4648 = vld [vmem:[%s307 + $0x168] sm:$0xf]
      %v4649 = vld [vmem:[%s307 + $0x16c] sm:$0xf]
      %v4650 = vld [vmem:[%s307 + $0x170] sm:$0xf]
      %v4651 = vld [vmem:[%s307 + $0x174] sm:$0xf]
      %v4652 = vld [vmem:[%s307 + $0x178] sm:$0xf]
      %v4653 = vld [vmem:[%s307 + $0x17c] sm:$0xf]
      %v4654 = vld [vmem:[%s307 + $0x180] sm:$0xf]
      %v4655 = vld [vmem:[%s307 + $0x184] sm:$0xf]
      %v4656 = vld [vmem:[%s307 + $0x188] sm:$0xf]
      %v4657 = vld [vmem:[%s307 + $0x18c] sm:$0xf]
      %v4658 = vld [vmem:[%s307 + $0x190] sm:$0xf]
      %v4659 = vld [vmem:[%s307 + $0x194] sm:$0xf]
      %v4660 = vld [vmem:[%s307 + $0x198] sm:$0xf]
      %v4661 = vld [vmem:[%s307 + $0x19c] sm:$0xf]
      %v4662 = vld [vmem:[%s307 + $0x1a0] sm:$0xf]
      %v4663 = vld [vmem:[%s307 + $0x1a4] sm:$0xf]
      %v4664 = vld [vmem:[%s307 + $0x1a8] sm:$0xf]
      %v4665 = vld [vmem:[%s307 + $0x1ac] sm:$0xf]
      %v4666 = vld [vmem:[%s307 + $0x1b0] sm:$0xf]
      %v4667 = vld [vmem:[%s307 + $0x1b4] sm:$0xf]
      %v4668 = vld [vmem:[%s307 + $0x1b8] sm:$0xf]
      %v4669 = vld [vmem:[%s307 + $0x1bc] sm:$0xf]
      %v4670 = vld [vmem:[%s307 + $0x1c0] sm:$0xf]
      %v4671 = vld [vmem:[%s307 + $0x1c4] sm:$0xf]
      %v4672 = vld [vmem:[%s307 + $0x1c8] sm:$0xf]
      %v4673 = vld [vmem:[%s307 + $0x1cc] sm:$0xf]
      %v4674 = vld [vmem:[%s307 + $0x1d0] sm:$0xf]
      %v4675 = vld [vmem:[%s307 + $0x1d4] sm:$0xf]
      %v4676 = vld [vmem:[%s307 + $0x1d8] sm:$0xf]
      %v4677 = vld [vmem:[%s307 + $0x1dc] sm:$0xf]
      %v4678 = vld [vmem:[%s307 + $0x1e0] sm:$0xf]
      %v4679 = vld [vmem:[%s307 + $0x1e4] sm:$0xf]
      %v4680 = vld [vmem:[%s307 + $0x1e8] sm:$0xf]
      %v4681 = vld [vmem:[%s307 + $0x1ec] sm:$0xf]
      %v4682 = vld [vmem:[%s307 + $0x1f0] sm:$0xf]
      %v4683 = vld [vmem:[%s307 + $0x1f4] sm:$0xf]
      %v4684 = vld [vmem:[%s307 + $0x1f8] sm:$0xf]
      %v4685 = vld [vmem:[%s307 + $0x1fc] sm:$0xf]
      %v4686 = vld [vmem:[%s307 + $0x200] sm:$0xf]
      %v4687 = vld [vmem:[%s307 + $0x204] sm:$0xf]
      %v4688 = vld [vmem:[%s307 + $0x208] sm:$0xf]
      %v4689 = vld [vmem:[%s307 + $0x20c] sm:$0xf]
      %v4690 = vld [vmem:[%s307 + $0x210] sm:$0xf]
      %v4691 = vld [vmem:[%s307 + $0x214] sm:$0xf]
      %v4692 = vld [vmem:[%s307 + $0x218] sm:$0xf]
      %v4693 = vld [vmem:[%s307 + $0x21c] sm:$0xf]
      %v4694 = vld [vmem:[%s307 + $0x220] sm:$0xf]
      %v4695 = vld [vmem:[%s307 + $0x224] sm:$0xf]
      %v4696 = vld [vmem:[%s307 + $0x228] sm:$0xf]
      %v4697 = vld [vmem:[%s307 + $0x22c] sm:$0xf]
      %v4698 = vld [vmem:[%s307 + $0x230] sm:$0xf]
      %v4699 = vld [vmem:[%s307 + $0x234] sm:$0xf]
      %v4700 = vld [vmem:[%s307 + $0x238] sm:$0xf]
      %v4701 = vld [vmem:[%s307 + $0x23c] sm:$0xf]
      %v4702 = vld [vmem:[%s307 + $0x240] sm:$0xf]
      %v4703 = vld [vmem:[%s307 + $0x244] sm:$0xf]
      %v4704 = vld [vmem:[%s307 + $0x248] sm:$0xf]
      %v4705 = vld [vmem:[%s307 + $0x24c] sm:$0xf]
      %v4706 = vld [vmem:[%s307 + $0x250] sm:$0xf]
      %v4707 = vld [vmem:[%s307 + $0x254] sm:$0xf]
      %v4708 = vld [vmem:[%s307 + $0x258] sm:$0xf]
      %v4709 = vld [vmem:[%s307 + $0x25c] sm:$0xf]
      %v4710 = vld [vmem:[%s307 + $0x260] sm:$0xf]
      %v4711 = vld [vmem:[%s307 + $0x264] sm:$0xf]
      %v4712 = vld [vmem:[%s307 + $0x268] sm:$0xf]
      %v4713 = vld [vmem:[%s307 + $0x26c] sm:$0xf]
      %v4714 = vld [vmem:[%s307 + $0x270] sm:$0xf]
      %v4715 = vld [vmem:[%s307 + $0x274] sm:$0xf]
      %v4716 = vld [vmem:[%s307 + $0x278] sm:$0xf]
      %v4717 = vld [vmem:[%s307 + $0x27c] sm:$0xf]
      %v4718 = vld [vmem:[%s307 + $0x280] sm:$0xf]
      %v4719 = vld [vmem:[%s307 + $0x284] sm:$0xf]
      %v4720 = vld [vmem:[%s307 + $0x288] sm:$0xf]
      %v4721 = vld [vmem:[%s307 + $0x28c] sm:$0xf]
      %v4722 = vld [vmem:[%s307 + $0x290] sm:$0xf]
      %v4723 = vld [vmem:[%s307 + $0x294] sm:$0xf]
      %v4724 = vld [vmem:[%s307 + $0x298] sm:$0xf]
      %v4725 = vld [vmem:[%s307 + $0x29c] sm:$0xf]
      %v4726 = vld [vmem:[%s307 + $0x2a0] sm:$0xf]
      %v4727 = vld [vmem:[%s307 + $0x2a4] sm:$0xf]
      %v4728 = vld [vmem:[%s307 + $0x2a8] sm:$0xf]
      %v4729 = vld [vmem:[%s307 + $0x2ac] sm:$0xf]
      %v4730 = vld [vmem:[%s307 + $0x2b0] sm:$0xf]
      %v4731 = vld [vmem:[%s307 + $0x2b4] sm:$0xf]
      %v4732 = vld [vmem:[%s307 + $0x2b8] sm:$0xf]
      %v4733 = vld [vmem:[%s307 + $0x2bc] sm:$0xf]
      %v4734 = vld [vmem:[%s307 + $0x2c0] sm:$0xf]
      %v4735 = vld [vmem:[%s307 + $0x2c4] sm:$0xf]
      %v4736 = vld [vmem:[%s307 + $0x2c8] sm:$0xf]
      %v4737 = vld [vmem:[%s307 + $0x2cc] sm:$0xf]
      %v4738 = vld [vmem:[%s307 + $0x2d0] sm:$0xf]
      %v4739 = vld [vmem:[%s307 + $0x2d4] sm:$0xf]
      %v4740 = vld [vmem:[%s307 + $0x2d8] sm:$0xf]
      %v4741 = vld [vmem:[%s307 + $0x2dc] sm:$0xf]
      %v4742 = vld [vmem:[%s307 + $0x2e0] sm:$0xf]
      %v4743 = vld [vmem:[%s307 + $0x2e4] sm:$0xf]
      %v4744 = vld [vmem:[%s307 + $0x2e8] sm:$0xf]
      %v4745 = vld [vmem:[%s307 + $0x2ec] sm:$0xf]
      %v4746 = vld [vmem:[%s307 + $0x2f0] sm:$0xf]
      %v4747 = vld [vmem:[%s307 + $0x2f4] sm:$0xf]
      %v4748 = vld [vmem:[%s307 + $0x2f8] sm:$0xf]
      %v4749 = vld [vmem:[%s307 + $0x2fc] sm:$0xf]
      %v4750 = vld [vmem:[%s307 + $0x300] sm:$0xf]
      %v4751 = vld [vmem:[%s307 + $0x304] sm:$0xf]
      %v4752 = vld [vmem:[%s307 + $0x308] sm:$0xf]
      %v4753 = vld [vmem:[%s307 + $0x30c] sm:$0xf]
      %v4950 = vunpack.c.l.b16 %v4558
      %v4951 = vunpack.c.l.b16 %v4559
      %v4952 = vunpack.c.l.b16 %v4560
      %v4953 = vunpack.c.l.b16 %v4561
      %v4954 = vunpack.c.l.b16 %v4562
      %v4955 = vunpack.c.l.b16 %v4563
      %v4956 = vunpack.c.l.b16 %v4564
      %v4957 = vunpack.c.l.b16 %v4565
      %v4958 = vunpack.c.l.b16 %v4566
      %v4959 = vunpack.c.l.b16 %v4567
      %v4960 = vunpack.c.l.b16 %v4568
      %v4961 = vunpack.c.l.b16 %v4569
      %v4962 = vunpack.c.l.b16 %v4570
      %v4963 = vunpack.c.l.b16 %v4571
      %v4964 = vunpack.c.l.b16 %v4572
      %v4965 = vunpack.c.l.b16 %v4573
      %v4966 = vunpack.c.l.b16 %v4574
      %v4967 = vunpack.c.l.b16 %v4575
      %v4968 = vunpack.c.l.b16 %v4576
      %v4969 = vunpack.c.l.b16 %v4577
      %v4970 = vunpack.c.l.b16 %v4578
      %v4971 = vunpack.c.l.b16 %v4579
      %v4972 = vunpack.c.l.b16 %v4580
      %v4973 = vunpack.c.l.b16 %v4581
      %v4974 = vunpack.c.l.b16 %v4582
      %v4975 = vunpack.c.l.b16 %v4583
      %v4976 = vunpack.c.l.b16 %v4584
      %v4977 = vunpack.c.l.b16 %v4585
      %v4978 = vunpack.c.l.b16 %v4586
      %v4979 = vunpack.c.l.b16 %v4587
      %v4980 = vunpack.c.l.b16 %v4588
      %v4981 = vunpack.c.l.b16 %v4589
      %v4982 = vunpack.c.l.b16 %v4590
      %v4983 = vunpack.c.l.b16 %v4591
      %v4984 = vunpack.c.l.b16 %v4592
      %v4985 = vunpack.c.l.b16 %v4593
      %v4986 = vunpack.c.l.b16 %v4594
      %v4987 = vunpack.c.l.b16 %v4595
      %v4988 = vunpack.c.l.b16 %v4596
      %v4989 = vunpack.c.l.b16 %v4597
      %v4990 = vunpack.c.l.b16 %v4598
      %v4991 = vunpack.c.l.b16 %v4599
      %v4992 = vunpack.c.l.b16 %v4600
      %v4993 = vunpack.c.l.b16 %v4601
      %v4994 = vunpack.c.l.b16 %v4602
      %v4995 = vunpack.c.l.b16 %v4603
      %v4996 = vunpack.c.l.b16 %v4604
      %v4997 = vunpack.c.l.b16 %v4605
      %v4998 = vunpack.c.l.b16 %v4606
      %v4999 = vunpack.c.l.b16 %v4607
      %v5000 = vunpack.c.l.b16 %v4608
      %v5001 = vunpack.c.l.b16 %v4609
      %v5002 = vunpack.c.l.b16 %v4610
      %v5003 = vunpack.c.l.b16 %v4611
      %v5004 = vunpack.c.l.b16 %v4612
      %v5005 = vunpack.c.l.b16 %v4613
      %v5006 = vunpack.c.l.b16 %v4614
      %v5007 = vunpack.c.l.b16 %v4615
      %v5008 = vunpack.c.l.b16 %v4616
      %v5009 = vunpack.c.l.b16 %v4617
      %v5010 = vunpack.c.l.b16 %v4618
      %v5011 = vunpack.c.l.b16 %v4619
      %v5012 = vunpack.c.l.b16 %v4620
      %v5013 = vunpack.c.l.b16 %v4621
      %v5014 = vunpack.c.l.b16 %v4622
      %v5015 = vunpack.c.l.b16 %v4623
      %v5016 = vunpack.c.l.b16 %v4624
      %v5017 = vunpack.c.l.b16 %v4625
      %v5018 = vunpack.c.l.b16 %v4626
      %v5019 = vunpack.c.l.b16 %v4627
      %v5020 = vunpack.c.l.b16 %v4628
      %v5021 = vunpack.c.l.b16 %v4629
      %v5022 = vunpack.c.l.b16 %v4630
      %v5023 = vunpack.c.l.b16 %v4631
      %v5024 = vunpack.c.l.b16 %v4632
      %v5025 = vunpack.c.l.b16 %v4633
      %v5026 = vunpack.c.l.b16 %v4634
      %v5027 = vunpack.c.l.b16 %v4635
      %v5028 = vunpack.c.l.b16 %v4636
      %v5029 = vunpack.c.l.b16 %v4637
      %v5030 = vunpack.c.l.b16 %v4638
      %v5031 = vunpack.c.l.b16 %v4639
      %v5032 = vunpack.c.l.b16 %v4640
      %v5033 = vunpack.c.l.b16 %v4641
      %v5034 = vunpack.c.l.b16 %v4642
      %v5035 = vunpack.c.l.b16 %v4643
      %v5036 = vunpack.c.l.b16 %v4644
      %v5037 = vunpack.c.l.b16 %v4645
      %v5038 = vunpack.c.l.b16 %v4646
      %v5039 = vunpack.c.l.b16 %v4647
      %v5040 = vunpack.c.l.b16 %v4648
      %v5041 = vunpack.c.l.b16 %v4649
      %v5042 = vunpack.c.l.b16 %v4650
      %v5043 = vunpack.c.l.b16 %v4651
      %v5044 = vunpack.c.l.b16 %v4652
      %v5045 = vunpack.c.l.b16 %v4653
      %v5046 = vunpack.c.l.b16 %v4654
      %v5047 = vunpack.c.l.b16 %v4655
      %v5048 = vunpack.c.l.b16 %v4656
      %v5049 = vunpack.c.l.b16 %v4657
      %v5050 = vunpack.c.l.b16 %v4658
      %v5051 = vunpack.c.l.b16 %v4659
      %v5052 = vunpack.c.l.b16 %v4660
      %v5053 = vunpack.c.l.b16 %v4661
      %v5054 = vunpack.c.l.b16 %v4662
      %v5055 = vunpack.c.l.b16 %v4663
      %v5056 = vunpack.c.l.b16 %v4664
      %v5057 = vunpack.c.l.b16 %v4665
      %v5058 = vunpack.c.l.b16 %v4666
      %v5059 = vunpack.c.l.b16 %v4667
      %v5060 = vunpack.c.l.b16 %v4668
      %v5061 = vunpack.c.l.b16 %v4669
      %v5062 = vunpack.c.l.b16 %v4670
      %v5063 = vunpack.c.l.b16 %v4671
      %v5064 = vunpack.c.l.b16 %v4672
      %v5065 = vunpack.c.l.b16 %v4673
      %v5066 = vunpack.c.l.b16 %v4674
      %v5067 = vunpack.c.l.b16 %v4675
      %v5068 = vunpack.c.l.b16 %v4676
      %v5069 = vunpack.c.l.b16 %v4677
      %v5070 = vunpack.c.l.b16 %v4678
      %v5071 = vunpack.c.l.b16 %v4679
      %v5072 = vunpack.c.l.b16 %v4680
      %v5073 = vunpack.c.l.b16 %v4681
      %v5074 = vunpack.c.l.b16 %v4682
      %v5075 = vunpack.c.l.b16 %v4683
      %v5076 = vunpack.c.l.b16 %v4684
      %v5077 = vunpack.c.l.b16 %v4685
      %v5078 = vunpack.c.l.b16 %v4686
      %v5079 = vunpack.c.l.b16 %v4687
      %v5080 = vunpack.c.l.b16 %v4688
      %v5081 = vunpack.c.l.b16 %v4689
      %v5082 = vunpack.c.l.b16 %v4690
      %v5083 = vunpack.c.l.b16 %v4691
      %v5084 = vunpack.c.l.b16 %v4692
      %v5085 = vunpack.c.l.b16 %v4693
      %v5086 = vunpack.c.l.b16 %v4694
      %v5087 = vunpack.c.l.b16 %v4695
      %v5088 = vunpack.c.l.b16 %v4696
      %v5089 = vunpack.c.l.b16 %v4697
      %v5090 = vunpack.c.l.b16 %v4698
      %v5091 = vunpack.c.l.b16 %v4699
      %v5092 = vunpack.c.l.b16 %v4700
      %v5093 = vunpack.c.l.b16 %v4701
      %v5094 = vunpack.c.l.b16 %v4702
      %v5095 = vunpack.c.l.b16 %v4703
      %v5096 = vunpack.c.l.b16 %v4704
      %v5097 = vunpack.c.l.b16 %v4705
      %v5098 = vunpack.c.l.b16 %v4706
      %v5099 = vunpack.c.l.b16 %v4707
      %v5100 = vunpack.c.l.b16 %v4708
      %v5101 = vunpack.c.l.b16 %v4709
      %v5102 = vunpack.c.l.b16 %v4710
      %v5103 = vunpack.c.l.b16 %v4711
      %v5104 = vunpack.c.l.b16 %v4712
      %v5105 = vunpack.c.l.b16 %v4713
      %v5106 = vunpack.c.l.b16 %v4714
      %v5107 = vunpack.c.l.b16 %v4715
      %v5108 = vunpack.c.l.b16 %v4716
      %v5109 = vunpack.c.l.b16 %v4717
      %v5110 = vunpack.c.l.b16 %v4718
      %v5111 = vunpack.c.l.b16 %v4719
      %v5112 = vunpack.c.l.b16 %v4720
      %v5113 = vunpack.c.l.b16 %v4721
      %v5114 = vunpack.c.l.b16 %v4722
      %v5115 = vunpack.c.l.b16 %v4723
      %v5116 = vunpack.c.l.b16 %v4724
      %v5117 = vunpack.c.l.b16 %v4725
      %v5118 = vunpack.c.l.b16 %v4726
      %v5119 = vunpack.c.l.b16 %v4727
      %v5120 = vunpack.c.l.b16 %v4728
      %v5121 = vunpack.c.l.b16 %v4729
      %v5122 = vunpack.c.l.b16 %v4730
      %v5123 = vunpack.c.l.b16 %v4731
      %v5124 = vunpack.c.l.b16 %v4732
      %v5125 = vunpack.c.l.b16 %v4733
      %v5126 = vunpack.c.l.b16 %v4734
      %v5127 = vunpack.c.l.b16 %v4735
      %v5128 = vunpack.c.l.b16 %v4736
      %v5129 = vunpack.c.l.b16 %v4737
      %v5130 = vunpack.c.l.b16 %v4738
      %v5131 = vunpack.c.l.b16 %v4739
      %v5132 = vunpack.c.l.b16 %v4740
      %v5133 = vunpack.c.l.b16 %v4741
      %v5134 = vunpack.c.l.b16 %v4742
      %v5135 = vunpack.c.l.b16 %v4743
      %v5136 = vunpack.c.l.b16 %v4744
      %v5137 = vunpack.c.l.b16 %v4745
      %v5138 = vunpack.c.l.b16 %v4746
      %v5139 = vunpack.c.l.b16 %v4747
      %v5140 = vunpack.c.l.b16 %v4748
      %v5141 = vunpack.c.l.b16 %v4749
      %v5142 = vunpack.c.l.b16 %v4750
      %v5143 = vunpack.c.l.b16 %v4751
      %v5144 = vunpack.c.l.b16 %v4752
      %v5145 = vunpack.c.l.b16 %v4753
      %v5146 = vpack.c.b16 %v4951, %v4950
      %v5147 = vpack.c.b16 %v4953, %v4952
      %v5148 = vpack.c.b16 %v4955, %v4954
      %v5149 = vpack.c.b16 %v4957, %v4956
      %v5150 = vpack.c.b16 %v4959, %v4958
      %v5151 = vpack.c.b16 %v4961, %v4960
      %v5152 = vpack.c.b16 %v4963, %v4962
      %v5153 = vpack.c.b16 %v4965, %v4964
      %v5154 = vpack.c.b16 %v4967, %v4966
      %v5155 = vpack.c.b16 %v4969, %v4968
      %v5156 = vpack.c.b16 %v4971, %v4970
      %v5157 = vpack.c.b16 %v4973, %v4972
      %v5158 = vpack.c.b16 %v4975, %v4974
      %v5159 = vpack.c.b16 %v4977, %v4976
      %v5160 = vpack.c.b16 %v4979, %v4978
      %v5161 = vpack.c.b16 %v4981, %v4980
      %v5162 = vpack.c.b16 %v4983, %v4982
      %v5163 = vpack.c.b16 %v4985, %v4984
      %v5164 = vpack.c.b16 %v4987, %v4986
      %v5165 = vpack.c.b16 %v4989, %v4988
      %v5166 = vpack.c.b16 %v4991, %v4990
      %v5167 = vpack.c.b16 %v4993, %v4992
      %v5168 = vpack.c.b16 %v4995, %v4994
      %v5169 = vpack.c.b16 %v4997, %v4996
      %v5170 = vpack.c.b16 %v4999, %v4998
      %v5171 = vpack.c.b16 %v5001, %v5000
      %v5172 = vpack.c.b16 %v5003, %v5002
      %v5173 = vpack.c.b16 %v5005, %v5004
      %v5174 = vpack.c.b16 %v5007, %v5006
      %v5175 = vpack.c.b16 %v5009, %v5008
      %v5176 = vpack.c.b16 %v5011, %v5010
      %v5177 = vpack.c.b16 %v5013, %v5012
      %v5178 = vpack.c.b16 %v5015, %v5014
      %v5179 = vpack.c.b16 %v5017, %v5016
      %v5180 = vpack.c.b16 %v5019, %v5018
      %v5181 = vpack.c.b16 %v5021, %v5020
      %v5182 = vpack.c.b16 %v5023, %v5022
      %v5183 = vpack.c.b16 %v5025, %v5024
      %v5184 = vpack.c.b16 %v5027, %v5026
      %v5185 = vpack.c.b16 %v5029, %v5028
      %v5186 = vpack.c.b16 %v5031, %v5030
      %v5187 = vpack.c.b16 %v5033, %v5032
      %v5188 = vpack.c.b16 %v5035, %v5034
      %v5189 = vpack.c.b16 %v5037, %v5036
      %v5190 = vpack.c.b16 %v5039, %v5038
      %v5191 = vpack.c.b16 %v5041, %v5040
      %v5192 = vpack.c.b16 %v5043, %v5042
      %v5193 = vpack.c.b16 %v5045, %v5044
      %v5194 = vpack.c.b16 %v5047, %v5046
      %v5195 = vpack.c.b16 %v5049, %v5048
      %v5196 = vpack.c.b16 %v5051, %v5050
      %v5197 = vpack.c.b16 %v5053, %v5052
      %v5198 = vpack.c.b16 %v5055, %v5054
      %v5199 = vpack.c.b16 %v5057, %v5056
      %v5200 = vpack.c.b16 %v5059, %v5058
      %v5201 = vpack.c.b16 %v5061, %v5060
      %v5202 = vpack.c.b16 %v5063, %v5062
      %v5203 = vpack.c.b16 %v5065, %v5064
      %v5204 = vpack.c.b16 %v5067, %v5066
      %v5205 = vpack.c.b16 %v5069, %v5068
      %v5206 = vpack.c.b16 %v5071, %v5070
      %v5207 = vpack.c.b16 %v5073, %v5072
      %v5208 = vpack.c.b16 %v5075, %v5074
      %v5209 = vpack.c.b16 %v5077, %v5076
      %v5210 = vpack.c.b16 %v5079, %v5078
      %v5211 = vpack.c.b16 %v5081, %v5080
      %v5212 = vpack.c.b16 %v5083, %v5082
      %v5213 = vpack.c.b16 %v5085, %v5084
      %v5214 = vpack.c.b16 %v5087, %v5086
      %v5215 = vpack.c.b16 %v5089, %v5088
      %v5216 = vpack.c.b16 %v5091, %v5090
      %v5217 = vpack.c.b16 %v5093, %v5092
      %v5218 = vpack.c.b16 %v5095, %v5094
      %v5219 = vpack.c.b16 %v5097, %v5096
      %v5220 = vpack.c.b16 %v5099, %v5098
      %v5221 = vpack.c.b16 %v5101, %v5100
      %v5222 = vpack.c.b16 %v5103, %v5102
      %v5223 = vpack.c.b16 %v5105, %v5104
      %v5224 = vpack.c.b16 %v5107, %v5106
      %v5225 = vpack.c.b16 %v5109, %v5108
      %v5226 = vpack.c.b16 %v5111, %v5110
      %v5227 = vpack.c.b16 %v5113, %v5112
      %v5228 = vpack.c.b16 %v5115, %v5114
      %v5229 = vpack.c.b16 %v5117, %v5116
      %v5230 = vpack.c.b16 %v5119, %v5118
      %v5231 = vpack.c.b16 %v5121, %v5120
      %v5232 = vpack.c.b16 %v5123, %v5122
      %v5233 = vpack.c.b16 %v5125, %v5124
      %v5234 = vpack.c.b16 %v5127, %v5126
      %v5235 = vpack.c.b16 %v5129, %v5128
      %v5236 = vpack.c.b16 %v5131, %v5130
      %v5237 = vpack.c.b16 %v5133, %v5132
      %v5238 = vpack.c.b16 %v5135, %v5134
      %v5239 = vpack.c.b16 %v5137, %v5136
      %v5240 = vpack.c.b16 %v5139, %v5138
      %v5241 = vpack.c.b16 %v5141, %v5140
      %v5242 = vpack.c.b16 %v5143, %v5142
      %v5243 = vpack.c.b16 %v5145, %v5144
      %v5245 = vsel %vm1054, %v5146, 0
      %v5248 = vsel %vm1054, %v5147, 0
      %v5251 = vsel %vm1054, %v5148, 0
      %v5254 = vsel %vm1054, %v5149, 0
      %v5257 = vsel %vm1054, %v5150, 0
      %v5260 = vsel %vm1054, %v5151, 0
      %v5263 = vsel %vm1054, %v5152, 0
      %v5266 = vsel %vm1054, %v5153, 0
      %v5269 = vsel %vm1054, %v5154, 0
      %v5272 = vsel %vm1054, %v5155, 0
      %v5275 = vsel %vm1054, %v5156, 0
      %v5278 = vsel %vm1054, %v5157, 0
      %v5281 = vsel %vm1054, %v5158, 0
      %v5284 = vsel %vm1054, %v5159, 0
      %v5287 = vsel %vm1054, %v5160, 0
      %v5290 = vsel %vm1054, %v5161, 0
      %v5293 = vsel %vm1054, %v5162, 0
      %v5296 = vsel %vm1054, %v5163, 0
      %v5299 = vsel %vm1054, %v5164, 0
      %v5302 = vsel %vm1054, %v5165, 0
      %v5305 = vsel %vm1054, %v5166, 0
      %v5308 = vsel %vm1054, %v5167, 0
      %v5311 = vsel %vm1054, %v5168, 0
      %v5314 = vsel %vm1054, %v5169, 0
      %v5317 = vsel %vm1054, %v5170, 0
      %v5320 = vsel %vm1054, %v5171, 0
      %v5323 = vsel %vm1054, %v5172, 0
      %v5326 = vsel %vm1054, %v5173, 0
      %v5329 = vsel %vm1054, %v5174, 0
      %v5332 = vsel %vm1054, %v5175, 0
      %v5335 = vsel %vm1054, %v5176, 0
      %v5338 = vsel %vm1054, %v5177, 0
      %v5341 = vsel %vm1054, %v5178, 0
      %v5344 = vsel %vm1054, %v5179, 0
      %v5347 = vsel %vm1054, %v5180, 0
      %v5350 = vsel %vm1054, %v5181, 0
      %v5353 = vsel %vm1054, %v5182, 0
      %v5356 = vsel %vm1054, %v5183, 0
      %v5359 = vsel %vm1054, %v5184, 0
      %v5362 = vsel %vm1054, %v5185, 0
      %v5365 = vsel %vm1054, %v5186, 0
      %v5368 = vsel %vm1054, %v5187, 0
      %v5371 = vsel %vm1054, %v5188, 0
      %v5374 = vsel %vm1054, %v5189, 0
      %v5377 = vsel %vm1054, %v5190, 0
      %v5380 = vsel %vm1054, %v5191, 0
      %v5383 = vsel %vm1054, %v5192, 0
      %v5386 = vsel %vm1054, %v5193, 0
      %v5389 = vsel %vm1054, %v5194, 0
      %v5392 = vsel %vm1054, %v5195, 0
      %v5395 = vsel %vm1054, %v5196, 0
      %v5398 = vsel %vm1054, %v5197, 0
      %v5401 = vsel %vm1054, %v5198, 0
      %v5404 = vsel %vm1054, %v5199, 0
      %v5407 = vsel %vm1054, %v5200, 0
      %v5410 = vsel %vm1054, %v5201, 0
      %v5413 = vsel %vm1054, %v5202, 0
      %v5416 = vsel %vm1054, %v5203, 0
      %v5419 = vsel %vm1054, %v5204, 0
      %v5422 = vsel %vm1054, %v5205, 0
      %v5425 = vsel %vm1054, %v5206, 0
      %v5428 = vsel %vm1054, %v5207, 0
      %v5431 = vsel %vm1054, %v5208, 0
      %v5434 = vsel %vm1054, %v5209, 0
      %v5437 = vsel %vm1054, %v5210, 0
      %v5440 = vsel %vm1054, %v5211, 0
      %v5443 = vsel %vm1054, %v5212, 0
      %v5446 = vsel %vm1054, %v5213, 0
      %v5449 = vsel %vm1054, %v5214, 0
      %v5452 = vsel %vm1054, %v5215, 0
      %v5455 = vsel %vm1054, %v5216, 0
      %v5458 = vsel %vm1054, %v5217, 0
      %v5461 = vsel %vm1054, %v5218, 0
      %v5464 = vsel %vm1054, %v5219, 0
      %v5467 = vsel %vm1054, %v5220, 0
      %v5470 = vsel %vm1054, %v5221, 0
      %v5473 = vsel %vm1054, %v5222, 0
      %v5476 = vsel %vm1054, %v5223, 0
      %v5479 = vsel %vm1054, %v5224, 0
      %v5482 = vsel %vm1054, %v5225, 0
      %v5485 = vsel %vm1054, %v5226, 0
      %v5488 = vsel %vm1054, %v5227, 0
      %v5491 = vsel %vm1054, %v5228, 0
      %v5494 = vsel %vm1054, %v5229, 0
      %v5497 = vsel %vm1054, %v5230, 0
      %v5500 = vsel %vm1054, %v5231, 0
      %v5503 = vsel %vm1054, %v5232, 0
      %v5506 = vsel %vm1054, %v5233, 0
      %v5509 = vsel %vm1054, %v5234, 0
      %v5512 = vsel %vm1054, %v5235, 0
      %v5515 = vsel %vm1054, %v5236, 0
      %v5518 = vsel %vm1054, %v5237, 0
      %v5521 = vsel %vm1054, %v5238, 0
      %v5524 = vsel %vm1054, %v5239, 0
      %v5527 = vsel %vm1054, %v5240, 0
      %v5530 = vsel %vm1054, %v5241, 0
      %v5533 = vsel %vm1054, %v5242, 0
      %v5536 = vsel %vm1054, %v5243, 0
      %5538 = vmatprep.subr.bf16.mxu0 0
      %5539 = vmatpush1.bf16.msra.mxu0 %v1045
      %5540 = vmatprep.subr.bf16.mxu0 0
      %5541 = vmatpush1.bf16.msra.mxu0 %v1046
      %5542 = vmatprep.subr.bf16.mxu0 0
      %5543 = vmatpush1.bf16.msra.mxu0 %v1047
      %5544 = vmatprep.subr.bf16.mxu0 0
      %5545 = vmatpush1.bf16.msra.mxu0 %v1048
      %5546 = vmatprep.subr.bf16.mxu0 0
      %5547 = vmatpush1.bf16.msra.mxu0 %v1354
      %5548 = vmatprep.subr.bf16.mxu0 0
      %5549 = vmatpush1.bf16.msra.mxu0 0
      %5550 = vmatprep.subr.bf16.mxu0 0
      %5551 = vmatpush1.bf16.msra.mxu0 0
      %5552 = vmatprep.subr.bf16.mxu0 0
      %5553 = vmatpush1.bf16.msra.mxu0 0
      %5554 = vmatprep.subr.bf16.mxu0 0
      %5555 = vmatpush1.bf16.msra.mxu0 0
      %5556 = vmatprep.subr.bf16.mxu0 0
      %5557 = vmatpush1.bf16.msra.mxu0 0
      %5558 = vmatprep.subr.bf16.mxu0 0
      %5559 = vmatpush1.bf16.msra.mxu0 0
      %5560 = vmatprep.subr.bf16.mxu0 0
      %5561 = vmatpush1.bf16.msra.mxu0 0
      %5562 = vmatprep.subr.bf16.mxu0 0
      %5563 = vmatpush1.bf16.msra.mxu0 0
      %5564 = vmatprep.subr.bf16.mxu0 0
      %5565 = vmatpush1.bf16.msra.mxu0 0
      %5566 = vmatprep.subr.bf16.mxu0 0
      %5567 = vmatpush1.bf16.msra.mxu0 0
      %5568 = vmatprep.subr.bf16.mxu0 0
      %5569 = vmatpush1.bf16.msra.mxu0 0
      %5570 = vmatprep.mubr.bf16.mxu0 0
      %5571 = vmatmul.mubr.bf16.gmra.mrb[0].mxu0 %v5245
      %v5572 = vpop.f32.mrb[0].mxu0
      %v5573 = vadd.f32 %v533, %v5572
      %v5574 = vpop.f32.mrb[0].mxu0
      %v5575 = vpop.f32.mrb[0].mxu0
      %v5576 = vadd.f32 %v533, %v5575
      %v5577 = vpop.f32.mrb[0].mxu0
      %5578 = vmatprep.mubr.bf16.mxu0 0
      %5579 = vmatmul.mubr.bf16.gmra.mrb[0].mxu0 %v5248
      %v5580 = vpop.f32.mrb[0].mxu0
      %v5581 = vadd.f32 %v533, %v5580
      %v5582 = vpop.f32.mrb[0].mxu0
      %v5583 = vpop.f32.mrb[0].mxu0
      %v5584 = vadd.f32 %v533, %v5583
      %v5585 = vpop.f32.mrb[0].mxu0
      %5586 = vmatprep.mubr.bf16.mxu0 0
      %5587 = vmatmul.mubr.bf16.gmra.mrb[0].mxu0 %v5251
      %v5588 = vpop.f32.mrb[0].mxu0
      %v5589 = vadd.f32 %v533, %v5588
      %v5590 = vpop.f32.mrb[0].mxu0
      %v5591 = vpop.f32.mrb[0].mxu0
      %v5592 = vadd.f32 %v533, %v5591
      %v5593 = vpop.f32.mrb[0].mxu0
      %5594 = vmatprep.mubr.bf16.mxu0 0
      %5595 = vmatmul.mubr.bf16.gmra.mrb[0].mxu0 %v5254
      %v5596 = vpop.f32.mrb[0].mxu0
      %v5597 = vadd.f32 %v533, %v5596
      %v5598 = vpop.f32.mrb[0].mxu0
      %v5599 = vpop.f32.mrb[0].mxu0
      %v5600 = vadd.f32 %v533, %v5599
      %v5601 = vpop.f32.mrb[0].mxu0
      %5602 = vmatprep.mubr.bf16.mxu0 0
      %5603 = vmatmul.mubr.bf16.gmra.mrb[0].mxu0 %v5257
      %v5604 = vpop.f32.mrb[0].mxu0
      %v5605 = vadd.f32 %v533, %v5604
      %v5606 = vpop.f32.mrb[0].mxu0
      %v5607 = vpop.f32.mrb[0].mxu0
      %v5608 = vadd.f32 %v533, %v5607
      %v5609 = vpop.f32.mrb[0].mxu0
      %5610 = vmatprep.mubr.bf16.mxu0 0
      %5611 = vmatmul.mubr.bf16.gmra.mrb[0].mxu0 %v5260
      %v5612 = vpop.f32.mrb[0].mxu0
      %v5613 = vadd.f32 %v533, %v5612
      %v5614 = vpop.f32.mrb[0].mxu0
      %v5615 = vpop.f32.mrb[0].mxu0
      %v5616 = vadd.f32 %v533, %v5615
      %v5617 = vpop.f32.mrb[0].mxu0
      %5618 = vmatprep.mubr.bf16.mxu0 0
      %5619 = vmatmul.mubr.bf16.gmra.mrb[0].mxu0 %v5263
      %v5620 = vpop.f32.mrb[0].mxu0
      %v5621 = vadd.f32 %v533, %v5620
      %v5622 = vpop.f32.mrb[0].mxu0
      %v5623 = vpop.f32.mrb[0].mxu0
      %v5624 = vadd.f32 %v533, %v5623
      %v5625 = vpop.f32.mrb[0].mxu0
      %5626 = vmatprep.mubr.bf16.mxu0 0
      %5627 = vmatmul.mubr.bf16.gmra.mrb[0].mxu0 %v5266
      %v5628 = vpop.f32.mrb[0].mxu0
      %v5629 = vadd.f32 %v533, %v5628
      %v5630 = vpop.f32.mrb[0].mxu0
      %v5631 = vpop.f32.mrb[0].mxu0
      %v5632 = vadd.f32 %v533, %v5631
      %v5633 = vpop.f32.mrb[0].mxu0
      %5634 = vmatprep.mubr.bf16.mxu0 0
      %5635 = vmatmul.mubr.bf16.gmra.mrb[0].mxu0 %v5269
      %v5636 = vpop.f32.mrb[0].mxu0
      %v5637 = vadd.f32 %v533, %v5636
      %v5638 = vpop.f32.mrb[0].mxu0
      %v5639 = vpop.f32.mrb[0].mxu0
      %v5640 = vadd.f32 %v533, %v5639
      %v5641 = vpop.f32.mrb[0].mxu0
      %5642 = vmatprep.mubr.bf16.mxu0 0
      %5643 = vmatmul.mubr.bf16.gmra.mrb[0].mxu0 %v5272
      %v5644 = vpop.f32.mrb[0].mxu0
      %v5645 = vadd.f32 %v533, %v5644
      %v5646 = vpop.f32.mrb[0].mxu0
      %v5647 = vpop.f32.mrb[0].mxu0
      %v5648 = vadd.f32 %v533, %v5647
      %v5649 = vpop.f32.mrb[0].mxu0
      %5650 = vmatprep.mubr.bf16.mxu0 0
      %5651 = vmatmul.mubr.bf16.gmra.mrb[0].mxu0 %v5275
      %v5652 = vpop.f32.mrb[0].mxu0
      %v5653 = vadd.f32 %v533, %v5652
      %v5654 = vpop.f32.mrb[0].mxu0
      %v5655 = vpop.f32.mrb[0].mxu0
      %v5656 = vadd.f32 %v533, %v5655
      %v5657 = vpop.f32.mrb[0].mxu0
      %5658 = vmatprep.mubr.bf16.mxu0 0
      %5659 = vmatmul.mubr.bf16.gmra.mrb[0].mxu0 %v5278
      %v5660 = vpop.f32.mrb[0].mxu0
      %v5661 = vadd.f32 %v533, %v5660
      %v5662 = vpop.f32.mrb[0].mxu0
      %v5663 = vpop.f32.mrb[0].mxu0
      %v5664 = vadd.f32 %v533, %v5663
      %v5665 = vpop.f32.mrb[0].mxu0
      %5666 = vmatprep.mubr.bf16.mxu0 0
      %5667 = vmatmul.mubr.bf16.gmra.mrb[0].mxu0 %v5281
      %v5668 = vpop.f32.mrb[0].mxu0
      %v5669 = vadd.f32 %v533, %v5668
      %v5670 = vpop.f32.mrb[0].mxu0
      %v5671 = vpop.f32.mrb[0].mxu0
      %v5672 = vadd.f32 %v533, %v5671
      %v5673 = vpop.f32.mrb[0].mxu0
      %5674 = vmatprep.mubr.bf16.mxu0 0
      %5675 = vmatmul.mubr.bf16.gmra.mrb[0].mxu0 %v5284
      %v5676 = vpop.f32.mrb[0].mxu0
      %v5677 = vadd.f32 %v533, %v5676
      %v5678 = vpop.f32.mrb[0].mxu0
      %v5679 = vpop.f32.mrb[0].mxu0
      %v5680 = vadd.f32 %v533, %v5679
      %v5681 = vpop.f32.mrb[0].mxu0
      %5682 = vmatprep.mubr.bf16.mxu0 0
      %5683 = vmatmul.mubr.bf16.gmra.mrb[0].mxu0 %v5287
      %v5684 = vpop.f32.mrb[0].mxu0
      %v5685 = vadd.f32 %v533, %v5684
      %v5686 = vpop.f32.mrb[0].mxu0
      %v5687 = vpop.f32.mrb[0].mxu0
      %v5688 = vadd.f32 %v533, %v5687
      %v5689 = vpop.f32.mrb[0].mxu0
      %5690 = vmatprep.mubr.bf16.mxu0 0
      %5691 = vmatmul.mubr.bf16.gmra.mrb[0].mxu0 %v5290
      %v5692 = vpop.f32.mrb[0].mxu0
      %v5693 = vadd.f32 %v533, %v5692
      %v5694 = vpop.f32.mrb[0].mxu0
      %v5695 = vpop.f32.mrb[0].mxu0
      %v5696 = vadd.f32 %v533, %v5695
      %v5697 = vpop.f32.mrb[0].mxu0
      %5698 = vmatprep.mubr.bf16.mxu0 0
      %5699 = vmatmul.mubr.bf16.gmra.mrb[0].mxu0 %v5293
      %v5700 = vpop.f32.mrb[0].mxu0
      %v5701 = vadd.f32 %v533, %v5700
      %v5702 = vpop.f32.mrb[0].mxu0
      %v5703 = vpop.f32.mrb[0].mxu0
      %v5704 = vadd.f32 %v533, %v5703
      %v5705 = vpop.f32.mrb[0].mxu0
      %5706 = vmatprep.mubr.bf16.mxu0 0
      %5707 = vmatmul.mubr.bf16.gmra.mrb[0].mxu0 %v5296
      %v5708 = vpop.f32.mrb[0].mxu0
      %v5709 = vadd.f32 %v533, %v5708
      %v5710 = vpop.f32.mrb[0].mxu0
      %v5711 = vpop.f32.mrb[0].mxu0
      %v5712 = vadd.f32 %v533, %v5711
      %v5713 = vpop.f32.mrb[0].mxu0
      %5714 = vmatprep.mubr.bf16.mxu0 0
      %5715 = vmatmul.mubr.bf16.gmra.mrb[0].mxu0 %v5299
      %v5716 = vpop.f32.mrb[0].mxu0
      %v5717 = vadd.f32 %v533, %v5716
      %v5718 = vpop.f32.mrb[0].mxu0
      %v5719 = vpop.f32.mrb[0].mxu0
      %v5720 = vadd.f32 %v533, %v5719
      %v5721 = vpop.f32.mrb[0].mxu0
      %5722 = vmatprep.mubr.bf16.mxu0 0
      %5723 = vmatmul.mubr.bf16.gmra.mrb[0].mxu0 %v5302
      %v5724 = vpop.f32.mrb[0].mxu0
      %v5725 = vadd.f32 %v533, %v5724
      %v5726 = vpop.f32.mrb[0].mxu0
      %v5727 = vpop.f32.mrb[0].mxu0
      %v5728 = vadd.f32 %v533, %v5727
      %v5729 = vpop.f32.mrb[0].mxu0
      %5730 = vmatprep.mubr.bf16.mxu0 0
      %5731 = vmatmul.mubr.bf16.gmra.mrb[0].mxu0 %v5305
      %v5732 = vpop.f32.mrb[0].mxu0
      %v5733 = vadd.f32 %v533, %v5732
      %v5734 = vpop.f32.mrb[0].mxu0
      %v5735 = vpop.f32.mrb[0].mxu0
      %v5736 = vadd.f32 %v533, %v5735
      %v5737 = vpop.f32.mrb[0].mxu0
      %5738 = vmatprep.mubr.bf16.mxu0 0
      %5739 = vmatmul.mubr.bf16.gmra.mrb[0].mxu0 %v5308
      %v5740 = vpop.f32.mrb[0].mxu0
      %v5741 = vadd.f32 %v533, %v5740
      %v5742 = vpop.f32.mrb[0].mxu0
      %v5743 = vpop.f32.mrb[0].mxu0
      %v5744 = vadd.f32 %v533, %v5743
      %v5745 = vpop.f32.mrb[0].mxu0
      %5746 = vmatprep.mubr.bf16.mxu0 0
      %5747 = vmatmul.mubr.bf16.gmra.mrb[0].mxu0 %v5311
      %v5748 = vpop.f32.mrb[0].mxu0
      %v5749 = vadd.f32 %v533, %v5748
      %v5750 = vpop.f32.mrb[0].mxu0
      %v5751 = vpop.f32.mrb[0].mxu0
      %v5752 = vadd.f32 %v533, %v5751
      %v5753 = vpop.f32.mrb[0].mxu0
      %5754 = vmatprep.mubr.bf16.mxu0 0
      %5755 = vmatmul.mubr.bf16.gmra.mrb[0].mxu0 %v5314
      %v5756 = vpop.f32.mrb[0].mxu0
      %v5757 = vadd.f32 %v533, %v5756
      %v5758 = vpop.f32.mrb[0].mxu0
      %v5759 = vpop.f32.mrb[0].mxu0
      %v5760 = vadd.f32 %v533, %v5759
      %v5761 = vpop.f32.mrb[0].mxu0
      %5762 = vmatprep.mubr.bf16.mxu0 0
      %5763 = vmatmul.mubr.bf16.gmra.mrb[0].mxu0 %v5317
      %v5764 = vpop.f32.mrb[0].mxu0
      %v5765 = vadd.f32 %v533, %v5764
      %v5766 = vpop.f32.mrb[0].mxu0
      %v5767 = vpop.f32.mrb[0].mxu0
      %v5768 = vadd.f32 %v533, %v5767
      %v5769 = vpop.f32.mrb[0].mxu0
      %5770 = vmatprep.mubr.bf16.mxu0 0
      %5771 = vmatmul.mubr.bf16.gmra.mrb[0].mxu0 %v5320
      %v5772 = vpop.f32.mrb[0].mxu0
      %v5773 = vadd.f32 %v533, %v5772
      %v5774 = vpop.f32.mrb[0].mxu0
      %v5775 = vpop.f32.mrb[0].mxu0
      %v5776 = vadd.f32 %v533, %v5775
      %v5777 = vpop.f32.mrb[0].mxu0
      %5778 = vmatprep.mubr.bf16.mxu0 0
      %5779 = vmatmul.mubr.bf16.gmra.mrb[0].mxu0 %v5323
      %v5780 = vpop.f32.mrb[0].mxu0
      %v5781 = vadd.f32 %v533, %v5780
      %v5782 = vpop.f32.mrb[0].mxu0
      %v5783 = vpop.f32.mrb[0].mxu0
      %v5784 = vadd.f32 %v533, %v5783
      %v5785 = vpop.f32.mrb[0].mxu0
      %5786 = vmatprep.mubr.bf16.mxu0 0
      %5787 = vmatmul.mubr.bf16.gmra.mrb[0].mxu0 %v5326
      %v5788 = vpop.f32.mrb[0].mxu0
      %v5789 = vadd.f32 %v533, %v5788
      %v5790 = vpop.f32.mrb[0].mxu0
      %v5791 = vpop.f32.mrb[0].mxu0
      %v5792 = vadd.f32 %v533, %v5791
      %v5793 = vpop.f32.mrb[0].mxu0
      %5794 = vmatprep.mubr.bf16.mxu0 0
      %5795 = vmatmul.mubr.bf16.gmra.mrb[0].mxu0 %v5329
      %v5796 = vpop.f32.mrb[0].mxu0
      %v5797 = vadd.f32 %v533, %v5796
      %v5798 = vpop.f32.mrb[0].mxu0
      %v5799 = vpop.f32.mrb[0].mxu0
      %v5800 = vadd.f32 %v533, %v5799
      %v5801 = vpop.f32.mrb[0].mxu0
      %5802 = vmatprep.mubr.bf16.mxu0 0
      %5803 = vmatmul.mubr.bf16.gmra.mrb[0].mxu0 %v5332
      %v5804 = vpop.f32.mrb[0].mxu0
      %v5805 = vadd.f32 %v533, %v5804
      %v5806 = vpop.f32.mrb[0].mxu0
      %v5807 = vpop.f32.mrb[0].mxu0
      %v5808 = vadd.f32 %v533, %v5807
      %v5809 = vpop.f32.mrb[0].mxu0
      %5810 = vmatprep.mubr.bf16.mxu0 0
      %5811 = vmatmul.mubr.bf16.gmra.mrb[0].mxu0 %v5335
      %v5812 = vpop.f32.mrb[0].mxu0
      %v5813 = vadd.f32 %v533, %v5812
      %v5814 = vpop.f32.mrb[0].mxu0
      %v5815 = vpop.f32.mrb[0].mxu0
      %v5816 = vadd.f32 %v533, %v5815
      %v5817 = vpop.f32.mrb[0].mxu0
      %5818 = vmatprep.mubr.bf16.mxu0 0
      %5819 = vmatmul.mubr.bf16.gmra.mrb[0].mxu0 %v5338
      %v5820 = vpop.f32.mrb[0].mxu0
      %v5821 = vadd.f32 %v533, %v5820
      %v5822 = vpop.f32.mrb[0].mxu0
      %v5823 = vpop.f32.mrb[0].mxu0
      %v5824 = vadd.f32 %v533, %v5823
      %v5825 = vpop.f32.mrb[0].mxu0
      %5826 = vmatprep.mubr.bf16.mxu0 0
      %5827 = vmatmul.mubr.bf16.gmra.mrb[0].mxu0 %v5341
      %v5828 = vpop.f32.mrb[0].mxu0
      %v5829 = vadd.f32 %v533, %v5828
      %v5830 = vpop.f32.mrb[0].mxu0
      %v5831 = vpop.f32.mrb[0].mxu0
      %v5832 = vadd.f32 %v533, %v5831
      %v5833 = vpop.f32.mrb[0].mxu0
      %5834 = vmatprep.mubr.bf16.mxu0 0
      %5835 = vmatmul.mubr.bf16.gmra.mrb[0].mxu0 %v5344
      %v5836 = vpop.f32.mrb[0].mxu0
      %v5837 = vadd.f32 %v533, %v5836
      %v5838 = vpop.f32.mrb[0].mxu0
      %v5839 = vpop.f32.mrb[0].mxu0
      %v5840 = vadd.f32 %v533, %v5839
      %v5841 = vpop.f32.mrb[0].mxu0
      %5842 = vmatprep.mubr.bf16.mxu0 0
      %5843 = vmatmul.mubr.bf16.gmra.mrb[0].mxu0 %v5347
      %v5844 = vpop.f32.mrb[0].mxu0
      %v5845 = vadd.f32 %v533, %v5844
      %v5846 = vpop.f32.mrb[0].mxu0
      %v5847 = vpop.f32.mrb[0].mxu0
      %v5848 = vadd.f32 %v533, %v5847
      %v5849 = vpop.f32.mrb[0].mxu0
      %5850 = vmatprep.mubr.bf16.mxu0 0
      %5851 = vmatmul.mubr.bf16.gmra.mrb[0].mxu0 %v5350
      %v5852 = vpop.f32.mrb[0].mxu0
      %v5853 = vadd.f32 %v533, %v5852
      %v5854 = vpop.f32.mrb[0].mxu0
      %v5855 = vpop.f32.mrb[0].mxu0
      %v5856 = vadd.f32 %v533, %v5855
      %v5857 = vpop.f32.mrb[0].mxu0
      %5858 = vmatprep.mubr.bf16.mxu0 0
      %5859 = vmatmul.mubr.bf16.gmra.mrb[0].mxu0 %v5353
      %v5860 = vpop.f32.mrb[0].mxu0
      %v5861 = vadd.f32 %v533, %v5860
      %v5862 = vpop.f32.mrb[0].mxu0
      %v5863 = vpop.f32.mrb[0].mxu0
      %v5864 = vadd.f32 %v533, %v5863
      %v5865 = vpop.f32.mrb[0].mxu0
      %5866 = vmatprep.mubr.bf16.mxu0 0
      %5867 = vmatmul.mubr.bf16.gmra.mrb[0].mxu0 %v5356
      %v5868 = vpop.f32.mrb[0].mxu0
      %v5869 = vadd.f32 %v533, %v5868
      %v5870 = vpop.f32.mrb[0].mxu0
      %v5871 = vpop.f32.mrb[0].mxu0
      %v5872 = vadd.f32 %v533, %v5871
      %v5873 = vpop.f32.mrb[0].mxu0
      %5874 = vmatprep.mubr.bf16.mxu0 0
      %5875 = vmatmul.mubr.bf16.gmra.mrb[0].mxu0 %v5359
      %v5876 = vpop.f32.mrb[0].mxu0
      %v5877 = vadd.f32 %v533, %v5876
      %v5878 = vpop.f32.mrb[0].mxu0
      %v5879 = vpop.f32.mrb[0].mxu0
      %v5880 = vadd.f32 %v533, %v5879
      %v5881 = vpop.f32.mrb[0].mxu0
      %5882 = vmatprep.mubr.bf16.mxu0 0
      %5883 = vmatmul.mubr.bf16.gmra.mrb[0].mxu0 %v5362
      %v5884 = vpop.f32.mrb[0].mxu0
      %v5885 = vadd.f32 %v533, %v5884
      %v5886 = vpop.f32.mrb[0].mxu0
      %v5887 = vpop.f32.mrb[0].mxu0
      %v5888 = vadd.f32 %v533, %v5887
      %v5889 = vpop.f32.mrb[0].mxu0
      %5890 = vmatprep.mubr.bf16.mxu0 0
      %5891 = vmatmul.mubr.bf16.gmra.mrb[0].mxu0 %v5365
      %v5892 = vpop.f32.mrb[0].mxu0
      %v5893 = vadd.f32 %v533, %v5892
      %v5894 = vpop.f32.mrb[0].mxu0
      %v5895 = vpop.f32.mrb[0].mxu0
      %v5896 = vadd.f32 %v533, %v5895
      %v5897 = vpop.f32.mrb[0].mxu0
      %5898 = vmatprep.mubr.bf16.mxu0 0
      %5899 = vmatmul.mubr.bf16.gmra.mrb[0].mxu0 %v5368
      %v5900 = vpop.f32.mrb[0].mxu0
      %v5901 = vadd.f32 %v533, %v5900
      %v5902 = vpop.f32.mrb[0].mxu0
      %v5903 = vpop.f32.mrb[0].mxu0
      %v5904 = vadd.f32 %v533, %v5903
      %v5905 = vpop.f32.mrb[0].mxu0
      %5906 = vmatprep.mubr.bf16.mxu0 0
      %5907 = vmatmul.mubr.bf16.gmra.mrb[0].mxu0 %v5371
      %v5908 = vpop.f32.mrb[0].mxu0
      %v5909 = vadd.f32 %v533, %v5908
      %v5910 = vpop.f32.mrb[0].mxu0
      %v5911 = vpop.f32.mrb[0].mxu0
      %v5912 = vadd.f32 %v533, %v5911
      %v5913 = vpop.f32.mrb[0].mxu0
      %5914 = vmatprep.mubr.bf16.mxu0 0
      %5915 = vmatmul.mubr.bf16.gmra.mrb[0].mxu0 %v5374
      %v5916 = vpop.f32.mrb[0].mxu0
      %v5917 = vadd.f32 %v533, %v5916
      %v5918 = vpop.f32.mrb[0].mxu0
      %v5919 = vpop.f32.mrb[0].mxu0
      %v5920 = vadd.f32 %v533, %v5919
      %v5921 = vpop.f32.mrb[0].mxu0
      %5922 = vmatprep.mubr.bf16.mxu0 0
      %5923 = vmatmul.mubr.bf16.gmra.mrb[0].mxu0 %v5377
      %v5924 = vpop.f32.mrb[0].mxu0
      %v5925 = vadd.f32 %v533, %v5924
      %v5926 = vpop.f32.mrb[0].mxu0
      %v5927 = vpop.f32.mrb[0].mxu0
      %v5928 = vadd.f32 %v533, %v5927
      %v5929 = vpop.f32.mrb[0].mxu0
      %5930 = vmatprep.mubr.bf16.mxu0 0
      %5931 = vmatmul.mubr.bf16.gmra.mrb[0].mxu0 %v5380
      %v5932 = vpop.f32.mrb[0].mxu0
      %v5933 = vadd.f32 %v533, %v5932
      %v5934 = vpop.f32.mrb[0].mxu0
      %v5935 = vpop.f32.mrb[0].mxu0
      %v5936 = vadd.f32 %v533, %v5935
      %v5937 = vpop.f32.mrb[0].mxu0
      %5938 = vmatprep.mubr.bf16.mxu0 0
      %5939 = vmatmul.mubr.bf16.gmra.mrb[0].mxu0 %v5383
      %v5940 = vpop.f32.mrb[0].mxu0
      %v5941 = vadd.f32 %v533, %v5940
      %v5942 = vpop.f32.mrb[0].mxu0
      %v5943 = vpop.f32.mrb[0].mxu0
      %v5944 = vadd.f32 %v533, %v5943
      %v5945 = vpop.f32.mrb[0].mxu0
      %5946 = vmatprep.mubr.bf16.mxu0 0
      %5947 = vmatmul.mubr.bf16.gmra.mrb[0].mxu0 %v5386
      %v5948 = vpop.f32.mrb[0].mxu0
      %v5949 = vadd.f32 %v533, %v5948
      %v5950 = vpop.f32.mrb[0].mxu0
      %v5951 = vpop.f32.mrb[0].mxu0
      %v5952 = vadd.f32 %v533, %v5951
      %v5953 = vpop.f32.mrb[0].mxu0
      %5954 = vmatprep.mubr.bf16.mxu0 0
      %5955 = vmatmul.mubr.bf16.gmra.mrb[0].mxu0 %v5389
      %v5956 = vpop.f32.mrb[0].mxu0
      %v5957 = vadd.f32 %v533, %v5956
      %v5958 = vpop.f32.mrb[0].mxu0
      %v5959 = vpop.f32.mrb[0].mxu0
      %v5960 = vadd.f32 %v533, %v5959
      %v5961 = vpop.f32.mrb[0].mxu0
      %5962 = vmatprep.mubr.bf16.mxu0 0
      %5963 = vmatmul.mubr.bf16.gmra.mrb[0].mxu0 %v5392
      %v5964 = vpop.f32.mrb[0].mxu0
      %v5965 = vadd.f32 %v533, %v5964
      %v5966 = vpop.f32.mrb[0].mxu0
      %v5967 = vpop.f32.mrb[0].mxu0
      %v5968 = vadd.f32 %v533, %v5967
      %v5969 = vpop.f32.mrb[0].mxu0
      %5970 = vmatprep.mubr.bf16.mxu0 0
      %5971 = vmatmul.mubr.bf16.gmra.mrb[0].mxu0 %v5395
      %v5972 = vpop.f32.mrb[0].mxu0
      %v5973 = vadd.f32 %v533, %v5972
      %v5974 = vpop.f32.mrb[0].mxu0
      %v5975 = vpop.f32.mrb[0].mxu0
      %v5976 = vadd.f32 %v533, %v5975
      %v5977 = vpop.f32.mrb[0].mxu0
      %5978 = vmatprep.mubr.bf16.mxu0 0
      %5979 = vmatmul.mubr.bf16.gmra.mrb[0].mxu0 %v5398
      %v5980 = vpop.f32.mrb[0].mxu0
      %v5981 = vadd.f32 %v533, %v5980
      %v5982 = vpop.f32.mrb[0].mxu0
      %v5983 = vpop.f32.mrb[0].mxu0
      %v5984 = vadd.f32 %v533, %v5983
      %v5985 = vpop.f32.mrb[0].mxu0
      %5986 = vmatprep.mubr.bf16.mxu0 0
      %5987 = vmatmul.mubr.bf16.gmra.mrb[0].mxu0 %v5401
      %v5988 = vpop.f32.mrb[0].mxu0
      %v5989 = vadd.f32 %v533, %v5988
      %v5990 = vpop.f32.mrb[0].mxu0
      %v5991 = vpop.f32.mrb[0].mxu0
      %v5992 = vadd.f32 %v533, %v5991
      %v5993 = vpop.f32.mrb[0].mxu0
      %5994 = vmatprep.mubr.bf16.mxu0 0
      %5995 = vmatmul.mubr.bf16.gmra.mrb[0].mxu0 %v5404
      %v5996 = vpop.f32.mrb[0].mxu0
      %v5997 = vadd.f32 %v533, %v5996
      %v5998 = vpop.f32.mrb[0].mxu0
      %v5999 = vpop.f32.mrb[0].mxu0
      %v6000 = vadd.f32 %v533, %v5999
      %v6001 = vpop.f32.mrb[0].mxu0
      %6002 = vmatprep.mubr.bf16.mxu0 0
      %6003 = vmatmul.mubr.bf16.gmra.mrb[0].mxu0 %v5407
      %v6004 = vpop.f32.mrb[0].mxu0
      %v6005 = vadd.f32 %v533, %v6004
      %v6006 = vpop.f32.mrb[0].mxu0
      %v6007 = vpop.f32.mrb[0].mxu0
      %v6008 = vadd.f32 %v533, %v6007
      %v6009 = vpop.f32.mrb[0].mxu0
      %6010 = vmatprep.mubr.bf16.mxu0 0
      %6011 = vmatmul.mubr.bf16.gmra.mrb[0].mxu0 %v5410
      %v6012 = vpop.f32.mrb[0].mxu0
      %v6013 = vadd.f32 %v533, %v6012
      %v6014 = vpop.f32.mrb[0].mxu0
      %v6015 = vpop.f32.mrb[0].mxu0
      %v6016 = vadd.f32 %v533, %v6015
      %v6017 = vpop.f32.mrb[0].mxu0
      %6018 = vmatprep.mubr.bf16.mxu0 0
      %6019 = vmatmul.mubr.bf16.gmra.mrb[0].mxu0 %v5413
      %v6020 = vpop.f32.mrb[0].mxu0
      %v6021 = vadd.f32 %v533, %v6020
      %v6022 = vpop.f32.mrb[0].mxu0
      %v6023 = vpop.f32.mrb[0].mxu0
      %v6024 = vadd.f32 %v533, %v6023
      %v6025 = vpop.f32.mrb[0].mxu0
      %6026 = vmatprep.mubr.bf16.mxu0 0
      %6027 = vmatmul.mubr.bf16.gmra.mrb[0].mxu0 %v5416
      %v6028 = vpop.f32.mrb[0].mxu0
      %v6029 = vadd.f32 %v533, %v6028
      %v6030 = vpop.f32.mrb[0].mxu0
      %v6031 = vpop.f32.mrb[0].mxu0
      %v6032 = vadd.f32 %v533, %v6031
      %v6033 = vpop.f32.mrb[0].mxu0
      %6034 = vmatprep.mubr.bf16.mxu0 0
      %6035 = vmatmul.mubr.bf16.gmra.mrb[0].mxu0 %v5419
      %v6036 = vpop.f32.mrb[0].mxu0
      %v6037 = vadd.f32 %v533, %v6036
      %v6038 = vpop.f32.mrb[0].mxu0
      %v6039 = vpop.f32.mrb[0].mxu0
      %v6040 = vadd.f32 %v533, %v6039
      %v6041 = vpop.f32.mrb[0].mxu0
      %6042 = vmatprep.mubr.bf16.mxu0 0
      %6043 = vmatmul.mubr.bf16.gmra.mrb[0].mxu0 %v5422
      %v6044 = vpop.f32.mrb[0].mxu0
      %v6045 = vadd.f32 %v533, %v6044
      %v6046 = vpop.f32.mrb[0].mxu0
      %v6047 = vpop.f32.mrb[0].mxu0
      %v6048 = vadd.f32 %v533, %v6047
      %v6049 = vpop.f32.mrb[0].mxu0
      %6050 = vmatprep.mubr.bf16.mxu0 0
      %6051 = vmatmul.mubr.bf16.gmra.mrb[0].mxu0 %v5425
      %v6052 = vpop.f32.mrb[0].mxu0
      %v6053 = vadd.f32 %v533, %v6052
      %v6054 = vpop.f32.mrb[0].mxu0
      %v6055 = vpop.f32.mrb[0].mxu0
      %v6056 = vadd.f32 %v533, %v6055
      %v6057 = vpop.f32.mrb[0].mxu0
      %6058 = vmatprep.mubr.bf16.mxu0 0
      %6059 = vmatmul.mubr.bf16.gmra.mrb[0].mxu0 %v5428
      %v6060 = vpop.f32.mrb[0].mxu0
      %v6061 = vadd.f32 %v533, %v6060
      %v6062 = vpop.f32.mrb[0].mxu0
      %v6063 = vpop.f32.mrb[0].mxu0
      %v6064 = vadd.f32 %v533, %v6063
      %v6065 = vpop.f32.mrb[0].mxu0
      %6066 = vmatprep.mubr.bf16.mxu0 0
      %6067 = vmatmul.mubr.bf16.gmra.mrb[0].mxu0 %v5431
      %v6068 = vpop.f32.mrb[0].mxu0
      %v6069 = vadd.f32 %v533, %v6068
      %v6070 = vpop.f32.mrb[0].mxu0
      %v6071 = vpop.f32.mrb[0].mxu0
      %v6072 = vadd.f32 %v533, %v6071
      %v6073 = vpop.f32.mrb[0].mxu0
      %6074 = vmatprep.mubr.bf16.mxu0 0
      %6075 = vmatmul.mubr.bf16.gmra.mrb[0].mxu0 %v5434
      %v6076 = vpop.f32.mrb[0].mxu0
      %v6077 = vadd.f32 %v533, %v6076
      %v6078 = vpop.f32.mrb[0].mxu0
      %v6079 = vpop.f32.mrb[0].mxu0
      %v6080 = vadd.f32 %v533, %v6079
      %v6081 = vpop.f32.mrb[0].mxu0
      %6082 = vmatprep.mubr.bf16.mxu0 0
      %6083 = vmatmul.mubr.bf16.gmra.mrb[0].mxu0 %v5437
      %v6084 = vpop.f32.mrb[0].mxu0
      %v6085 = vadd.f32 %v533, %v6084
      %v6086 = vpop.f32.mrb[0].mxu0
      %v6087 = vpop.f32.mrb[0].mxu0
      %v6088 = vadd.f32 %v533, %v6087
      %v6089 = vpop.f32.mrb[0].mxu0
      %6090 = vmatprep.mubr.bf16.mxu0 0
      %6091 = vmatmul.mubr.bf16.gmra.mrb[0].mxu0 %v5440
      %v6092 = vpop.f32.mrb[0].mxu0
      %v6093 = vadd.f32 %v533, %v6092
      %v6094 = vpop.f32.mrb[0].mxu0
      %v6095 = vpop.f32.mrb[0].mxu0
      %v6096 = vadd.f32 %v533, %v6095
      %v6097 = vpop.f32.mrb[0].mxu0
      %6098 = vmatprep.mubr.bf16.mxu0 0
      %6099 = vmatmul.mubr.bf16.gmra.mrb[0].mxu0 %v5443
      %v6100 = vpop.f32.mrb[0].mxu0
      %v6101 = vadd.f32 %v533, %v6100
      %v6102 = vpop.f32.mrb[0].mxu0
      %v6103 = vpop.f32.mrb[0].mxu0
      %v6104 = vadd.f32 %v533, %v6103
      %v6105 = vpop.f32.mrb[0].mxu0
      %6106 = vmatprep.mubr.bf16.mxu0 0
      %6107 = vmatmul.mubr.bf16.gmra.mrb[0].mxu0 %v5446
      %v6108 = vpop.f32.mrb[0].mxu0
      %v6109 = vadd.f32 %v533, %v6108
      %v6110 = vpop.f32.mrb[0].mxu0
      %v6111 = vpop.f32.mrb[0].mxu0
      %v6112 = vadd.f32 %v533, %v6111
      %v6113 = vpop.f32.mrb[0].mxu0
      %6114 = vmatprep.mubr.bf16.mxu0 0
      %6115 = vmatmul.mubr.bf16.gmra.mrb[0].mxu0 %v5449
      %v6116 = vpop.f32.mrb[0].mxu0
      %v6117 = vadd.f32 %v533, %v6116
      %v6118 = vpop.f32.mrb[0].mxu0
      %v6119 = vpop.f32.mrb[0].mxu0
      %v6120 = vadd.f32 %v533, %v6119
      %v6121 = vpop.f32.mrb[0].mxu0
      %6122 = vmatprep.mubr.bf16.mxu0 0
      %6123 = vmatmul.mubr.bf16.gmra.mrb[0].mxu0 %v5452
      %v6124 = vpop.f32.mrb[0].mxu0
      %v6125 = vadd.f32 %v533, %v6124
      %v6126 = vpop.f32.mrb[0].mxu0
      %v6127 = vpop.f32.mrb[0].mxu0
      %v6128 = vadd.f32 %v533, %v6127
      %v6129 = vpop.f32.mrb[0].mxu0
      %6130 = vmatprep.mubr.bf16.mxu0 0
      %6131 = vmatmul.mubr.bf16.gmra.mrb[0].mxu0 %v5455
      %v6132 = vpop.f32.mrb[0].mxu0
      %v6133 = vadd.f32 %v533, %v6132
      %v6134 = vpop.f32.mrb[0].mxu0
      %v6135 = vpop.f32.mrb[0].mxu0
      %v6136 = vadd.f32 %v533, %v6135
      %v6137 = vpop.f32.mrb[0].mxu0
      %6138 = vmatprep.mubr.bf16.mxu0 0
      %6139 = vmatmul.mubr.bf16.gmra.mrb[0].mxu0 %v5458
      %v6140 = vpop.f32.mrb[0].mxu0
      %v6141 = vadd.f32 %v533, %v6140
      %v6142 = vpop.f32.mrb[0].mxu0
      %v6143 = vpop.f32.mrb[0].mxu0
      %v6144 = vadd.f32 %v533, %v6143
      %v6145 = vpop.f32.mrb[0].mxu0
      %6146 = vmatprep.mubr.bf16.mxu0 0
      %6147 = vmatmul.mubr.bf16.gmra.mrb[0].mxu0 %v5461
      %v6148 = vpop.f32.mrb[0].mxu0
      %v6149 = vadd.f32 %v533, %v6148
      %v6150 = vpop.f32.mrb[0].mxu0
      %v6151 = vpop.f32.mrb[0].mxu0
      %v6152 = vadd.f32 %v533, %v6151
      %v6153 = vpop.f32.mrb[0].mxu0
      %6154 = vmatprep.mubr.bf16.mxu0 0
      %6155 = vmatmul.mubr.bf16.gmra.mrb[0].mxu0 %v5464
      %v6156 = vpop.f32.mrb[0].mxu0
      %v6157 = vadd.f32 %v533, %v6156
      %v6158 = vpop.f32.mrb[0].mxu0
      %v6159 = vpop.f32.mrb[0].mxu0
      %v6160 = vadd.f32 %v533, %v6159
      %v6161 = vpop.f32.mrb[0].mxu0
      %6162 = vmatprep.mubr.bf16.mxu0 0
      %6163 = vmatmul.mubr.bf16.gmra.mrb[0].mxu0 %v5467
      %v6164 = vpop.f32.mrb[0].mxu0
      %v6165 = vadd.f32 %v533, %v6164
      %v6166 = vpop.f32.mrb[0].mxu0
      %v6167 = vpop.f32.mrb[0].mxu0
      %v6168 = vadd.f32 %v533, %v6167
      %v6169 = vpop.f32.mrb[0].mxu0
      %6170 = vmatprep.mubr.bf16.mxu0 0
      %6171 = vmatmul.mubr.bf16.gmra.mrb[0].mxu0 %v5470
      %v6172 = vpop.f32.mrb[0].mxu0
      %v6173 = vadd.f32 %v533, %v6172
      %v6174 = vpop.f32.mrb[0].mxu0
      %v6175 = vpop.f32.mrb[0].mxu0
      %v6176 = vadd.f32 %v533, %v6175
      %v6177 = vpop.f32.mrb[0].mxu0
      %6178 = vmatprep.mubr.bf16.mxu0 0
      %6179 = vmatmul.mubr.bf16.gmra.mrb[0].mxu0 %v5473
      %v6180 = vpop.f32.mrb[0].mxu0
      %v6181 = vadd.f32 %v533, %v6180
      %v6182 = vpop.f32.mrb[0].mxu0
      %v6183 = vpop.f32.mrb[0].mxu0
      %v6184 = vadd.f32 %v533, %v6183
      %v6185 = vpop.f32.mrb[0].mxu0
      %6186 = vmatprep.mubr.bf16.mxu0 0
      %6187 = vmatmul.mubr.bf16.gmra.mrb[0].mxu0 %v5476
      %v6188 = vpop.f32.mrb[0].mxu0
      %v6189 = vadd.f32 %v533, %v6188
      %v6190 = vpop.f32.mrb[0].mxu0
      %v6191 = vpop.f32.mrb[0].mxu0
      %v6192 = vadd.f32 %v533, %v6191
      %v6193 = vpop.f32.mrb[0].mxu0
      %6194 = vmatprep.mubr.bf16.mxu0 0
      %6195 = vmatmul.mubr.bf16.gmra.mrb[0].mxu0 %v5479
      %v6196 = vpop.f32.mrb[0].mxu0
      %v6197 = vadd.f32 %v533, %v6196
      %v6198 = vpop.f32.mrb[0].mxu0
      %v6199 = vpop.f32.mrb[0].mxu0
      %v6200 = vadd.f32 %v533, %v6199
      %v6201 = vpop.f32.mrb[0].mxu0
      %6202 = vmatprep.mubr.bf16.mxu0 0
      %6203 = vmatmul.mubr.bf16.gmra.mrb[0].mxu0 %v5482
      %v6204 = vpop.f32.mrb[0].mxu0
      %v6205 = vadd.f32 %v533, %v6204
      %v6206 = vpop.f32.mrb[0].mxu0
      %v6207 = vpop.f32.mrb[0].mxu0
      %v6208 = vadd.f32 %v533, %v6207
      %v6209 = vpop.f32.mrb[0].mxu0
      %6210 = vmatprep.mubr.bf16.mxu0 0
      %6211 = vmatmul.mubr.bf16.gmra.mrb[0].mxu0 %v5485
      %v6212 = vpop.f32.mrb[0].mxu0
      %v6213 = vadd.f32 %v533, %v6212
      %v6214 = vpop.f32.mrb[0].mxu0
      %v6215 = vpop.f32.mrb[0].mxu0
      %v6216 = vadd.f32 %v533, %v6215
      %v6217 = vpop.f32.mrb[0].mxu0
      %6218 = vmatprep.mubr.bf16.mxu0 0
      %6219 = vmatmul.mubr.bf16.gmra.mrb[0].mxu0 %v5488
      %v6220 = vpop.f32.mrb[0].mxu0
      %v6221 = vadd.f32 %v533, %v6220
      %v6222 = vpop.f32.mrb[0].mxu0
      %v6223 = vpop.f32.mrb[0].mxu0
      %v6224 = vadd.f32 %v533, %v6223
      %v6225 = vpop.f32.mrb[0].mxu0
      %6226 = vmatprep.mubr.bf16.mxu0 0
      %6227 = vmatmul.mubr.bf16.gmra.mrb[0].mxu0 %v5491
      %v6228 = vpop.f32.mrb[0].mxu0
      %v6229 = vadd.f32 %v533, %v6228
      %v6230 = vpop.f32.mrb[0].mxu0
      %v6231 = vpop.f32.mrb[0].mxu0
      %v6232 = vadd.f32 %v533, %v6231
      %v6233 = vpop.f32.mrb[0].mxu0
      %6234 = vmatprep.mubr.bf16.mxu0 0
      %6235 = vmatmul.mubr.bf16.gmra.mrb[0].mxu0 %v5494
      %v6236 = vpop.f32.mrb[0].mxu0
      %v6237 = vadd.f32 %v533, %v6236
      %v6238 = vpop.f32.mrb[0].mxu0
      %v6239 = vpop.f32.mrb[0].mxu0
      %v6240 = vadd.f32 %v533, %v6239
      %v6241 = vpop.f32.mrb[0].mxu0
      %6242 = vmatprep.mubr.bf16.mxu0 0
      %6243 = vmatmul.mubr.bf16.gmra.mrb[0].mxu0 %v5497
      %v6244 = vpop.f32.mrb[0].mxu0
      %v6245 = vadd.f32 %v533, %v6244
      %v6246 = vpop.f32.mrb[0].mxu0
      %v6247 = vpop.f32.mrb[0].mxu0
      %v6248 = vadd.f32 %v533, %v6247
      %v6249 = vpop.f32.mrb[0].mxu0
      %6250 = vmatprep.mubr.bf16.mxu0 0
      %6251 = vmatmul.mubr.bf16.gmra.mrb[0].mxu0 %v5500
      %v6252 = vpop.f32.mrb[0].mxu0
      %v6253 = vadd.f32 %v533, %v6252
      %v6254 = vpop.f32.mrb[0].mxu0
      %v6255 = vpop.f32.mrb[0].mxu0
      %v6256 = vadd.f32 %v533, %v6255
      %v6257 = vpop.f32.mrb[0].mxu0
      %6258 = vmatprep.mubr.bf16.mxu0 0
      %6259 = vmatmul.mubr.bf16.gmra.mrb[0].mxu0 %v5503
      %v6260 = vpop.f32.mrb[0].mxu0
      %v6261 = vadd.f32 %v533, %v6260
      %v6262 = vpop.f32.mrb[0].mxu0
      %v6263 = vpop.f32.mrb[0].mxu0
      %v6264 = vadd.f32 %v533, %v6263
      %v6265 = vpop.f32.mrb[0].mxu0
      %6266 = vmatprep.mubr.bf16.mxu0 0
      %6267 = vmatmul.mubr.bf16.gmra.mrb[0].mxu0 %v5506
      %v6268 = vpop.f32.mrb[0].mxu0
      %v6269 = vadd.f32 %v533, %v6268
      %v6270 = vpop.f32.mrb[0].mxu0
      %v6271 = vpop.f32.mrb[0].mxu0
      %v6272 = vadd.f32 %v533, %v6271
      %v6273 = vpop.f32.mrb[0].mxu0
      %6274 = vmatprep.mubr.bf16.mxu0 0
      %6275 = vmatmul.mubr.bf16.gmra.mrb[0].mxu0 %v5509
      %v6276 = vpop.f32.mrb[0].mxu0
      %v6277 = vadd.f32 %v533, %v6276
      %v6278 = vpop.f32.mrb[0].mxu0
      %v6279 = vpop.f32.mrb[0].mxu0
      %v6280 = vadd.f32 %v533, %v6279
      %v6281 = vpop.f32.mrb[0].mxu0
      %6282 = vmatprep.mubr.bf16.mxu0 0
      %6283 = vmatmul.mubr.bf16.gmra.mrb[0].mxu0 %v5512
      %v6284 = vpop.f32.mrb[0].mxu0
      %v6285 = vadd.f32 %v533, %v6284
      %v6286 = vpop.f32.mrb[0].mxu0
      %v6287 = vpop.f32.mrb[0].mxu0
      %v6288 = vadd.f32 %v533, %v6287
      %v6289 = vpop.f32.mrb[0].mxu0
      %6290 = vmatprep.mubr.bf16.mxu0 0
      %6291 = vmatmul.mubr.bf16.gmra.mrb[0].mxu0 %v5515
      %v6292 = vpop.f32.mrb[0].mxu0
      %v6293 = vadd.f32 %v533, %v6292
      %v6294 = vpop.f32.mrb[0].mxu0
      %v6295 = vpop.f32.mrb[0].mxu0
      %v6296 = vadd.f32 %v533, %v6295
      %v6297 = vpop.f32.mrb[0].mxu0
      %6298 = vmatprep.mubr.bf16.mxu0 0
      %6299 = vmatmul.mubr.bf16.gmra.mrb[0].mxu0 %v5518
      %v6300 = vpop.f32.mrb[0].mxu0
      %v6301 = vadd.f32 %v533, %v6300
      %v6302 = vpop.f32.mrb[0].mxu0
      %v6303 = vpop.f32.mrb[0].mxu0
      %v6304 = vadd.f32 %v533, %v6303
      %v6305 = vpop.f32.mrb[0].mxu0
      %6306 = vmatprep.mubr.bf16.mxu0 0
      %6307 = vmatmul.mubr.bf16.gmra.mrb[0].mxu0 %v5521
      %v6308 = vpop.f32.mrb[0].mxu0
      %v6309 = vadd.f32 %v533, %v6308
      %v6310 = vpop.f32.mrb[0].mxu0
      %v6311 = vpop.f32.mrb[0].mxu0
      %v6312 = vadd.f32 %v533, %v6311
      %v6313 = vpop.f32.mrb[0].mxu0
      %6314 = vmatprep.mubr.bf16.mxu0 0
      %6315 = vmatmul.mubr.bf16.gmra.mrb[0].mxu0 %v5524
      %v6316 = vpop.f32.mrb[0].mxu0
      %v6317 = vadd.f32 %v533, %v6316
      %v6318 = vpop.f32.mrb[0].mxu0
      %v6319 = vpop.f32.mrb[0].mxu0
      %v6320 = vadd.f32 %v533, %v6319
      %v6321 = vpop.f32.mrb[0].mxu0
      %6322 = vmatprep.mubr.bf16.mxu0 0
      %6323 = vmatmul.mubr.bf16.gmra.mrb[0].mxu0 %v5527
      %v6324 = vpop.f32.mrb[0].mxu0
      %v6325 = vadd.f32 %v533, %v6324
      %v6326 = vpop.f32.mrb[0].mxu0
      %v6327 = vpop.f32.mrb[0].mxu0
      %v6328 = vadd.f32 %v533, %v6327
      %v6329 = vpop.f32.mrb[0].mxu0
      %6330 = vmatprep.mubr.bf16.mxu0 0
      %6331 = vmatmul.mubr.bf16.gmra.mrb[0].mxu0 %v5530
      %v6332 = vpop.f32.mrb[0].mxu0
      %v6333 = vadd.f32 %v533, %v6332
      %v6334 = vpop.f32.mrb[0].mxu0
      %v6335 = vpop.f32.mrb[0].mxu0
      %v6336 = vadd.f32 %v533, %v6335
      %v6337 = vpop.f32.mrb[0].mxu0
      %6338 = vmatprep.mubr.bf16.mxu0 0
      %6339 = vmatmul.mubr.bf16.gmra.mrb[0].mxu0 %v5533
      %v6340 = vpop.f32.mrb[0].mxu0
      %v6341 = vadd.f32 %v533, %v6340
      %v6342 = vpop.f32.mrb[0].mxu0
      %v6343 = vpop.f32.mrb[0].mxu0
      %v6344 = vadd.f32 %v533, %v6343
      %v6345 = vpop.f32.mrb[0].mxu0
      %6346 = vmatprep.mubr.bf16.mxu0 0
      %6347 = vmatmul.mubr.bf16.gmra.mrb[0].mxu0 %v5536
      %v6348 = vpop.f32.mrb[0].mxu0
      %v6349 = vadd.f32 %v533, %v6348
      %v6350 = vpop.f32.mrb[0].mxu0
      %v6351 = vpop.f32.mrb[0].mxu0
      %v6352 = vadd.f32 %v533, %v6351
      %v6353 = vpop.f32.mrb[0].mxu0
      %6354 = vdwg.mxu0
      %v6355 = vmax.f32 %v5573, 0.0
      %v6356 = vmax.f32 %v5576, 0.0
      %v6357 = vmax.f32 %v5581, 0.0
      %v6358 = vmax.f32 %v5584, 0.0
      %v6359 = vmax.f32 %v5589, 0.0
      %v6360 = vmax.f32 %v5592, 0.0
      %v6361 = vmax.f32 %v5597, 0.0
      %v6362 = vmax.f32 %v5600, 0.0
      %v6363 = vmax.f32 %v5605, 0.0
      %v6364 = vmax.f32 %v5608, 0.0
      %v6365 = vmax.f32 %v5613, 0.0
      %v6366 = vmax.f32 %v5616, 0.0
      %v6367 = vmax.f32 %v5621, 0.0
      %v6368 = vmax.f32 %v5624, 0.0
      %v6369 = vmax.f32 %v5629, 0.0
      %v6370 = vmax.f32 %v5632, 0.0
      %v6371 = vmax.f32 %v5637, 0.0
      %v6372 = vmax.f32 %v5640, 0.0
      %v6373 = vmax.f32 %v5645, 0.0
      %v6374 = vmax.f32 %v5648, 0.0
      %v6375 = vmax.f32 %v5653, 0.0
      %v6376 = vmax.f32 %v5656, 0.0
      %v6377 = vmax.f32 %v5661, 0.0
      %v6378 = vmax.f32 %v5664, 0.0
      %v6379 = vmax.f32 %v5669, 0.0
      %v6380 = vmax.f32 %v5672, 0.0
      %v6381 = vmax.f32 %v5677, 0.0
      %v6382 = vmax.f32 %v5680, 0.0
      %v6383 = vmax.f32 %v5685, 0.0
      %v6384 = vmax.f32 %v5688, 0.0
      %v6385 = vmax.f32 %v5693, 0.0
      %v6386 = vmax.f32 %v5696, 0.0
      %v6387 = vmax.f32 %v5701, 0.0
      %v6388 = vmax.f32 %v5704, 0.0
      %v6389 = vmax.f32 %v5709, 0.0
      %v6390 = vmax.f32 %v5712, 0.0
      %v6391 = vmax.f32 %v5717, 0.0
      %v6392 = vmax.f32 %v5720, 0.0
      %v6393 = vmax.f32 %v5725, 0.0
      %v6394 = vmax.f32 %v5728, 0.0
      %v6395 = vmax.f32 %v5733, 0.0
      %v6396 = vmax.f32 %v5736, 0.0
      %v6397 = vmax.f32 %v5741, 0.0
      %v6398 = vmax.f32 %v5744, 0.0
      %v6399 = vmax.f32 %v5749, 0.0
      %v6400 = vmax.f32 %v5752, 0.0
      %v6401 = vmax.f32 %v5757, 0.0
      %v6402 = vmax.f32 %v5760, 0.0
      %v6403 = vmax.f32 %v5765, 0.0
      %v6404 = vmax.f32 %v5768, 0.0
      %v6405 = vmax.f32 %v5773, 0.0
      %v6406 = vmax.f32 %v5776, 0.0
      %v6407 = vmax.f32 %v5781, 0.0
      %v6408 = vmax.f32 %v5784, 0.0
      %v6409 = vmax.f32 %v5789, 0.0
      %v6410 = vmax.f32 %v5792, 0.0
      %v6411 = vmax.f32 %v5797, 0.0
      %v6412 = vmax.f32 %v5800, 0.0
      %v6413 = vmax.f32 %v5805, 0.0
      %v6414 = vmax.f32 %v5808, 0.0
      %v6415 = vmax.f32 %v5813, 0.0
      %v6416 = vmax.f32 %v5816, 0.0
      %v6417 = vmax.f32 %v5821, 0.0
      %v6418 = vmax.f32 %v5824, 0.0
      %v6419 = vmax.f32 %v5829, 0.0
      %v6420 = vmax.f32 %v5832, 0.0
      %v6421 = vmax.f32 %v5837, 0.0
      %v6422 = vmax.f32 %v5840, 0.0
      %v6423 = vmax.f32 %v5845, 0.0
      %v6424 = vmax.f32 %v5848, 0.0
      %v6425 = vmax.f32 %v5853, 0.0
      %v6426 = vmax.f32 %v5856, 0.0
      %v6427 = vmax.f32 %v5861, 0.0
      %v6428 = vmax.f32 %v5864, 0.0
      %v6429 = vmax.f32 %v5869, 0.0
      %v6430 = vmax.f32 %v5872, 0.0
      %v6431 = vmax.f32 %v5877, 0.0
      %v6432 = vmax.f32 %v5880, 0.0
      %v6433 = vmax.f32 %v5885, 0.0
      %v6434 = vmax.f32 %v5888, 0.0
      %v6435 = vmax.f32 %v5893, 0.0
      %v6436 = vmax.f32 %v5896, 0.0
      %v6437 = vmax.f32 %v5901, 0.0
      %v6438 = vmax.f32 %v5904, 0.0
      %v6439 = vmax.f32 %v5909, 0.0
      %v6440 = vmax.f32 %v5912, 0.0
      %v6441 = vmax.f32 %v5917, 0.0
      %v6442 = vmax.f32 %v5920, 0.0
      %v6443 = vmax.f32 %v5925, 0.0
      %v6444 = vmax.f32 %v5928, 0.0
      %v6445 = vmax.f32 %v5933, 0.0
      %v6446 = vmax.f32 %v5936, 0.0
      %v6447 = vmax.f32 %v5941, 0.0
      %v6448 = vmax.f32 %v5944, 0.0
      %v6449 = vmax.f32 %v5949, 0.0
      %v6450 = vmax.f32 %v5952, 0.0
      %v6451 = vmax.f32 %v5957, 0.0
      %v6452 = vmax.f32 %v5960, 0.0
      %v6453 = vmax.f32 %v5965, 0.0
      %v6454 = vmax.f32 %v5968, 0.0
      %v6455 = vmax.f32 %v5973, 0.0
      %v6456 = vmax.f32 %v5976, 0.0
      %v6457 = vmax.f32 %v5981, 0.0
      %v6458 = vmax.f32 %v5984, 0.0
      %v6459 = vmax.f32 %v5989, 0.0
      %v6460 = vmax.f32 %v5992, 0.0
      %v6461 = vmax.f32 %v5997, 0.0
      %v6462 = vmax.f32 %v6000, 0.0
      %v6463 = vmax.f32 %v6005, 0.0
      %v6464 = vmax.f32 %v6008, 0.0
      %v6465 = vmax.f32 %v6013, 0.0
      %v6466 = vmax.f32 %v6016, 0.0
      %v6467 = vmax.f32 %v6021, 0.0
      %v6468 = vmax.f32 %v6024, 0.0
      %v6469 = vmax.f32 %v6029, 0.0
      %v6470 = vmax.f32 %v6032, 0.0
      %v6471 = vmax.f32 %v6037, 0.0
      %v6472 = vmax.f32 %v6040, 0.0
      %v6473 = vmax.f32 %v6045, 0.0
      %v6474 = vmax.f32 %v6048, 0.0
      %v6475 = vmax.f32 %v6053, 0.0
      %v6476 = vmax.f32 %v6056, 0.0
      %v6477 = vmax.f32 %v6061, 0.0
      %v6478 = vmax.f32 %v6064, 0.0
      %v6479 = vmax.f32 %v6069, 0.0
      %v6480 = vmax.f32 %v6072, 0.0
      %v6481 = vmax.f32 %v6077, 0.0
      %v6482 = vmax.f32 %v6080, 0.0
      %v6483 = vmax.f32 %v6085, 0.0
      %v6484 = vmax.f32 %v6088, 0.0
      %v6485 = vmax.f32 %v6093, 0.0
      %v6486 = vmax.f32 %v6096, 0.0
      %v6487 = vmax.f32 %v6101, 0.0
      %v6488 = vmax.f32 %v6104, 0.0
      %v6489 = vmax.f32 %v6109, 0.0
      %v6490 = vmax.f32 %v6112, 0.0
      %v6491 = vmax.f32 %v6117, 0.0
      %v6492 = vmax.f32 %v6120, 0.0
      %v6493 = vmax.f32 %v6125, 0.0
      %v6494 = vmax.f32 %v6128, 0.0
      %v6495 = vmax.f32 %v6133, 0.0
      %v6496 = vmax.f32 %v6136, 0.0
      %v6497 = vmax.f32 %v6141, 0.0
      %v6498 = vmax.f32 %v6144, 0.0
      %v6499 = vmax.f32 %v6149, 0.0
      %v6500 = vmax.f32 %v6152, 0.0
      %v6501 = vmax.f32 %v6157, 0.0
      %v6502 = vmax.f32 %v6160, 0.0
      %v6503 = vmax.f32 %v6165, 0.0
      %v6504 = vmax.f32 %v6168, 0.0
      %v6505 = vmax.f32 %v6173, 0.0
      %v6506 = vmax.f32 %v6176, 0.0
      %v6507 = vmax.f32 %v6181, 0.0
      %v6508 = vmax.f32 %v6184, 0.0
      %v6509 = vmax.f32 %v6189, 0.0
      %v6510 = vmax.f32 %v6192, 0.0
      %v6511 = vmax.f32 %v6197, 0.0
      %v6512 = vmax.f32 %v6200, 0.0
      %v6513 = vmax.f32 %v6205, 0.0
      %v6514 = vmax.f32 %v6208, 0.0
      %v6515 = vmax.f32 %v6213, 0.0
      %v6516 = vmax.f32 %v6216, 0.0
      %v6517 = vmax.f32 %v6221, 0.0
      %v6518 = vmax.f32 %v6224, 0.0
      %v6519 = vmax.f32 %v6229, 0.0
      %v6520 = vmax.f32 %v6232, 0.0
      %v6521 = vmax.f32 %v6237, 0.0
      %v6522 = vmax.f32 %v6240, 0.0
      %v6523 = vmax.f32 %v6245, 0.0
      %v6524 = vmax.f32 %v6248, 0.0
      %v6525 = vmax.f32 %v6253, 0.0
      %v6526 = vmax.f32 %v6256, 0.0
      %v6527 = vmax.f32 %v6261, 0.0
      %v6528 = vmax.f32 %v6264, 0.0
      %v6529 = vmax.f32 %v6269, 0.0
      %v6530 = vmax.f32 %v6272, 0.0
      %v6531 = vmax.f32 %v6277, 0.0
      %v6532 = vmax.f32 %v6280, 0.0
      %v6533 = vmax.f32 %v6285, 0.0
      %v6534 = vmax.f32 %v6288, 0.0
      %v6535 = vmax.f32 %v6293, 0.0
      %v6536 = vmax.f32 %v6296, 0.0
      %v6537 = vmax.f32 %v6301, 0.0
      %v6538 = vmax.f32 %v6304, 0.0
      %v6539 = vmax.f32 %v6309, 0.0
      %v6540 = vmax.f32 %v6312, 0.0
      %v6541 = vmax.f32 %v6317, 0.0
      %v6542 = vmax.f32 %v6320, 0.0
      %v6543 = vmax.f32 %v6325, 0.0
      %v6544 = vmax.f32 %v6328, 0.0
      %v6545 = vmax.f32 %v6333, 0.0
      %v6546 = vmax.f32 %v6336, 0.0
      %v6547 = vmax.f32 %v6341, 0.0
      %v6548 = vmax.f32 %v6344, 0.0
      %v6549 = vmax.f32 %v6349, 0.0
      %v6550 = vmax.f32 %v6352, 0.0
      %v6551 = vadd.f32 %v4362, %v6355
      %v6552 = vadd.f32 %v4363, %v6356
      %v6553 = vadd.f32 %v4364, %v6357
      %v6554 = vadd.f32 %v4365, %v6358
      %v6555 = vadd.f32 %v4366, %v6359
      %v6556 = vadd.f32 %v4367, %v6360
      %v6557 = vadd.f32 %v4368, %v6361
      %v6558 = vadd.f32 %v4369, %v6362
      %v6559 = vadd.f32 %v4370, %v6363
      %v6560 = vadd.f32 %v4371, %v6364
      %v6561 = vadd.f32 %v4372, %v6365
      %v6562 = vadd.f32 %v4373, %v6366
      %v6563 = vadd.f32 %v4374, %v6367
      %v6564 = vadd.f32 %v4375, %v6368
      %v6565 = vadd.f32 %v4376, %v6369
      %v6566 = vadd.f32 %v4377, %v6370
      %v6567 = vadd.f32 %v4378, %v6371
      %v6568 = vadd.f32 %v4379, %v6372
      %v6569 = vadd.f32 %v4380, %v6373
      %v6570 = vadd.f32 %v4381, %v6374
      %v6571 = vadd.f32 %v4382, %v6375
      %v6572 = vadd.f32 %v4383, %v6376
      %v6573 = vadd.f32 %v4384, %v6377
      %v6574 = vadd.f32 %v4385, %v6378
      %v6575 = vadd.f32 %v4386, %v6379
      %v6576 = vadd.f32 %v4387, %v6380
      %v6577 = vadd.f32 %v4388, %v6381
      %v6578 = vadd.f32 %v4389, %v6382
      %v6579 = vadd.f32 %v4390, %v6383
      %v6580 = vadd.f32 %v4391, %v6384
      %v6581 = vadd.f32 %v4392, %v6385
      %v6582 = vadd.f32 %v4393, %v6386
      %v6583 = vadd.f32 %v4394, %v6387
      %v6584 = vadd.f32 %v4395, %v6388
      %v6585 = vadd.f32 %v4396, %v6389
      %v6586 = vadd.f32 %v4397, %v6390
      %v6587 = vadd.f32 %v4398, %v6391
      %v6588 = vadd.f32 %v4399, %v6392
      %v6589 = vadd.f32 %v4400, %v6393
      %v6590 = vadd.f32 %v4401, %v6394
      %v6591 = vadd.f32 %v4402, %v6395
      %v6592 = vadd.f32 %v4403, %v6396
      %v6593 = vadd.f32 %v4404, %v6397
      %v6594 = vadd.f32 %v4405, %v6398
      %v6595 = vadd.f32 %v4406, %v6399
      %v6596 = vadd.f32 %v4407, %v6400
      %v6597 = vadd.f32 %v4408, %v6401
      %v6598 = vadd.f32 %v4409, %v6402
      %v6599 = vadd.f32 %v4410, %v6403
      %v6600 = vadd.f32 %v4411, %v6404
      %v6601 = vadd.f32 %v4412, %v6405
      %v6602 = vadd.f32 %v4413, %v6406
      %v6603 = vadd.f32 %v4414, %v6407
      %v6604 = vadd.f32 %v4415, %v6408
      %v6605 = vadd.f32 %v4416, %v6409
      %v6606 = vadd.f32 %v4417, %v6410
      %v6607 = vadd.f32 %v4418, %v6411
      %v6608 = vadd.f32 %v4419, %v6412
      %v6609 = vadd.f32 %v4420, %v6413
      %v6610 = vadd.f32 %v4421, %v6414
      %v6611 = vadd.f32 %v4422, %v6415
      %v6612 = vadd.f32 %v4423, %v6416
      %v6613 = vadd.f32 %v4424, %v6417
      %v6614 = vadd.f32 %v4425, %v6418
      %v6615 = vadd.f32 %v4426, %v6419
      %v6616 = vadd.f32 %v4427, %v6420
      %v6617 = vadd.f32 %v4428, %v6421
      %v6618 = vadd.f32 %v4429, %v6422
      %v6619 = vadd.f32 %v4430, %v6423
      %v6620 = vadd.f32 %v4431, %v6424
      %v6621 = vadd.f32 %v4432, %v6425
      %v6622 = vadd.f32 %v4433, %v6426
      %v6623 = vadd.f32 %v4434, %v6427
      %v6624 = vadd.f32 %v4435, %v6428
      %v6625 = vadd.f32 %v4436, %v6429
      %v6626 = vadd.f32 %v4437, %v6430
      %v6627 = vadd.f32 %v4438, %v6431
      %v6628 = vadd.f32 %v4439, %v6432
      %v6629 = vadd.f32 %v4440, %v6433
      %v6630 = vadd.f32 %v4441, %v6434
      %v6631 = vadd.f32 %v4442, %v6435
      %v6632 = vadd.f32 %v4443, %v6436
      %v6633 = vadd.f32 %v4444, %v6437
      %v6634 = vadd.f32 %v4445, %v6438
      %v6635 = vadd.f32 %v4446, %v6439
      %v6636 = vadd.f32 %v4447, %v6440
      %v6637 = vadd.f32 %v4448, %v6441
      %v6638 = vadd.f32 %v4449, %v6442
      %v6639 = vadd.f32 %v4450, %v6443
      %v6640 = vadd.f32 %v4451, %v6444
      %v6641 = vadd.f32 %v4452, %v6445
      %v6642 = vadd.f32 %v4453, %v6446
      %v6643 = vadd.f32 %v4454, %v6447
      %v6644 = vadd.f32 %v4455, %v6448
      %v6645 = vadd.f32 %v4456, %v6449
      %v6646 = vadd.f32 %v4457, %v6450
      %v6647 = vadd.f32 %v4458, %v6451
      %v6648 = vadd.f32 %v4459, %v6452
      %v6649 = vadd.f32 %v4460, %v6453
      %v6650 = vadd.f32 %v4461, %v6454
      %v6651 = vadd.f32 %v4462, %v6455
      %v6652 = vadd.f32 %v4463, %v6456
      %v6653 = vadd.f32 %v4464, %v6457
      %v6654 = vadd.f32 %v4465, %v6458
      %v6655 = vadd.f32 %v4466, %v6459
      %v6656 = vadd.f32 %v4467, %v6460
      %v6657 = vadd.f32 %v4468, %v6461
      %v6658 = vadd.f32 %v4469, %v6462
      %v6659 = vadd.f32 %v4470, %v6463
      %v6660 = vadd.f32 %v4471, %v6464
      %v6661 = vadd.f32 %v4472, %v6465
      %v6662 = vadd.f32 %v4473, %v6466
      %v6663 = vadd.f32 %v4474, %v6467
      %v6664 = vadd.f32 %v4475, %v6468
      %v6665 = vadd.f32 %v4476, %v6469
      %v6666 = vadd.f32 %v4477, %v6470
      %v6667 = vadd.f32 %v4478, %v6471
      %v6668 = vadd.f32 %v4479, %v6472
      %v6669 = vadd.f32 %v4480, %v6473
      %v6670 = vadd.f32 %v4481, %v6474
      %v6671 = vadd.f32 %v4482, %v6475
      %v6672 = vadd.f32 %v4483, %v6476
      %v6673 = vadd.f32 %v4484, %v6477
      %v6674 = vadd.f32 %v4485, %v6478
      %v6675 = vadd.f32 %v4486, %v6479
      %v6676 = vadd.f32 %v4487, %v6480
      %v6677 = vadd.f32 %v4488, %v6481
      %v6678 = vadd.f32 %v4489, %v6482
      %v6679 = vadd.f32 %v4490, %v6483
      %v6680 = vadd.f32 %v4491, %v6484
      %v6681 = vadd.f32 %v4492, %v6485
      %v6682 = vadd.f32 %v4493, %v6486
      %v6683 = vadd.f32 %v4494, %v6487
      %v6684 = vadd.f32 %v4495, %v6488
      %v6685 = vadd.f32 %v4496, %v6489
      %v6686 = vadd.f32 %v4497, %v6490
      %v6687 = vadd.f32 %v4498, %v6491
      %v6688 = vadd.f32 %v4499, %v6492
      %v6689 = vadd.f32 %v4500, %v6493
      %v6690 = vadd.f32 %v4501, %v6494
      %v6691 = vadd.f32 %v4502, %v6495
      %v6692 = vadd.f32 %v4503, %v6496
      %v6693 = vadd.f32 %v4504, %v6497
      %v6694 = vadd.f32 %v4505, %v6498
      %v6695 = vadd.f32 %v4506, %v6499
      %v6696 = vadd.f32 %v4507, %v6500
      %v6697 = vadd.f32 %v4508, %v6501
      %v6698 = vadd.f32 %v4509, %v6502
      %v6699 = vadd.f32 %v4510, %v6503
      %v6700 = vadd.f32 %v4511, %v6504
      %v6701 = vadd.f32 %v4512, %v6505
      %v6702 = vadd.f32 %v4513, %v6506
      %v6703 = vadd.f32 %v4514, %v6507
      %v6704 = vadd.f32 %v4515, %v6508
      %v6705 = vadd.f32 %v4516, %v6509
      %v6706 = vadd.f32 %v4517, %v6510
      %v6707 = vadd.f32 %v4518, %v6511
      %v6708 = vadd.f32 %v4519, %v6512
      %v6709 = vadd.f32 %v4520, %v6513
      %v6710 = vadd.f32 %v4521, %v6514
      %v6711 = vadd.f32 %v4522, %v6515
      %v6712 = vadd.f32 %v4523, %v6516
      %v6713 = vadd.f32 %v4524, %v6517
      %v6714 = vadd.f32 %v4525, %v6518
      %v6715 = vadd.f32 %v4526, %v6519
      %v6716 = vadd.f32 %v4527, %v6520
      %v6717 = vadd.f32 %v4528, %v6521
      %v6718 = vadd.f32 %v4529, %v6522
      %v6719 = vadd.f32 %v4530, %v6523
      %v6720 = vadd.f32 %v4531, %v6524
      %v6721 = vadd.f32 %v4532, %v6525
      %v6722 = vadd.f32 %v4533, %v6526
      %v6723 = vadd.f32 %v4534, %v6527
      %v6724 = vadd.f32 %v4535, %v6528
      %v6725 = vadd.f32 %v4536, %v6529
      %v6726 = vadd.f32 %v4537, %v6530
      %v6727 = vadd.f32 %v4538, %v6531
      %v6728 = vadd.f32 %v4539, %v6532
      %v6729 = vadd.f32 %v4540, %v6533
      %v6730 = vadd.f32 %v4541, %v6534
      %v6731 = vadd.f32 %v4542, %v6535
      %v6732 = vadd.f32 %v4543, %v6536
      %v6733 = vadd.f32 %v4544, %v6537
      %v6734 = vadd.f32 %v4545, %v6538
      %v6735 = vadd.f32 %v4546, %v6539
      %v6736 = vadd.f32 %v4547, %v6540
      %v6737 = vadd.f32 %v4548, %v6541
      %v6738 = vadd.f32 %v4549, %v6542
      %v6739 = vadd.f32 %v4550, %v6543
      %v6740 = vadd.f32 %v4551, %v6544
      %v6741 = vadd.f32 %v4552, %v6545
      %v6742 = vadd.f32 %v4553, %v6546
      %v6743 = vadd.f32 %v4554, %v6547
      %v6744 = vadd.f32 %v4555, %v6548
      %v6745 = vadd.f32 %v4556, %v6549
      %v6746 = vadd.f32 %v4557, %v6550
      %v6747 = vld [vmem:[%s313] sm:$0xf]
      %v6748 = vld [vmem:[%s313 + $0x4] sm:$0xf]
      %v6749 = vld [vmem:[%s313 + $0x8] sm:$0xf]
      %v6750 = vld [vmem:[%s313 + $0xc] sm:$0xf]
      %v6751 = vld [vmem:[%s313 + $0x10] sm:$0xf]
      %v6752 = vld [vmem:[%s313 + $0x14] sm:$0xf]
      %v6753 = vld [vmem:[%s313 + $0x18] sm:$0xf]
      %v6754 = vld [vmem:[%s313 + $0x1c] sm:$0xf]
      %v6755 = vld [vmem:[%s313 + $0x20] sm:$0xf]
      %v6756 = vld [vmem:[%s313 + $0x24] sm:$0xf]
      %v6757 = vld [vmem:[%s313 + $0x28] sm:$0xf]
      %v6758 = vld [vmem:[%s313 + $0x2c] sm:$0xf]
      %v6759 = vld [vmem:[%s313 + $0x30] sm:$0xf]
      %v6760 = vld [vmem:[%s313 + $0x34] sm:$0xf]
      %v6761 = vld [vmem:[%s313 + $0x38] sm:$0xf]
      %v6762 = vld [vmem:[%s313 + $0x3c] sm:$0xf]
      %v6763 = vld [vmem:[%s313 + $0x40] sm:$0xf]
      %v6764 = vld [vmem:[%s313 + $0x44] sm:$0xf]
      %v6765 = vld [vmem:[%s313 + $0x48] sm:$0xf]
      %v6766 = vld [vmem:[%s313 + $0x4c] sm:$0xf]
      %v6767 = vld [vmem:[%s313 + $0x50] sm:$0xf]
      %v6768 = vld [vmem:[%s313 + $0x54] sm:$0xf]
      %v6769 = vld [vmem:[%s313 + $0x58] sm:$0xf]
      %v6770 = vld [vmem:[%s313 + $0x5c] sm:$0xf]
      %v6771 = vld [vmem:[%s313 + $0x60] sm:$0xf]
      %v6772 = vld [vmem:[%s313 + $0x64] sm:$0xf]
      %v6773 = vld [vmem:[%s313 + $0x68] sm:$0xf]
      %v6774 = vld [vmem:[%s313 + $0x6c] sm:$0xf]
      %v6775 = vld [vmem:[%s313 + $0x70] sm:$0xf]
      %v6776 = vld [vmem:[%s313 + $0x74] sm:$0xf]
      %v6777 = vld [vmem:[%s313 + $0x78] sm:$0xf]
      %v6778 = vld [vmem:[%s313 + $0x7c] sm:$0xf]
      %v6779 = vld [vmem:[%s313 + $0x80] sm:$0xf]
      %v6780 = vld [vmem:[%s313 + $0x84] sm:$0xf]
      %v6781 = vld [vmem:[%s313 + $0x88] sm:$0xf]
      %v6782 = vld [vmem:[%s313 + $0x8c] sm:$0xf]
      %v6783 = vld [vmem:[%s313 + $0x90] sm:$0xf]
      %v6784 = vld [vmem:[%s313 + $0x94] sm:$0xf]
      %v6785 = vld [vmem:[%s313 + $0x98] sm:$0xf]
      %v6786 = vld [vmem:[%s313 + $0x9c] sm:$0xf]
      %v6787 = vld [vmem:[%s313 + $0xa0] sm:$0xf]
      %v6788 = vld [vmem:[%s313 + $0xa4] sm:$0xf]
      %v6789 = vld [vmem:[%s313 + $0xa8] sm:$0xf]
      %v6790 = vld [vmem:[%s313 + $0xac] sm:$0xf]
      %v6791 = vld [vmem:[%s313 + $0xb0] sm:$0xf]
      %v6792 = vld [vmem:[%s313 + $0xb4] sm:$0xf]
      %v6793 = vld [vmem:[%s313 + $0xb8] sm:$0xf]
      %v6794 = vld [vmem:[%s313 + $0xbc] sm:$0xf]
      %v6795 = vld [vmem:[%s313 + $0xc0] sm:$0xf]
      %v6796 = vld [vmem:[%s313 + $0xc4] sm:$0xf]
      %v6797 = vld [vmem:[%s313 + $0xc8] sm:$0xf]
      %v6798 = vld [vmem:[%s313 + $0xcc] sm:$0xf]
      %v6799 = vld [vmem:[%s313 + $0xd0] sm:$0xf]
      %v6800 = vld [vmem:[%s313 + $0xd4] sm:$0xf]
      %v6801 = vld [vmem:[%s313 + $0xd8] sm:$0xf]
      %v6802 = vld [vmem:[%s313 + $0xdc] sm:$0xf]
      %v6803 = vld [vmem:[%s313 + $0xe0] sm:$0xf]
      %v6804 = vld [vmem:[%s313 + $0xe4] sm:$0xf]
      %v6805 = vld [vmem:[%s313 + $0xe8] sm:$0xf]
      %v6806 = vld [vmem:[%s313 + $0xec] sm:$0xf]
      %v6807 = vld [vmem:[%s313 + $0xf0] sm:$0xf]
      %v6808 = vld [vmem:[%s313 + $0xf4] sm:$0xf]
      %v6809 = vld [vmem:[%s313 + $0xf8] sm:$0xf]
      %v6810 = vld [vmem:[%s313 + $0xfc] sm:$0xf]
      %v6811 = vld [vmem:[%s313 + $0x100] sm:$0xf]
      %v6812 = vld [vmem:[%s313 + $0x104] sm:$0xf]
      %v6813 = vld [vmem:[%s313 + $0x108] sm:$0xf]
      %v6814 = vld [vmem:[%s313 + $0x10c] sm:$0xf]
      %v6815 = vld [vmem:[%s313 + $0x110] sm:$0xf]
      %v6816 = vld [vmem:[%s313 + $0x114] sm:$0xf]
      %v6817 = vld [vmem:[%s313 + $0x118] sm:$0xf]
      %v6818 = vld [vmem:[%s313 + $0x11c] sm:$0xf]
      %v6819 = vld [vmem:[%s313 + $0x120] sm:$0xf]
      %v6820 = vld [vmem:[%s313 + $0x124] sm:$0xf]
      %v6821 = vld [vmem:[%s313 + $0x128] sm:$0xf]
      %v6822 = vld [vmem:[%s313 + $0x12c] sm:$0xf]
      %v6823 = vld [vmem:[%s313 + $0x130] sm:$0xf]
      %v6824 = vld [vmem:[%s313 + $0x134] sm:$0xf]
      %v6825 = vld [vmem:[%s313 + $0x138] sm:$0xf]
      %v6826 = vld [vmem:[%s313 + $0x13c] sm:$0xf]
      %v6827 = vld [vmem:[%s313 + $0x140] sm:$0xf]
      %v6828 = vld [vmem:[%s313 + $0x144] sm:$0xf]
      %v6829 = vld [vmem:[%s313 + $0x148] sm:$0xf]
      %v6830 = vld [vmem:[%s313 + $0x14c] sm:$0xf]
      %v6831 = vld [vmem:[%s313 + $0x150] sm:$0xf]
      %v6832 = vld [vmem:[%s313 + $0x154] sm:$0xf]
      %v6833 = vld [vmem:[%s313 + $0x158] sm:$0xf]
      %v6834 = vld [vmem:[%s313 + $0x15c] sm:$0xf]
      %v6835 = vld [vmem:[%s313 + $0x160] sm:$0xf]
      %v6836 = vld [vmem:[%s313 + $0x164] sm:$0xf]
      %v6837 = vld [vmem:[%s313 + $0x168] sm:$0xf]
      %v6838 = vld [vmem:[%s313 + $0x16c] sm:$0xf]
      %v6839 = vld [vmem:[%s313 + $0x170] sm:$0xf]
      %v6840 = vld [vmem:[%s313 + $0x174] sm:$0xf]
      %v6841 = vld [vmem:[%s313 + $0x178] sm:$0xf]
      %v6842 = vld [vmem:[%s313 + $0x17c] sm:$0xf]
      %v6843 = vld [vmem:[%s313 + $0x180] sm:$0xf]
      %v6844 = vld [vmem:[%s313 + $0x184] sm:$0xf]
      %v6845 = vld [vmem:[%s313 + $0x188] sm:$0xf]
      %v6846 = vld [vmem:[%s313 + $0x18c] sm:$0xf]
      %v6847 = vld [vmem:[%s313 + $0x190] sm:$0xf]
      %v6848 = vld [vmem:[%s313 + $0x194] sm:$0xf]
      %v6849 = vld [vmem:[%s313 + $0x198] sm:$0xf]
      %v6850 = vld [vmem:[%s313 + $0x19c] sm:$0xf]
      %v6851 = vld [vmem:[%s313 + $0x1a0] sm:$0xf]
      %v6852 = vld [vmem:[%s313 + $0x1a4] sm:$0xf]
      %v6853 = vld [vmem:[%s313 + $0x1a8] sm:$0xf]
      %v6854 = vld [vmem:[%s313 + $0x1ac] sm:$0xf]
      %v6855 = vld [vmem:[%s313 + $0x1b0] sm:$0xf]
      %v6856 = vld [vmem:[%s313 + $0x1b4] sm:$0xf]
      %v6857 = vld [vmem:[%s313 + $0x1b8] sm:$0xf]
      %v6858 = vld [vmem:[%s313 + $0x1bc] sm:$0xf]
      %v6859 = vld [vmem:[%s313 + $0x1c0] sm:$0xf]
      %v6860 = vld [vmem:[%s313 + $0x1c4] sm:$0xf]
      %v6861 = vld [vmem:[%s313 + $0x1c8] sm:$0xf]
      %v6862 = vld [vmem:[%s313 + $0x1cc] sm:$0xf]
      %v6863 = vld [vmem:[%s313 + $0x1d0] sm:$0xf]
      %v6864 = vld [vmem:[%s313 + $0x1d4] sm:$0xf]
      %v6865 = vld [vmem:[%s313 + $0x1d8] sm:$0xf]
      %v6866 = vld [vmem:[%s313 + $0x1dc] sm:$0xf]
      %v6867 = vld [vmem:[%s313 + $0x1e0] sm:$0xf]
      %v6868 = vld [vmem:[%s313 + $0x1e4] sm:$0xf]
      %v6869 = vld [vmem:[%s313 + $0x1e8] sm:$0xf]
      %v6870 = vld [vmem:[%s313 + $0x1ec] sm:$0xf]
      %v6871 = vld [vmem:[%s313 + $0x1f0] sm:$0xf]
      %v6872 = vld [vmem:[%s313 + $0x1f4] sm:$0xf]
      %v6873 = vld [vmem:[%s313 + $0x1f8] sm:$0xf]
      %v6874 = vld [vmem:[%s313 + $0x1fc] sm:$0xf]
      %v6875 = vld [vmem:[%s313 + $0x200] sm:$0xf]
      %v6876 = vld [vmem:[%s313 + $0x204] sm:$0xf]
      %v6877 = vld [vmem:[%s313 + $0x208] sm:$0xf]
      %v6878 = vld [vmem:[%s313 + $0x20c] sm:$0xf]
      %v6879 = vld [vmem:[%s313 + $0x210] sm:$0xf]
      %v6880 = vld [vmem:[%s313 + $0x214] sm:$0xf]
      %v6881 = vld [vmem:[%s313 + $0x218] sm:$0xf]
      %v6882 = vld [vmem:[%s313 + $0x21c] sm:$0xf]
      %v6883 = vld [vmem:[%s313 + $0x220] sm:$0xf]
      %v6884 = vld [vmem:[%s313 + $0x224] sm:$0xf]
      %v6885 = vld [vmem:[%s313 + $0x228] sm:$0xf]
      %v6886 = vld [vmem:[%s313 + $0x22c] sm:$0xf]
      %v6887 = vld [vmem:[%s313 + $0x230] sm:$0xf]
      %v6888 = vld [vmem:[%s313 + $0x234] sm:$0xf]
      %v6889 = vld [vmem:[%s313 + $0x238] sm:$0xf]
      %v6890 = vld [vmem:[%s313 + $0x23c] sm:$0xf]
      %v6891 = vld [vmem:[%s313 + $0x240] sm:$0xf]
      %v6892 = vld [vmem:[%s313 + $0x244] sm:$0xf]
      %v6893 = vld [vmem:[%s313 + $0x248] sm:$0xf]
      %v6894 = vld [vmem:[%s313 + $0x24c] sm:$0xf]
      %v6895 = vld [vmem:[%s313 + $0x250] sm:$0xf]
      %v6896 = vld [vmem:[%s313 + $0x254] sm:$0xf]
      %v6897 = vld [vmem:[%s313 + $0x258] sm:$0xf]
      %v6898 = vld [vmem:[%s313 + $0x25c] sm:$0xf]
      %v6899 = vld [vmem:[%s313 + $0x260] sm:$0xf]
      %v6900 = vld [vmem:[%s313 + $0x264] sm:$0xf]
      %v6901 = vld [vmem:[%s313 + $0x268] sm:$0xf]
      %v6902 = vld [vmem:[%s313 + $0x26c] sm:$0xf]
      %v6903 = vld [vmem:[%s313 + $0x270] sm:$0xf]
      %v6904 = vld [vmem:[%s313 + $0x274] sm:$0xf]
      %v6905 = vld [vmem:[%s313 + $0x278] sm:$0xf]
      %v6906 = vld [vmem:[%s313 + $0x27c] sm:$0xf]
      %v6907 = vld [vmem:[%s313 + $0x280] sm:$0xf]
      %v6908 = vld [vmem:[%s313 + $0x284] sm:$0xf]
      %v6909 = vld [vmem:[%s313 + $0x288] sm:$0xf]
      %v6910 = vld [vmem:[%s313 + $0x28c] sm:$0xf]
      %v6911 = vld [vmem:[%s313 + $0x290] sm:$0xf]
      %v6912 = vld [vmem:[%s313 + $0x294] sm:$0xf]
      %v6913 = vld [vmem:[%s313 + $0x298] sm:$0xf]
      %v6914 = vld [vmem:[%s313 + $0x29c] sm:$0xf]
      %v6915 = vld [vmem:[%s313 + $0x2a0] sm:$0xf]
      %v6916 = vld [vmem:[%s313 + $0x2a4] sm:$0xf]
      %v6917 = vld [vmem:[%s313 + $0x2a8] sm:$0xf]
      %v6918 = vld [vmem:[%s313 + $0x2ac] sm:$0xf]
      %v6919 = vld [vmem:[%s313 + $0x2b0] sm:$0xf]
      %v6920 = vld [vmem:[%s313 + $0x2b4] sm:$0xf]
      %v6921 = vld [vmem:[%s313 + $0x2b8] sm:$0xf]
      %v6922 = vld [vmem:[%s313 + $0x2bc] sm:$0xf]
      %v6923 = vld [vmem:[%s313 + $0x2c0] sm:$0xf]
      %v6924 = vld [vmem:[%s313 + $0x2c4] sm:$0xf]
      %v6925 = vld [vmem:[%s313 + $0x2c8] sm:$0xf]
      %v6926 = vld [vmem:[%s313 + $0x2cc] sm:$0xf]
      %v6927 = vld [vmem:[%s313 + $0x2d0] sm:$0xf]
      %v6928 = vld [vmem:[%s313 + $0x2d4] sm:$0xf]
      %v6929 = vld [vmem:[%s313 + $0x2d8] sm:$0xf]
      %v6930 = vld [vmem:[%s313 + $0x2dc] sm:$0xf]
      %v6931 = vld [vmem:[%s313 + $0x2e0] sm:$0xf]
      %v6932 = vld [vmem:[%s313 + $0x2e4] sm:$0xf]
      %v6933 = vld [vmem:[%s313 + $0x2e8] sm:$0xf]
      %v6934 = vld [vmem:[%s313 + $0x2ec] sm:$0xf]
      %v6935 = vld [vmem:[%s313 + $0x2f0] sm:$0xf]
      %v6936 = vld [vmem:[%s313 + $0x2f4] sm:$0xf]
      %v6937 = vld [vmem:[%s313 + $0x2f8] sm:$0xf]
      %v6938 = vld [vmem:[%s313 + $0x2fc] sm:$0xf]
      %v6939 = vld [vmem:[%s313 + $0x300] sm:$0xf]
      %v6940 = vld [vmem:[%s313 + $0x304] sm:$0xf]
      %v6941 = vld [vmem:[%s313 + $0x308] sm:$0xf]
      %v6942 = vld [vmem:[%s313 + $0x30c] sm:$0xf]
      %v7139 = vunpack.c.l.b16 %v6747
      %v7140 = vunpack.c.l.b16 %v6748
      %v7141 = vunpack.c.l.b16 %v6749
      %v7142 = vunpack.c.l.b16 %v6750
      %v7143 = vunpack.c.l.b16 %v6751
      %v7144 = vunpack.c.l.b16 %v6752
      %v7145 = vunpack.c.l.b16 %v6753
      %v7146 = vunpack.c.l.b16 %v6754
      %v7147 = vunpack.c.l.b16 %v6755
      %v7148 = vunpack.c.l.b16 %v6756
      %v7149 = vunpack.c.l.b16 %v6757
      %v7150 = vunpack.c.l.b16 %v6758
      %v7151 = vunpack.c.l.b16 %v6759
      %v7152 = vunpack.c.l.b16 %v6760
      %v7153 = vunpack.c.l.b16 %v6761
      %v7154 = vunpack.c.l.b16 %v6762
      %v7155 = vunpack.c.l.b16 %v6763
      %v7156 = vunpack.c.l.b16 %v6764
      %v7157 = vunpack.c.l.b16 %v6765
      %v7158 = vunpack.c.l.b16 %v6766
      %v7159 = vunpack.c.l.b16 %v6767
      %v7160 = vunpack.c.l.b16 %v6768
      %v7161 = vunpack.c.l.b16 %v6769
      %v7162 = vunpack.c.l.b16 %v6770
      %v7163 = vunpack.c.l.b16 %v6771
      %v7164 = vunpack.c.l.b16 %v6772
      %v7165 = vunpack.c.l.b16 %v6773
      %v7166 = vunpack.c.l.b16 %v6774
      %v7167 = vunpack.c.l.b16 %v6775
      %v7168 = vunpack.c.l.b16 %v6776
      %v7169 = vunpack.c.l.b16 %v6777
      %v7170 = vunpack.c.l.b16 %v6778
      %v7171 = vunpack.c.l.b16 %v6779
      %v7172 = vunpack.c.l.b16 %v6780
      %v7173 = vunpack.c.l.b16 %v6781
      %v7174 = vunpack.c.l.b16 %v6782
      %v7175 = vunpack.c.l.b16 %v6783
      %v7176 = vunpack.c.l.b16 %v6784
      %v7177 = vunpack.c.l.b16 %v6785
      %v7178 = vunpack.c.l.b16 %v6786
      %v7179 = vunpack.c.l.b16 %v6787
      %v7180 = vunpack.c.l.b16 %v6788
      %v7181 = vunpack.c.l.b16 %v6789
      %v7182 = vunpack.c.l.b16 %v6790
      %v7183 = vunpack.c.l.b16 %v6791
      %v7184 = vunpack.c.l.b16 %v6792
      %v7185 = vunpack.c.l.b16 %v6793
      %v7186 = vunpack.c.l.b16 %v6794
      %v7187 = vunpack.c.l.b16 %v6795
      %v7188 = vunpack.c.l.b16 %v6796
      %v7189 = vunpack.c.l.b16 %v6797
      %v7190 = vunpack.c.l.b16 %v6798
      %v7191 = vunpack.c.l.b16 %v6799
      %v7192 = vunpack.c.l.b16 %v6800
      %v7193 = vunpack.c.l.b16 %v6801
      %v7194 = vunpack.c.l.b16 %v6802
      %v7195 = vunpack.c.l.b16 %v6803
      %v7196 = vunpack.c.l.b16 %v6804
      %v7197 = vunpack.c.l.b16 %v6805
      %v7198 = vunpack.c.l.b16 %v6806
      %v7199 = vunpack.c.l.b16 %v6807
      %v7200 = vunpack.c.l.b16 %v6808
      %v7201 = vunpack.c.l.b16 %v6809
      %v7202 = vunpack.c.l.b16 %v6810
      %v7203 = vunpack.c.l.b16 %v6811
      %v7204 = vunpack.c.l.b16 %v6812
      %v7205 = vunpack.c.l.b16 %v6813
      %v7206 = vunpack.c.l.b16 %v6814
      %v7207 = vunpack.c.l.b16 %v6815
      %v7208 = vunpack.c.l.b16 %v6816
      %v7209 = vunpack.c.l.b16 %v6817
      %v7210 = vunpack.c.l.b16 %v6818
      %v7211 = vunpack.c.l.b16 %v6819
      %v7212 = vunpack.c.l.b16 %v6820
      %v7213 = vunpack.c.l.b16 %v6821
      %v7214 = vunpack.c.l.b16 %v6822
      %v7215 = vunpack.c.l.b16 %v6823
      %v7216 = vunpack.c.l.b16 %v6824
      %v7217 = vunpack.c.l.b16 %v6825
      %v7218 = vunpack.c.l.b16 %v6826
      %v7219 = vunpack.c.l.b16 %v6827
      %v7220 = vunpack.c.l.b16 %v6828
      %v7221 = vunpack.c.l.b16 %v6829
      %v7222 = vunpack.c.l.b16 %v6830
      %v7223 = vunpack.c.l.b16 %v6831
      %v7224 = vunpack.c.l.b16 %v6832
      %v7225 = vunpack.c.l.b16 %v6833
      %v7226 = vunpack.c.l.b16 %v6834
      %v7227 = vunpack.c.l.b16 %v6835
      %v7228 = vunpack.c.l.b16 %v6836
      %v7229 = vunpack.c.l.b16 %v6837
      %v7230 = vunpack.c.l.b16 %v6838
      %v7231 = vunpack.c.l.b16 %v6839
      %v7232 = vunpack.c.l.b16 %v6840
      %v7233 = vunpack.c.l.b16 %v6841
      %v7234 = vunpack.c.l.b16 %v6842
      %v7235 = vunpack.c.l.b16 %v6843
      %v7236 = vunpack.c.l.b16 %v6844
      %v7237 = vunpack.c.l.b16 %v6845
      %v7238 = vunpack.c.l.b16 %v6846
      %v7239 = vunpack.c.l.b16 %v6847
      %v7240 = vunpack.c.l.b16 %v6848
      %v7241 = vunpack.c.l.b16 %v6849
      %v7242 = vunpack.c.l.b16 %v6850
      %v7243 = vunpack.c.l.b16 %v6851
      %v7244 = vunpack.c.l.b16 %v6852
      %v7245 = vunpack.c.l.b16 %v6853
      %v7246 = vunpack.c.l.b16 %v6854
      %v7247 = vunpack.c.l.b16 %v6855
      %v7248 = vunpack.c.l.b16 %v6856
      %v7249 = vunpack.c.l.b16 %v6857
      %v7250 = vunpack.c.l.b16 %v6858
      %v7251 = vunpack.c.l.b16 %v6859
      %v7252 = vunpack.c.l.b16 %v6860
      %v7253 = vunpack.c.l.b16 %v6861
      %v7254 = vunpack.c.l.b16 %v6862
      %v7255 = vunpack.c.l.b16 %v6863
      %v7256 = vunpack.c.l.b16 %v6864
      %v7257 = vunpack.c.l.b16 %v6865
      %v7258 = vunpack.c.l.b16 %v6866
      %v7259 = vunpack.c.l.b16 %v6867
      %v7260 = vunpack.c.l.b16 %v6868
      %v7261 = vunpack.c.l.b16 %v6869
      %v7262 = vunpack.c.l.b16 %v6870
      %v7263 = vunpack.c.l.b16 %v6871
      %v7264 = vunpack.c.l.b16 %v6872
      %v7265 = vunpack.c.l.b16 %v6873
      %v7266 = vunpack.c.l.b16 %v6874
      %v7267 = vunpack.c.l.b16 %v6875
      %v7268 = vunpack.c.l.b16 %v6876
      %v7269 = vunpack.c.l.b16 %v6877
      %v7270 = vunpack.c.l.b16 %v6878
      %v7271 = vunpack.c.l.b16 %v6879
      %v7272 = vunpack.c.l.b16 %v6880
      %v7273 = vunpack.c.l.b16 %v6881
      %v7274 = vunpack.c.l.b16 %v6882
      %v7275 = vunpack.c.l.b16 %v6883
      %v7276 = vunpack.c.l.b16 %v6884
      %v7277 = vunpack.c.l.b16 %v6885
      %v7278 = vunpack.c.l.b16 %v6886
      %v7279 = vunpack.c.l.b16 %v6887
      %v7280 = vunpack.c.l.b16 %v6888
      %v7281 = vunpack.c.l.b16 %v6889
      %v7282 = vunpack.c.l.b16 %v6890
      %v7283 = vunpack.c.l.b16 %v6891
      %v7284 = vunpack.c.l.b16 %v6892
      %v7285 = vunpack.c.l.b16 %v6893
      %v7286 = vunpack.c.l.b16 %v6894
      %v7287 = vunpack.c.l.b16 %v6895
      %v7288 = vunpack.c.l.b16 %v6896
      %v7289 = vunpack.c.l.b16 %v6897
      %v7290 = vunpack.c.l.b16 %v6898
      %v7291 = vunpack.c.l.b16 %v6899
      %v7292 = vunpack.c.l.b16 %v6900
      %v7293 = vunpack.c.l.b16 %v6901
      %v7294 = vunpack.c.l.b16 %v6902
      %v7295 = vunpack.c.l.b16 %v6903
      %v7296 = vunpack.c.l.b16 %v6904
      %v7297 = vunpack.c.l.b16 %v6905
      %v7298 = vunpack.c.l.b16 %v6906
      %v7299 = vunpack.c.l.b16 %v6907
      %v7300 = vunpack.c.l.b16 %v6908
      %v7301 = vunpack.c.l.b16 %v6909
      %v7302 = vunpack.c.l.b16 %v6910
      %v7303 = vunpack.c.l.b16 %v6911
      %v7304 = vunpack.c.l.b16 %v6912
      %v7305 = vunpack.c.l.b16 %v6913
      %v7306 = vunpack.c.l.b16 %v6914
      %v7307 = vunpack.c.l.b16 %v6915
      %v7308 = vunpack.c.l.b16 %v6916
      %v7309 = vunpack.c.l.b16 %v6917
      %v7310 = vunpack.c.l.b16 %v6918
      %v7311 = vunpack.c.l.b16 %v6919
      %v7312 = vunpack.c.l.b16 %v6920
      %v7313 = vunpack.c.l.b16 %v6921
      %v7314 = vunpack.c.l.b16 %v6922
      %v7315 = vunpack.c.l.b16 %v6923
      %v7316 = vunpack.c.l.b16 %v6924
      %v7317 = vunpack.c.l.b16 %v6925
      %v7318 = vunpack.c.l.b16 %v6926
      %v7319 = vunpack.c.l.b16 %v6927
      %v7320 = vunpack.c.l.b16 %v6928
      %v7321 = vunpack.c.l.b16 %v6929
      %v7322 = vunpack.c.l.b16 %v6930
      %v7323 = vunpack.c.l.b16 %v6931
      %v7324 = vunpack.c.l.b16 %v6932
      %v7325 = vunpack.c.l.b16 %v6933
      %v7326 = vunpack.c.l.b16 %v6934
      %v7327 = vunpack.c.l.b16 %v6935
      %v7328 = vunpack.c.l.b16 %v6936
      %v7329 = vunpack.c.l.b16 %v6937
      %v7330 = vunpack.c.l.b16 %v6938
      %v7331 = vunpack.c.l.b16 %v6939
      %v7332 = vunpack.c.l.b16 %v6940
      %v7333 = vunpack.c.l.b16 %v6941
      %v7334 = vunpack.c.l.b16 %v6942
      %v7335 = vpack.c.b16 %v7140, %v7139
      %v7336 = vpack.c.b16 %v7142, %v7141
      %v7337 = vpack.c.b16 %v7144, %v7143
      %v7338 = vpack.c.b16 %v7146, %v7145
      %v7339 = vpack.c.b16 %v7148, %v7147
      %v7340 = vpack.c.b16 %v7150, %v7149
      %v7341 = vpack.c.b16 %v7152, %v7151
      %v7342 = vpack.c.b16 %v7154, %v7153
      %v7343 = vpack.c.b16 %v7156, %v7155
      %v7344 = vpack.c.b16 %v7158, %v7157
      %v7345 = vpack.c.b16 %v7160, %v7159
      %v7346 = vpack.c.b16 %v7162, %v7161
      %v7347 = vpack.c.b16 %v7164, %v7163
      %v7348 = vpack.c.b16 %v7166, %v7165
      %v7349 = vpack.c.b16 %v7168, %v7167
      %v7350 = vpack.c.b16 %v7170, %v7169
      %v7351 = vpack.c.b16 %v7172, %v7171
      %v7352 = vpack.c.b16 %v7174, %v7173
      %v7353 = vpack.c.b16 %v7176, %v7175
      %v7354 = vpack.c.b16 %v7178, %v7177
      %v7355 = vpack.c.b16 %v7180, %v7179
      %v7356 = vpack.c.b16 %v7182, %v7181
      %v7357 = vpack.c.b16 %v7184, %v7183
      %v7358 = vpack.c.b16 %v7186, %v7185
      %v7359 = vpack.c.b16 %v7188, %v7187
      %v7360 = vpack.c.b16 %v7190, %v7189
      %v7361 = vpack.c.b16 %v7192, %v7191
      %v7362 = vpack.c.b16 %v7194, %v7193
      %v7363 = vpack.c.b16 %v7196, %v7195
      %v7364 = vpack.c.b16 %v7198, %v7197
      %v7365 = vpack.c.b16 %v7200, %v7199
      %v7366 = vpack.c.b16 %v7202, %v7201
      %v7367 = vpack.c.b16 %v7204, %v7203
      %v7368 = vpack.c.b16 %v7206, %v7205
      %v7369 = vpack.c.b16 %v7208, %v7207
      %v7370 = vpack.c.b16 %v7210, %v7209
      %v7371 = vpack.c.b16 %v7212, %v7211
      %v7372 = vpack.c.b16 %v7214, %v7213
      %v7373 = vpack.c.b16 %v7216, %v7215
      %v7374 = vpack.c.b16 %v7218, %v7217
      %v7375 = vpack.c.b16 %v7220, %v7219
      %v7376 = vpack.c.b16 %v7222, %v7221
      %v7377 = vpack.c.b16 %v7224, %v7223
      %v7378 = vpack.c.b16 %v7226, %v7225
      %v7379 = vpack.c.b16 %v7228, %v7227
      %v7380 = vpack.c.b16 %v7230, %v7229
      %v7381 = vpack.c.b16 %v7232, %v7231
      %v7382 = vpack.c.b16 %v7234, %v7233
      %v7383 = vpack.c.b16 %v7236, %v7235
      %v7384 = vpack.c.b16 %v7238, %v7237
      %v7385 = vpack.c.b16 %v7240, %v7239
      %v7386 = vpack.c.b16 %v7242, %v7241
      %v7387 = vpack.c.b16 %v7244, %v7243
      %v7388 = vpack.c.b16 %v7246, %v7245
      %v7389 = vpack.c.b16 %v7248, %v7247
      %v7390 = vpack.c.b16 %v7250, %v7249
      %v7391 = vpack.c.b16 %v7252, %v7251
      %v7392 = vpack.c.b16 %v7254, %v7253
      %v7393 = vpack.c.b16 %v7256, %v7255
      %v7394 = vpack.c.b16 %v7258, %v7257
      %v7395 = vpack.c.b16 %v7260, %v7259
      %v7396 = vpack.c.b16 %v7262, %v7261
      %v7397 = vpack.c.b16 %v7264, %v7263
      %v7398 = vpack.c.b16 %v7266, %v7265
      %v7399 = vpack.c.b16 %v7268, %v7267
      %v7400 = vpack.c.b16 %v7270, %v7269
      %v7401 = vpack.c.b16 %v7272, %v7271
      %v7402 = vpack.c.b16 %v7274, %v7273
      %v7403 = vpack.c.b16 %v7276, %v7275
      %v7404 = vpack.c.b16 %v7278, %v7277
      %v7405 = vpack.c.b16 %v7280, %v7279
      %v7406 = vpack.c.b16 %v7282, %v7281
      %v7407 = vpack.c.b16 %v7284, %v7283
      %v7408 = vpack.c.b16 %v7286, %v7285
      %v7409 = vpack.c.b16 %v7288, %v7287
      %v7410 = vpack.c.b16 %v7290, %v7289
      %v7411 = vpack.c.b16 %v7292, %v7291
      %v7412 = vpack.c.b16 %v7294, %v7293
      %v7413 = vpack.c.b16 %v7296, %v7295
      %v7414 = vpack.c.b16 %v7298, %v7297
      %v7415 = vpack.c.b16 %v7300, %v7299
      %v7416 = vpack.c.b16 %v7302, %v7301
      %v7417 = vpack.c.b16 %v7304, %v7303
      %v7418 = vpack.c.b16 %v7306, %v7305
      %v7419 = vpack.c.b16 %v7308, %v7307
      %v7420 = vpack.c.b16 %v7310, %v7309
      %v7421 = vpack.c.b16 %v7312, %v7311
      %v7422 = vpack.c.b16 %v7314, %v7313
      %v7423 = vpack.c.b16 %v7316, %v7315
      %v7424 = vpack.c.b16 %v7318, %v7317
      %v7425 = vpack.c.b16 %v7320, %v7319
      %v7426 = vpack.c.b16 %v7322, %v7321
      %v7427 = vpack.c.b16 %v7324, %v7323
      %v7428 = vpack.c.b16 %v7326, %v7325
      %v7429 = vpack.c.b16 %v7328, %v7327
      %v7430 = vpack.c.b16 %v7330, %v7329
      %v7431 = vpack.c.b16 %v7332, %v7331
      %v7432 = vpack.c.b16 %v7334, %v7333
      %v7434 = vsel %vm1054, %v7335, 0
      %v7437 = vsel %vm1054, %v7336, 0
      %v7440 = vsel %vm1054, %v7337, 0
      %v7443 = vsel %vm1054, %v7338, 0
      %v7446 = vsel %vm1054, %v7339, 0
      %v7449 = vsel %vm1054, %v7340, 0
      %v7452 = vsel %vm1054, %v7341, 0
      %v7455 = vsel %vm1054, %v7342, 0
      %v7458 = vsel %vm1054, %v7343, 0
      %v7461 = vsel %vm1054, %v7344, 0
      %v7464 = vsel %vm1054, %v7345, 0
      %v7467 = vsel %vm1054, %v7346, 0
      %v7470 = vsel %vm1054, %v7347, 0
      %v7473 = vsel %vm1054, %v7348, 0
      %v7476 = vsel %vm1054, %v7349, 0
      %v7479 = vsel %vm1054, %v7350, 0
      %v7482 = vsel %vm1054, %v7351, 0
      %v7485 = vsel %vm1054, %v7352, 0
      %v7488 = vsel %vm1054, %v7353, 0
      %v7491 = vsel %vm1054, %v7354, 0
      %v7494 = vsel %vm1054, %v7355, 0
      %v7497 = vsel %vm1054, %v7356, 0
      %v7500 = vsel %vm1054, %v7357, 0
      %v7503 = vsel %vm1054, %v7358, 0
      %v7506 = vsel %vm1054, %v7359, 0
      %v7509 = vsel %vm1054, %v7360, 0
      %v7512 = vsel %vm1054, %v7361, 0
      %v7515 = vsel %vm1054, %v7362, 0
      %v7518 = vsel %vm1054, %v7363, 0
      %v7521 = vsel %vm1054, %v7364, 0
      %v7524 = vsel %vm1054, %v7365, 0
      %v7527 = vsel %vm1054, %v7366, 0
      %v7530 = vsel %vm1054, %v7367, 0
      %v7533 = vsel %vm1054, %v7368, 0
      %v7536 = vsel %vm1054, %v7369, 0
      %v7539 = vsel %vm1054, %v7370, 0
      %v7542 = vsel %vm1054, %v7371, 0
      %v7545 = vsel %vm1054, %v7372, 0
      %v7548 = vsel %vm1054, %v7373, 0
      %v7551 = vsel %vm1054, %v7374, 0
      %v7554 = vsel %vm1054, %v7375, 0
      %v7557 = vsel %vm1054, %v7376, 0
      %v7560 = vsel %vm1054, %v7377, 0
      %v7563 = vsel %vm1054, %v7378, 0
      %v7566 = vsel %vm1054, %v7379, 0
      %v7569 = vsel %vm1054, %v7380, 0
      %v7572 = vsel %vm1054, %v7381, 0
      %v7575 = vsel %vm1054, %v7382, 0
      %v7578 = vsel %vm1054, %v7383, 0
      %v7581 = vsel %vm1054, %v7384, 0
      %v7584 = vsel %vm1054, %v7385, 0
      %v7587 = vsel %vm1054, %v7386, 0
      %v7590 = vsel %vm1054, %v7387, 0
      %v7593 = vsel %vm1054, %v7388, 0
      %v7596 = vsel %vm1054, %v7389, 0
      %v7599 = vsel %vm1054, %v7390, 0
      %v7602 = vsel %vm1054, %v7391, 0
      %v7605 = vsel %vm1054, %v7392, 0
      %v7608 = vsel %vm1054, %v7393, 0
      %v7611 = vsel %vm1054, %v7394, 0
      %v7614 = vsel %vm1054, %v7395, 0
      %v7617 = vsel %vm1054, %v7396, 0
      %v7620 = vsel %vm1054, %v7397, 0
      %v7623 = vsel %vm1054, %v7398, 0
      %v7626 = vsel %vm1054, %v7399, 0
      %v7629 = vsel %vm1054, %v7400, 0
      %v7632 = vsel %vm1054, %v7401, 0
      %v7635 = vsel %vm1054, %v7402, 0
      %v7638 = vsel %vm1054, %v7403, 0
      %v7641 = vsel %vm1054, %v7404, 0
      %v7644 = vsel %vm1054, %v7405, 0
      %v7647 = vsel %vm1054, %v7406, 0
      %v7650 = vsel %vm1054, %v7407, 0
      %v7653 = vsel %vm1054, %v7408, 0
      %v7656 = vsel %vm1054, %v7409, 0
      %v7659 = vsel %vm1054, %v7410, 0
      %v7662 = vsel %vm1054, %v7411, 0
      %v7665 = vsel %vm1054, %v7412, 0
      %v7668 = vsel %vm1054, %v7413, 0
      %v7671 = vsel %vm1054, %v7414, 0
      %v7674 = vsel %vm1054, %v7415, 0
      %v7677 = vsel %vm1054, %v7416, 0
      %v7680 = vsel %vm1054, %v7417, 0
      %v7683 = vsel %vm1054, %v7418, 0
      %v7686 = vsel %vm1054, %v7419, 0
      %v7689 = vsel %vm1054, %v7420, 0
      %v7692 = vsel %vm1054, %v7421, 0
      %v7695 = vsel %vm1054, %v7422, 0
      %v7698 = vsel %vm1054, %v7423, 0
      %v7701 = vsel %vm1054, %v7424, 0
      %v7704 = vsel %vm1054, %v7425, 0
      %v7707 = vsel %vm1054, %v7426, 0
      %v7710 = vsel %vm1054, %v7427, 0
      %v7713 = vsel %vm1054, %v7428, 0
      %v7716 = vsel %vm1054, %v7429, 0
      %v7719 = vsel %vm1054, %v7430, 0
      %v7722 = vsel %vm1054, %v7431, 0
      %v7725 = vsel %vm1054, %v7432, 0
      %7727 = vmatprep.subr.bf16.mxu0 0
      %7728 = vmatpush1.bf16.msra.mxu0 %v1045
      %7729 = vmatprep.subr.bf16.mxu0 0
      %7730 = vmatpush1.bf16.msra.mxu0 %v1046
      %7731 = vmatprep.subr.bf16.mxu0 0
      %7732 = vmatpush1.bf16.msra.mxu0 %v1047
      %7733 = vmatprep.subr.bf16.mxu0 0
      %7734 = vmatpush1.bf16.msra.mxu0 %v1048
      %7735 = vmatprep.subr.bf16.mxu0 0
      %7736 = vmatpush1.bf16.msra.mxu0 %v1354
      %7737 = vmatprep.subr.bf16.mxu0 0
      %7738 = vmatpush1.bf16.msra.mxu0 0
      %7739 = vmatprep.subr.bf16.mxu0 0
      %7740 = vmatpush1.bf16.msra.mxu0 0
      %7741 = vmatprep.subr.bf16.mxu0 0
      %7742 = vmatpush1.bf16.msra.mxu0 0
      %7743 = vmatprep.subr.bf16.mxu0 0
      %7744 = vmatpush1.bf16.msra.mxu0 0
      %7745 = vmatprep.subr.bf16.mxu0 0
      %7746 = vmatpush1.bf16.msra.mxu0 0
      %7747 = vmatprep.subr.bf16.mxu0 0
      %7748 = vmatpush1.bf16.msra.mxu0 0
      %7749 = vmatprep.subr.bf16.mxu0 0
      %7750 = vmatpush1.bf16.msra.mxu0 0
      %7751 = vmatprep.subr.bf16.mxu0 0
      %7752 = vmatpush1.bf16.msra.mxu0 0
      %7753 = vmatprep.subr.bf16.mxu0 0
      %7754 = vmatpush1.bf16.msra.mxu0 0
      %7755 = vmatprep.subr.bf16.mxu0 0
      %7756 = vmatpush1.bf16.msra.mxu0 0
      %7757 = vmatprep.subr.bf16.mxu0 0
      %7758 = vmatpush1.bf16.msra.mxu0 0
      %7759 = vmatprep.mubr.bf16.mxu0 0
      %7760 = vmatmul.mubr.bf16.gmra.mrb[0].mxu0 %v7434
      %v7761 = vpop.f32.mrb[0].mxu0
      %v7762 = vadd.f32 %v533, %v7761
      %v7763 = vpop.f32.mrb[0].mxu0
      %v7764 = vpop.f32.mrb[0].mxu0
      %v7765 = vadd.f32 %v533, %v7764
      %v7766 = vpop.f32.mrb[0].mxu0
      %7767 = vmatprep.mubr.bf16.mxu0 0
      %7768 = vmatmul.mubr.bf16.gmra.mrb[0].mxu0 %v7437
      %v7769 = vpop.f32.mrb[0].mxu0
      %v7770 = vadd.f32 %v533, %v7769
      %v7771 = vpop.f32.mrb[0].mxu0
      %v7772 = vpop.f32.mrb[0].mxu0
      %v7773 = vadd.f32 %v533, %v7772
      %v7774 = vpop.f32.mrb[0].mxu0
      %7775 = vmatprep.mubr.bf16.mxu0 0
      %7776 = vmatmul.mubr.bf16.gmra.mrb[0].mxu0 %v7440
      %v7777 = vpop.f32.mrb[0].mxu0
      %v7778 = vadd.f32 %v533, %v7777
      %v7779 = vpop.f32.mrb[0].mxu0
      %v7780 = vpop.f32.mrb[0].mxu0
      %v7781 = vadd.f32 %v533, %v7780
      %v7782 = vpop.f32.mrb[0].mxu0
      %7783 = vmatprep.mubr.bf16.mxu0 0
      %7784 = vmatmul.mubr.bf16.gmra.mrb[0].mxu0 %v7443
      %v7785 = vpop.f32.mrb[0].mxu0
      %v7786 = vadd.f32 %v533, %v7785
      %v7787 = vpop.f32.mrb[0].mxu0
      %v7788 = vpop.f32.mrb[0].mxu0
      %v7789 = vadd.f32 %v533, %v7788
      %v7790 = vpop.f32.mrb[0].mxu0
      %7791 = vmatprep.mubr.bf16.mxu0 0
      %7792 = vmatmul.mubr.bf16.gmra.mrb[0].mxu0 %v7446
      %v7793 = vpop.f32.mrb[0].mxu0
      %v7794 = vadd.f32 %v533, %v7793
      %v7795 = vpop.f32.mrb[0].mxu0
      %v7796 = vpop.f32.mrb[0].mxu0
      %v7797 = vadd.f32 %v533, %v7796
      %v7798 = vpop.f32.mrb[0].mxu0
      %7799 = vmatprep.mubr.bf16.mxu0 0
      %7800 = vmatmul.mubr.bf16.gmra.mrb[0].mxu0 %v7449
      %v7801 = vpop.f32.mrb[0].mxu0
      %v7802 = vadd.f32 %v533, %v7801
      %v7803 = vpop.f32.mrb[0].mxu0
      %v7804 = vpop.f32.mrb[0].mxu0
      %v7805 = vadd.f32 %v533, %v7804
      %v7806 = vpop.f32.mrb[0].mxu0
      %7807 = vmatprep.mubr.bf16.mxu0 0
      %7808 = vmatmul.mubr.bf16.gmra.mrb[0].mxu0 %v7452
      %v7809 = vpop.f32.mrb[0].mxu0
      %v7810 = vadd.f32 %v533, %v7809
      %v7811 = vpop.f32.mrb[0].mxu0
      %v7812 = vpop.f32.mrb[0].mxu0
      %v7813 = vadd.f32 %v533, %v7812
      %v7814 = vpop.f32.mrb[0].mxu0
      %7815 = vmatprep.mubr.bf16.mxu0 0
      %7816 = vmatmul.mubr.bf16.gmra.mrb[0].mxu0 %v7455
      %v7817 = vpop.f32.mrb[0].mxu0
      %v7818 = vadd.f32 %v533, %v7817
      %v7819 = vpop.f32.mrb[0].mxu0
      %v7820 = vpop.f32.mrb[0].mxu0
      %v7821 = vadd.f32 %v533, %v7820
      %v7822 = vpop.f32.mrb[0].mxu0
      %7823 = vmatprep.mubr.bf16.mxu0 0
      %7824 = vmatmul.mubr.bf16.gmra.mrb[0].mxu0 %v7458
      %v7825 = vpop.f32.mrb[0].mxu0
      %v7826 = vadd.f32 %v533, %v7825
      %v7827 = vpop.f32.mrb[0].mxu0
      %v7828 = vpop.f32.mrb[0].mxu0
      %v7829 = vadd.f32 %v533, %v7828
      %v7830 = vpop.f32.mrb[0].mxu0
      %7831 = vmatprep.mubr.bf16.mxu0 0
      %7832 = vmatmul.mubr.bf16.gmra.mrb[0].mxu0 %v7461
      %v7833 = vpop.f32.mrb[0].mxu0
      %v7834 = vadd.f32 %v533, %v7833
      %v7835 = vpop.f32.mrb[0].mxu0
      %v7836 = vpop.f32.mrb[0].mxu0
      %v7837 = vadd.f32 %v533, %v7836
      %v7838 = vpop.f32.mrb[0].mxu0
      %7839 = vmatprep.mubr.bf16.mxu0 0
      %7840 = vmatmul.mubr.bf16.gmra.mrb[0].mxu0 %v7464
      %v7841 = vpop.f32.mrb[0].mxu0
      %v7842 = vadd.f32 %v533, %v7841
      %v7843 = vpop.f32.mrb[0].mxu0
      %v7844 = vpop.f32.mrb[0].mxu0
      %v7845 = vadd.f32 %v533, %v7844
      %v7846 = vpop.f32.mrb[0].mxu0
      %7847 = vmatprep.mubr.bf16.mxu0 0
      %7848 = vmatmul.mubr.bf16.gmra.mrb[0].mxu0 %v7467
      %v7849 = vpop.f32.mrb[0].mxu0
      %v7850 = vadd.f32 %v533, %v7849
      %v7851 = vpop.f32.mrb[0].mxu0
      %v7852 = vpop.f32.mrb[0].mxu0
      %v7853 = vadd.f32 %v533, %v7852
      %v7854 = vpop.f32.mrb[0].mxu0
      %7855 = vmatprep.mubr.bf16.mxu0 0
      %7856 = vmatmul.mubr.bf16.gmra.mrb[0].mxu0 %v7470
      %v7857 = vpop.f32.mrb[0].mxu0
      %v7858 = vadd.f32 %v533, %v7857
      %v7859 = vpop.f32.mrb[0].mxu0
      %v7860 = vpop.f32.mrb[0].mxu0
      %v7861 = vadd.f32 %v533, %v7860
      %v7862 = vpop.f32.mrb[0].mxu0
      %7863 = vmatprep.mubr.bf16.mxu0 0
      %7864 = vmatmul.mubr.bf16.gmra.mrb[0].mxu0 %v7473
      %v7865 = vpop.f32.mrb[0].mxu0
      %v7866 = vadd.f32 %v533, %v7865
      %v7867 = vpop.f32.mrb[0].mxu0
      %v7868 = vpop.f32.mrb[0].mxu0
      %v7869 = vadd.f32 %v533, %v7868
      %v7870 = vpop.f32.mrb[0].mxu0
      %7871 = vmatprep.mubr.bf16.mxu0 0
      %7872 = vmatmul.mubr.bf16.gmra.mrb[0].mxu0 %v7476
      %v7873 = vpop.f32.mrb[0].mxu0
      %v7874 = vadd.f32 %v533, %v7873
      %v7875 = vpop.f32.mrb[0].mxu0
      %v7876 = vpop.f32.mrb[0].mxu0
      %v7877 = vadd.f32 %v533, %v7876
      %v7878 = vpop.f32.mrb[0].mxu0
      %7879 = vmatprep.mubr.bf16.mxu0 0
      %7880 = vmatmul.mubr.bf16.gmra.mrb[0].mxu0 %v7479
      %v7881 = vpop.f32.mrb[0].mxu0
      %v7882 = vadd.f32 %v533, %v7881
      %v7883 = vpop.f32.mrb[0].mxu0
      %v7884 = vpop.f32.mrb[0].mxu0
      %v7885 = vadd.f32 %v533, %v7884
      %v7886 = vpop.f32.mrb[0].mxu0
      %7887 = vmatprep.mubr.bf16.mxu0 0
      %7888 = vmatmul.mubr.bf16.gmra.mrb[0].mxu0 %v7482
      %v7889 = vpop.f32.mrb[0].mxu0
      %v7890 = vadd.f32 %v533, %v7889
      %v7891 = vpop.f32.mrb[0].mxu0
      %v7892 = vpop.f32.mrb[0].mxu0
      %v7893 = vadd.f32 %v533, %v7892
      %v7894 = vpop.f32.mrb[0].mxu0
      %7895 = vmatprep.mubr.bf16.mxu0 0
      %7896 = vmatmul.mubr.bf16.gmra.mrb[0].mxu0 %v7485
      %v7897 = vpop.f32.mrb[0].mxu0
      %v7898 = vadd.f32 %v533, %v7897
      %v7899 = vpop.f32.mrb[0].mxu0
      %v7900 = vpop.f32.mrb[0].mxu0
      %v7901 = vadd.f32 %v533, %v7900
      %v7902 = vpop.f32.mrb[0].mxu0
      %7903 = vmatprep.mubr.bf16.mxu0 0
      %7904 = vmatmul.mubr.bf16.gmra.mrb[0].mxu0 %v7488
      %v7905 = vpop.f32.mrb[0].mxu0
      %v7906 = vadd.f32 %v533, %v7905
      %v7907 = vpop.f32.mrb[0].mxu0
      %v7908 = vpop.f32.mrb[0].mxu0
      %v7909 = vadd.f32 %v533, %v7908
      %v7910 = vpop.f32.mrb[0].mxu0
      %7911 = vmatprep.mubr.bf16.mxu0 0
      %7912 = vmatmul.mubr.bf16.gmra.mrb[0].mxu0 %v7491
      %v7913 = vpop.f32.mrb[0].mxu0
      %v7914 = vadd.f32 %v533, %v7913
      %v7915 = vpop.f32.mrb[0].mxu0
      %v7916 = vpop.f32.mrb[0].mxu0
      %v7917 = vadd.f32 %v533, %v7916
      %v7918 = vpop.f32.mrb[0].mxu0
      %7919 = vmatprep.mubr.bf16.mxu0 0
      %7920 = vmatmul.mubr.bf16.gmra.mrb[0].mxu0 %v7494
      %v7921 = vpop.f32.mrb[0].mxu0
      %v7922 = vadd.f32 %v533, %v7921
      %v7923 = vpop.f32.mrb[0].mxu0
      %v7924 = vpop.f32.mrb[0].mxu0
      %v7925 = vadd.f32 %v533, %v7924
      %v7926 = vpop.f32.mrb[0].mxu0
      %7927 = vmatprep.mubr.bf16.mxu0 0
      %7928 = vmatmul.mubr.bf16.gmra.mrb[0].mxu0 %v7497
      %v7929 = vpop.f32.mrb[0].mxu0
      %v7930 = vadd.f32 %v533, %v7929
      %v7931 = vpop.f32.mrb[0].mxu0
      %v7932 = vpop.f32.mrb[0].mxu0
      %v7933 = vadd.f32 %v533, %v7932
      %v7934 = vpop.f32.mrb[0].mxu0
      %7935 = vmatprep.mubr.bf16.mxu0 0
      %7936 = vmatmul.mubr.bf16.gmra.mrb[0].mxu0 %v7500
      %v7937 = vpop.f32.mrb[0].mxu0
      %v7938 = vadd.f32 %v533, %v7937
      %v7939 = vpop.f32.mrb[0].mxu0
      %v7940 = vpop.f32.mrb[0].mxu0
      %v7941 = vadd.f32 %v533, %v7940
      %v7942 = vpop.f32.mrb[0].mxu0
      %7943 = vmatprep.mubr.bf16.mxu0 0
      %7944 = vmatmul.mubr.bf16.gmra.mrb[0].mxu0 %v7503
      %v7945 = vpop.f32.mrb[0].mxu0
      %v7946 = vadd.f32 %v533, %v7945
      %v7947 = vpop.f32.mrb[0].mxu0
      %v7948 = vpop.f32.mrb[0].mxu0
      %v7949 = vadd.f32 %v533, %v7948
      %v7950 = vpop.f32.mrb[0].mxu0
      %7951 = vmatprep.mubr.bf16.mxu0 0
      %7952 = vmatmul.mubr.bf16.gmra.mrb[0].mxu0 %v7506
      %v7953 = vpop.f32.mrb[0].mxu0
      %v7954 = vadd.f32 %v533, %v7953
      %v7955 = vpop.f32.mrb[0].mxu0
      %v7956 = vpop.f32.mrb[0].mxu0
      %v7957 = vadd.f32 %v533, %v7956
      %v7958 = vpop.f32.mrb[0].mxu0
      %7959 = vmatprep.mubr.bf16.mxu0 0
      %7960 = vmatmul.mubr.bf16.gmra.mrb[0].mxu0 %v7509
      %v7961 = vpop.f32.mrb[0].mxu0
      %v7962 = vadd.f32 %v533, %v7961
      %v7963 = vpop.f32.mrb[0].mxu0
      %v7964 = vpop.f32.mrb[0].mxu0
      %v7965 = vadd.f32 %v533, %v7964
      %v7966 = vpop.f32.mrb[0].mxu0
      %7967 = vmatprep.mubr.bf16.mxu0 0
      %7968 = vmatmul.mubr.bf16.gmra.mrb[0].mxu0 %v7512
      %v7969 = vpop.f32.mrb[0].mxu0
      %v7970 = vadd.f32 %v533, %v7969
      %v7971 = vpop.f32.mrb[0].mxu0
      %v7972 = vpop.f32.mrb[0].mxu0
      %v7973 = vadd.f32 %v533, %v7972
      %v7974 = vpop.f32.mrb[0].mxu0
      %7975 = vmatprep.mubr.bf16.mxu0 0
      %7976 = vmatmul.mubr.bf16.gmra.mrb[0].mxu0 %v7515
      %v7977 = vpop.f32.mrb[0].mxu0
      %v7978 = vadd.f32 %v533, %v7977
      %v7979 = vpop.f32.mrb[0].mxu0
      %v7980 = vpop.f32.mrb[0].mxu0
      %v7981 = vadd.f32 %v533, %v7980
      %v7982 = vpop.f32.mrb[0].mxu0
      %7983 = vmatprep.mubr.bf16.mxu0 0
      %7984 = vmatmul.mubr.bf16.gmra.mrb[0].mxu0 %v7518
      %v7985 = vpop.f32.mrb[0].mxu0
      %v7986 = vadd.f32 %v533, %v7985
      %v7987 = vpop.f32.mrb[0].mxu0
      %v7988 = vpop.f32.mrb[0].mxu0
      %v7989 = vadd.f32 %v533, %v7988
      %v7990 = vpop.f32.mrb[0].mxu0
      %7991 = vmatprep.mubr.bf16.mxu0 0
      %7992 = vmatmul.mubr.bf16.gmra.mrb[0].mxu0 %v7521
      %v7993 = vpop.f32.mrb[0].mxu0
      %v7994 = vadd.f32 %v533, %v7993
      %v7995 = vpop.f32.mrb[0].mxu0
      %v7996 = vpop.f32.mrb[0].mxu0
      %v7997 = vadd.f32 %v533, %v7996
      %v7998 = vpop.f32.mrb[0].mxu0
      %7999 = vmatprep.mubr.bf16.mxu0 0
      %8000 = vmatmul.mubr.bf16.gmra.mrb[0].mxu0 %v7524
      %v8001 = vpop.f32.mrb[0].mxu0
      %v8002 = vadd.f32 %v533, %v8001
      %v8003 = vpop.f32.mrb[0].mxu0
      %v8004 = vpop.f32.mrb[0].mxu0
      %v8005 = vadd.f32 %v533, %v8004
      %v8006 = vpop.f32.mrb[0].mxu0
      %8007 = vmatprep.mubr.bf16.mxu0 0
      %8008 = vmatmul.mubr.bf16.gmra.mrb[0].mxu0 %v7527
      %v8009 = vpop.f32.mrb[0].mxu0
      %v8010 = vadd.f32 %v533, %v8009
      %v8011 = vpop.f32.mrb[0].mxu0
      %v8012 = vpop.f32.mrb[0].mxu0
      %v8013 = vadd.f32 %v533, %v8012
      %v8014 = vpop.f32.mrb[0].mxu0
      %8015 = vmatprep.mubr.bf16.mxu0 0
      %8016 = vmatmul.mubr.bf16.gmra.mrb[0].mxu0 %v7530
      %v8017 = vpop.f32.mrb[0].mxu0
      %v8018 = vadd.f32 %v533, %v8017
      %v8019 = vpop.f32.mrb[0].mxu0
      %v8020 = vpop.f32.mrb[0].mxu0
      %v8021 = vadd.f32 %v533, %v8020
      %v8022 = vpop.f32.mrb[0].mxu0
      %8023 = vmatprep.mubr.bf16.mxu0 0
      %8024 = vmatmul.mubr.bf16.gmra.mrb[0].mxu0 %v7533
      %v8025 = vpop.f32.mrb[0].mxu0
      %v8026 = vadd.f32 %v533, %v8025
      %v8027 = vpop.f32.mrb[0].mxu0
      %v8028 = vpop.f32.mrb[0].mxu0
      %v8029 = vadd.f32 %v533, %v8028
      %v8030 = vpop.f32.mrb[0].mxu0
      %8031 = vmatprep.mubr.bf16.mxu0 0
      %8032 = vmatmul.mubr.bf16.gmra.mrb[0].mxu0 %v7536
      %v8033 = vpop.f32.mrb[0].mxu0
      %v8034 = vadd.f32 %v533, %v8033
      %v8035 = vpop.f32.mrb[0].mxu0
      %v8036 = vpop.f32.mrb[0].mxu0
      %v8037 = vadd.f32 %v533, %v8036
      %v8038 = vpop.f32.mrb[0].mxu0
      %8039 = vmatprep.mubr.bf16.mxu0 0
      %8040 = vmatmul.mubr.bf16.gmra.mrb[0].mxu0 %v7539
      %v8041 = vpop.f32.mrb[0].mxu0
      %v8042 = vadd.f32 %v533, %v8041
      %v8043 = vpop.f32.mrb[0].mxu0
      %v8044 = vpop.f32.mrb[0].mxu0
      %v8045 = vadd.f32 %v533, %v8044
      %v8046 = vpop.f32.mrb[0].mxu0
      %8047 = vmatprep.mubr.bf16.mxu0 0
      %8048 = vmatmul.mubr.bf16.gmra.mrb[0].mxu0 %v7542
      %v8049 = vpop.f32.mrb[0].mxu0
      %v8050 = vadd.f32 %v533, %v8049
      %v8051 = vpop.f32.mrb[0].mxu0
      %v8052 = vpop.f32.mrb[0].mxu0
      %v8053 = vadd.f32 %v533, %v8052
      %v8054 = vpop.f32.mrb[0].mxu0
      %8055 = vmatprep.mubr.bf16.mxu0 0
      %8056 = vmatmul.mubr.bf16.gmra.mrb[0].mxu0 %v7545
      %v8057 = vpop.f32.mrb[0].mxu0
      %v8058 = vadd.f32 %v533, %v8057
      %v8059 = vpop.f32.mrb[0].mxu0
      %v8060 = vpop.f32.mrb[0].mxu0
      %v8061 = vadd.f32 %v533, %v8060
      %v8062 = vpop.f32.mrb[0].mxu0
      %8063 = vmatprep.mubr.bf16.mxu0 0
      %8064 = vmatmul.mubr.bf16.gmra.mrb[0].mxu0 %v7548
      %v8065 = vpop.f32.mrb[0].mxu0
      %v8066 = vadd.f32 %v533, %v8065
      %v8067 = vpop.f32.mrb[0].mxu0
      %v8068 = vpop.f32.mrb[0].mxu0
      %v8069 = vadd.f32 %v533, %v8068
      %v8070 = vpop.f32.mrb[0].mxu0
      %8071 = vmatprep.mubr.bf16.mxu0 0
      %8072 = vmatmul.mubr.bf16.gmra.mrb[0].mxu0 %v7551
      %v8073 = vpop.f32.mrb[0].mxu0
      %v8074 = vadd.f32 %v533, %v8073
      %v8075 = vpop.f32.mrb[0].mxu0
      %v8076 = vpop.f32.mrb[0].mxu0
      %v8077 = vadd.f32 %v533, %v8076
      %v8078 = vpop.f32.mrb[0].mxu0
      %8079 = vmatprep.mubr.bf16.mxu0 0
      %8080 = vmatmul.mubr.bf16.gmra.mrb[0].mxu0 %v7554
      %v8081 = vpop.f32.mrb[0].mxu0
      %v8082 = vadd.f32 %v533, %v8081
      %v8083 = vpop.f32.mrb[0].mxu0
      %v8084 = vpop.f32.mrb[0].mxu0
      %v8085 = vadd.f32 %v533, %v8084
      %v8086 = vpop.f32.mrb[0].mxu0
      %8087 = vmatprep.mubr.bf16.mxu0 0
      %8088 = vmatmul.mubr.bf16.gmra.mrb[0].mxu0 %v7557
      %v8089 = vpop.f32.mrb[0].mxu0
      %v8090 = vadd.f32 %v533, %v8089
      %v8091 = vpop.f32.mrb[0].mxu0
      %v8092 = vpop.f32.mrb[0].mxu0
      %v8093 = vadd.f32 %v533, %v8092
      %v8094 = vpop.f32.mrb[0].mxu0
      %8095 = vmatprep.mubr.bf16.mxu0 0
      %8096 = vmatmul.mubr.bf16.gmra.mrb[0].mxu0 %v7560
      %v8097 = vpop.f32.mrb[0].mxu0
      %v8098 = vadd.f32 %v533, %v8097
      %v8099 = vpop.f32.mrb[0].mxu0
      %v8100 = vpop.f32.mrb[0].mxu0
      %v8101 = vadd.f32 %v533, %v8100
      %v8102 = vpop.f32.mrb[0].mxu0
      %8103 = vmatprep.mubr.bf16.mxu0 0
      %8104 = vmatmul.mubr.bf16.gmra.mrb[0].mxu0 %v7563
      %v8105 = vpop.f32.mrb[0].mxu0
      %v8106 = vadd.f32 %v533, %v8105
      %v8107 = vpop.f32.mrb[0].mxu0
      %v8108 = vpop.f32.mrb[0].mxu0
      %v8109 = vadd.f32 %v533, %v8108
      %v8110 = vpop.f32.mrb[0].mxu0
      %8111 = vmatprep.mubr.bf16.mxu0 0
      %8112 = vmatmul.mubr.bf16.gmra.mrb[0].mxu0 %v7566
      %v8113 = vpop.f32.mrb[0].mxu0
      %v8114 = vadd.f32 %v533, %v8113
      %v8115 = vpop.f32.mrb[0].mxu0
      %v8116 = vpop.f32.mrb[0].mxu0
      %v8117 = vadd.f32 %v533, %v8116
      %v8118 = vpop.f32.mrb[0].mxu0
      %8119 = vmatprep.mubr.bf16.mxu0 0
      %8120 = vmatmul.mubr.bf16.gmra.mrb[0].mxu0 %v7569
      %v8121 = vpop.f32.mrb[0].mxu0
      %v8122 = vadd.f32 %v533, %v8121
      %v8123 = vpop.f32.mrb[0].mxu0
      %v8124 = vpop.f32.mrb[0].mxu0
      %v8125 = vadd.f32 %v533, %v8124
      %v8126 = vpop.f32.mrb[0].mxu0
      %8127 = vmatprep.mubr.bf16.mxu0 0
      %8128 = vmatmul.mubr.bf16.gmra.mrb[0].mxu0 %v7572
      %v8129 = vpop.f32.mrb[0].mxu0
      %v8130 = vadd.f32 %v533, %v8129
      %v8131 = vpop.f32.mrb[0].mxu0
      %v8132 = vpop.f32.mrb[0].mxu0
      %v8133 = vadd.f32 %v533, %v8132
      %v8134 = vpop.f32.mrb[0].mxu0
      %8135 = vmatprep.mubr.bf16.mxu0 0
      %8136 = vmatmul.mubr.bf16.gmra.mrb[0].mxu0 %v7575
      %v8137 = vpop.f32.mrb[0].mxu0
      %v8138 = vadd.f32 %v533, %v8137
      %v8139 = vpop.f32.mrb[0].mxu0
      %v8140 = vpop.f32.mrb[0].mxu0
      %v8141 = vadd.f32 %v533, %v8140
      %v8142 = vpop.f32.mrb[0].mxu0
      %8143 = vmatprep.mubr.bf16.mxu0 0
      %8144 = vmatmul.mubr.bf16.gmra.mrb[0].mxu0 %v7578
      %v8145 = vpop.f32.mrb[0].mxu0
      %v8146 = vadd.f32 %v533, %v8145
      %v8147 = vpop.f32.mrb[0].mxu0
      %v8148 = vpop.f32.mrb[0].mxu0
      %v8149 = vadd.f32 %v533, %v8148
      %v8150 = vpop.f32.mrb[0].mxu0
      %8151 = vmatprep.mubr.bf16.mxu0 0
      %8152 = vmatmul.mubr.bf16.gmra.mrb[0].mxu0 %v7581
      %v8153 = vpop.f32.mrb[0].mxu0
      %v8154 = vadd.f32 %v533, %v8153
      %v8155 = vpop.f32.mrb[0].mxu0
      %v8156 = vpop.f32.mrb[0].mxu0
      %v8157 = vadd.f32 %v533, %v8156
      %v8158 = vpop.f32.mrb[0].mxu0
      %8159 = vmatprep.mubr.bf16.mxu0 0
      %8160 = vmatmul.mubr.bf16.gmra.mrb[0].mxu0 %v7584
      %v8161 = vpop.f32.mrb[0].mxu0
      %v8162 = vadd.f32 %v533, %v8161
      %v8163 = vpop.f32.mrb[0].mxu0
      %v8164 = vpop.f32.mrb[0].mxu0
      %v8165 = vadd.f32 %v533, %v8164
      %v8166 = vpop.f32.mrb[0].mxu0
      %8167 = vmatprep.mubr.bf16.mxu0 0
      %8168 = vmatmul.mubr.bf16.gmra.mrb[0].mxu0 %v7587
      %v8169 = vpop.f32.mrb[0].mxu0
      %v8170 = vadd.f32 %v533, %v8169
      %v8171 = vpop.f32.mrb[0].mxu0
      %v8172 = vpop.f32.mrb[0].mxu0
      %v8173 = vadd.f32 %v533, %v8172
      %v8174 = vpop.f32.mrb[0].mxu0
      %8175 = vmatprep.mubr.bf16.mxu0 0
      %8176 = vmatmul.mubr.bf16.gmra.mrb[0].mxu0 %v7590
      %v8177 = vpop.f32.mrb[0].mxu0
      %v8178 = vadd.f32 %v533, %v8177
      %v8179 = vpop.f32.mrb[0].mxu0
      %v8180 = vpop.f32.mrb[0].mxu0
      %v8181 = vadd.f32 %v533, %v8180
      %v8182 = vpop.f32.mrb[0].mxu0
      %8183 = vmatprep.mubr.bf16.mxu0 0
      %8184 = vmatmul.mubr.bf16.gmra.mrb[0].mxu0 %v7593
      %v8185 = vpop.f32.mrb[0].mxu0
      %v8186 = vadd.f32 %v533, %v8185
      %v8187 = vpop.f32.mrb[0].mxu0
      %v8188 = vpop.f32.mrb[0].mxu0
      %v8189 = vadd.f32 %v533, %v8188
      %v8190 = vpop.f32.mrb[0].mxu0
      %8191 = vmatprep.mubr.bf16.mxu0 0
      %8192 = vmatmul.mubr.bf16.gmra.mrb[0].mxu0 %v7596
      %v8193 = vpop.f32.mrb[0].mxu0
      %v8194 = vadd.f32 %v533, %v8193
      %v8195 = vpop.f32.mrb[0].mxu0
      %v8196 = vpop.f32.mrb[0].mxu0
      %v8197 = vadd.f32 %v533, %v8196
      %v8198 = vpop.f32.mrb[0].mxu0
      %8199 = vmatprep.mubr.bf16.mxu0 0
      %8200 = vmatmul.mubr.bf16.gmra.mrb[0].mxu0 %v7599
      %v8201 = vpop.f32.mrb[0].mxu0
      %v8202 = vadd.f32 %v533, %v8201
      %v8203 = vpop.f32.mrb[0].mxu0
      %v8204 = vpop.f32.mrb[0].mxu0
      %v8205 = vadd.f32 %v533, %v8204
      %v8206 = vpop.f32.mrb[0].mxu0
      %8207 = vmatprep.mubr.bf16.mxu0 0
      %8208 = vmatmul.mubr.bf16.gmra.mrb[0].mxu0 %v7602
      %v8209 = vpop.f32.mrb[0].mxu0
      %v8210 = vadd.f32 %v533, %v8209
      %v8211 = vpop.f32.mrb[0].mxu0
      %v8212 = vpop.f32.mrb[0].mxu0
      %v8213 = vadd.f32 %v533, %v8212
      %v8214 = vpop.f32.mrb[0].mxu0
      %8215 = vmatprep.mubr.bf16.mxu0 0
      %8216 = vmatmul.mubr.bf16.gmra.mrb[0].mxu0 %v7605
      %v8217 = vpop.f32.mrb[0].mxu0
      %v8218 = vadd.f32 %v533, %v8217
      %v8219 = vpop.f32.mrb[0].mxu0
      %v8220 = vpop.f32.mrb[0].mxu0
      %v8221 = vadd.f32 %v533, %v8220
      %v8222 = vpop.f32.mrb[0].mxu0
      %8223 = vmatprep.mubr.bf16.mxu0 0
      %8224 = vmatmul.mubr.bf16.gmra.mrb[0].mxu0 %v7608
      %v8225 = vpop.f32.mrb[0].mxu0
      %v8226 = vadd.f32 %v533, %v8225
      %v8227 = vpop.f32.mrb[0].mxu0
      %v8228 = vpop.f32.mrb[0].mxu0
      %v8229 = vadd.f32 %v533, %v8228
      %v8230 = vpop.f32.mrb[0].mxu0
      %8231 = vmatprep.mubr.bf16.mxu0 0
      %8232 = vmatmul.mubr.bf16.gmra.mrb[0].mxu0 %v7611
      %v8233 = vpop.f32.mrb[0].mxu0
      %v8234 = vadd.f32 %v533, %v8233
      %v8235 = vpop.f32.mrb[0].mxu0
      %v8236 = vpop.f32.mrb[0].mxu0
      %v8237 = vadd.f32 %v533, %v8236
      %v8238 = vpop.f32.mrb[0].mxu0
      %8239 = vmatprep.mubr.bf16.mxu0 0
      %8240 = vmatmul.mubr.bf16.gmra.mrb[0].mxu0 %v7614
      %v8241 = vpop.f32.mrb[0].mxu0
      %v8242 = vadd.f32 %v533, %v8241
      %v8243 = vpop.f32.mrb[0].mxu0
      %v8244 = vpop.f32.mrb[0].mxu0
      %v8245 = vadd.f32 %v533, %v8244
      %v8246 = vpop.f32.mrb[0].mxu0
      %8247 = vmatprep.mubr.bf16.mxu0 0
      %8248 = vmatmul.mubr.bf16.gmra.mrb[0].mxu0 %v7617
      %v8249 = vpop.f32.mrb[0].mxu0
      %v8250 = vadd.f32 %v533, %v8249
      %v8251 = vpop.f32.mrb[0].mxu0
      %v8252 = vpop.f32.mrb[0].mxu0
      %v8253 = vadd.f32 %v533, %v8252
      %v8254 = vpop.f32.mrb[0].mxu0
      %8255 = vmatprep.mubr.bf16.mxu0 0
      %8256 = vmatmul.mubr.bf16.gmra.mrb[0].mxu0 %v7620
      %v8257 = vpop.f32.mrb[0].mxu0
      %v8258 = vadd.f32 %v533, %v8257
      %v8259 = vpop.f32.mrb[0].mxu0
      %v8260 = vpop.f32.mrb[0].mxu0
      %v8261 = vadd.f32 %v533, %v8260
      %v8262 = vpop.f32.mrb[0].mxu0
      %8263 = vmatprep.mubr.bf16.mxu0 0
      %8264 = vmatmul.mubr.bf16.gmra.mrb[0].mxu0 %v7623
      %v8265 = vpop.f32.mrb[0].mxu0
      %v8266 = vadd.f32 %v533, %v8265
      %v8267 = vpop.f32.mrb[0].mxu0
      %v8268 = vpop.f32.mrb[0].mxu0
      %v8269 = vadd.f32 %v533, %v8268
      %v8270 = vpop.f32.mrb[0].mxu0
      %8271 = vmatprep.mubr.bf16.mxu0 0
      %8272 = vmatmul.mubr.bf16.gmra.mrb[0].mxu0 %v7626
      %v8273 = vpop.f32.mrb[0].mxu0
      %v8274 = vadd.f32 %v533, %v8273
      %v8275 = vpop.f32.mrb[0].mxu0
      %v8276 = vpop.f32.mrb[0].mxu0
      %v8277 = vadd.f32 %v533, %v8276
      %v8278 = vpop.f32.mrb[0].mxu0
      %8279 = vmatprep.mubr.bf16.mxu0 0
      %8280 = vmatmul.mubr.bf16.gmra.mrb[0].mxu0 %v7629
      %v8281 = vpop.f32.mrb[0].mxu0
      %v8282 = vadd.f32 %v533, %v8281
      %v8283 = vpop.f32.mrb[0].mxu0
      %v8284 = vpop.f32.mrb[0].mxu0
      %v8285 = vadd.f32 %v533, %v8284
      %v8286 = vpop.f32.mrb[0].mxu0
      %8287 = vmatprep.mubr.bf16.mxu0 0
      %8288 = vmatmul.mubr.bf16.gmra.mrb[0].mxu0 %v7632
      %v8289 = vpop.f32.mrb[0].mxu0
      %v8290 = vadd.f32 %v533, %v8289
      %v8291 = vpop.f32.mrb[0].mxu0
      %v8292 = vpop.f32.mrb[0].mxu0
      %v8293 = vadd.f32 %v533, %v8292
      %v8294 = vpop.f32.mrb[0].mxu0
      %8295 = vmatprep.mubr.bf16.mxu0 0
      %8296 = vmatmul.mubr.bf16.gmra.mrb[0].mxu0 %v7635
      %v8297 = vpop.f32.mrb[0].mxu0
      %v8298 = vadd.f32 %v533, %v8297
      %v8299 = vpop.f32.mrb[0].mxu0
      %v8300 = vpop.f32.mrb[0].mxu0
      %v8301 = vadd.f32 %v533, %v8300
      %v8302 = vpop.f32.mrb[0].mxu0
      %8303 = vmatprep.mubr.bf16.mxu0 0
      %8304 = vmatmul.mubr.bf16.gmra.mrb[0].mxu0 %v7638
      %v8305 = vpop.f32.mrb[0].mxu0
      %v8306 = vadd.f32 %v533, %v8305
      %v8307 = vpop.f32.mrb[0].mxu0
      %v8308 = vpop.f32.mrb[0].mxu0
      %v8309 = vadd.f32 %v533, %v8308
      %v8310 = vpop.f32.mrb[0].mxu0
      %8311 = vmatprep.mubr.bf16.mxu0 0
      %8312 = vmatmul.mubr.bf16.gmra.mrb[0].mxu0 %v7641
      %v8313 = vpop.f32.mrb[0].mxu0
      %v8314 = vadd.f32 %v533, %v8313
      %v8315 = vpop.f32.mrb[0].mxu0
      %v8316 = vpop.f32.mrb[0].mxu0
      %v8317 = vadd.f32 %v533, %v8316
      %v8318 = vpop.f32.mrb[0].mxu0
      %8319 = vmatprep.mubr.bf16.mxu0 0
      %8320 = vmatmul.mubr.bf16.gmra.mrb[0].mxu0 %v7644
      %v8321 = vpop.f32.mrb[0].mxu0
      %v8322 = vadd.f32 %v533, %v8321
      %v8323 = vpop.f32.mrb[0].mxu0
      %v8324 = vpop.f32.mrb[0].mxu0
      %v8325 = vadd.f32 %v533, %v8324
      %v8326 = vpop.f32.mrb[0].mxu0
      %8327 = vmatprep.mubr.bf16.mxu0 0
      %8328 = vmatmul.mubr.bf16.gmra.mrb[0].mxu0 %v7647
      %v8329 = vpop.f32.mrb[0].mxu0
      %v8330 = vadd.f32 %v533, %v8329
      %v8331 = vpop.f32.mrb[0].mxu0
      %v8332 = vpop.f32.mrb[0].mxu0
      %v8333 = vadd.f32 %v533, %v8332
      %v8334 = vpop.f32.mrb[0].mxu0
      %8335 = vmatprep.mubr.bf16.mxu0 0
      %8336 = vmatmul.mubr.bf16.gmra.mrb[0].mxu0 %v7650
      %v8337 = vpop.f32.mrb[0].mxu0
      %v8338 = vadd.f32 %v533, %v8337
      %v8339 = vpop.f32.mrb[0].mxu0
      %v8340 = vpop.f32.mrb[0].mxu0
      %v8341 = vadd.f32 %v533, %v8340
      %v8342 = vpop.f32.mrb[0].mxu0
      %8343 = vmatprep.mubr.bf16.mxu0 0
      %8344 = vmatmul.mubr.bf16.gmra.mrb[0].mxu0 %v7653
      %v8345 = vpop.f32.mrb[0].mxu0
      %v8346 = vadd.f32 %v533, %v8345
      %v8347 = vpop.f32.mrb[0].mxu0
      %v8348 = vpop.f32.mrb[0].mxu0
      %v8349 = vadd.f32 %v533, %v8348
      %v8350 = vpop.f32.mrb[0].mxu0
      %8351 = vmatprep.mubr.bf16.mxu0 0
      %8352 = vmatmul.mubr.bf16.gmra.mrb[0].mxu0 %v7656
      %v8353 = vpop.f32.mrb[0].mxu0
      %v8354 = vadd.f32 %v533, %v8353
      %v8355 = vpop.f32.mrb[0].mxu0
      %v8356 = vpop.f32.mrb[0].mxu0
      %v8357 = vadd.f32 %v533, %v8356
      %v8358 = vpop.f32.mrb[0].mxu0
      %8359 = vmatprep.mubr.bf16.mxu0 0
      %8360 = vmatmul.mubr.bf16.gmra.mrb[0].mxu0 %v7659
      %v8361 = vpop.f32.mrb[0].mxu0
      %v8362 = vadd.f32 %v533, %v8361
      %v8363 = vpop.f32.mrb[0].mxu0
      %v8364 = vpop.f32.mrb[0].mxu0
      %v8365 = vadd.f32 %v533, %v8364
      %v8366 = vpop.f32.mrb[0].mxu0
      %8367 = vmatprep.mubr.bf16.mxu0 0
      %8368 = vmatmul.mubr.bf16.gmra.mrb[0].mxu0 %v7662
      %v8369 = vpop.f32.mrb[0].mxu0
      %v8370 = vadd.f32 %v533, %v8369
      %v8371 = vpop.f32.mrb[0].mxu0
      %v8372 = vpop.f32.mrb[0].mxu0
      %v8373 = vadd.f32 %v533, %v8372
      %v8374 = vpop.f32.mrb[0].mxu0
      %8375 = vmatprep.mubr.bf16.mxu0 0
      %8376 = vmatmul.mubr.bf16.gmra.mrb[0].mxu0 %v7665
      %v8377 = vpop.f32.mrb[0].mxu0
      %v8378 = vadd.f32 %v533, %v8377
      %v8379 = vpop.f32.mrb[0].mxu0
      %v8380 = vpop.f32.mrb[0].mxu0
      %v8381 = vadd.f32 %v533, %v8380
      %v8382 = vpop.f32.mrb[0].mxu0
      %8383 = vmatprep.mubr.bf16.mxu0 0
      %8384 = vmatmul.mubr.bf16.gmra.mrb[0].mxu0 %v7668
      %v8385 = vpop.f32.mrb[0].mxu0
      %v8386 = vadd.f32 %v533, %v8385
      %v8387 = vpop.f32.mrb[0].mxu0
      %v8388 = vpop.f32.mrb[0].mxu0
      %v8389 = vadd.f32 %v533, %v8388
      %v8390 = vpop.f32.mrb[0].mxu0
      %8391 = vmatprep.mubr.bf16.mxu0 0
      %8392 = vmatmul.mubr.bf16.gmra.mrb[0].mxu0 %v7671
      %v8393 = vpop.f32.mrb[0].mxu0
      %v8394 = vadd.f32 %v533, %v8393
      %v8395 = vpop.f32.mrb[0].mxu0
      %v8396 = vpop.f32.mrb[0].mxu0
      %v8397 = vadd.f32 %v533, %v8396
      %v8398 = vpop.f32.mrb[0].mxu0
      %8399 = vmatprep.mubr.bf16.mxu0 0
      %8400 = vmatmul.mubr.bf16.gmra.mrb[0].mxu0 %v7674
      %v8401 = vpop.f32.mrb[0].mxu0
      %v8402 = vadd.f32 %v533, %v8401
      %v8403 = vpop.f32.mrb[0].mxu0
      %v8404 = vpop.f32.mrb[0].mxu0
      %v8405 = vadd.f32 %v533, %v8404
      %v8406 = vpop.f32.mrb[0].mxu0
      %8407 = vmatprep.mubr.bf16.mxu0 0
      %8408 = vmatmul.mubr.bf16.gmra.mrb[0].mxu0 %v7677
      %v8409 = vpop.f32.mrb[0].mxu0
      %v8410 = vadd.f32 %v533, %v8409
      %v8411 = vpop.f32.mrb[0].mxu0
      %v8412 = vpop.f32.mrb[0].mxu0
      %v8413 = vadd.f32 %v533, %v8412
      %v8414 = vpop.f32.mrb[0].mxu0
      %8415 = vmatprep.mubr.bf16.mxu0 0
      %8416 = vmatmul.mubr.bf16.gmra.mrb[0].mxu0 %v7680
      %v8417 = vpop.f32.mrb[0].mxu0
      %v8418 = vadd.f32 %v533, %v8417
      %v8419 = vpop.f32.mrb[0].mxu0
      %v8420 = vpop.f32.mrb[0].mxu0
      %v8421 = vadd.f32 %v533, %v8420
      %v8422 = vpop.f32.mrb[0].mxu0
      %8423 = vmatprep.mubr.bf16.mxu0 0
      %8424 = vmatmul.mubr.bf16.gmra.mrb[0].mxu0 %v7683
      %v8425 = vpop.f32.mrb[0].mxu0
      %v8426 = vadd.f32 %v533, %v8425
      %v8427 = vpop.f32.mrb[0].mxu0
      %v8428 = vpop.f32.mrb[0].mxu0
      %v8429 = vadd.f32 %v533, %v8428
      %v8430 = vpop.f32.mrb[0].mxu0
      %8431 = vmatprep.mubr.bf16.mxu0 0
      %8432 = vmatmul.mubr.bf16.gmra.mrb[0].mxu0 %v7686
      %v8433 = vpop.f32.mrb[0].mxu0
      %v8434 = vadd.f32 %v533, %v8433
      %v8435 = vpop.f32.mrb[0].mxu0
      %v8436 = vpop.f32.mrb[0].mxu0
      %v8437 = vadd.f32 %v533, %v8436
      %v8438 = vpop.f32.mrb[0].mxu0
      %8439 = vmatprep.mubr.bf16.mxu0 0
      %8440 = vmatmul.mubr.bf16.gmra.mrb[0].mxu0 %v7689
      %v8441 = vpop.f32.mrb[0].mxu0
      %v8442 = vadd.f32 %v533, %v8441
      %v8443 = vpop.f32.mrb[0].mxu0
      %v8444 = vpop.f32.mrb[0].mxu0
      %v8445 = vadd.f32 %v533, %v8444
      %v8446 = vpop.f32.mrb[0].mxu0
      %8447 = vmatprep.mubr.bf16.mxu0 0
      %8448 = vmatmul.mubr.bf16.gmra.mrb[0].mxu0 %v7692
      %v8449 = vpop.f32.mrb[0].mxu0
      %v8450 = vadd.f32 %v533, %v8449
      %v8451 = vpop.f32.mrb[0].mxu0
      %v8452 = vpop.f32.mrb[0].mxu0
      %v8453 = vadd.f32 %v533, %v8452
      %v8454 = vpop.f32.mrb[0].mxu0
      %8455 = vmatprep.mubr.bf16.mxu0 0
      %8456 = vmatmul.mubr.bf16.gmra.mrb[0].mxu0 %v7695
      %v8457 = vpop.f32.mrb[0].mxu0
      %v8458 = vadd.f32 %v533, %v8457
      %v8459 = vpop.f32.mrb[0].mxu0
      %v8460 = vpop.f32.mrb[0].mxu0
      %v8461 = vadd.f32 %v533, %v8460
      %v8462 = vpop.f32.mrb[0].mxu0
      %8463 = vmatprep.mubr.bf16.mxu0 0
      %8464 = vmatmul.mubr.bf16.gmra.mrb[0].mxu0 %v7698
      %v8465 = vpop.f32.mrb[0].mxu0
      %v8466 = vadd.f32 %v533, %v8465
      %v8467 = vpop.f32.mrb[0].mxu0
      %v8468 = vpop.f32.mrb[0].mxu0
      %v8469 = vadd.f32 %v533, %v8468
      %v8470 = vpop.f32.mrb[0].mxu0
      %8471 = vmatprep.mubr.bf16.mxu0 0
      %8472 = vmatmul.mubr.bf16.gmra.mrb[0].mxu0 %v7701
      %v8473 = vpop.f32.mrb[0].mxu0
      %v8474 = vadd.f32 %v533, %v8473
      %v8475 = vpop.f32.mrb[0].mxu0
      %v8476 = vpop.f32.mrb[0].mxu0
      %v8477 = vadd.f32 %v533, %v8476
      %v8478 = vpop.f32.mrb[0].mxu0
      %8479 = vmatprep.mubr.bf16.mxu0 0
      %8480 = vmatmul.mubr.bf16.gmra.mrb[0].mxu0 %v7704
      %v8481 = vpop.f32.mrb[0].mxu0
      %v8482 = vadd.f32 %v533, %v8481
      %v8483 = vpop.f32.mrb[0].mxu0
      %v8484 = vpop.f32.mrb[0].mxu0
      %v8485 = vadd.f32 %v533, %v8484
      %v8486 = vpop.f32.mrb[0].mxu0
      %8487 = vmatprep.mubr.bf16.mxu0 0
      %8488 = vmatmul.mubr.bf16.gmra.mrb[0].mxu0 %v7707
      %v8489 = vpop.f32.mrb[0].mxu0
      %v8490 = vadd.f32 %v533, %v8489
      %v8491 = vpop.f32.mrb[0].mxu0
      %v8492 = vpop.f32.mrb[0].mxu0
      %v8493 = vadd.f32 %v533, %v8492
      %v8494 = vpop.f32.mrb[0].mxu0
      %8495 = vmatprep.mubr.bf16.mxu0 0
      %8496 = vmatmul.mubr.bf16.gmra.mrb[0].mxu0 %v7710
      %v8497 = vpop.f32.mrb[0].mxu0
      %v8498 = vadd.f32 %v533, %v8497
      %v8499 = vpop.f32.mrb[0].mxu0
      %v8500 = vpop.f32.mrb[0].mxu0
      %v8501 = vadd.f32 %v533, %v8500
      %v8502 = vpop.f32.mrb[0].mxu0
      %8503 = vmatprep.mubr.bf16.mxu0 0
      %8504 = vmatmul.mubr.bf16.gmra.mrb[0].mxu0 %v7713
      %v8505 = vpop.f32.mrb[0].mxu0
      %v8506 = vadd.f32 %v533, %v8505
      %v8507 = vpop.f32.mrb[0].mxu0
      %v8508 = vpop.f32.mrb[0].mxu0
      %v8509 = vadd.f32 %v533, %v8508
      %v8510 = vpop.f32.mrb[0].mxu0
      %8511 = vmatprep.mubr.bf16.mxu0 0
      %8512 = vmatmul.mubr.bf16.gmra.mrb[0].mxu0 %v7716
      %v8513 = vpop.f32.mrb[0].mxu0
      %v8514 = vadd.f32 %v533, %v8513
      %v8515 = vpop.f32.mrb[0].mxu0
      %v8516 = vpop.f32.mrb[0].mxu0
      %v8517 = vadd.f32 %v533, %v8516
      %v8518 = vpop.f32.mrb[0].mxu0
      %8519 = vmatprep.mubr.bf16.mxu0 0
      %8520 = vmatmul.mubr.bf16.gmra.mrb[0].mxu0 %v7719
      %v8521 = vpop.f32.mrb[0].mxu0
      %v8522 = vadd.f32 %v533, %v8521
      %v8523 = vpop.f32.mrb[0].mxu0
      %v8524 = vpop.f32.mrb[0].mxu0
      %v8525 = vadd.f32 %v533, %v8524
      %v8526 = vpop.f32.mrb[0].mxu0
      %8527 = vmatprep.mubr.bf16.mxu0 0
      %8528 = vmatmul.mubr.bf16.gmra.mrb[0].mxu0 %v7722
      %v8529 = vpop.f32.mrb[0].mxu0
      %v8530 = vadd.f32 %v533, %v8529
      %v8531 = vpop.f32.mrb[0].mxu0
      %v8532 = vpop.f32.mrb[0].mxu0
      %v8533 = vadd.f32 %v533, %v8532
      %v8534 = vpop.f32.mrb[0].mxu0
      %8535 = vmatprep.mubr.bf16.mxu0 0
      %8536 = vmatmul.mubr.bf16.gmra.mrb[0].mxu0 %v7725
      %v8537 = vpop.f32.mrb[0].mxu0
      %v8538 = vadd.f32 %v533, %v8537
      %v8539 = vpop.f32.mrb[0].mxu0
      %v8540 = vpop.f32.mrb[0].mxu0
      %v8541 = vadd.f32 %v533, %v8540
      %v8542 = vpop.f32.mrb[0].mxu0
      %8543 = vdwg.mxu0
      %v8544 = vmax.f32 %v7762, 0.0
      %v8545 = vmax.f32 %v7765, 0.0
      %v8546 = vmax.f32 %v7770, 0.0
      %v8547 = vmax.f32 %v7773, 0.0
      %v8548 = vmax.f32 %v7778, 0.0
      %v8549 = vmax.f32 %v7781, 0.0
      %v8550 = vmax.f32 %v7786, 0.0
      %v8551 = vmax.f32 %v7789, 0.0
      %v8552 = vmax.f32 %v7794, 0.0
      %v8553 = vmax.f32 %v7797, 0.0
      %v8554 = vmax.f32 %v7802, 0.0
      %v8555 = vmax.f32 %v7805, 0.0
      %v8556 = vmax.f32 %v7810, 0.0
      %v8557 = vmax.f32 %v7813, 0.0
      %v8558 = vmax.f32 %v7818, 0.0
      %v8559 = vmax.f32 %v7821, 0.0
      %v8560 = vmax.f32 %v7826, 0.0
      %v8561 = vmax.f32 %v7829, 0.0
      %v8562 = vmax.f32 %v7834, 0.0
      %v8563 = vmax.f32 %v7837, 0.0
      %v8564 = vmax.f32 %v7842, 0.0
      %v8565 = vmax.f32 %v7845, 0.0
      %v8566 = vmax.f32 %v7850, 0.0
      %v8567 = vmax.f32 %v7853, 0.0
      %v8568 = vmax.f32 %v7858, 0.0
      %v8569 = vmax.f32 %v7861, 0.0
      %v8570 = vmax.f32 %v7866, 0.0
      %v8571 = vmax.f32 %v7869, 0.0
      %v8572 = vmax.f32 %v7874, 0.0
      %v8573 = vmax.f32 %v7877, 0.0
      %v8574 = vmax.f32 %v7882, 0.0
      %v8575 = vmax.f32 %v7885, 0.0
      %v8576 = vmax.f32 %v7890, 0.0
      %v8577 = vmax.f32 %v7893, 0.0
      %v8578 = vmax.f32 %v7898, 0.0
      %v8579 = vmax.f32 %v7901, 0.0
      %v8580 = vmax.f32 %v7906, 0.0
      %v8581 = vmax.f32 %v7909, 0.0
      %v8582 = vmax.f32 %v7914, 0.0
      %v8583 = vmax.f32 %v7917, 0.0
      %v8584 = vmax.f32 %v7922, 0.0
      %v8585 = vmax.f32 %v7925, 0.0
      %v8586 = vmax.f32 %v7930, 0.0
      %v8587 = vmax.f32 %v7933, 0.0
      %v8588 = vmax.f32 %v7938, 0.0
      %v8589 = vmax.f32 %v7941, 0.0
      %v8590 = vmax.f32 %v7946, 0.0
      %v8591 = vmax.f32 %v7949, 0.0
      %v8592 = vmax.f32 %v7954, 0.0
      %v8593 = vmax.f32 %v7957, 0.0
      %v8594 = vmax.f32 %v7962, 0.0
      %v8595 = vmax.f32 %v7965, 0.0
      %v8596 = vmax.f32 %v7970, 0.0
      %v8597 = vmax.f32 %v7973, 0.0
      %v8598 = vmax.f32 %v7978, 0.0
      %v8599 = vmax.f32 %v7981, 0.0
      %v8600 = vmax.f32 %v7986, 0.0
      %v8601 = vmax.f32 %v7989, 0.0
      %v8602 = vmax.f32 %v7994, 0.0
      %v8603 = vmax.f32 %v7997, 0.0
      %v8604 = vmax.f32 %v8002, 0.0
      %v8605 = vmax.f32 %v8005, 0.0
      %v8606 = vmax.f32 %v8010, 0.0
      %v8607 = vmax.f32 %v8013, 0.0
      %v8608 = vmax.f32 %v8018, 0.0
      %v8609 = vmax.f32 %v8021, 0.0
      %v8610 = vmax.f32 %v8026, 0.0
      %v8611 = vmax.f32 %v8029, 0.0
      %v8612 = vmax.f32 %v8034, 0.0
      %v8613 = vmax.f32 %v8037, 0.0
      %v8614 = vmax.f32 %v8042, 0.0
      %v8615 = vmax.f32 %v8045, 0.0
      %v8616 = vmax.f32 %v8050, 0.0
      %v8617 = vmax.f32 %v8053, 0.0
      %v8618 = vmax.f32 %v8058, 0.0
      %v8619 = vmax.f32 %v8061, 0.0
      %v8620 = vmax.f32 %v8066, 0.0
      %v8621 = vmax.f32 %v8069, 0.0
      %v8622 = vmax.f32 %v8074, 0.0
      %v8623 = vmax.f32 %v8077, 0.0
      %v8624 = vmax.f32 %v8082, 0.0
      %v8625 = vmax.f32 %v8085, 0.0
      %v8626 = vmax.f32 %v8090, 0.0
      %v8627 = vmax.f32 %v8093, 0.0
      %v8628 = vmax.f32 %v8098, 0.0
      %v8629 = vmax.f32 %v8101, 0.0
      %v8630 = vmax.f32 %v8106, 0.0
      %v8631 = vmax.f32 %v8109, 0.0
      %v8632 = vmax.f32 %v8114, 0.0
      %v8633 = vmax.f32 %v8117, 0.0
      %v8634 = vmax.f32 %v8122, 0.0
      %v8635 = vmax.f32 %v8125, 0.0
      %v8636 = vmax.f32 %v8130, 0.0
      %v8637 = vmax.f32 %v8133, 0.0
      %v8638 = vmax.f32 %v8138, 0.0
      %v8639 = vmax.f32 %v8141, 0.0
      %v8640 = vmax.f32 %v8146, 0.0
      %v8641 = vmax.f32 %v8149, 0.0
      %v8642 = vmax.f32 %v8154, 0.0
      %v8643 = vmax.f32 %v8157, 0.0
      %v8644 = vmax.f32 %v8162, 0.0
      %v8645 = vmax.f32 %v8165, 0.0
      %v8646 = vmax.f32 %v8170, 0.0
      %v8647 = vmax.f32 %v8173, 0.0
      %v8648 = vmax.f32 %v8178, 0.0
      %v8649 = vmax.f32 %v8181, 0.0
      %v8650 = vmax.f32 %v8186, 0.0
      %v8651 = vmax.f32 %v8189, 0.0
      %v8652 = vmax.f32 %v8194, 0.0
      %v8653 = vmax.f32 %v8197, 0.0
      %v8654 = vmax.f32 %v8202, 0.0
      %v8655 = vmax.f32 %v8205, 0.0
      %v8656 = vmax.f32 %v8210, 0.0
      %v8657 = vmax.f32 %v8213, 0.0
      %v8658 = vmax.f32 %v8218, 0.0
      %v8659 = vmax.f32 %v8221, 0.0
      %v8660 = vmax.f32 %v8226, 0.0
      %v8661 = vmax.f32 %v8229, 0.0
      %v8662 = vmax.f32 %v8234, 0.0
      %v8663 = vmax.f32 %v8237, 0.0
      %v8664 = vmax.f32 %v8242, 0.0
      %v8665 = vmax.f32 %v8245, 0.0
      %v8666 = vmax.f32 %v8250, 0.0
      %v8667 = vmax.f32 %v8253, 0.0
      %v8668 = vmax.f32 %v8258, 0.0
      %v8669 = vmax.f32 %v8261, 0.0
      %v8670 = vmax.f32 %v8266, 0.0
      %v8671 = vmax.f32 %v8269, 0.0
      %v8672 = vmax.f32 %v8274, 0.0
      %v8673 = vmax.f32 %v8277, 0.0
      %v8674 = vmax.f32 %v8282, 0.0
      %v8675 = vmax.f32 %v8285, 0.0
      %v8676 = vmax.f32 %v8290, 0.0
      %v8677 = vmax.f32 %v8293, 0.0
      %v8678 = vmax.f32 %v8298, 0.0
      %v8679 = vmax.f32 %v8301, 0.0
      %v8680 = vmax.f32 %v8306, 0.0
      %v8681 = vmax.f32 %v8309, 0.0
      %v8682 = vmax.f32 %v8314, 0.0
      %v8683 = vmax.f32 %v8317, 0.0
      %v8684 = vmax.f32 %v8322, 0.0
      %v8685 = vmax.f32 %v8325, 0.0
      %v8686 = vmax.f32 %v8330, 0.0
      %v8687 = vmax.f32 %v8333, 0.0
      %v8688 = vmax.f32 %v8338, 0.0
      %v8689 = vmax.f32 %v8341, 0.0
      %v8690 = vmax.f32 %v8346, 0.0
      %v8691 = vmax.f32 %v8349, 0.0
      %v8692 = vmax.f32 %v8354, 0.0
      %v8693 = vmax.f32 %v8357, 0.0
      %v8694 = vmax.f32 %v8362, 0.0
      %v8695 = vmax.f32 %v8365, 0.0
      %v8696 = vmax.f32 %v8370, 0.0
      %v8697 = vmax.f32 %v8373, 0.0
      %v8698 = vmax.f32 %v8378, 0.0
      %v8699 = vmax.f32 %v8381, 0.0
      %v8700 = vmax.f32 %v8386, 0.0
      %v8701 = vmax.f32 %v8389, 0.0
      %v8702 = vmax.f32 %v8394, 0.0
      %v8703 = vmax.f32 %v8397, 0.0
      %v8704 = vmax.f32 %v8402, 0.0
      %v8705 = vmax.f32 %v8405, 0.0
      %v8706 = vmax.f32 %v8410, 0.0
      %v8707 = vmax.f32 %v8413, 0.0
      %v8708 = vmax.f32 %v8418, 0.0
      %v8709 = vmax.f32 %v8421, 0.0
      %v8710 = vmax.f32 %v8426, 0.0
      %v8711 = vmax.f32 %v8429, 0.0
      %v8712 = vmax.f32 %v8434, 0.0
      %v8713 = vmax.f32 %v8437, 0.0
      %v8714 = vmax.f32 %v8442, 0.0
      %v8715 = vmax.f32 %v8445, 0.0
      %v8716 = vmax.f32 %v8450, 0.0
      %v8717 = vmax.f32 %v8453, 0.0
      %v8718 = vmax.f32 %v8458, 0.0
      %v8719 = vmax.f32 %v8461, 0.0
      %v8720 = vmax.f32 %v8466, 0.0
      %v8721 = vmax.f32 %v8469, 0.0
      %v8722 = vmax.f32 %v8474, 0.0
      %v8723 = vmax.f32 %v8477, 0.0
      %v8724 = vmax.f32 %v8482, 0.0
      %v8725 = vmax.f32 %v8485, 0.0
      %v8726 = vmax.f32 %v8490, 0.0
      %v8727 = vmax.f32 %v8493, 0.0
      %v8728 = vmax.f32 %v8498, 0.0
      %v8729 = vmax.f32 %v8501, 0.0
      %v8730 = vmax.f32 %v8506, 0.0
      %v8731 = vmax.f32 %v8509, 0.0
      %v8732 = vmax.f32 %v8514, 0.0
      %v8733 = vmax.f32 %v8517, 0.0
      %v8734 = vmax.f32 %v8522, 0.0
      %v8735 = vmax.f32 %v8525, 0.0
      %v8736 = vmax.f32 %v8530, 0.0
      %v8737 = vmax.f32 %v8533, 0.0
      %v8738 = vmax.f32 %v8538, 0.0
      %v8739 = vmax.f32 %v8541, 0.0
      %v8740 = vadd.f32 %v6551, %v8544
      %v8741 = vadd.f32 %v6552, %v8545
      %v8742 = vadd.f32 %v6553, %v8546
      %v8743 = vadd.f32 %v6554, %v8547
      %v8744 = vadd.f32 %v6555, %v8548
      %v8745 = vadd.f32 %v6556, %v8549
      %v8746 = vadd.f32 %v6557, %v8550
      %v8747 = vadd.f32 %v6558, %v8551
      %v8748 = vadd.f32 %v6559, %v8552
      %v8749 = vadd.f32 %v6560, %v8553
      %v8750 = vadd.f32 %v6561, %v8554
      %v8751 = vadd.f32 %v6562, %v8555
      %v8752 = vadd.f32 %v6563, %v8556
      %v8753 = vadd.f32 %v6564, %v8557
      %v8754 = vadd.f32 %v6565, %v8558
      %v8755 = vadd.f32 %v6566, %v8559
      %v8756 = vadd.f32 %v6567, %v8560
      %v8757 = vadd.f32 %v6568, %v8561
      %v8758 = vadd.f32 %v6569, %v8562
      %v8759 = vadd.f32 %v6570, %v8563
      %v8760 = vadd.f32 %v6571, %v8564
      %v8761 = vadd.f32 %v6572, %v8565
      %v8762 = vadd.f32 %v6573, %v8566
      %v8763 = vadd.f32 %v6574, %v8567
      %v8764 = vadd.f32 %v6575, %v8568
      %v8765 = vadd.f32 %v6576, %v8569
      %v8766 = vadd.f32 %v6577, %v8570
      %v8767 = vadd.f32 %v6578, %v8571
      %v8768 = vadd.f32 %v6579, %v8572
      %v8769 = vadd.f32 %v6580, %v8573
      %v8770 = vadd.f32 %v6581, %v8574
      %v8771 = vadd.f32 %v6582, %v8575
      %v8772 = vadd.f32 %v6583, %v8576
      %v8773 = vadd.f32 %v6584, %v8577
      %v8774 = vadd.f32 %v6585, %v8578
      %v8775 = vadd.f32 %v6586, %v8579
      %v8776 = vadd.f32 %v6587, %v8580
      %v8777 = vadd.f32 %v6588, %v8581
      %v8778 = vadd.f32 %v6589, %v8582
      %v8779 = vadd.f32 %v6590, %v8583
      %v8780 = vadd.f32 %v6591, %v8584
      %v8781 = vadd.f32 %v6592, %v8585
      %v8782 = vadd.f32 %v6593, %v8586
      %v8783 = vadd.f32 %v6594, %v8587
      %v8784 = vadd.f32 %v6595, %v8588
      %v8785 = vadd.f32 %v6596, %v8589
      %v8786 = vadd.f32 %v6597, %v8590
      %v8787 = vadd.f32 %v6598, %v8591
      %v8788 = vadd.f32 %v6599, %v8592
      %v8789 = vadd.f32 %v6600, %v8593
      %v8790 = vadd.f32 %v6601, %v8594
      %v8791 = vadd.f32 %v6602, %v8595
      %v8792 = vadd.f32 %v6603, %v8596
      %v8793 = vadd.f32 %v6604, %v8597
      %v8794 = vadd.f32 %v6605, %v8598
      %v8795 = vadd.f32 %v6606, %v8599
      %v8796 = vadd.f32 %v6607, %v8600
      %v8797 = vadd.f32 %v6608, %v8601
      %v8798 = vadd.f32 %v6609, %v8602
      %v8799 = vadd.f32 %v6610, %v8603
      %v8800 = vadd.f32 %v6611, %v8604
      %v8801 = vadd.f32 %v6612, %v8605
      %v8802 = vadd.f32 %v6613, %v8606
      %v8803 = vadd.f32 %v6614, %v8607
      %v8804 = vadd.f32 %v6615, %v8608
      %v8805 = vadd.f32 %v6616, %v8609
      %v8806 = vadd.f32 %v6617, %v8610
      %v8807 = vadd.f32 %v6618, %v8611
      %v8808 = vadd.f32 %v6619, %v8612
      %v8809 = vadd.f32 %v6620, %v8613
      %v8810 = vadd.f32 %v6621, %v8614
      %v8811 = vadd.f32 %v6622, %v8615
      %v8812 = vadd.f32 %v6623, %v8616
      %v8813 = vadd.f32 %v6624, %v8617
      %v8814 = vadd.f32 %v6625, %v8618
      %v8815 = vadd.f32 %v6626, %v8619
      %v8816 = vadd.f32 %v6627, %v8620
      %v8817 = vadd.f32 %v6628, %v8621
      %v8818 = vadd.f32 %v6629, %v8622
      %v8819 = vadd.f32 %v6630, %v8623
      %v8820 = vadd.f32 %v6631, %v8624
      %v8821 = vadd.f32 %v6632, %v8625
      %v8822 = vadd.f32 %v6633, %v8626
      %v8823 = vadd.f32 %v6634, %v8627
      %v8824 = vadd.f32 %v6635, %v8628
      %v8825 = vadd.f32 %v6636, %v8629
      %v8826 = vadd.f32 %v6637, %v8630
      %v8827 = vadd.f32 %v6638, %v8631
      %v8828 = vadd.f32 %v6639, %v8632
      %v8829 = vadd.f32 %v6640, %v8633
      %v8830 = vadd.f32 %v6641, %v8634
      %v8831 = vadd.f32 %v6642, %v8635
      %v8832 = vadd.f32 %v6643, %v8636
      %v8833 = vadd.f32 %v6644, %v8637
      %v8834 = vadd.f32 %v6645, %v8638
      %v8835 = vadd.f32 %v6646, %v8639
      %v8836 = vadd.f32 %v6647, %v8640
      %v8837 = vadd.f32 %v6648, %v8641
      %v8838 = vadd.f32 %v6649, %v8642
      %v8839 = vadd.f32 %v6650, %v8643
      %v8840 = vadd.f32 %v6651, %v8644
      %v8841 = vadd.f32 %v6652, %v8645
      %v8842 = vadd.f32 %v6653, %v8646
      %v8843 = vadd.f32 %v6654, %v8647
      %v8844 = vadd.f32 %v6655, %v8648
      %v8845 = vadd.f32 %v6656, %v8649
      %v8846 = vadd.f32 %v6657, %v8650
      %v8847 = vadd.f32 %v6658, %v8651
      %v8848 = vadd.f32 %v6659, %v8652
      %v8849 = vadd.f32 %v6660, %v8653
      %v8850 = vadd.f32 %v6661, %v8654
      %v8851 = vadd.f32 %v6662, %v8655
      %v8852 = vadd.f32 %v6663, %v8656
      %v8853 = vadd.f32 %v6664, %v8657
      %v8854 = vadd.f32 %v6665, %v8658
      %v8855 = vadd.f32 %v6666, %v8659
      %v8856 = vadd.f32 %v6667, %v8660
      %v8857 = vadd.f32 %v6668, %v8661
      %v8858 = vadd.f32 %v6669, %v8662
      %v8859 = vadd.f32 %v6670, %v8663
      %v8860 = vadd.f32 %v6671, %v8664
      %v8861 = vadd.f32 %v6672, %v8665
      %v8862 = vadd.f32 %v6673, %v8666
      %v8863 = vadd.f32 %v6674, %v8667
      %v8864 = vadd.f32 %v6675, %v8668
      %v8865 = vadd.f32 %v6676, %v8669
      %v8866 = vadd.f32 %v6677, %v8670
      %v8867 = vadd.f32 %v6678, %v8671
      %v8868 = vadd.f32 %v6679, %v8672
      %v8869 = vadd.f32 %v6680, %v8673
      %v8870 = vadd.f32 %v6681, %v8674
      %v8871 = vadd.f32 %v6682, %v8675
      %v8872 = vadd.f32 %v6683, %v8676
      %v8873 = vadd.f32 %v6684, %v8677
      %v8874 = vadd.f32 %v6685, %v8678
      %v8875 = vadd.f32 %v6686, %v8679
      %v8876 = vadd.f32 %v6687, %v8680
      %v8877 = vadd.f32 %v6688, %v8681
      %v8878 = vadd.f32 %v6689, %v8682
      %v8879 = vadd.f32 %v6690, %v8683
      %v8880 = vadd.f32 %v6691, %v8684
      %v8881 = vadd.f32 %v6692, %v8685
      %v8882 = vadd.f32 %v6693, %v8686
      %v8883 = vadd.f32 %v6694, %v8687
      %v8884 = vadd.f32 %v6695, %v8688
      %v8885 = vadd.f32 %v6696, %v8689
      %v8886 = vadd.f32 %v6697, %v8690
      %v8887 = vadd.f32 %v6698, %v8691
      %v8888 = vadd.f32 %v6699, %v8692
      %v8889 = vadd.f32 %v6700, %v8693
      %v8890 = vadd.f32 %v6701, %v8694
      %v8891 = vadd.f32 %v6702, %v8695
      %v8892 = vadd.f32 %v6703, %v8696
      %v8893 = vadd.f32 %v6704, %v8697
      %v8894 = vadd.f32 %v6705, %v8698
      %v8895 = vadd.f32 %v6706, %v8699
      %v8896 = vadd.f32 %v6707, %v8700
      %v8897 = vadd.f32 %v6708, %v8701
      %v8898 = vadd.f32 %v6709, %v8702
      %v8899 = vadd.f32 %v6710, %v8703
      %v8900 = vadd.f32 %v6711, %v8704
      %v8901 = vadd.f32 %v6712, %v8705
      %v8902 = vadd.f32 %v6713, %v8706
      %v8903 = vadd.f32 %v6714, %v8707
      %v8904 = vadd.f32 %v6715, %v8708
      %v8905 = vadd.f32 %v6716, %v8709
      %v8906 = vadd.f32 %v6717, %v8710
      %v8907 = vadd.f32 %v6718, %v8711
      %v8908 = vadd.f32 %v6719, %v8712
      %v8909 = vadd.f32 %v6720, %v8713
      %v8910 = vadd.f32 %v6721, %v8714
      %v8911 = vadd.f32 %v6722, %v8715
      %v8912 = vadd.f32 %v6723, %v8716
      %v8913 = vadd.f32 %v6724, %v8717
      %v8914 = vadd.f32 %v6725, %v8718
      %v8915 = vadd.f32 %v6726, %v8719
      %v8916 = vadd.f32 %v6727, %v8720
      %v8917 = vadd.f32 %v6728, %v8721
      %v8918 = vadd.f32 %v6729, %v8722
      %v8919 = vadd.f32 %v6730, %v8723
      %v8920 = vadd.f32 %v6731, %v8724
      %v8921 = vadd.f32 %v6732, %v8725
      %v8922 = vadd.f32 %v6733, %v8726
      %v8923 = vadd.f32 %v6734, %v8727
      %v8924 = vadd.f32 %v6735, %v8728
      %v8925 = vadd.f32 %v6736, %v8729
      %v8926 = vadd.f32 %v6737, %v8730
      %v8927 = vadd.f32 %v6738, %v8731
      %v8928 = vadd.f32 %v6739, %v8732
      %v8929 = vadd.f32 %v6740, %v8733
      %v8930 = vadd.f32 %v6741, %v8734
      %v8931 = vadd.f32 %v6742, %v8735
      %v8932 = vadd.f32 %v6743, %v8736
      %v8933 = vadd.f32 %v6744, %v8737
      %v8934 = vadd.f32 %v6745, %v8738
      %v8935 = vadd.f32 %v6746, %v8739
      %v8936 = vmul.f32 %v8740, 0.25
      %v8937 = vmul.f32 %v8741, 0.25
      %v8938 = vmul.f32 %v8742, 0.25
      %v8939 = vmul.f32 %v8743, 0.25
      %v8940 = vmul.f32 %v8744, 0.25
      %v8941 = vmul.f32 %v8745, 0.25
      %v8942 = vmul.f32 %v8746, 0.25
      %v8943 = vmul.f32 %v8747, 0.25
      %v8944 = vmul.f32 %v8748, 0.25
      %v8945 = vmul.f32 %v8749, 0.25
      %v8946 = vmul.f32 %v8750, 0.25
      %v8947 = vmul.f32 %v8751, 0.25
      %v8948 = vmul.f32 %v8752, 0.25
      %v8949 = vmul.f32 %v8753, 0.25
      %v8950 = vmul.f32 %v8754, 0.25
      %v8951 = vmul.f32 %v8755, 0.25
      %v8952 = vmul.f32 %v8756, 0.25
      %v8953 = vmul.f32 %v8757, 0.25
      %v8954 = vmul.f32 %v8758, 0.25
      %v8955 = vmul.f32 %v8759, 0.25
      %v8956 = vmul.f32 %v8760, 0.25
      %v8957 = vmul.f32 %v8761, 0.25
      %v8958 = vmul.f32 %v8762, 0.25
      %v8959 = vmul.f32 %v8763, 0.25
      %v8960 = vmul.f32 %v8764, 0.25
      %v8961 = vmul.f32 %v8765, 0.25
      %v8962 = vmul.f32 %v8766, 0.25
      %v8963 = vmul.f32 %v8767, 0.25
      %v8964 = vmul.f32 %v8768, 0.25
      %v8965 = vmul.f32 %v8769, 0.25
      %v8966 = vmul.f32 %v8770, 0.25
      %v8967 = vmul.f32 %v8771, 0.25
      %v8968 = vmul.f32 %v8772, 0.25
      %v8969 = vmul.f32 %v8773, 0.25
      %v8970 = vmul.f32 %v8774, 0.25
      %v8971 = vmul.f32 %v8775, 0.25
      %v8972 = vmul.f32 %v8776, 0.25
      %v8973 = vmul.f32 %v8777, 0.25
      %v8974 = vmul.f32 %v8778, 0.25
      %v8975 = vmul.f32 %v8779, 0.25
      %v8976 = vmul.f32 %v8780, 0.25
      %v8977 = vmul.f32 %v8781, 0.25
      %v8978 = vmul.f32 %v8782, 0.25
      %v8979 = vmul.f32 %v8783, 0.25
      %v8980 = vmul.f32 %v8784, 0.25
      %v8981 = vmul.f32 %v8785, 0.25
      %v8982 = vmul.f32 %v8786, 0.25
      %v8983 = vmul.f32 %v8787, 0.25
      %v8984 = vmul.f32 %v8788, 0.25
      %v8985 = vmul.f32 %v8789, 0.25
      %v8986 = vmul.f32 %v8790, 0.25
      %v8987 = vmul.f32 %v8791, 0.25
      %v8988 = vmul.f32 %v8792, 0.25
      %v8989 = vmul.f32 %v8793, 0.25
      %v8990 = vmul.f32 %v8794, 0.25
      %v8991 = vmul.f32 %v8795, 0.25
      %v8992 = vmul.f32 %v8796, 0.25
      %v8993 = vmul.f32 %v8797, 0.25
      %v8994 = vmul.f32 %v8798, 0.25
      %v8995 = vmul.f32 %v8799, 0.25
      %v8996 = vmul.f32 %v8800, 0.25
      %v8997 = vmul.f32 %v8801, 0.25
      %v8998 = vmul.f32 %v8802, 0.25
      %v8999 = vmul.f32 %v8803, 0.25
      %v9000 = vmul.f32 %v8804, 0.25
      %v9001 = vmul.f32 %v8805, 0.25
      %v9002 = vmul.f32 %v8806, 0.25
      %v9003 = vmul.f32 %v8807, 0.25
      %v9004 = vmul.f32 %v8808, 0.25
      %v9005 = vmul.f32 %v8809, 0.25
      %v9006 = vmul.f32 %v8810, 0.25
      %v9007 = vmul.f32 %v8811, 0.25
      %v9008 = vmul.f32 %v8812, 0.25
      %v9009 = vmul.f32 %v8813, 0.25
      %v9010 = vmul.f32 %v8814, 0.25
      %v9011 = vmul.f32 %v8815, 0.25
      %v9012 = vmul.f32 %v8816, 0.25
      %v9013 = vmul.f32 %v8817, 0.25
      %v9014 = vmul.f32 %v8818, 0.25
      %v9015 = vmul.f32 %v8819, 0.25
      %v9016 = vmul.f32 %v8820, 0.25
      %v9017 = vmul.f32 %v8821, 0.25
      %v9018 = vmul.f32 %v8822, 0.25
      %v9019 = vmul.f32 %v8823, 0.25
      %v9020 = vmul.f32 %v8824, 0.25
      %v9021 = vmul.f32 %v8825, 0.25
      %v9022 = vmul.f32 %v8826, 0.25
      %v9023 = vmul.f32 %v8827, 0.25
      %v9024 = vmul.f32 %v8828, 0.25
      %v9025 = vmul.f32 %v8829, 0.25
      %v9026 = vmul.f32 %v8830, 0.25
      %v9027 = vmul.f32 %v8831, 0.25
      %v9028 = vmul.f32 %v8832, 0.25
      %v9029 = vmul.f32 %v8833, 0.25
      %v9030 = vmul.f32 %v8834, 0.25
      %v9031 = vmul.f32 %v8835, 0.25
      %v9032 = vmul.f32 %v8836, 0.25
      %v9033 = vmul.f32 %v8837, 0.25
      %v9034 = vmul.f32 %v8838, 0.25
      %v9035 = vmul.f32 %v8839, 0.25
      %v9036 = vmul.f32 %v8840, 0.25
      %v9037 = vmul.f32 %v8841, 0.25
      %v9038 = vmul.f32 %v8842, 0.25
      %v9039 = vmul.f32 %v8843, 0.25
      %v9040 = vmul.f32 %v8844, 0.25
      %v9041 = vmul.f32 %v8845, 0.25
      %v9042 = vmul.f32 %v8846, 0.25
      %v9043 = vmul.f32 %v8847, 0.25
      %v9044 = vmul.f32 %v8848, 0.25
      %v9045 = vmul.f32 %v8849, 0.25
      %v9046 = vmul.f32 %v8850, 0.25
      %v9047 = vmul.f32 %v8851, 0.25
      %v9048 = vmul.f32 %v8852, 0.25
      %v9049 = vmul.f32 %v8853, 0.25
      %v9050 = vmul.f32 %v8854, 0.25
      %v9051 = vmul.f32 %v8855, 0.25
      %v9052 = vmul.f32 %v8856, 0.25
      %v9053 = vmul.f32 %v8857, 0.25
      %v9054 = vmul.f32 %v8858, 0.25
      %v9055 = vmul.f32 %v8859, 0.25
      %v9056 = vmul.f32 %v8860, 0.25
      %v9057 = vmul.f32 %v8861, 0.25
      %v9058 = vmul.f32 %v8862, 0.25
      %v9059 = vmul.f32 %v8863, 0.25
      %v9060 = vmul.f32 %v8864, 0.25
      %v9061 = vmul.f32 %v8865, 0.25
      %v9062 = vmul.f32 %v8866, 0.25
      %v9063 = vmul.f32 %v8867, 0.25
      %v9064 = vmul.f32 %v8868, 0.25
      %v9065 = vmul.f32 %v8869, 0.25
      %v9066 = vmul.f32 %v8870, 0.25
      %v9067 = vmul.f32 %v8871, 0.25
      %v9068 = vmul.f32 %v8872, 0.25
      %v9069 = vmul.f32 %v8873, 0.25
      %v9070 = vmul.f32 %v8874, 0.25
      %v9071 = vmul.f32 %v8875, 0.25
      %v9072 = vmul.f32 %v8876, 0.25
      %v9073 = vmul.f32 %v8877, 0.25
      %v9074 = vmul.f32 %v8878, 0.25
      %v9075 = vmul.f32 %v8879, 0.25
      %v9076 = vmul.f32 %v8880, 0.25
      %v9077 = vmul.f32 %v8881, 0.25
      %v9078 = vmul.f32 %v8882, 0.25
      %v9079 = vmul.f32 %v8883, 0.25
      %v9080 = vmul.f32 %v8884, 0.25
      %v9081 = vmul.f32 %v8885, 0.25
      %v9082 = vmul.f32 %v8886, 0.25
      %v9083 = vmul.f32 %v8887, 0.25
      %v9084 = vmul.f32 %v8888, 0.25
      %v9085 = vmul.f32 %v8889, 0.25
      %v9086 = vmul.f32 %v8890, 0.25
      %v9087 = vmul.f32 %v8891, 0.25
      %v9088 = vmul.f32 %v8892, 0.25
      %v9089 = vmul.f32 %v8893, 0.25
      %v9090 = vmul.f32 %v8894, 0.25
      %v9091 = vmul.f32 %v8895, 0.25
      %v9092 = vmul.f32 %v8896, 0.25
      %v9093 = vmul.f32 %v8897, 0.25
      %v9094 = vmul.f32 %v8898, 0.25
      %v9095 = vmul.f32 %v8899, 0.25
      %v9096 = vmul.f32 %v8900, 0.25
      %v9097 = vmul.f32 %v8901, 0.25
      %v9098 = vmul.f32 %v8902, 0.25
      %v9099 = vmul.f32 %v8903, 0.25
      %v9100 = vmul.f32 %v8904, 0.25
      %v9101 = vmul.f32 %v8905, 0.25
      %v9102 = vmul.f32 %v8906, 0.25
      %v9103 = vmul.f32 %v8907, 0.25
      %v9104 = vmul.f32 %v8908, 0.25
      %v9105 = vmul.f32 %v8909, 0.25
      %v9106 = vmul.f32 %v8910, 0.25
      %v9107 = vmul.f32 %v8911, 0.25
      %v9108 = vmul.f32 %v8912, 0.25
      %v9109 = vmul.f32 %v8913, 0.25
      %v9110 = vmul.f32 %v8914, 0.25
      %v9111 = vmul.f32 %v8915, 0.25
      %v9112 = vmul.f32 %v8916, 0.25
      %v9113 = vmul.f32 %v8917, 0.25
      %v9114 = vmul.f32 %v8918, 0.25
      %v9115 = vmul.f32 %v8919, 0.25
      %v9116 = vmul.f32 %v8920, 0.25
      %v9117 = vmul.f32 %v8921, 0.25
      %v9118 = vmul.f32 %v8922, 0.25
      %v9119 = vmul.f32 %v8923, 0.25
      %v9120 = vmul.f32 %v8924, 0.25
      %v9121 = vmul.f32 %v8925, 0.25
      %v9122 = vmul.f32 %v8926, 0.25
      %v9123 = vmul.f32 %v8927, 0.25
      %v9124 = vmul.f32 %v8928, 0.25
      %v9125 = vmul.f32 %v8929, 0.25
      %v9126 = vmul.f32 %v8930, 0.25
      %v9127 = vmul.f32 %v8931, 0.25
      %v9128 = vmul.f32 %v8932, 0.25
      %v9129 = vmul.f32 %v8933, 0.25
      %v9130 = vmul.f32 %v8934, 0.25
      %v9131 = vmul.f32 %v8935, 0.25
      %v9132 = vpack.c.bf16 %v8937, %v8936
      %v9133 = vpack.c.bf16 %v8939, %v8938
      %v9134 = vpack.c.bf16 %v8941, %v8940
      %v9135 = vpack.c.bf16 %v8943, %v8942
      %v9136 = vpack.c.bf16 %v8945, %v8944
      %v9137 = vpack.c.bf16 %v8947, %v8946
      %v9138 = vpack.c.bf16 %v8949, %v8948
      %v9139 = vpack.c.bf16 %v8951, %v8950
      %v9140 = vpack.c.bf16 %v8953, %v8952
      %v9141 = vpack.c.bf16 %v8955, %v8954
      %v9142 = vpack.c.bf16 %v8957, %v8956
      %v9143 = vpack.c.bf16 %v8959, %v8958
      %v9144 = vpack.c.bf16 %v8961, %v8960
      %v9145 = vpack.c.bf16 %v8963, %v8962
      %v9146 = vpack.c.bf16 %v8965, %v8964
      %v9147 = vpack.c.bf16 %v8967, %v8966
      %v9148 = vpack.c.bf16 %v8969, %v8968
      %v9149 = vpack.c.bf16 %v8971, %v8970
      %v9150 = vpack.c.bf16 %v8973, %v8972
      %v9151 = vpack.c.bf16 %v8975, %v8974
      %v9152 = vpack.c.bf16 %v8977, %v8976
      %v9153 = vpack.c.bf16 %v8979, %v8978
      %v9154 = vpack.c.bf16 %v8981, %v8980
      %v9155 = vpack.c.bf16 %v8983, %v8982
      %v9156 = vpack.c.bf16 %v8985, %v8984
      %v9157 = vpack.c.bf16 %v8987, %v8986
      %v9158 = vpack.c.bf16 %v8989, %v8988
      %v9159 = vpack.c.bf16 %v8991, %v8990
      %v9160 = vpack.c.bf16 %v8993, %v8992
      %v9161 = vpack.c.bf16 %v8995, %v8994
      %v9162 = vpack.c.bf16 %v8997, %v8996
      %v9163 = vpack.c.bf16 %v8999, %v8998
      %v9164 = vpack.c.bf16 %v9001, %v9000
      %v9165 = vpack.c.bf16 %v9003, %v9002
      %v9166 = vpack.c.bf16 %v9005, %v9004
      %v9167 = vpack.c.bf16 %v9007, %v9006
      %v9168 = vpack.c.bf16 %v9009, %v9008
      %v9169 = vpack.c.bf16 %v9011, %v9010
      %v9170 = vpack.c.bf16 %v9013, %v9012
      %v9171 = vpack.c.bf16 %v9015, %v9014
      %v9172 = vpack.c.bf16 %v9017, %v9016
      %v9173 = vpack.c.bf16 %v9019, %v9018
      %v9174 = vpack.c.bf16 %v9021, %v9020
      %v9175 = vpack.c.bf16 %v9023, %v9022
      %v9176 = vpack.c.bf16 %v9025, %v9024
      %v9177 = vpack.c.bf16 %v9027, %v9026
      %v9178 = vpack.c.bf16 %v9029, %v9028
      %v9179 = vpack.c.bf16 %v9031, %v9030
      %v9180 = vpack.c.bf16 %v9033, %v9032
      %v9181 = vpack.c.bf16 %v9035, %v9034
      %v9182 = vpack.c.bf16 %v9037, %v9036
      %v9183 = vpack.c.bf16 %v9039, %v9038
      %v9184 = vpack.c.bf16 %v9041, %v9040
      %v9185 = vpack.c.bf16 %v9043, %v9042
      %v9186 = vpack.c.bf16 %v9045, %v9044
      %v9187 = vpack.c.bf16 %v9047, %v9046
      %v9188 = vpack.c.bf16 %v9049, %v9048
      %v9189 = vpack.c.bf16 %v9051, %v9050
      %v9190 = vpack.c.bf16 %v9053, %v9052
      %v9191 = vpack.c.bf16 %v9055, %v9054
      %v9192 = vpack.c.bf16 %v9057, %v9056
      %v9193 = vpack.c.bf16 %v9059, %v9058
      %v9194 = vpack.c.bf16 %v9061, %v9060
      %v9195 = vpack.c.bf16 %v9063, %v9062
      %v9196 = vpack.c.bf16 %v9065, %v9064
      %v9197 = vpack.c.bf16 %v9067, %v9066
      %v9198 = vpack.c.bf16 %v9069, %v9068
      %v9199 = vpack.c.bf16 %v9071, %v9070
      %v9200 = vpack.c.bf16 %v9073, %v9072
      %v9201 = vpack.c.bf16 %v9075, %v9074
      %v9202 = vpack.c.bf16 %v9077, %v9076
      %v9203 = vpack.c.bf16 %v9079, %v9078
      %v9204 = vpack.c.bf16 %v9081, %v9080
      %v9205 = vpack.c.bf16 %v9083, %v9082
      %v9206 = vpack.c.bf16 %v9085, %v9084
      %v9207 = vpack.c.bf16 %v9087, %v9086
      %v9208 = vpack.c.bf16 %v9089, %v9088
      %v9209 = vpack.c.bf16 %v9091, %v9090
      %v9210 = vpack.c.bf16 %v9093, %v9092
      %v9211 = vpack.c.bf16 %v9095, %v9094
      %v9212 = vpack.c.bf16 %v9097, %v9096
      %v9213 = vpack.c.bf16 %v9099, %v9098
      %v9214 = vpack.c.bf16 %v9101, %v9100
      %v9215 = vpack.c.bf16 %v9103, %v9102
      %v9216 = vpack.c.bf16 %v9105, %v9104
      %v9217 = vpack.c.bf16 %v9107, %v9106
      %v9218 = vpack.c.bf16 %v9109, %v9108
      %v9219 = vpack.c.bf16 %v9111, %v9110
      %v9220 = vpack.c.bf16 %v9113, %v9112
      %v9221 = vpack.c.bf16 %v9115, %v9114
      %v9222 = vpack.c.bf16 %v9117, %v9116
      %v9223 = vpack.c.bf16 %v9119, %v9118
      %v9224 = vpack.c.bf16 %v9121, %v9120
      %v9225 = vpack.c.bf16 %v9123, %v9122
      %v9226 = vpack.c.bf16 %v9125, %v9124
      %v9227 = vpack.c.bf16 %v9127, %v9126
      %v9228 = vpack.c.bf16 %v9129, %v9128
      %v9229 = vpack.c.bf16 %v9131, %v9130
      %v9328 = vunpack.c.l.b16 %v9132
      %v9329 = vunpack.c.h.b16 %v9132
      %v9330 = vunpack.c.l.b16 %v9133
      %v9331 = vunpack.c.h.b16 %v9133
      %v9332 = vunpack.c.l.b16 %v9134
      %v9333 = vunpack.c.h.b16 %v9134
      %v9334 = vunpack.c.l.b16 %v9135
      %v9335 = vunpack.c.h.b16 %v9135
      %v9336 = vunpack.c.l.b16 %v9136
      %v9337 = vunpack.c.h.b16 %v9136
      %v9338 = vunpack.c.l.b16 %v9137
      %v9339 = vunpack.c.h.b16 %v9137
      %v9340 = vunpack.c.l.b16 %v9138
      %v9341 = vunpack.c.h.b16 %v9138
      %v9342 = vunpack.c.l.b16 %v9139
      %v9343 = vunpack.c.h.b16 %v9139
      %v9344 = vunpack.c.l.b16 %v9140
      %v9345 = vunpack.c.h.b16 %v9140
      %v9346 = vunpack.c.l.b16 %v9141
      %v9347 = vunpack.c.h.b16 %v9141
      %v9348 = vunpack.c.l.b16 %v9142
      %v9349 = vunpack.c.h.b16 %v9142
      %v9350 = vunpack.c.l.b16 %v9143
      %v9351 = vunpack.c.h.b16 %v9143
      %v9352 = vunpack.c.l.b16 %v9144
      %v9353 = vunpack.c.h.b16 %v9144
      %v9354 = vunpack.c.l.b16 %v9145
      %v9355 = vunpack.c.h.b16 %v9145
      %v9356 = vunpack.c.l.b16 %v9146
      %v9357 = vunpack.c.h.b16 %v9146
      %v9358 = vunpack.c.l.b16 %v9147
      %v9359 = vunpack.c.h.b16 %v9147
      %v9360 = vunpack.c.l.b16 %v9148
      %v9361 = vunpack.c.h.b16 %v9148
      %v9362 = vunpack.c.l.b16 %v9149
      %v9363 = vunpack.c.h.b16 %v9149
      %v9364 = vunpack.c.l.b16 %v9150
      %v9365 = vunpack.c.h.b16 %v9150
      %v9366 = vunpack.c.l.b16 %v9151
      %v9367 = vunpack.c.h.b16 %v9151
      %v9368 = vunpack.c.l.b16 %v9152
      %v9369 = vunpack.c.h.b16 %v9152
      %v9370 = vunpack.c.l.b16 %v9153
      %v9371 = vunpack.c.h.b16 %v9153
      %v9372 = vunpack.c.l.b16 %v9154
      %v9373 = vunpack.c.h.b16 %v9154
      %v9374 = vunpack.c.l.b16 %v9155
      %v9375 = vunpack.c.h.b16 %v9155
      %v9376 = vunpack.c.l.b16 %v9156
      %v9377 = vunpack.c.h.b16 %v9156
      %v9378 = vunpack.c.l.b16 %v9157
      %v9379 = vunpack.c.h.b16 %v9157
      %v9380 = vunpack.c.l.b16 %v9158
      %v9381 = vunpack.c.h.b16 %v9158
      %v9382 = vunpack.c.l.b16 %v9159
      %v9383 = vunpack.c.h.b16 %v9159
      %v9384 = vunpack.c.l.b16 %v9160
      %v9385 = vunpack.c.h.b16 %v9160
      %v9386 = vunpack.c.l.b16 %v9161
      %v9387 = vunpack.c.h.b16 %v9161
      %v9388 = vunpack.c.l.b16 %v9162
      %v9389 = vunpack.c.h.b16 %v9162
      %v9390 = vunpack.c.l.b16 %v9163
      %v9391 = vunpack.c.h.b16 %v9163
      %v9392 = vunpack.c.l.b16 %v9164
      %v9393 = vunpack.c.h.b16 %v9164
      %v9394 = vunpack.c.l.b16 %v9165
      %v9395 = vunpack.c.h.b16 %v9165
      %v9396 = vunpack.c.l.b16 %v9166
      %v9397 = vunpack.c.h.b16 %v9166
      %v9398 = vunpack.c.l.b16 %v9167
      %v9399 = vunpack.c.h.b16 %v9167
      %v9400 = vunpack.c.l.b16 %v9168
      %v9401 = vunpack.c.h.b16 %v9168
      %v9402 = vunpack.c.l.b16 %v9169
      %v9403 = vunpack.c.h.b16 %v9169
      %v9404 = vunpack.c.l.b16 %v9170
      %v9405 = vunpack.c.h.b16 %v9170
      %v9406 = vunpack.c.l.b16 %v9171
      %v9407 = vunpack.c.h.b16 %v9171
      %v9408 = vunpack.c.l.b16 %v9172
      %v9409 = vunpack.c.h.b16 %v9172
      %v9410 = vunpack.c.l.b16 %v9173
      %v9411 = vunpack.c.h.b16 %v9173
      %v9412 = vunpack.c.l.b16 %v9174
      %v9413 = vunpack.c.h.b16 %v9174
      %v9414 = vunpack.c.l.b16 %v9175
      %v9415 = vunpack.c.h.b16 %v9175
      %v9416 = vunpack.c.l.b16 %v9176
      %v9417 = vunpack.c.h.b16 %v9176
      %v9418 = vunpack.c.l.b16 %v9177
      %v9419 = vunpack.c.h.b16 %v9177
      %v9420 = vunpack.c.l.b16 %v9178
      %v9421 = vunpack.c.h.b16 %v9178
      %v9422 = vunpack.c.l.b16 %v9179
      %v9423 = vunpack.c.h.b16 %v9179
      %v9424 = vunpack.c.l.b16 %v9180
      %v9425 = vunpack.c.h.b16 %v9180
      %v9426 = vunpack.c.l.b16 %v9181
      %v9427 = vunpack.c.h.b16 %v9181
      %v9428 = vunpack.c.l.b16 %v9182
      %v9429 = vunpack.c.h.b16 %v9182
      %v9430 = vunpack.c.l.b16 %v9183
      %v9431 = vunpack.c.h.b16 %v9183
      %v9432 = vunpack.c.l.b16 %v9184
      %v9433 = vunpack.c.h.b16 %v9184
      %v9434 = vunpack.c.l.b16 %v9185
      %v9435 = vunpack.c.h.b16 %v9185
      %v9436 = vunpack.c.l.b16 %v9186
      %v9437 = vunpack.c.h.b16 %v9186
      %v9438 = vunpack.c.l.b16 %v9187
      %v9439 = vunpack.c.h.b16 %v9187
      %v9440 = vunpack.c.l.b16 %v9188
      %v9441 = vunpack.c.h.b16 %v9188
      %v9442 = vunpack.c.l.b16 %v9189
      %v9443 = vunpack.c.h.b16 %v9189
      %v9444 = vunpack.c.l.b16 %v9190
      %v9445 = vunpack.c.h.b16 %v9190
      %v9446 = vunpack.c.l.b16 %v9191
      %v9447 = vunpack.c.h.b16 %v9191
      %v9448 = vunpack.c.l.b16 %v9192
      %v9449 = vunpack.c.h.b16 %v9192
      %v9450 = vunpack.c.l.b16 %v9193
      %v9451 = vunpack.c.h.b16 %v9193
      %v9452 = vunpack.c.l.b16 %v9194
      %v9453 = vunpack.c.h.b16 %v9194
      %v9454 = vunpack.c.l.b16 %v9195
      %v9455 = vunpack.c.h.b16 %v9195
      %v9456 = vunpack.c.l.b16 %v9196
      %v9457 = vunpack.c.h.b16 %v9196
      %v9458 = vunpack.c.l.b16 %v9197
      %v9459 = vunpack.c.h.b16 %v9197
      %v9460 = vunpack.c.l.b16 %v9198
      %v9461 = vunpack.c.h.b16 %v9198
      %v9462 = vunpack.c.l.b16 %v9199
      %v9463 = vunpack.c.h.b16 %v9199
      %v9464 = vunpack.c.l.b16 %v9200
      %v9465 = vunpack.c.h.b16 %v9200
      %v9466 = vunpack.c.l.b16 %v9201
      %v9467 = vunpack.c.h.b16 %v9201
      %v9468 = vunpack.c.l.b16 %v9202
      %v9469 = vunpack.c.h.b16 %v9202
      %v9470 = vunpack.c.l.b16 %v9203
      %v9471 = vunpack.c.h.b16 %v9203
      %v9472 = vunpack.c.l.b16 %v9204
      %v9473 = vunpack.c.h.b16 %v9204
      %v9474 = vunpack.c.l.b16 %v9205
      %v9475 = vunpack.c.h.b16 %v9205
      %v9476 = vunpack.c.l.b16 %v9206
      %v9477 = vunpack.c.h.b16 %v9206
      %v9478 = vunpack.c.l.b16 %v9207
      %v9479 = vunpack.c.h.b16 %v9207
      %v9480 = vunpack.c.l.b16 %v9208
      %v9481 = vunpack.c.h.b16 %v9208
      %v9482 = vunpack.c.l.b16 %v9209
      %v9483 = vunpack.c.h.b16 %v9209
      %v9484 = vunpack.c.l.b16 %v9210
      %v9485 = vunpack.c.h.b16 %v9210
      %v9486 = vunpack.c.l.b16 %v9211
      %v9487 = vunpack.c.h.b16 %v9211
      %v9488 = vunpack.c.l.b16 %v9212
      %v9489 = vunpack.c.h.b16 %v9212
      %v9490 = vunpack.c.l.b16 %v9213
      %v9491 = vunpack.c.h.b16 %v9213
      %v9492 = vunpack.c.l.b16 %v9214
      %v9493 = vunpack.c.h.b16 %v9214
      %v9494 = vunpack.c.l.b16 %v9215
      %v9495 = vunpack.c.h.b16 %v9215
      %v9496 = vunpack.c.l.b16 %v9216
      %v9497 = vunpack.c.h.b16 %v9216
      %v9498 = vunpack.c.l.b16 %v9217
      %v9499 = vunpack.c.h.b16 %v9217
      %v9500 = vunpack.c.l.b16 %v9218
      %v9501 = vunpack.c.h.b16 %v9218
      %v9502 = vunpack.c.l.b16 %v9219
      %v9503 = vunpack.c.h.b16 %v9219
      %v9504 = vunpack.c.l.b16 %v9220
      %v9505 = vunpack.c.h.b16 %v9220
      %v9506 = vunpack.c.l.b16 %v9221
      %v9507 = vunpack.c.h.b16 %v9221
      %v9508 = vunpack.c.l.b16 %v9222
      %v9509 = vunpack.c.h.b16 %v9222
      %v9510 = vunpack.c.l.b16 %v9223
      %v9511 = vunpack.c.h.b16 %v9223
      %v9512 = vunpack.c.l.b16 %v9224
      %v9513 = vunpack.c.h.b16 %v9224
      %v9514 = vunpack.c.l.b16 %v9225
      %v9515 = vunpack.c.h.b16 %v9225
      %v9516 = vunpack.c.l.b16 %v9226
      %v9517 = vunpack.c.h.b16 %v9226
      %v9518 = vunpack.c.l.b16 %v9227
      %v9519 = vunpack.c.h.b16 %v9227
      %v9520 = vunpack.c.l.b16 %v9228
      %v9521 = vunpack.c.h.b16 %v9228
      %v9522 = vunpack.c.l.b16 %v9229
      %v9523 = vunpack.c.h.b16 %v9229
      %v9524 = vpack.c.b16 %v9328, %v9328
      %v9525 = vpack.c.b16 %v9329, %v9329
      %v9526 = vpack.c.b16 %v9330, %v9330
      %v9527 = vpack.c.b16 %v9331, %v9331
      %v9528 = vpack.c.b16 %v9332, %v9332
      %v9529 = vpack.c.b16 %v9333, %v9333
      %v9530 = vpack.c.b16 %v9334, %v9334
      %v9531 = vpack.c.b16 %v9335, %v9335
      %v9532 = vpack.c.b16 %v9336, %v9336
      %v9533 = vpack.c.b16 %v9337, %v9337
      %v9534 = vpack.c.b16 %v9338, %v9338
      %v9535 = vpack.c.b16 %v9339, %v9339
      %v9536 = vpack.c.b16 %v9340, %v9340
      %v9537 = vpack.c.b16 %v9341, %v9341
      %v9538 = vpack.c.b16 %v9342, %v9342
      %v9539 = vpack.c.b16 %v9343, %v9343
      %v9540 = vpack.c.b16 %v9344, %v9344
      %v9541 = vpack.c.b16 %v9345, %v9345
      %v9542 = vpack.c.b16 %v9346, %v9346
      %v9543 = vpack.c.b16 %v9347, %v9347
      %v9544 = vpack.c.b16 %v9348, %v9348
      %v9545 = vpack.c.b16 %v9349, %v9349
      %v9546 = vpack.c.b16 %v9350, %v9350
      %v9547 = vpack.c.b16 %v9351, %v9351
      %v9548 = vpack.c.b16 %v9352, %v9352
      %v9549 = vpack.c.b16 %v9353, %v9353
      %v9550 = vpack.c.b16 %v9354, %v9354
      %v9551 = vpack.c.b16 %v9355, %v9355
      %v9552 = vpack.c.b16 %v9356, %v9356
      %v9553 = vpack.c.b16 %v9357, %v9357
      %v9554 = vpack.c.b16 %v9358, %v9358
      %v9555 = vpack.c.b16 %v9359, %v9359
      %v9556 = vpack.c.b16 %v9360, %v9360
      %v9557 = vpack.c.b16 %v9361, %v9361
      %v9558 = vpack.c.b16 %v9362, %v9362
      %v9559 = vpack.c.b16 %v9363, %v9363
      %v9560 = vpack.c.b16 %v9364, %v9364
      %v9561 = vpack.c.b16 %v9365, %v9365
      %v9562 = vpack.c.b16 %v9366, %v9366
      %v9563 = vpack.c.b16 %v9367, %v9367
      %v9564 = vpack.c.b16 %v9368, %v9368
      %v9565 = vpack.c.b16 %v9369, %v9369
      %v9566 = vpack.c.b16 %v9370, %v9370
      %v9567 = vpack.c.b16 %v9371, %v9371
      %v9568 = vpack.c.b16 %v9372, %v9372
      %v9569 = vpack.c.b16 %v9373, %v9373
      %v9570 = vpack.c.b16 %v9374, %v9374
      %v9571 = vpack.c.b16 %v9375, %v9375
      %v9572 = vpack.c.b16 %v9376, %v9376
      %v9573 = vpack.c.b16 %v9377, %v9377
      %v9574 = vpack.c.b16 %v9378, %v9378
      %v9575 = vpack.c.b16 %v9379, %v9379
      %v9576 = vpack.c.b16 %v9380, %v9380
      %v9577 = vpack.c.b16 %v9381, %v9381
      %v9578 = vpack.c.b16 %v9382, %v9382
      %v9579 = vpack.c.b16 %v9383, %v9383
      %v9580 = vpack.c.b16 %v9384, %v9384
      %v9581 = vpack.c.b16 %v9385, %v9385
      %v9582 = vpack.c.b16 %v9386, %v9386
      %v9583 = vpack.c.b16 %v9387, %v9387
      %v9584 = vpack.c.b16 %v9388, %v9388
      %v9585 = vpack.c.b16 %v9389, %v9389
      %v9586 = vpack.c.b16 %v9390, %v9390
      %v9587 = vpack.c.b16 %v9391, %v9391
      %v9588 = vpack.c.b16 %v9392, %v9392
      %v9589 = vpack.c.b16 %v9393, %v9393
      %v9590 = vpack.c.b16 %v9394, %v9394
      %v9591 = vpack.c.b16 %v9395, %v9395
      %v9592 = vpack.c.b16 %v9396, %v9396
      %v9593 = vpack.c.b16 %v9397, %v9397
      %v9594 = vpack.c.b16 %v9398, %v9398
      %v9595 = vpack.c.b16 %v9399, %v9399
      %v9596 = vpack.c.b16 %v9400, %v9400
      %v9597 = vpack.c.b16 %v9401, %v9401
      %v9598 = vpack.c.b16 %v9402, %v9402
      %v9599 = vpack.c.b16 %v9403, %v9403
      %v9600 = vpack.c.b16 %v9404, %v9404
      %v9601 = vpack.c.b16 %v9405, %v9405
      %v9602 = vpack.c.b16 %v9406, %v9406
      %v9603 = vpack.c.b16 %v9407, %v9407
      %v9604 = vpack.c.b16 %v9408, %v9408
      %v9605 = vpack.c.b16 %v9409, %v9409
      %v9606 = vpack.c.b16 %v9410, %v9410
      %v9607 = vpack.c.b16 %v9411, %v9411
      %v9608 = vpack.c.b16 %v9412, %v9412
      %v9609 = vpack.c.b16 %v9413, %v9413
      %v9610 = vpack.c.b16 %v9414, %v9414
      %v9611 = vpack.c.b16 %v9415, %v9415
      %v9612 = vpack.c.b16 %v9416, %v9416
      %v9613 = vpack.c.b16 %v9417, %v9417
      %v9614 = vpack.c.b16 %v9418, %v9418
      %v9615 = vpack.c.b16 %v9419, %v9419
      %v9616 = vpack.c.b16 %v9420, %v9420
      %v9617 = vpack.c.b16 %v9421, %v9421
      %v9618 = vpack.c.b16 %v9422, %v9422
      %v9619 = vpack.c.b16 %v9423, %v9423
      %v9620 = vpack.c.b16 %v9424, %v9424
      %v9621 = vpack.c.b16 %v9425, %v9425
      %v9622 = vpack.c.b16 %v9426, %v9426
      %v9623 = vpack.c.b16 %v9427, %v9427
      %v9624 = vpack.c.b16 %v9428, %v9428
      %v9625 = vpack.c.b16 %v9429, %v9429
      %v9626 = vpack.c.b16 %v9430, %v9430
      %v9627 = vpack.c.b16 %v9431, %v9431
      %v9628 = vpack.c.b16 %v9432, %v9432
      %v9629 = vpack.c.b16 %v9433, %v9433
      %v9630 = vpack.c.b16 %v9434, %v9434
      %v9631 = vpack.c.b16 %v9435, %v9435
      %v9632 = vpack.c.b16 %v9436, %v9436
      %v9633 = vpack.c.b16 %v9437, %v9437
      %v9634 = vpack.c.b16 %v9438, %v9438
      %v9635 = vpack.c.b16 %v9439, %v9439
      %v9636 = vpack.c.b16 %v9440, %v9440
      %v9637 = vpack.c.b16 %v9441, %v9441
      %v9638 = vpack.c.b16 %v9442, %v9442
      %v9639 = vpack.c.b16 %v9443, %v9443
      %v9640 = vpack.c.b16 %v9444, %v9444
      %v9641 = vpack.c.b16 %v9445, %v9445
      %v9642 = vpack.c.b16 %v9446, %v9446
      %v9643 = vpack.c.b16 %v9447, %v9447
      %v9644 = vpack.c.b16 %v9448, %v9448
      %v9645 = vpack.c.b16 %v9449, %v9449
      %v9646 = vpack.c.b16 %v9450, %v9450
      %v9647 = vpack.c.b16 %v9451, %v9451
      %v9648 = vpack.c.b16 %v9452, %v9452
      %v9649 = vpack.c.b16 %v9453, %v9453
      %v9650 = vpack.c.b16 %v9454, %v9454
      %v9651 = vpack.c.b16 %v9455, %v9455
      %v9652 = vpack.c.b16 %v9456, %v9456
      %v9653 = vpack.c.b16 %v9457, %v9457
      %v9654 = vpack.c.b16 %v9458, %v9458
      %v9655 = vpack.c.b16 %v9459, %v9459
      %v9656 = vpack.c.b16 %v9460, %v9460
      %v9657 = vpack.c.b16 %v9461, %v9461
      %v9658 = vpack.c.b16 %v9462, %v9462
      %v9659 = vpack.c.b16 %v9463, %v9463
      %v9660 = vpack.c.b16 %v9464, %v9464
      %v9661 = vpack.c.b16 %v9465, %v9465
      %v9662 = vpack.c.b16 %v9466, %v9466
      %v9663 = vpack.c.b16 %v9467, %v9467
      %v9664 = vpack.c.b16 %v9468, %v9468
      %v9665 = vpack.c.b16 %v9469, %v9469
      %v9666 = vpack.c.b16 %v9470, %v9470
      %v9667 = vpack.c.b16 %v9471, %v9471
      %v9668 = vpack.c.b16 %v9472, %v9472
      %v9669 = vpack.c.b16 %v9473, %v9473
      %v9670 = vpack.c.b16 %v9474, %v9474
      %v9671 = vpack.c.b16 %v9475, %v9475
      %v9672 = vpack.c.b16 %v9476, %v9476
      %v9673 = vpack.c.b16 %v9477, %v9477
      %v9674 = vpack.c.b16 %v9478, %v9478
      %v9675 = vpack.c.b16 %v9479, %v9479
      %v9676 = vpack.c.b16 %v9480, %v9480
      %v9677 = vpack.c.b16 %v9481, %v9481
      %v9678 = vpack.c.b16 %v9482, %v9482
      %v9679 = vpack.c.b16 %v9483, %v9483
      %v9680 = vpack.c.b16 %v9484, %v9484
      %v9681 = vpack.c.b16 %v9485, %v9485
      %v9682 = vpack.c.b16 %v9486, %v9486
      %v9683 = vpack.c.b16 %v9487, %v9487
      %v9684 = vpack.c.b16 %v9488, %v9488
      %v9685 = vpack.c.b16 %v9489, %v9489
      %v9686 = vpack.c.b16 %v9490, %v9490
      %v9687 = vpack.c.b16 %v9491, %v9491
      %v9688 = vpack.c.b16 %v9492, %v9492
      %v9689 = vpack.c.b16 %v9493, %v9493
      %v9690 = vpack.c.b16 %v9494, %v9494
      %v9691 = vpack.c.b16 %v9495, %v9495
      %v9692 = vpack.c.b16 %v9496, %v9496
      %v9693 = vpack.c.b16 %v9497, %v9497
      %v9694 = vpack.c.b16 %v9498, %v9498
      %v9695 = vpack.c.b16 %v9499, %v9499
      %v9696 = vpack.c.b16 %v9500, %v9500
      %v9697 = vpack.c.b16 %v9501, %v9501
      %v9698 = vpack.c.b16 %v9502, %v9502
      %v9699 = vpack.c.b16 %v9503, %v9503
      %v9700 = vpack.c.b16 %v9504, %v9504
      %v9701 = vpack.c.b16 %v9505, %v9505
      %v9702 = vpack.c.b16 %v9506, %v9506
      %v9703 = vpack.c.b16 %v9507, %v9507
      %v9704 = vpack.c.b16 %v9508, %v9508
      %v9705 = vpack.c.b16 %v9509, %v9509
      %v9706 = vpack.c.b16 %v9510, %v9510
      %v9707 = vpack.c.b16 %v9511, %v9511
      %v9708 = vpack.c.b16 %v9512, %v9512
      %v9709 = vpack.c.b16 %v9513, %v9513
      %v9710 = vpack.c.b16 %v9514, %v9514
      %v9711 = vpack.c.b16 %v9515, %v9515
      %v9712 = vpack.c.b16 %v9516, %v9516
      %v9713 = vpack.c.b16 %v9517, %v9517
      %v9714 = vpack.c.b16 %v9518, %v9518
      %v9715 = vpack.c.b16 %v9519, %v9519
      %v9716 = vpack.c.b16 %v9520, %v9520
      %v9717 = vpack.c.b16 %v9521, %v9521
      %v9718 = vpack.c.b16 %v9522, %v9522
      %v9719 = vpack.c.b16 %v9523, %v9523
      %9916 = vst [vmem:[%s319] sm:$0xf] %v9524
      %9917 = vst [vmem:[%s319 + $0x4] sm:$0xf] %v9525
      %9918 = vst [vmem:[%s319 + $0x8] sm:$0xf] %v9526
      %9919 = vst [vmem:[%s319 + $0xc] sm:$0xf] %v9527
      %9920 = vst [vmem:[%s319 + $0x10] sm:$0xf] %v9528
      %9921 = vst [vmem:[%s319 + $0x14] sm:$0xf] %v9529
      %9922 = vst [vmem:[%s319 + $0x18] sm:$0xf] %v9530
      %9923 = vst [vmem:[%s319 + $0x1c] sm:$0xf] %v9531
      %9924 = vst [vmem:[%s319 + $0x20] sm:$0xf] %v9532
      %9925 = vst [vmem:[%s319 + $0x24] sm:$0xf] %v9533
      %9926 = vst [vmem:[%s319 + $0x28] sm:$0xf] %v9534
      %9927 = vst [vmem:[%s319 + $0x2c] sm:$0xf] %v9535
      %9928 = vst [vmem:[%s319 + $0x30] sm:$0xf] %v9536
      %9929 = vst [vmem:[%s319 + $0x34] sm:$0xf] %v9537
      %9930 = vst [vmem:[%s319 + $0x38] sm:$0xf] %v9538
      %9931 = vst [vmem:[%s319 + $0x3c] sm:$0xf] %v9539
      %9932 = vst [vmem:[%s319 + $0x40] sm:$0xf] %v9540
      %9933 = vst [vmem:[%s319 + $0x44] sm:$0xf] %v9541
      %9934 = vst [vmem:[%s319 + $0x48] sm:$0xf] %v9542
      %9935 = vst [vmem:[%s319 + $0x4c] sm:$0xf] %v9543
      %9936 = vst [vmem:[%s319 + $0x50] sm:$0xf] %v9544
      %9937 = vst [vmem:[%s319 + $0x54] sm:$0xf] %v9545
      %9938 = vst [vmem:[%s319 + $0x58] sm:$0xf] %v9546
      %9939 = vst [vmem:[%s319 + $0x5c] sm:$0xf] %v9547
      %9940 = vst [vmem:[%s319 + $0x60] sm:$0xf] %v9548
      %9941 = vst [vmem:[%s319 + $0x64] sm:$0xf] %v9549
      %9942 = vst [vmem:[%s319 + $0x68] sm:$0xf] %v9550
      %9943 = vst [vmem:[%s319 + $0x6c] sm:$0xf] %v9551
      %9944 = vst [vmem:[%s319 + $0x70] sm:$0xf] %v9552
      %9945 = vst [vmem:[%s319 + $0x74] sm:$0xf] %v9553
      %9946 = vst [vmem:[%s319 + $0x78] sm:$0xf] %v9554
      %9947 = vst [vmem:[%s319 + $0x7c] sm:$0xf] %v9555
      %9948 = vst [vmem:[%s319 + $0x80] sm:$0xf] %v9556
      %9949 = vst [vmem:[%s319 + $0x84] sm:$0xf] %v9557
      %9950 = vst [vmem:[%s319 + $0x88] sm:$0xf] %v9558
      %9951 = vst [vmem:[%s319 + $0x8c] sm:$0xf] %v9559
      %9952 = vst [vmem:[%s319 + $0x90] sm:$0xf] %v9560
      %9953 = vst [vmem:[%s319 + $0x94] sm:$0xf] %v9561
      %9954 = vst [vmem:[%s319 + $0x98] sm:$0xf] %v9562
      %9955 = vst [vmem:[%s319 + $0x9c] sm:$0xf] %v9563
      %9956 = vst [vmem:[%s319 + $0xa0] sm:$0xf] %v9564
      %9957 = vst [vmem:[%s319 + $0xa4] sm:$0xf] %v9565
      %9958 = vst [vmem:[%s319 + $0xa8] sm:$0xf] %v9566
      %9959 = vst [vmem:[%s319 + $0xac] sm:$0xf] %v9567
      %9960 = vst [vmem:[%s319 + $0xb0] sm:$0xf] %v9568
      %9961 = vst [vmem:[%s319 + $0xb4] sm:$0xf] %v9569
      %9962 = vst [vmem:[%s319 + $0xb8] sm:$0xf] %v9570
      %9963 = vst [vmem:[%s319 + $0xbc] sm:$0xf] %v9571
      %9964 = vst [vmem:[%s319 + $0xc0] sm:$0xf] %v9572
      %9965 = vst [vmem:[%s319 + $0xc4] sm:$0xf] %v9573
      %9966 = vst [vmem:[%s319 + $0xc8] sm:$0xf] %v9574
      %9967 = vst [vmem:[%s319 + $0xcc] sm:$0xf] %v9575
      %9968 = vst [vmem:[%s319 + $0xd0] sm:$0xf] %v9576
      %9969 = vst [vmem:[%s319 + $0xd4] sm:$0xf] %v9577
      %9970 = vst [vmem:[%s319 + $0xd8] sm:$0xf] %v9578
      %9971 = vst [vmem:[%s319 + $0xdc] sm:$0xf] %v9579
      %9972 = vst [vmem:[%s319 + $0xe0] sm:$0xf] %v9580
      %9973 = vst [vmem:[%s319 + $0xe4] sm:$0xf] %v9581
      %9974 = vst [vmem:[%s319 + $0xe8] sm:$0xf] %v9582
      %9975 = vst [vmem:[%s319 + $0xec] sm:$0xf] %v9583
      %9976 = vst [vmem:[%s319 + $0xf0] sm:$0xf] %v9584
      %9977 = vst [vmem:[%s319 + $0xf4] sm:$0xf] %v9585
      %9978 = vst [vmem:[%s319 + $0xf8] sm:$0xf] %v9586
      %9979 = vst [vmem:[%s319 + $0xfc] sm:$0xf] %v9587
      %9980 = vst [vmem:[%s319 + $0x100] sm:$0xf] %v9588
      %9981 = vst [vmem:[%s319 + $0x104] sm:$0xf] %v9589
      %9982 = vst [vmem:[%s319 + $0x108] sm:$0xf] %v9590
      %9983 = vst [vmem:[%s319 + $0x10c] sm:$0xf] %v9591
      %9984 = vst [vmem:[%s319 + $0x110] sm:$0xf] %v9592
      %9985 = vst [vmem:[%s319 + $0x114] sm:$0xf] %v9593
      %9986 = vst [vmem:[%s319 + $0x118] sm:$0xf] %v9594
      %9987 = vst [vmem:[%s319 + $0x11c] sm:$0xf] %v9595
      %9988 = vst [vmem:[%s319 + $0x120] sm:$0xf] %v9596
      %9989 = vst [vmem:[%s319 + $0x124] sm:$0xf] %v9597
      %9990 = vst [vmem:[%s319 + $0x128] sm:$0xf] %v9598
      %9991 = vst [vmem:[%s319 + $0x12c] sm:$0xf] %v9599
      %9992 = vst [vmem:[%s319 + $0x130] sm:$0xf] %v9600
      %9993 = vst [vmem:[%s319 + $0x134] sm:$0xf] %v9601
      %9994 = vst [vmem:[%s319 + $0x138] sm:$0xf] %v9602
      %9995 = vst [vmem:[%s319 + $0x13c] sm:$0xf] %v9603
      %9996 = vst [vmem:[%s319 + $0x140] sm:$0xf] %v9604
      %9997 = vst [vmem:[%s319 + $0x144] sm:$0xf] %v9605
      %9998 = vst [vmem:[%s319 + $0x148] sm:$0xf] %v9606
      %9999 = vst [vmem:[%s319 + $0x14c] sm:$0xf] %v9607
      %10000 = vst [vmem:[%s319 + $0x150] sm:$0xf] %v9608
      %10001 = vst [vmem:[%s319 + $0x154] sm:$0xf] %v9609
      %10002 = vst [vmem:[%s319 + $0x158] sm:$0xf] %v9610
      %10003 = vst [vmem:[%s319 + $0x15c] sm:$0xf] %v9611
      %10004 = vst [vmem:[%s319 + $0x160] sm:$0xf] %v9612
      %10005 = vst [vmem:[%s319 + $0x164] sm:$0xf] %v9613
      %10006 = vst [vmem:[%s319 + $0x168] sm:$0xf] %v9614
      %10007 = vst [vmem:[%s319 + $0x16c] sm:$0xf] %v9615
      %10008 = vst [vmem:[%s319 + $0x170] sm:$0xf] %v9616
      %10009 = vst [vmem:[%s319 + $0x174] sm:$0xf] %v9617
      %10010 = vst [vmem:[%s319 + $0x178] sm:$0xf] %v9618
      %10011 = vst [vmem:[%s319 + $0x17c] sm:$0xf] %v9619
      %10012 = vst [vmem:[%s319 + $0x180] sm:$0xf] %v9620
      %10013 = vst [vmem:[%s319 + $0x184] sm:$0xf] %v9621
      %10014 = vst [vmem:[%s319 + $0x188] sm:$0xf] %v9622
      %10015 = vst [vmem:[%s319 + $0x18c] sm:$0xf] %v9623
      %10016 = vst [vmem:[%s319 + $0x190] sm:$0xf] %v9624
      %10017 = vst [vmem:[%s319 + $0x194] sm:$0xf] %v9625
      %10018 = vst [vmem:[%s319 + $0x198] sm:$0xf] %v9626
      %10019 = vst [vmem:[%s319 + $0x19c] sm:$0xf] %v9627
      %10020 = vst [vmem:[%s319 + $0x1a0] sm:$0xf] %v9628
      %10021 = vst [vmem:[%s319 + $0x1a4] sm:$0xf] %v9629
      %10022 = vst [vmem:[%s319 + $0x1a8] sm:$0xf] %v9630
      %10023 = vst [vmem:[%s319 + $0x1ac] sm:$0xf] %v9631
      %10024 = vst [vmem:[%s319 + $0x1b0] sm:$0xf] %v9632
      %10025 = vst [vmem:[%s319 + $0x1b4] sm:$0xf] %v9633
      %10026 = vst [vmem:[%s319 + $0x1b8] sm:$0xf] %v9634
      %10027 = vst [vmem:[%s319 + $0x1bc] sm:$0xf] %v9635
      %10028 = vst [vmem:[%s319 + $0x1c0] sm:$0xf] %v9636
      %10029 = vst [vmem:[%s319 + $0x1c4] sm:$0xf] %v9637
      %10030 = vst [vmem:[%s319 + $0x1c8] sm:$0xf] %v9638
      %10031 = vst [vmem:[%s319 + $0x1cc] sm:$0xf] %v9639
      %10032 = vst [vmem:[%s319 + $0x1d0] sm:$0xf] %v9640
      %10033 = vst [vmem:[%s319 + $0x1d4] sm:$0xf] %v9641
      %10034 = vst [vmem:[%s319 + $0x1d8] sm:$0xf] %v9642
      %10035 = vst [vmem:[%s319 + $0x1dc] sm:$0xf] %v9643
      %10036 = vst [vmem:[%s319 + $0x1e0] sm:$0xf] %v9644
      %10037 = vst [vmem:[%s319 + $0x1e4] sm:$0xf] %v9645
      %10038 = vst [vmem:[%s319 + $0x1e8] sm:$0xf] %v9646
      %10039 = vst [vmem:[%s319 + $0x1ec] sm:$0xf] %v9647
      %10040 = vst [vmem:[%s319 + $0x1f0] sm:$0xf] %v9648
      %10041 = vst [vmem:[%s319 + $0x1f4] sm:$0xf] %v9649
      %10042 = vst [vmem:[%s319 + $0x1f8] sm:$0xf] %v9650
      %10043 = vst [vmem:[%s319 + $0x1fc] sm:$0xf] %v9651
      %10044 = vst [vmem:[%s319 + $0x200] sm:$0xf] %v9652
      %10045 = vst [vmem:[%s319 + $0x204] sm:$0xf] %v9653
      %10046 = vst [vmem:[%s319 + $0x208] sm:$0xf] %v9654
      %10047 = vst [vmem:[%s319 + $0x20c] sm:$0xf] %v9655
      %10048 = vst [vmem:[%s319 + $0x210] sm:$0xf] %v9656
      %10049 = vst [vmem:[%s319 + $0x214] sm:$0xf] %v9657
      %10050 = vst [vmem:[%s319 + $0x218] sm:$0xf] %v9658
      %10051 = vst [vmem:[%s319 + $0x21c] sm:$0xf] %v9659
      %10052 = vst [vmem:[%s319 + $0x220] sm:$0xf] %v9660
      %10053 = vst [vmem:[%s319 + $0x224] sm:$0xf] %v9661
      %10054 = vst [vmem:[%s319 + $0x228] sm:$0xf] %v9662
      %10055 = vst [vmem:[%s319 + $0x22c] sm:$0xf] %v9663
      %10056 = vst [vmem:[%s319 + $0x230] sm:$0xf] %v9664
      %10057 = vst [vmem:[%s319 + $0x234] sm:$0xf] %v9665
      %10058 = vst [vmem:[%s319 + $0x238] sm:$0xf] %v9666
      %10059 = vst [vmem:[%s319 + $0x23c] sm:$0xf] %v9667
      %10060 = vst [vmem:[%s319 + $0x240] sm:$0xf] %v9668
      %10061 = vst [vmem:[%s319 + $0x244] sm:$0xf] %v9669
      %10062 = vst [vmem:[%s319 + $0x248] sm:$0xf] %v9670
      %10063 = vst [vmem:[%s319 + $0x24c] sm:$0xf] %v9671
      %10064 = vst [vmem:[%s319 + $0x250] sm:$0xf] %v9672
      %10065 = vst [vmem:[%s319 + $0x254] sm:$0xf] %v9673
      %10066 = vst [vmem:[%s319 + $0x258] sm:$0xf] %v9674
      %10067 = vst [vmem:[%s319 + $0x25c] sm:$0xf] %v9675
      %10068 = vst [vmem:[%s319 + $0x260] sm:$0xf] %v9676
      %10069 = vst [vmem:[%s319 + $0x264] sm:$0xf] %v9677
      %10070 = vst [vmem:[%s319 + $0x268] sm:$0xf] %v9678
      %10071 = vst [vmem:[%s319 + $0x26c] sm:$0xf] %v9679
      %10072 = vst [vmem:[%s319 + $0x270] sm:$0xf] %v9680
      %10073 = vst [vmem:[%s319 + $0x274] sm:$0xf] %v9681
      %10074 = vst [vmem:[%s319 + $0x278] sm:$0xf] %v9682
      %10075 = vst [vmem:[%s319 + $0x27c] sm:$0xf] %v9683
      %10076 = vst [vmem:[%s319 + $0x280] sm:$0xf] %v9684
      %10077 = vst [vmem:[%s319 + $0x284] sm:$0xf] %v9685
      %10078 = vst [vmem:[%s319 + $0x288] sm:$0xf] %v9686
      %10079 = vst [vmem:[%s319 + $0x28c] sm:$0xf] %v9687
      %10080 = vst [vmem:[%s319 + $0x290] sm:$0xf] %v9688
      %10081 = vst [vmem:[%s319 + $0x294] sm:$0xf] %v9689
      %10082 = vst [vmem:[%s319 + $0x298] sm:$0xf] %v9690
      %10083 = vst [vmem:[%s319 + $0x29c] sm:$0xf] %v9691
      %10084 = vst [vmem:[%s319 + $0x2a0] sm:$0xf] %v9692
      %10085 = vst [vmem:[%s319 + $0x2a4] sm:$0xf] %v9693
      %10086 = vst [vmem:[%s319 + $0x2a8] sm:$0xf] %v9694
      %10087 = vst [vmem:[%s319 + $0x2ac] sm:$0xf] %v9695
      %10088 = vst [vmem:[%s319 + $0x2b0] sm:$0xf] %v9696
      %10089 = vst [vmem:[%s319 + $0x2b4] sm:$0xf] %v9697
      %10090 = vst [vmem:[%s319 + $0x2b8] sm:$0xf] %v9698
      %10091 = vst [vmem:[%s319 + $0x2bc] sm:$0xf] %v9699
      %10092 = vst [vmem:[%s319 + $0x2c0] sm:$0xf] %v9700
      %10093 = vst [vmem:[%s319 + $0x2c4] sm:$0xf] %v9701
      %10094 = vst [vmem:[%s319 + $0x2c8] sm:$0xf] %v9702
      %10095 = vst [vmem:[%s319 + $0x2cc] sm:$0xf] %v9703
      %10096 = vst [vmem:[%s319 + $0x2d0] sm:$0xf] %v9704
      %10097 = vst [vmem:[%s319 + $0x2d4] sm:$0xf] %v9705
      %10098 = vst [vmem:[%s319 + $0x2d8] sm:$0xf] %v9706
      %10099 = vst [vmem:[%s319 + $0x2dc] sm:$0xf] %v9707
      %10100 = vst [vmem:[%s319 + $0x2e0] sm:$0xf] %v9708
      %10101 = vst [vmem:[%s319 + $0x2e4] sm:$0xf] %v9709
      %10102 = vst [vmem:[%s319 + $0x2e8] sm:$0xf] %v9710
      %10103 = vst [vmem:[%s319 + $0x2ec] sm:$0xf] %v9711
      %10104 = vst [vmem:[%s319 + $0x2f0] sm:$0xf] %v9712
      %10105 = vst [vmem:[%s319 + $0x2f4] sm:$0xf] %v9713
      %10106 = vst [vmem:[%s319 + $0x2f8] sm:$0xf] %v9714
      %10107 = vst [vmem:[%s319 + $0x2fc] sm:$0xf] %v9715
      %10108 = vst [vmem:[%s319 + $0x300] sm:$0xf] %v9716
      %10109 = vst [vmem:[%s319 + $0x304] sm:$0xf] %v9717
      %10110 = vst [vmem:[%s319 + $0x308] sm:$0xf] %v9718
      %10111 = vst [vmem:[%s319 + $0x30c] sm:$0xf] %v9719
      %s10112 = smul.u32 196, %s17
      %p10113 = scmp.lt.s32.totalorder %s10112, 391
      %s10114 = scalar_select %p10113, %s10112, 391
      %s10115 = smul.addr %s10114, 4
      %s10116 = scalar_lea.vmem %s6, %s10115
      // Predicated region
      $region45: #{lenet5_forward.3} parent=43 // pred_check
        %p10117 = pneg %p181
      $region46: #{lenet5_forward.3} parent=43 // pred_check_branch
        %10119 = sbr.rel (%p10117) target = $region48
      $region47: #{lenet5_forward.3} parent=43 // pred_region
        %s10120 = smul.u32 196, %s17
      $region48: #{lenet5_forward.3} parent=43 // pred_fallthru
        _
    $region44: #{lenet5_forward.3} parent=5 // pred_fallthru
      _
    %p10121 = scmp.le.s32.totalorder 2, %s12
    // Predicated region
    $region49: #{lenet5_forward.3} parent=5 // pred_check
      %p10122 = pneg %p10121
    $region50: #{lenet5_forward.3} parent=5 // pred_check_branch
      %10124 = sbr.rel (%p10122) target = $region52
    $region51: #{lenet5_forward.3} parent=5 // pred_region
      %s10125 = ssub.s32 %s12, 2
      // Predicated region
      $region53: #{lenet5_forward.3} parent=51 // pred_check
        %p10126 = pneg %p187
      $region54: #{lenet5_forward.3} parent=51 // pred_check_branch
        %10128 = sbr.rel (%p10126) target = $region56
      $region55: #{lenet5_forward.3} parent=51 // pred_region
        %s10129 = smul.u32 196, %s18
        %p10130 = scmp.lt.s32.totalorder %s10129, 391
        %s10131 = scalar_select %p10130, %s10129, 391
        %s10132 = smul.addr %s10131, 4
        %s10133 = scalar_lea.vmem %s6, %s10132
      $region56: #{lenet5_forward.3} parent=51 // pred_fallthru
        _
    $region52: #{lenet5_forward.3} parent=5 // pred_fallthru
      _
  $region6: #{lenet5_forward.3} parent=0 // loop_footer
    %s16 = sadd.s32 1, %s12
  $region7: #{lenet5_forward.3} parent=0 // loop_footer_branch
    %11 = sbr.rel target = $region3
  $region8: #{lenet5_forward.3} parent=0 // loop_exit
    _

// kernel: lenet5_forward.4
$region0: #{lenet5_forward.4}
  #allocation0 [shape = 'u32[]', space=smem, size = 0x4, offset = 0x4, fixed_abs, tag = 'smem constant byte address 0x4 - core index']
  #allocation1 [shape = 'u32[144,128]{1,0:T(1,128)}', space=vmem, size = 0x12000, scoped, tag = 'internal scratch']
  %s0 = inlined_call_operand.vmem [shape: bf16[400,150], index: 0, kind: input, shape index: {}]
  %s1 = inlined_call_operand.vmem [shape: bf16[400,150], index: 1, kind: input, shape index: {}]
  %s2 = inlined_call_operand.vmem [shape: bf16[400,150], index: 2, kind: input, shape index: {}]
  %s3 = inlined_call_operand.vmem [shape: bf16[400,150], index: 3, kind: input, shape index: {}]
  %s4 = inlined_call_operand.vmem [shape: bf16[150,128], index: 4, kind: input, shape index: {}]
  %s5 = inlined_call_operand.vmem [shape: f32[1,128], index: 5, kind: input, shape index: {}]
  %s6 = inlined_call_operand.vmem [shape: bf16[400,128], index: 6, kind: output, shape index: {}]
  %s7 = sld [smem:[#allocation0]]
  $region57: #{lenet5_forward.4} parent=0
    _
  %s9 = ssub.s32 1, %s7
  %s10 = scalar_select 0, %s9, %s7
  loop: start=0, step=1, limit=4
  $region2: #{lenet5_forward.4} parent=0 // loop_pre_header
    _
  $region3: #{lenet5_forward.4} parent=0 // loop_header
    %s12 = sphi 0, %s16
    %p13 = scmp.ge.s32.totalorder %s12, 4
    %s22 = sphi 0, %s24
    %s25 = sphi 0, %s22
    %s26 = sphi 0, %s25
    %s42 = sphi 0, %s26
    %s48 = sphi 0, %s50
    %s51 = sphi 0, %s48
    %s52 = sphi 0, %s51
    %s68 = sphi 0, %s52
    %s74 = sphi 0, %s76
    %s77 = sphi 0, %s74
    %s78 = sphi 0, %s77
    %s94 = sphi 0, %s78
    %s100 = sphi 0, %s102
    %s103 = sphi 0, %s100
    %s104 = sphi 0, %s103
    %s120 = sphi 0, %s104
    %s124 = sphi 0, %s124
    %s126 = sphi 0, %s124
    %s127 = sphi 0, %s126
    %s141 = sphi 0, %s127
    %s145 = sphi 0, %s145
    %s147 = sphi 0, %s145
    %s148 = sphi 0, %s147
    %s162 = sphi 0, %s148
    %s168 = sphi 0, %s170
    %s171 = sphi 0, %s168
    %s172 = sphi 0, %s171
    %s188 = sphi 0, %s172
  $region4: #{lenet5_forward.4} parent=0 // loop_header_branch
    %15 = sbr.rel (%p13) target = $region8
  $region5: #{lenet5_forward.4} parent=0 // loop_body
    %s17 = ssub.s32 %s12, 1
    %s18 = ssub.s32 %s12, 2
    %s19 = sadd.s32 %s12, 1
    %s20 = ssub.s32 %s12, %s19
    %p21 = scmp.eq.s32.totalorder %s20, 0
    %s23 = sadd.s32 %s22, 1
    %s24 = scalar_select %p21, %s22, %s23
    %p27 = pneg %p21
    %p28 = scmp.eq.s32.totalorder %s12, 1
    %p29 = por %p27, %p28
    %p30 = scmp.ne.s32.totalorder %s22, %s25
    %p31 = scmp.eq.s32.totalorder %s12, 0
    %p32 = por %p30, %p31
    %p33 = scmp.ne.s32.totalorder %s22, %s25
    %p34 = scmp.eq.s32.totalorder %s17, 1
    %p35 = por %p33, %p34
    %p36 = scmp.ne.s32.totalorder %s25, %s26
    %p37 = scmp.eq.s32.totalorder %s17, 0
    %p38 = por %p36, %p37
    %p39 = scmp.ne.s32.totalorder %s25, %s26
    %p40 = scmp.eq.s32.totalorder %s18, 1
    %p41 = por %p39, %p40
    %p43 = scmp.ne.s32.totalorder %s26, %s42
    %p44 = scmp.eq.s32.totalorder %s18, 0
    %p45 = por %p43, %p44
    %s46 = ssub.s32 %s12, %s19
    %p47 = scmp.eq.s32.totalorder %s46, 0
    %s49 = sadd.s32 %s48, 1
    %s50 = scalar_select %p47, %s48, %s49
    %p53 = pneg %p47
    %p54 = scmp.eq.s32.totalorder %s12, 1
    %p55 = por %p53, %p54
    %p56 = scmp.ne.s32.totalorder %s48, %s51
    %p57 = scmp.eq.s32.totalorder %s12, 0
    %p58 = por %p56, %p57
    %p59 = scmp.ne.s32.totalorder %s48, %s51
    %p60 = scmp.eq.s32.totalorder %s17, 1
    %p61 = por %p59, %p60
    %p62 = scmp.ne.s32.totalorder %s51, %s52
    %p63 = scmp.eq.s32.totalorder %s17, 0
    %p64 = por %p62, %p63
    %p65 = scmp.ne.s32.totalorder %s51, %s52
    %p66 = scmp.eq.s32.totalorder %s18, 1
    %p67 = por %p65, %p66
    %p69 = scmp.ne.s32.totalorder %s52, %s68
    %p70 = scmp.eq.s32.totalorder %s18, 0
    %p71 = por %p69, %p70
    %s72 = ssub.s32 %s12, %s19
    %p73 = scmp.eq.s32.totalorder %s72, 0
    %s75 = sadd.s32 %s74, 1
    %s76 = scalar_select %p73, %s74, %s75
    %p79 = pneg %p73
    %p80 = scmp.eq.s32.totalorder %s12, 1
    %p81 = por %p79, %p80
    %p82 = scmp.ne.s32.totalorder %s74, %s77
    %p83 = scmp.eq.s32.totalorder %s12, 0
    %p84 = por %p82, %p83
    %p85 = scmp.ne.s32.totalorder %s74, %s77
    %p86 = scmp.eq.s32.totalorder %s17, 1
    %p87 = por %p85, %p86
    %p88 = scmp.ne.s32.totalorder %s77, %s78
    %p89 = scmp.eq.s32.totalorder %s17, 0
    %p90 = por %p88, %p89
    %p91 = scmp.ne.s32.totalorder %s77, %s78
    %p92 = scmp.eq.s32.totalorder %s18, 1
    %p93 = por %p91, %p92
    %p95 = scmp.ne.s32.totalorder %s78, %s94
    %p96 = scmp.eq.s32.totalorder %s18, 0
    %p97 = por %p95, %p96
    %s98 = ssub.s32 %s12, %s19
    %p99 = scmp.eq.s32.totalorder %s98, 0
    %s101 = sadd.s32 %s100, 1
    %s102 = scalar_select %p99, %s100, %s101
    %p105 = pneg %p99
    %p106 = scmp.eq.s32.totalorder %s12, 1
    %p107 = por %p105, %p106
    %p108 = scmp.ne.s32.totalorder %s100, %s103
    %p109 = scmp.eq.s32.totalorder %s12, 0
    %p110 = por %p108, %p109
    %p111 = scmp.ne.s32.totalorder %s100, %s103
    %p112 = scmp.eq.s32.totalorder %s17, 1
    %p113 = por %p111, %p112
    %p114 = scmp.ne.s32.totalorder %s103, %s104
    %p115 = scmp.eq.s32.totalorder %s17, 0
    %p116 = por %p114, %p115
    %p117 = scmp.ne.s32.totalorder %s103, %s104
    %p118 = scmp.eq.s32.totalorder %s18, 1
    %p119 = por %p117, %p118
    %p121 = scmp.ne.s32.totalorder %s104, %s120
    %p122 = scmp.eq.s32.totalorder %s18, 0
    %p123 = por %p121, %p122
    %s125 = sadd.s32 %s124, 1
    %p128 = scmp.eq.s32.totalorder %s12, 1
    %p129 = scmp.ne.s32.totalorder %s124, %s126
    %p130 = scmp.eq.s32.totalorder %s12, 0
    %p131 = por %p129, %p130
    %p132 = scmp.ne.s32.totalorder %s124, %s126
    %p133 = scmp.eq.s32.totalorder %s17, 1
    %p134 = por %p132, %p133
    %p135 = scmp.ne.s32.totalorder %s126, %s127
    %p136 = scmp.eq.s32.totalorder %s17, 0
    %p137 = por %p135, %p136
    %p138 = scmp.ne.s32.totalorder %s126, %s127
    %p139 = scmp.eq.s32.totalorder %s18, 1
    %p140 = por %p138, %p139
    %p142 = scmp.ne.s32.totalorder %s127, %s141
    %p143 = scmp.eq.s32.totalorder %s18, 0
    %p144 = por %p142, %p143
    %s146 = sadd.s32 %s145, 1
    %p149 = scmp.eq.s32.totalorder %s12, 1
    %p150 = scmp.ne.s32.totalorder %s145, %s147
    %p151 = scmp.eq.s32.totalorder %s12, 0
    %p152 = por %p150, %p151
    %p153 = scmp.ne.s32.totalorder %s145, %s147
    %p154 = scmp.eq.s32.totalorder %s17, 1
    %p155 = por %p153, %p154
    %p156 = scmp.ne.s32.totalorder %s147, %s148
    %p157 = scmp.eq.s32.totalorder %s17, 0
    %p158 = por %p156, %p157
    %p159 = scmp.ne.s32.totalorder %s147, %s148
    %p160 = scmp.eq.s32.totalorder %s18, 1
    %p161 = por %p159, %p160
    %p163 = scmp.ne.s32.totalorder %s148, %s162
    %p164 = scmp.eq.s32.totalorder %s18, 0
    %p165 = por %p163, %p164
    %s166 = ssub.s32 %s12, %s19
    %p167 = scmp.eq.s32.totalorder %s166, 0
    %s169 = sadd.s32 %s168, 1
    %s170 = scalar_select %p167, %s168, %s169
    %p173 = pneg %p167
    %p174 = scmp.eq.s32.totalorder %s12, 1
    %p175 = por %p173, %p174
    %p176 = scmp.ne.s32.totalorder %s168, %s171
    %p177 = scmp.eq.s32.totalorder %s12, 0
    %p178 = por %p176, %p177
    %p179 = scmp.ne.s32.totalorder %s168, %s171
    %p180 = scmp.eq.s32.totalorder %s17, 1
    %p181 = por %p179, %p180
    %p182 = scmp.ne.s32.totalorder %s171, %s172
    %p183 = scmp.eq.s32.totalorder %s17, 0
    %p184 = por %p182, %p183
    %p185 = scmp.ne.s32.totalorder %s171, %s172
    %p186 = scmp.eq.s32.totalorder %s18, 1
    %p187 = por %p185, %p186
    %p189 = scmp.ne.s32.totalorder %s172, %s188
    %p190 = scmp.eq.s32.totalorder %s18, 0
    %p191 = por %p189, %p190
    %p192 = scmp.le.s32.totalorder 1, %s12
    %p193 = scmp.lt.s32.totalorder %s12, 3
    %p194 = pnand %p192, %p193
    %p195 = pneg %p194
    // Predicated region
    $region9: #{lenet5_forward.4} parent=5 // pred_check
      _
    $region10: #{lenet5_forward.4} parent=5 // pred_check_branch
      %197 = sbr.rel (%p194) target = $region12
    $region11: #{lenet5_forward.4} parent=5 // pred_region
      %s198 = ssub.s32 %s12, 1
      // Predicated region
      $region13: #{lenet5_forward.4} parent=11 // pred_check
        %p199 = pneg %p137
      $region14: #{lenet5_forward.4} parent=11 // pred_check_branch
        %201 = sbr.rel (%p199) target = $region16
      $region15: #{lenet5_forward.4} parent=11 // pred_region
        _
      $region16: #{lenet5_forward.4} parent=11 // pred_fallthru
        _
      // Predicated region
      $region17: #{lenet5_forward.4} parent=11 // pred_check
        %p202 = pneg %p158
      $region18: #{lenet5_forward.4} parent=11 // pred_check_branch
        %204 = sbr.rel (%p202) target = $region20
      $region19: #{lenet5_forward.4} parent=11 // pred_region
        _
      $region20: #{lenet5_forward.4} parent=11 // pred_fallthru
        _
    $region12: #{lenet5_forward.4} parent=5 // pred_fallthru
      _
    %p205 = scmp.lt.s32.totalorder %s12, 2
    // Predicated region
    $region21: #{lenet5_forward.4} parent=5 // pred_check
      %p206 = pneg %p205
    $region22: #{lenet5_forward.4} parent=5 // pred_check_branch
      %208 = sbr.rel (%p206) target = $region24
    $region23: #{lenet5_forward.4} parent=5 // pred_region
      // Predicated region
      $region25: #{lenet5_forward.4} parent=23 // pred_check
        %p209 = pneg %p32
      $region26: #{lenet5_forward.4} parent=23 // pred_check_branch
        %211 = sbr.rel (%p209) target = $region28
      $region27: #{lenet5_forward.4} parent=23 // pred_region
        %s212 = smul.u32 25, %s12
        %p213 = scmp.lt.s32.totalorder %s212, 49
        %s214 = scalar_select %p213, %s212, 49
        %s215 = smul.addr %s214, 2
        %s216 = smul.addr %s215, 4
        %s217 = scalar_lea.vmem %s0, %s216
        %s218 = smul.u32 25, %s12
      $region28: #{lenet5_forward.4} parent=23 // pred_fallthru
        _
      // Predicated region
      $region29: #{lenet5_forward.4} parent=23 // pred_check
        %p219 = pneg %p58
      $region30: #{lenet5_forward.4} parent=23 // pred_check_branch
        %221 = sbr.rel (%p219) target = $region32
      $region31: #{lenet5_forward.4} parent=23 // pred_region
        %s222 = smul.u32 25, %s12
        %p223 = scmp.lt.s32.totalorder %s222, 49
        %s224 = scalar_select %p223, %s222, 49
        %s225 = smul.addr %s224, 2
        %s226 = smul.addr %s225, 4
        %s227 = scalar_lea.vmem %s1, %s226
        %s228 = smul.u32 25, %s12
      $region32: #{lenet5_forward.4} parent=23 // pred_fallthru
        _
      // Predicated region
      $region33: #{lenet5_forward.4} parent=23 // pred_check
        %p229 = pneg %p84
      $region34: #{lenet5_forward.4} parent=23 // pred_check_branch
        %231 = sbr.rel (%p229) target = $region36
      $region35: #{lenet5_forward.4} parent=23 // pred_region
        %s232 = smul.u32 25, %s12
        %p233 = scmp.lt.s32.totalorder %s232, 49
        %s234 = scalar_select %p233, %s232, 49
        %s235 = smul.addr %s234, 2
        %s236 = smul.addr %s235, 4
        %s237 = scalar_lea.vmem %s2, %s236
        %s238 = smul.u32 25, %s12
      $region36: #{lenet5_forward.4} parent=23 // pred_fallthru
        _
      // Predicated region
      $region37: #{lenet5_forward.4} parent=23 // pred_check
        %p239 = pneg %p110
      $region38: #{lenet5_forward.4} parent=23 // pred_check_branch
        %241 = sbr.rel (%p239) target = $region40
      $region39: #{lenet5_forward.4} parent=23 // pred_region
        %s242 = smul.u32 25, %s12
        %p243 = scmp.lt.s32.totalorder %s242, 49
        %s244 = scalar_select %p243, %s242, 49
        %s245 = smul.addr %s244, 2
        %s246 = smul.addr %s245, 4
        %s247 = scalar_lea.vmem %s3, %s246
        %s248 = smul.u32 25, %s12
      $region40: #{lenet5_forward.4} parent=23 // pred_fallthru
        _
    $region24: #{lenet5_forward.4} parent=5 // pred_fallthru
      _
    %p249 = scmp.le.s32.totalorder 1, %s12
    %p250 = scmp.lt.s32.totalorder %s12, 3
    %p251 = pnand %p249, %p250
    %p252 = pneg %p251
    // Predicated region
    $region41: #{lenet5_forward.4} parent=5 // pred_check
      _
    $region42: #{lenet5_forward.4} parent=5 // pred_check_branch
      %254 = sbr.rel (%p251) target = $region44
    $region43: #{lenet5_forward.4} parent=5 // pred_region
      %s255 = ssub.s32 %s12, 1
      %s256 = smul.u32 25, %s17
      %p257 = scmp.lt.s32.totalorder %s256, 49
      %s258 = scalar_select %p257, %s256, 49
      %s259 = smul.addr %s258, 2
      %s260 = smul.addr %s259, 4
      %s261 = scalar_lea.vmem %s0, %s260
      %p262 = pneg %p38
      %p263 = pneg %p35
      %s264 = smul.u32 25, %s17
      %p265 = scmp.lt.s32.totalorder %s264, 49
      %s266 = scalar_select %p265, %s264, 49
      %s267 = smul.addr %s266, 2
      %s268 = smul.addr %s267, 4
      %s269 = scalar_lea.vmem %s1, %s268
      %p270 = pneg %p64
      %p271 = pneg %p61
      %s272 = smul.u32 25, %s17
      %p273 = scmp.lt.s32.totalorder %s272, 49
      %s274 = scalar_select %p273, %s272, 49
      %s275 = smul.addr %s274, 2
      %s276 = smul.addr %s275, 4
      %s277 = scalar_lea.vmem %s2, %s276
      %p278 = pneg %p90
      %p279 = pneg %p87
      %s280 = smul.u32 25, %s17
      %p281 = scmp.lt.s32.totalorder %s280, 49
      %s282 = scalar_select %p281, %s280, 49
      %s283 = smul.addr %s282, 2
      %s284 = smul.addr %s283, 4
      %s285 = scalar_lea.vmem %s3, %s284
      %p286 = pneg %p116
      %p287 = pneg %p113
      %p288 = pneg %p137
      %p289 = pneg %p134
      %p290 = pneg %p158
      %p291 = pneg %p155
      %p292 = pneg %p184
      %p293 = pneg %p181
      %s294 = smul.u32 25, %s17
      %p295 = scmp.lt.s32.totalorder %s294, 49
      %s296 = scalar_select %p295, %s294, 49
      %s297 = smul.addr %s296, 4
      %s298 = scalar_lea.vmem %s6, %s297
      %s299 = smul.u32 25, %s17
      %p300 = scmp.lt.s32.totalorder %s299, 49
      %s301 = scalar_select %p300, %s299, 49
      %s302 = smul.addr %s301, 2
      %s303 = smul.addr %s302, 4
      %s304 = scalar_lea.vmem %s0, %s303
      %s305 = smul.u32 25, %s17
      %s306 = smul.u32 25, %s17
      %p307 = scmp.lt.s32.totalorder %s306, 49
      %s308 = scalar_select %p307, %s306, 49
      %s309 = smul.addr %s308, 2
      %s310 = smul.addr %s309, 4
      %s311 = scalar_lea.vmem %s1, %s310
      %s312 = smul.u32 25, %s17
      %s313 = smul.u32 25, %s17
      %p314 = scmp.lt.s32.totalorder %s313, 49
      %s315 = scalar_select %p314, %s313, 49
      %s316 = smul.addr %s315, 2
      %s317 = smul.addr %s316, 4
      %s318 = scalar_lea.vmem %s2, %s317
      %s319 = smul.u32 25, %s17
      %s320 = smul.u32 25, %s17
      %p321 = scmp.lt.s32.totalorder %s320, 49
      %s322 = scalar_select %p321, %s320, 49
      %s323 = smul.addr %s322, 2
      %s324 = smul.addr %s323, 4
      %s325 = scalar_lea.vmem %s3, %s324
      %s326 = smul.u32 25, %s17
      %s327 = smul.u32 25, %s17
      %p328 = scmp.lt.s32.totalorder %s327, 49
      %s329 = scalar_select %p328, %s327, 49
      %s330 = smul.addr %s329, 4
      %s331 = scalar_lea.vmem %s6, %s330
      %s332 = smul.u32 25, %s17
      %v334 = vld [vmem:[%s4] sm:$0xf]
      %v335 = vld [vmem:[%s4 + $0x4] sm:$0xf]
      %v336 = vld [vmem:[%s4 + $0x8] sm:$0xf]
      %v337 = vld [vmem:[%s4 + $0xc] sm:$0xf]
      %v338 = vld [vmem:[%s4 + $0x10] sm:$0xf]
      %v339 = vld [vmem:[%s4 + $0x14] sm:$0xf]
      %v340 = vld [vmem:[%s4 + $0x18] sm:$0xf]
      %v341 = vld [vmem:[%s4 + $0x1c] sm:$0xf]
      %v342 = vld [vmem:[%s4 + $0x20] sm:$0xf]
      %v343 = vld [vmem:[%s4 + $0x24] sm:$0xf]
      %v344 = vld [vmem:[%s4 + $0x28] sm:$0xf]
      %v345 = vld [vmem:[%s4 + $0x2c] sm:$0xf]
      %v346 = vld [vmem:[%s4 + $0x30] sm:$0xf]
      %v347 = vld [vmem:[%s4 + $0x34] sm:$0xf]
      %v348 = vld [vmem:[%s4 + $0x38] sm:$0xf]
      %v349 = vld [vmem:[%s4 + $0x3c] sm:$0xf]
      %v350 = vld [vmem:[%s4 + $0x40] sm:$0xf]
      %v351 = vld [vmem:[%s4 + $0x44] sm:$0xf]
      %v352 = vld [vmem:[%s4 + $0x48] sm:$0x7]
      %v353 = vld [vmem:[%s5] sm:$0x1]
      %v354 = vld [vmem:[%s304] sm:$0xff]
      %v355 = vld [vmem:[%s304 + $0x8] sm:$0xff]
      %v356 = vld [vmem:[%s304 + $0x10] sm:$0xff]
      %v357 = vld [vmem:[%s304 + $0x18] sm:$0xff]
      %v358 = vld [vmem:[%s304 + $0x20] sm:$0xff]
      %v359 = vld [vmem:[%s304 + $0x28] sm:$0xff]
      %v360 = vld [vmem:[%s304 + $0x30] sm:$0xff]
      %v361 = vld [vmem:[%s304 + $0x38] sm:$0xff]
      %v362 = vld [vmem:[%s304 + $0x40] sm:$0xff]
      %v363 = vld [vmem:[%s304 + $0x48] sm:$0xff]
      %v364 = vld [vmem:[%s304 + $0x50] sm:$0xff]
      %v365 = vld [vmem:[%s304 + $0x58] sm:$0xff]
      %v366 = vld [vmem:[%s304 + $0x60] sm:$0xff]
      %v367 = vld [vmem:[%s304 + $0x68] sm:$0xff]
      %v368 = vld [vmem:[%s304 + $0x70] sm:$0xff]
      %v369 = vld [vmem:[%s304 + $0x78] sm:$0xff]
      %v370 = vld [vmem:[%s304 + $0x80] sm:$0xff]
      %v371 = vld [vmem:[%s304 + $0x88] sm:$0xff]
      %v372 = vld [vmem:[%s304 + $0x90] sm:$0xff]
      %v373 = vld [vmem:[%s304 + $0x98] sm:$0xff]
      %v374 = vld [vmem:[%s304 + $0xa0] sm:$0xff]
      %v375 = vld [vmem:[%s304 + $0xa8] sm:$0xff]
      %v376 = vld [vmem:[%s304 + $0xb0] sm:$0xff]
      %v377 = vld [vmem:[%s304 + $0xb8] sm:$0xff]
      %v378 = vld [vmem:[%s304 + $0xc0] sm:$0xff]
      %v380 = vlaneseq
      %v381 = vshrl.u32 %v380, 7
      %v382 = vsub.s32 0, %v381
      %v383 = vrot.slane %v353, %v382
      %v410 = vunpack.c.l.b16 %v354
      %v411 = vunpack.c.h.b16 %v354
      %v412 = vunpack.c.l.b16 %v355
      %v413 = vunpack.c.h.b16 %v355
      %v414 = vunpack.c.l.b16 %v356
      %v415 = vunpack.c.h.b16 %v356
      %v416 = vunpack.c.l.b16 %v357
      %v417 = vunpack.c.h.b16 %v357
      %v418 = vunpack.c.l.b16 %v358
      %v419 = vunpack.c.h.b16 %v358
      %v420 = vunpack.c.l.b16 %v359
      %v421 = vunpack.c.h.b16 %v359
      %v422 = vunpack.c.l.b16 %v360
      %v423 = vunpack.c.h.b16 %v360
      %v424 = vunpack.c.l.b16 %v361
      %v425 = vunpack.c.h.b16 %v361
      %v426 = vunpack.c.l.b16 %v362
      %v427 = vunpack.c.h.b16 %v362
      %v428 = vunpack.c.l.b16 %v363
      %v429 = vunpack.c.h.b16 %v363
      %v430 = vunpack.c.l.b16 %v364
      %v431 = vunpack.c.h.b16 %v364
      %v432 = vunpack.c.l.b16 %v365
      %v433 = vunpack.c.h.b16 %v365
      %v434 = vunpack.c.l.b16 %v366
      %v435 = vunpack.c.h.b16 %v366
      %v436 = vunpack.c.l.b16 %v367
      %v437 = vunpack.c.h.b16 %v367
      %v438 = vunpack.c.l.b16 %v368
      %v439 = vunpack.c.h.b16 %v368
      %v440 = vunpack.c.l.b16 %v369
      %v441 = vunpack.c.h.b16 %v369
      %v442 = vunpack.c.l.b16 %v370
      %v443 = vunpack.c.h.b16 %v370
      %v444 = vunpack.c.l.b16 %v371
      %v445 = vunpack.c.h.b16 %v371
      %v446 = vunpack.c.l.b16 %v372
      %v447 = vunpack.c.h.b16 %v372
      %v448 = vunpack.c.l.b16 %v373
      %v449 = vunpack.c.h.b16 %v373
      %v450 = vunpack.c.l.b16 %v374
      %v451 = vunpack.c.h.b16 %v374
      %v452 = vunpack.c.l.b16 %v375
      %v453 = vunpack.c.h.b16 %v375
      %v454 = vunpack.c.l.b16 %v376
      %v455 = vunpack.c.h.b16 %v376
      %v456 = vunpack.c.l.b16 %v377
      %v457 = vunpack.c.h.b16 %v377
      %v458 = vunpack.c.l.b16 %v378
      %v459 = vunpack.c.h.b16 %v378
      %v460 = vpack.c.b16 %v412, %v410
      %v461 = vpack.c.b16 %v413, %v411
      %v462 = vpack.c.b16 %v416, %v414
      %v463 = vpack.c.b16 %v417, %v415
      %v464 = vpack.c.b16 %v420, %v418
      %v465 = vpack.c.b16 %v421, %v419
      %v466 = vpack.c.b16 %v424, %v422
      %v467 = vpack.c.b16 %v425, %v423
      %v468 = vpack.c.b16 %v428, %v426
      %v469 = vpack.c.b16 %v429, %v427
      %v470 = vpack.c.b16 %v432, %v430
      %v471 = vpack.c.b16 %v433, %v431
      %v472 = vpack.c.b16 %v436, %v434
      %v473 = vpack.c.b16 %v437, %v435
      %v474 = vpack.c.b16 %v440, %v438
      %v475 = vpack.c.b16 %v441, %v439
      %v476 = vpack.c.b16 %v444, %v442
      %v477 = vpack.c.b16 %v445, %v443
      %v478 = vpack.c.b16 %v448, %v446
      %v479 = vpack.c.b16 %v449, %v447
      %v480 = vpack.c.b16 %v452, %v450
      %v481 = vpack.c.b16 %v453, %v451
      %v482 = vpack.c.b16 %v456, %v454
      %v483 = vpack.c.b16 %v457, %v455
      %v484 = vpack.c.b16 %v458, %v458
      %v485 = vpack.c.b16 %v459, %v459
      %v518 = vunpack.c.l.b16 %v334
      %v519 = vunpack.c.l.b16 %v335
      %v520 = vunpack.c.l.b16 %v336
      %v521 = vunpack.c.l.b16 %v337
      %v522 = vunpack.c.l.b16 %v338
      %v523 = vunpack.c.l.b16 %v339
      %v524 = vunpack.c.l.b16 %v340
      %v525 = vunpack.c.l.b16 %v341
      %v526 = vunpack.c.l.b16 %v342
      %v527 = vunpack.c.l.b16 %v343
      %v528 = vunpack.c.l.b16 %v344
      %v529 = vunpack.c.l.b16 %v345
      %v530 = vunpack.c.l.b16 %v346
      %v531 = vunpack.c.l.b16 %v347
      %v532 = vunpack.c.l.b16 %v348
      %v533 = vunpack.c.l.b16 %v349
      %v534 = vunpack.c.l.b16 %v350
      %v535 = vunpack.c.l.b16 %v351
      %v536 = vunpack.c.l.b16 %v352
      %v537 = vpack.c.b16 %v519, %v518
      %v538 = vpack.c.b16 %v521, %v520
      %v539 = vpack.c.b16 %v523, %v522
      %v540 = vpack.c.b16 %v525, %v524
      %v541 = vpack.c.b16 %v527, %v526
      %v542 = vpack.c.b16 %v529, %v528
      %v543 = vpack.c.b16 %v531, %v530
      %v544 = vpack.c.b16 %v533, %v532
      %v545 = vpack.c.b16 %v535, %v534
      %v546 = vpack.c.b16 %v536, %v536
      %vm556 = vcmask 179200
      %v558 = vsel %vm556, %v461, 0
      %v561 = vsel %vm556, %v463, 0
      %v564 = vsel %vm556, %v465, 0
      %v567 = vsel %vm556, %v467, 0
      %v570 = vsel %vm556, %v469, 0
      %v573 = vsel %vm556, %v471, 0
      %v576 = vsel %vm556, %v473, 0
      %v579 = vsel %vm556, %v475, 0
      %v582 = vsel %vm556, %v477, 0
      %v585 = vsel %vm556, %v479, 0
      %v588 = vsel %vm556, %v481, 0
      %v591 = vsel %vm556, %v483, 0
      %v594 = vsel %vm556, %v485, 0
      %vm596 = vcmask 1042432
      %v598 = vsel %vm596, %v546, 0
      %600 = vmatprep.subr.bf16.mxu0 0
      %601 = vmatpush1.bf16.msra.mxu0 %v537
      %602 = vmatprep.subr.bf16.mxu0 0
      %603 = vmatpush1.bf16.msra.mxu0 %v538
      %604 = vmatprep.subr.bf16.mxu0 0
      %605 = vmatpush1.bf16.msra.mxu0 %v539
      %606 = vmatprep.subr.bf16.mxu0 0
      %607 = vmatpush1.bf16.msra.mxu0 %v540
      %608 = vmatprep.subr.bf16.mxu0 0
      %609 = vmatpush1.bf16.msra.mxu0 %v541
      %610 = vmatprep.subr.bf16.mxu0 0
      %611 = vmatpush1.bf16.msra.mxu0 %v542
      %612 = vmatprep.subr.bf16.mxu0 0
      %613 = vmatpush1.bf16.msra.mxu0 %v543
      %614 = vmatprep.subr.bf16.mxu0 0
      %615 = vmatpush1.bf16.msra.mxu0 %v544
      %616 = vmatprep.subr.bf16.mxu0 0
      %617 = vmatpush1.bf16.msra.mxu0 %v545
      %618 = vmatprep.subr.bf16.mxu0 0
      %619 = vmatpush1.bf16.msra.mxu0 %v598
      %620 = vmatprep.subr.bf16.mxu0 0
      %621 = vmatpush1.bf16.msra.mxu0 0
      %622 = vmatprep.subr.bf16.mxu0 0
      %623 = vmatpush1.bf16.msra.mxu0 0
      %624 = vmatprep.subr.bf16.mxu0 0
      %625 = vmatpush1.bf16.msra.mxu0 0
      %626 = vmatprep.subr.bf16.mxu0 0
      %627 = vmatpush1.bf16.msra.mxu0 0
      %628 = vmatprep.subr.bf16.mxu0 0
      %629 = vmatpush1.bf16.msra.mxu0 0
      %630 = vmatprep.subr.bf16.mxu0 0
      %631 = vmatpush1.bf16.msra.mxu0 0
      %632 = vmatprep.mubr.bf16.mxu0 %v558
      %633 = vmatmul.mubr.bf16.gmra.mrb[0].mxu0 %v460
      %v634 = vpop.f32.mrb[0].mxu0
      %v635 = vadd.f32 %v383, %v634
      %v636 = vpop.f32.mrb[0].mxu0
      %v637 = vpop.f32.mrb[0].mxu0
      %v638 = vadd.f32 %v383, %v637
      %v639 = vpop.f32.mrb[0].mxu0
      %640 = vmatprep.mubr.bf16.mxu0 %v561
      %641 = vmatmul.mubr.bf16.gmra.mrb[0].mxu0 %v462
      %v642 = vpop.f32.mrb[0].mxu0
      %v643 = vadd.f32 %v383, %v642
      %v644 = vpop.f32.mrb[0].mxu0
      %v645 = vpop.f32.mrb[0].mxu0
      %v646 = vadd.f32 %v383, %v645
      %v647 = vpop.f32.mrb[0].mxu0
      %648 = vmatprep.mubr.bf16.mxu0 %v564
      %649 = vmatmul.mubr.bf16.gmra.mrb[0].mxu0 %v464
      %v650 = vpop.f32.mrb[0].mxu0
      %v651 = vadd.f32 %v383, %v650
      %v652 = vpop.f32.mrb[0].mxu0
      %v653 = vpop.f32.mrb[0].mxu0
      %v654 = vadd.f32 %v383, %v653
      %v655 = vpop.f32.mrb[0].mxu0
      %656 = vmatprep.mubr.bf16.mxu0 %v567
      %657 = vmatmul.mubr.bf16.gmra.mrb[0].mxu0 %v466
      %v658 = vpop.f32.mrb[0].mxu0
      %v659 = vadd.f32 %v383, %v658
      %v660 = vpop.f32.mrb[0].mxu0
      %v661 = vpop.f32.mrb[0].mxu0
      %v662 = vadd.f32 %v383, %v661
      %v663 = vpop.f32.mrb[0].mxu0
      %664 = vmatprep.mubr.bf16.mxu0 %v570
      %665 = vmatmul.mubr.bf16.gmra.mrb[0].mxu0 %v468
      %v666 = vpop.f32.mrb[0].mxu0
      %v667 = vadd.f32 %v383, %v666
      %v668 = vpop.f32.mrb[0].mxu0
      %v669 = vpop.f32.mrb[0].mxu0
      %v670 = vadd.f32 %v383, %v669
      %v671 = vpop.f32.mrb[0].mxu0
      %672 = vmatprep.mubr.bf16.mxu0 %v573
      %673 = vmatmul.mubr.bf16.gmra.mrb[0].mxu0 %v470
      %v674 = vpop.f32.mrb[0].mxu0
      %v675 = vadd.f32 %v383, %v674
      %v676 = vpop.f32.mrb[0].mxu0
      %v677 = vpop.f32.mrb[0].mxu0
      %v678 = vadd.f32 %v383, %v677
      %v679 = vpop.f32.mrb[0].mxu0
      %680 = vmatprep.mubr.bf16.mxu0 %v576
      %681 = vmatmul.mubr.bf16.gmra.mrb[0].mxu0 %v472
      %v682 = vpop.f32.mrb[0].mxu0
      %v683 = vadd.f32 %v383, %v682
      %v684 = vpop.f32.mrb[0].mxu0
      %v685 = vpop.f32.mrb[0].mxu0
      %v686 = vadd.f32 %v383, %v685
      %v687 = vpop.f32.mrb[0].mxu0
      %688 = vmatprep.mubr.bf16.mxu0 %v579
      %689 = vmatmul.mubr.bf16.gmra.mrb[0].mxu0 %v474
      %v690 = vpop.f32.mrb[0].mxu0
      %v691 = vadd.f32 %v383, %v690
      %v692 = vpop.f32.mrb[0].mxu0
      %v693 = vpop.f32.mrb[0].mxu0
      %v694 = vadd.f32 %v383, %v693
      %v695 = vpop.f32.mrb[0].mxu0
      %696 = vmatprep.mubr.bf16.mxu0 %v582
      %697 = vmatmul.mubr.bf16.gmra.mrb[0].mxu0 %v476
      %v698 = vpop.f32.mrb[0].mxu0
      %v699 = vadd.f32 %v383, %v698
      %v700 = vpop.f32.mrb[0].mxu0
      %v701 = vpop.f32.mrb[0].mxu0
      %v702 = vadd.f32 %v383, %v701
      %v703 = vpop.f32.mrb[0].mxu0
      %704 = vmatprep.mubr.bf16.mxu0 %v585
      %705 = vmatmul.mubr.bf16.gmra.mrb[0].mxu0 %v478
      %v706 = vpop.f32.mrb[0].mxu0
      %v707 = vadd.f32 %v383, %v706
      %v708 = vpop.f32.mrb[0].mxu0
      %v709 = vpop.f32.mrb[0].mxu0
      %v710 = vadd.f32 %v383, %v709
      %v711 = vpop.f32.mrb[0].mxu0
      %712 = vmatprep.mubr.bf16.mxu0 %v588
      %713 = vmatmul.mubr.bf16.gmra.mrb[0].mxu0 %v480
      %v714 = vpop.f32.mrb[0].mxu0
      %v715 = vadd.f32 %v383, %v714
      %v716 = vpop.f32.mrb[0].mxu0
      %v717 = vpop.f32.mrb[0].mxu0
      %v718 = vadd.f32 %v383, %v717
      %v719 = vpop.f32.mrb[0].mxu0
      %720 = vmatprep.mubr.bf16.mxu0 %v591
      %721 = vmatmul.mubr.bf16.gmra.mrb[0].mxu0 %v482
      %v722 = vpop.f32.mrb[0].mxu0
      %v723 = vadd.f32 %v383, %v722
      %v724 = vpop.f32.mrb[0].mxu0
      %v725 = vpop.f32.mrb[0].mxu0
      %v726 = vadd.f32 %v383, %v725
      %v727 = vpop.f32.mrb[0].mxu0
      %728 = vmatprep.mubr.bf16.mxu0 %v594
      %729 = vmatmul.mubr.bf16.gmra.mrb[0].mxu0 %v484
      %v730 = vpop.f32.mrb[0].mxu0
      %v731 = vadd.f32 %v383, %v730
      %v732 = vpop.f32.mrb[0].mxu0
      %v733 = vpop.f32.mrb[0].mxu0
      %v734 = vpop.f32.mrb[0].mxu0
      %735 = vdwg.mxu0
      %v736 = vmax.f32 %v635, 0.0
      %v737 = vmax.f32 %v638, 0.0
      %v738 = vmax.f32 %v643, 0.0
      %v739 = vmax.f32 %v646, 0.0
      %v740 = vmax.f32 %v651, 0.0
      %v741 = vmax.f32 %v654, 0.0
      %v742 = vmax.f32 %v659, 0.0
      %v743 = vmax.f32 %v662, 0.0
      %v744 = vmax.f32 %v667, 0.0
      %v745 = vmax.f32 %v670, 0.0
      %v746 = vmax.f32 %v675, 0.0
      %v747 = vmax.f32 %v678, 0.0
      %v748 = vmax.f32 %v683, 0.0
      %v749 = vmax.f32 %v686, 0.0
      %v750 = vmax.f32 %v691, 0.0
      %v751 = vmax.f32 %v694, 0.0
      %v752 = vmax.f32 %v699, 0.0
      %v753 = vmax.f32 %v702, 0.0
      %v754 = vmax.f32 %v707, 0.0
      %v755 = vmax.f32 %v710, 0.0
      %v756 = vmax.f32 %v715, 0.0
      %v757 = vmax.f32 %v718, 0.0
      %v758 = vmax.f32 %v723, 0.0
      %v759 = vmax.f32 %v726, 0.0
      %v760 = vmax.f32 %v731, 0.0
      %v761 = vld [vmem:[%s311] sm:$0xff]
      %v762 = vld [vmem:[%s311 + $0x8] sm:$0xff]
      %v763 = vld [vmem:[%s311 + $0x10] sm:$0xff]
      %v764 = vld [vmem:[%s311 + $0x18] sm:$0xff]
      %v765 = vld [vmem:[%s311 + $0x20] sm:$0xff]
      %v766 = vld [vmem:[%s311 + $0x28] sm:$0xff]
      %v767 = vld [vmem:[%s311 + $0x30] sm:$0xff]
      %v768 = vld [vmem:[%s311 + $0x38] sm:$0xff]
      %v769 = vld [vmem:[%s311 + $0x40] sm:$0xff]
      %v770 = vld [vmem:[%s311 + $0x48] sm:$0xff]
      %v771 = vld [vmem:[%s311 + $0x50] sm:$0xff]
      %v772 = vld [vmem:[%s311 + $0x58] sm:$0xff]
      %v773 = vld [vmem:[%s311 + $0x60] sm:$0xff]
      %v774 = vld [vmem:[%s311 + $0x68] sm:$0xff]
      %v775 = vld [vmem:[%s311 + $0x70] sm:$0xff]
      %v776 = vld [vmem:[%s311 + $0x78] sm:$0xff]
      %v777 = vld [vmem:[%s311 + $0x80] sm:$0xff]
      %v778 = vld [vmem:[%s311 + $0x88] sm:$0xff]
      %v779 = vld [vmem:[%s311 + $0x90] sm:$0xff]
      %v780 = vld [vmem:[%s311 + $0x98] sm:$0xff]
      %v781 = vld [vmem:[%s311 + $0xa0] sm:$0xff]
      %v782 = vld [vmem:[%s311 + $0xa8] sm:$0xff]
      %v783 = vld [vmem:[%s311 + $0xb0] sm:$0xff]
      %v784 = vld [vmem:[%s311 + $0xb8] sm:$0xff]
      %v785 = vld [vmem:[%s311 + $0xc0] sm:$0xff]
      %v811 = vunpack.c.l.b16 %v761
      %v812 = vunpack.c.h.b16 %v761
      %v813 = vunpack.c.l.b16 %v762
      %v814 = vunpack.c.h.b16 %v762
      %v815 = vunpack.c.l.b16 %v763
      %v816 = vunpack.c.h.b16 %v763
      %v817 = vunpack.c.l.b16 %v764
      %v818 = vunpack.c.h.b16 %v764
      %v819 = vunpack.c.l.b16 %v765
      %v820 = vunpack.c.h.b16 %v765
      %v821 = vunpack.c.l.b16 %v766
      %v822 = vunpack.c.h.b16 %v766
      %v823 = vunpack.c.l.b16 %v767
      %v824 = vunpack.c.h.b16 %v767
      %v825 = vunpack.c.l.b16 %v768
      %v826 = vunpack.c.h.b16 %v768
      %v827 = vunpack.c.l.b16 %v769
      %v828 = vunpack.c.h.b16 %v769
      %v829 = vunpack.c.l.b16 %v770
      %v830 = vunpack.c.h.b16 %v770
      %v831 = vunpack.c.l.b16 %v771
      %v832 = vunpack.c.h.b16 %v771
      %v833 = vunpack.c.l.b16 %v772
      %v834 = vunpack.c.h.b16 %v772
      %v835 = vunpack.c.l.b16 %v773
      %v836 = vunpack.c.h.b16 %v773
      %v837 = vunpack.c.l.b16 %v774
      %v838 = vunpack.c.h.b16 %v774
      %v839 = vunpack.c.l.b16 %v775
      %v840 = vunpack.c.h.b16 %v775
      %v841 = vunpack.c.l.b16 %v776
      %v842 = vunpack.c.h.b16 %v776
      %v843 = vunpack.c.l.b16 %v777
      %v844 = vunpack.c.h.b16 %v777
      %v845 = vunpack.c.l.b16 %v778
      %v846 = vunpack.c.h.b16 %v778
      %v847 = vunpack.c.l.b16 %v779
      %v848 = vunpack.c.h.b16 %v779
      %v849 = vunpack.c.l.b16 %v780
      %v850 = vunpack.c.h.b16 %v780
      %v851 = vunpack.c.l.b16 %v781
      %v852 = vunpack.c.h.b16 %v781
      %v853 = vunpack.c.l.b16 %v782
      %v854 = vunpack.c.h.b16 %v782
      %v855 = vunpack.c.l.b16 %v783
      %v856 = vunpack.c.h.b16 %v783
      %v857 = vunpack.c.l.b16 %v784
      %v858 = vunpack.c.h.b16 %v784
      %v859 = vunpack.c.l.b16 %v785
      %v860 = vunpack.c.h.b16 %v785
      %v861 = vpack.c.b16 %v813, %v811
      %v862 = vpack.c.b16 %v814, %v812
      %v863 = vpack.c.b16 %v817, %v815
      %v864 = vpack.c.b16 %v818, %v816
      %v865 = vpack.c.b16 %v821, %v819
      %v866 = vpack.c.b16 %v822, %v820
      %v867 = vpack.c.b16 %v825, %v823
      %v868 = vpack.c.b16 %v826, %v824
      %v869 = vpack.c.b16 %v829, %v827
      %v870 = vpack.c.b16 %v830, %v828
      %v871 = vpack.c.b16 %v833, %v831
      %v872 = vpack.c.b16 %v834, %v832
      %v873 = vpack.c.b16 %v837, %v835
      %v874 = vpack.c.b16 %v838, %v836
      %v875 = vpack.c.b16 %v841, %v839
      %v876 = vpack.c.b16 %v842, %v840
      %v877 = vpack.c.b16 %v845, %v843
      %v878 = vpack.c.b16 %v846, %v844
      %v879 = vpack.c.b16 %v849, %v847
      %v880 = vpack.c.b16 %v850, %v848
      %v881 = vpack.c.b16 %v853, %v851
      %v882 = vpack.c.b16 %v854, %v852
      %v883 = vpack.c.b16 %v857, %v855
      %v884 = vpack.c.b16 %v858, %v856
      %v885 = vpack.c.b16 %v859, %v859
      %v886 = vpack.c.b16 %v860, %v860
      %v901 = vsel %vm556, %v862, 0
      %v904 = vsel %vm556, %v864, 0
      %v907 = vsel %vm556, %v866, 0
      %v910 = vsel %vm556, %v868, 0
      %v913 = vsel %vm556, %v870, 0
      %v916 = vsel %vm556, %v872, 0
      %v919 = vsel %vm556, %v874, 0
      %v922 = vsel %vm556, %v876, 0
      %v925 = vsel %vm556, %v878, 0
      %v928 = vsel %vm556, %v880, 0
      %v931 = vsel %vm556, %v882, 0
      %v934 = vsel %vm556, %v884, 0
      %v937 = vsel %vm556, %v886, 0
      %939 = vmatprep.subr.bf16.mxu0 0
      %940 = vmatpush1.bf16.msra.mxu0 %v537
      %941 = vmatprep.subr.bf16.mxu0 0
      %942 = vmatpush1.bf16.msra.mxu0 %v538
      %943 = vmatprep.subr.bf16.mxu0 0
      %944 = vmatpush1.bf16.msra.mxu0 %v539
      %945 = vmatprep.subr.bf16.mxu0 0
      %946 = vmatpush1.bf16.msra.mxu0 %v540
      %947 = vmatprep.subr.bf16.mxu0 0
      %948 = vmatpush1.bf16.msra.mxu0 %v541
      %949 = vmatprep.subr.bf16.mxu0 0
      %950 = vmatpush1.bf16.msra.mxu0 %v542
      %951 = vmatprep.subr.bf16.mxu0 0
      %952 = vmatpush1.bf16.msra.mxu0 %v543
      %953 = vmatprep.subr.bf16.mxu0 0
      %954 = vmatpush1.bf16.msra.mxu0 %v544
      %955 = vmatprep.subr.bf16.mxu0 0
      %956 = vmatpush1.bf16.msra.mxu0 %v545
      %957 = vmatprep.subr.bf16.mxu0 0
      %958 = vmatpush1.bf16.msra.mxu0 %v598
      %959 = vmatprep.subr.bf16.mxu0 0
      %960 = vmatpush1.bf16.msra.mxu0 0
      %961 = vmatprep.subr.bf16.mxu0 0
      %962 = vmatpush1.bf16.msra.mxu0 0
      %963 = vmatprep.subr.bf16.mxu0 0
      %964 = vmatpush1.bf16.msra.mxu0 0
      %965 = vmatprep.subr.bf16.mxu0 0
      %966 = vmatpush1.bf16.msra.mxu0 0
      %967 = vmatprep.subr.bf16.mxu0 0
      %968 = vmatpush1.bf16.msra.mxu0 0
      %969 = vmatprep.subr.bf16.mxu0 0
      %970 = vmatpush1.bf16.msra.mxu0 0
      %971 = vmatprep.mubr.bf16.mxu0 %v901
      %972 = vmatmul.mubr.bf16.gmra.mrb[0].mxu0 %v861
      %v973 = vpop.f32.mrb[0].mxu0
      %v974 = vadd.f32 %v383, %v973
      %v975 = vpop.f32.mrb[0].mxu0
      %v976 = vpop.f32.mrb[0].mxu0
      %v977 = vadd.f32 %v383, %v976
      %v978 = vpop.f32.mrb[0].mxu0
      %979 = vmatprep.mubr.bf16.mxu0 %v904
      %980 = vmatmul.mubr.bf16.gmra.mrb[0].mxu0 %v863
      %v981 = vpop.f32.mrb[0].mxu0
      %v982 = vadd.f32 %v383, %v981
      %v983 = vpop.f32.mrb[0].mxu0
      %v984 = vpop.f32.mrb[0].mxu0
      %v985 = vadd.f32 %v383, %v984
      %v986 = vpop.f32.mrb[0].mxu0
      %987 = vmatprep.mubr.bf16.mxu0 %v907
      %988 = vmatmul.mubr.bf16.gmra.mrb[0].mxu0 %v865
      %v989 = vpop.f32.mrb[0].mxu0
      %v990 = vadd.f32 %v383, %v989
      %v991 = vpop.f32.mrb[0].mxu0
      %v992 = vpop.f32.mrb[0].mxu0
      %v993 = vadd.f32 %v383, %v992
      %v994 = vpop.f32.mrb[0].mxu0
      %995 = vmatprep.mubr.bf16.mxu0 %v910
      %996 = vmatmul.mubr.bf16.gmra.mrb[0].mxu0 %v867
      %v997 = vpop.f32.mrb[0].mxu0
      %v998 = vadd.f32 %v383, %v997
      %v999 = vpop.f32.mrb[0].mxu0
      %v1000 = vpop.f32.mrb[0].mxu0
      %v1001 = vadd.f32 %v383, %v1000
      %v1002 = vpop.f32.mrb[0].mxu0
      %1003 = vmatprep.mubr.bf16.mxu0 %v913
      %1004 = vmatmul.mubr.bf16.gmra.mrb[0].mxu0 %v869
      %v1005 = vpop.f32.mrb[0].mxu0
      %v1006 = vadd.f32 %v383, %v1005
      %v1007 = vpop.f32.mrb[0].mxu0
      %v1008 = vpop.f32.mrb[0].mxu0
      %v1009 = vadd.f32 %v383, %v1008
      %v1010 = vpop.f32.mrb[0].mxu0
      %1011 = vmatprep.mubr.bf16.mxu0 %v916
      %1012 = vmatmul.mubr.bf16.gmra.mrb[0].mxu0 %v871
      %v1013 = vpop.f32.mrb[0].mxu0
      %v1014 = vadd.f32 %v383, %v1013
      %v1015 = vpop.f32.mrb[0].mxu0
      %v1016 = vpop.f32.mrb[0].mxu0
      %v1017 = vadd.f32 %v383, %v1016
      %v1018 = vpop.f32.mrb[0].mxu0
      %1019 = vmatprep.mubr.bf16.mxu0 %v919
      %1020 = vmatmul.mubr.bf16.gmra.mrb[0].mxu0 %v873
      %v1021 = vpop.f32.mrb[0].mxu0
      %v1022 = vadd.f32 %v383, %v1021
      %v1023 = vpop.f32.mrb[0].mxu0
      %v1024 = vpop.f32.mrb[0].mxu0
      %v1025 = vadd.f32 %v383, %v1024
      %v1026 = vpop.f32.mrb[0].mxu0
      %1027 = vmatprep.mubr.bf16.mxu0 %v922
      %1028 = vmatmul.mubr.bf16.gmra.mrb[0].mxu0 %v875
      %v1029 = vpop.f32.mrb[0].mxu0
      %v1030 = vadd.f32 %v383, %v1029
      %v1031 = vpop.f32.mrb[0].mxu0
      %v1032 = vpop.f32.mrb[0].mxu0
      %v1033 = vadd.f32 %v383, %v1032
      %v1034 = vpop.f32.mrb[0].mxu0
      %1035 = vmatprep.mubr.bf16.mxu0 %v925
      %1036 = vmatmul.mubr.bf16.gmra.mrb[0].mxu0 %v877
      %v1037 = vpop.f32.mrb[0].mxu0
      %v1038 = vadd.f32 %v383, %v1037
      %v1039 = vpop.f32.mrb[0].mxu0
      %v1040 = vpop.f32.mrb[0].mxu0
      %v1041 = vadd.f32 %v383, %v1040
      %v1042 = vpop.f32.mrb[0].mxu0
      %1043 = vmatprep.mubr.bf16.mxu0 %v928
      %1044 = vmatmul.mubr.bf16.gmra.mrb[0].mxu0 %v879
      %v1045 = vpop.f32.mrb[0].mxu0
      %v1046 = vadd.f32 %v383, %v1045
      %v1047 = vpop.f32.mrb[0].mxu0
      %v1048 = vpop.f32.mrb[0].mxu0
      %v1049 = vadd.f32 %v383, %v1048
      %v1050 = vpop.f32.mrb[0].mxu0
      %1051 = vmatprep.mubr.bf16.mxu0 %v931
      %1052 = vmatmul.mubr.bf16.gmra.mrb[0].mxu0 %v881
      %v1053 = vpop.f32.mrb[0].mxu0
      %v1054 = vadd.f32 %v383, %v1053
      %v1055 = vpop.f32.mrb[0].mxu0
      %v1056 = vpop.f32.mrb[0].mxu0
      %v1057 = vadd.f32 %v383, %v1056
      %v1058 = vpop.f32.mrb[0].mxu0
      %1059 = vmatprep.mubr.bf16.mxu0 %v934
      %1060 = vmatmul.mubr.bf16.gmra.mrb[0].mxu0 %v883
      %v1061 = vpop.f32.mrb[0].mxu0
      %v1062 = vadd.f32 %v383, %v1061
      %v1063 = vpop.f32.mrb[0].mxu0
      %v1064 = vpop.f32.mrb[0].mxu0
      %v1065 = vadd.f32 %v383, %v1064
      %v1066 = vpop.f32.mrb[0].mxu0
      %1067 = vmatprep.mubr.bf16.mxu0 %v937
      %1068 = vmatmul.mubr.bf16.gmra.mrb[0].mxu0 %v885
      %v1069 = vpop.f32.mrb[0].mxu0
      %v1070 = vadd.f32 %v383, %v1069
      %v1071 = vpop.f32.mrb[0].mxu0
      %v1072 = vpop.f32.mrb[0].mxu0
      %v1073 = vpop.f32.mrb[0].mxu0
      %1074 = vdwg.mxu0
      %v1075 = vmax.f32 %v974, 0.0
      %v1076 = vmax.f32 %v977, 0.0
      %v1077 = vmax.f32 %v982, 0.0
      %v1078 = vmax.f32 %v985, 0.0
      %v1079 = vmax.f32 %v990, 0.0
      %v1080 = vmax.f32 %v993, 0.0
      %v1081 = vmax.f32 %v998, 0.0
      %v1082 = vmax.f32 %v1001, 0.0
      %v1083 = vmax.f32 %v1006, 0.0
      %v1084 = vmax.f32 %v1009, 0.0
      %v1085 = vmax.f32 %v1014, 0.0
      %v1086 = vmax.f32 %v1017, 0.0
      %v1087 = vmax.f32 %v1022, 0.0
      %v1088 = vmax.f32 %v1025, 0.0
      %v1089 = vmax.f32 %v1030, 0.0
      %v1090 = vmax.f32 %v1033, 0.0
      %v1091 = vmax.f32 %v1038, 0.0
      %v1092 = vmax.f32 %v1041, 0.0
      %v1093 = vmax.f32 %v1046, 0.0
      %v1094 = vmax.f32 %v1049, 0.0
      %v1095 = vmax.f32 %v1054, 0.0
      %v1096 = vmax.f32 %v1057, 0.0
      %v1097 = vmax.f32 %v1062, 0.0
      %v1098 = vmax.f32 %v1065, 0.0
      %v1099 = vmax.f32 %v1070, 0.0
      %v1100 = vadd.f32 %v736, %v1075
      %v1101 = vadd.f32 %v737, %v1076
      %v1102 = vadd.f32 %v738, %v1077
      %v1103 = vadd.f32 %v739, %v1078
      %v1104 = vadd.f32 %v740, %v1079
      %v1105 = vadd.f32 %v741, %v1080
      %v1106 = vadd.f32 %v742, %v1081
      %v1107 = vadd.f32 %v743, %v1082
      %v1108 = vadd.f32 %v744, %v1083
      %v1109 = vadd.f32 %v745, %v1084
      %v1110 = vadd.f32 %v746, %v1085
      %v1111 = vadd.f32 %v747, %v1086
      %v1112 = vadd.f32 %v748, %v1087
      %v1113 = vadd.f32 %v749, %v1088
      %v1114 = vadd.f32 %v750, %v1089
      %v1115 = vadd.f32 %v751, %v1090
      %v1116 = vadd.f32 %v752, %v1091
      %v1117 = vadd.f32 %v753, %v1092
      %v1118 = vadd.f32 %v754, %v1093
      %v1119 = vadd.f32 %v755, %v1094
      %v1120 = vadd.f32 %v756, %v1095
      %v1121 = vadd.f32 %v757, %v1096
      %v1122 = vadd.f32 %v758, %v1097
      %v1123 = vadd.f32 %v759, %v1098
      %v1124 = vadd.f32 %v760, %v1099
      %v1125 = vld [vmem:[%s318] sm:$0xff]
      %v1126 = vld [vmem:[%s318 + $0x8] sm:$0xff]
      %v1127 = vld [vmem:[%s318 + $0x10] sm:$0xff]
      %v1128 = vld [vmem:[%s318 + $0x18] sm:$0xff]
      %v1129 = vld [vmem:[%s318 + $0x20] sm:$0xff]
      %v1130 = vld [vmem:[%s318 + $0x28] sm:$0xff]
      %v1131 = vld [vmem:[%s318 + $0x30] sm:$0xff]
      %v1132 = vld [vmem:[%s318 + $0x38] sm:$0xff]
      %v1133 = vld [vmem:[%s318 + $0x40] sm:$0xff]
      %v1134 = vld [vmem:[%s318 + $0x48] sm:$0xff]
      %v1135 = vld [vmem:[%s318 + $0x50] sm:$0xff]
      %v1136 = vld [vmem:[%s318 + $0x58] sm:$0xff]
      %v1137 = vld [vmem:[%s318 + $0x60] sm:$0xff]
      %v1138 = vld [vmem:[%s318 + $0x68] sm:$0xff]
      %v1139 = vld [vmem:[%s318 + $0x70] sm:$0xff]
      %v1140 = vld [vmem:[%s318 + $0x78] sm:$0xff]
      %v1141 = vld [vmem:[%s318 + $0x80] sm:$0xff]
      %v1142 = vld [vmem:[%s318 + $0x88] sm:$0xff]
      %v1143 = vld [vmem:[%s318 + $0x90] sm:$0xff]
      %v1144 = vld [vmem:[%s318 + $0x98] sm:$0xff]
      %v1145 = vld [vmem:[%s318 + $0xa0] sm:$0xff]
      %v1146 = vld [vmem:[%s318 + $0xa8] sm:$0xff]
      %v1147 = vld [vmem:[%s318 + $0xb0] sm:$0xff]
      %v1148 = vld [vmem:[%s318 + $0xb8] sm:$0xff]
      %v1149 = vld [vmem:[%s318 + $0xc0] sm:$0xff]
      %v1175 = vunpack.c.l.b16 %v1125
      %v1176 = vunpack.c.h.b16 %v1125
      %v1177 = vunpack.c.l.b16 %v1126
      %v1178 = vunpack.c.h.b16 %v1126
      %v1179 = vunpack.c.l.b16 %v1127
      %v1180 = vunpack.c.h.b16 %v1127
      %v1181 = vunpack.c.l.b16 %v1128
      %v1182 = vunpack.c.h.b16 %v1128
      %v1183 = vunpack.c.l.b16 %v1129
      %v1184 = vunpack.c.h.b16 %v1129
      %v1185 = vunpack.c.l.b16 %v1130
      %v1186 = vunpack.c.h.b16 %v1130
      %v1187 = vunpack.c.l.b16 %v1131
      %v1188 = vunpack.c.h.b16 %v1131
      %v1189 = vunpack.c.l.b16 %v1132
      %v1190 = vunpack.c.h.b16 %v1132
      %v1191 = vunpack.c.l.b16 %v1133
      %v1192 = vunpack.c.h.b16 %v1133
      %v1193 = vunpack.c.l.b16 %v1134
      %v1194 = vunpack.c.h.b16 %v1134
      %v1195 = vunpack.c.l.b16 %v1135
      %v1196 = vunpack.c.h.b16 %v1135
      %v1197 = vunpack.c.l.b16 %v1136
      %v1198 = vunpack.c.h.b16 %v1136
      %v1199 = vunpack.c.l.b16 %v1137
      %v1200 = vunpack.c.h.b16 %v1137
      %v1201 = vunpack.c.l.b16 %v1138
      %v1202 = vunpack.c.h.b16 %v1138
      %v1203 = vunpack.c.l.b16 %v1139
      %v1204 = vunpack.c.h.b16 %v1139
      %v1205 = vunpack.c.l.b16 %v1140
      %v1206 = vunpack.c.h.b16 %v1140
      %v1207 = vunpack.c.l.b16 %v1141
      %v1208 = vunpack.c.h.b16 %v1141
      %v1209 = vunpack.c.l.b16 %v1142
      %v1210 = vunpack.c.h.b16 %v1142
      %v1211 = vunpack.c.l.b16 %v1143
      %v1212 = vunpack.c.h.b16 %v1143
      %v1213 = vunpack.c.l.b16 %v1144
      %v1214 = vunpack.c.h.b16 %v1144
      %v1215 = vunpack.c.l.b16 %v1145
      %v1216 = vunpack.c.h.b16 %v1145
      %v1217 = vunpack.c.l.b16 %v1146
      %v1218 = vunpack.c.h.b16 %v1146
      %v1219 = vunpack.c.l.b16 %v1147
      %v1220 = vunpack.c.h.b16 %v1147
      %v1221 = vunpack.c.l.b16 %v1148
      %v1222 = vunpack.c.h.b16 %v1148
      %v1223 = vunpack.c.l.b16 %v1149
      %v1224 = vunpack.c.h.b16 %v1149
      %v1225 = vpack.c.b16 %v1177, %v1175
      %v1226 = vpack.c.b16 %v1178, %v1176
      %v1227 = vpack.c.b16 %v1181, %v1179
      %v1228 = vpack.c.b16 %v1182, %v1180
      %v1229 = vpack.c.b16 %v1185, %v1183
      %v1230 = vpack.c.b16 %v1186, %v1184
      %v1231 = vpack.c.b16 %v1189, %v1187
      %v1232 = vpack.c.b16 %v1190, %v1188
      %v1233 = vpack.c.b16 %v1193, %v1191
      %v1234 = vpack.c.b16 %v1194, %v1192
      %v1235 = vpack.c.b16 %v1197, %v1195
      %v1236 = vpack.c.b16 %v1198, %v1196
      %v1237 = vpack.c.b16 %v1201, %v1199
      %v1238 = vpack.c.b16 %v1202, %v1200
      %v1239 = vpack.c.b16 %v1205, %v1203
      %v1240 = vpack.c.b16 %v1206, %v1204
      %v1241 = vpack.c.b16 %v1209, %v1207
      %v1242 = vpack.c.b16 %v1210, %v1208
      %v1243 = vpack.c.b16 %v1213, %v1211
      %v1244 = vpack.c.b16 %v1214, %v1212
      %v1245 = vpack.c.b16 %v1217, %v1215
      %v1246 = vpack.c.b16 %v1218, %v1216
      %v1247 = vpack.c.b16 %v1221, %v1219
      %v1248 = vpack.c.b16 %v1222, %v1220
      %v1249 = vpack.c.b16 %v1223, %v1223
      %v1250 = vpack.c.b16 %v1224, %v1224
      %v1265 = vsel %vm556, %v1226, 0
      %v1268 = vsel %vm556, %v1228, 0
      %v1271 = vsel %vm556, %v1230, 0
      %v1274 = vsel %vm556, %v1232, 0
      %v1277 = vsel %vm556, %v1234, 0
      %v1280 = vsel %vm556, %v1236, 0
      %v1283 = vsel %vm556, %v1238, 0
      %v1286 = vsel %vm556, %v1240, 0
      %v1289 = vsel %vm556, %v1242, 0
      %v1292 = vsel %vm556, %v1244, 0
      %v1295 = vsel %vm556, %v1246, 0
      %v1298 = vsel %vm556, %v1248, 0
      %v1301 = vsel %vm556, %v1250, 0
      %1303 = vmatprep.subr.bf16.mxu0 0
      %1304 = vmatpush1.bf16.msra.mxu0 %v537
      %1305 = vmatprep.subr.bf16.mxu0 0
      %1306 = vmatpush1.bf16.msra.mxu0 %v538
      %1307 = vmatprep.subr.bf16.mxu0 0
      %1308 = vmatpush1.bf16.msra.mxu0 %v539
      %1309 = vmatprep.subr.bf16.mxu0 0
      %1310 = vmatpush1.bf16.msra.mxu0 %v540
      %1311 = vmatprep.subr.bf16.mxu0 0
      %1312 = vmatpush1.bf16.msra.mxu0 %v541
      %1313 = vmatprep.subr.bf16.mxu0 0
      %1314 = vmatpush1.bf16.msra.mxu0 %v542
      %1315 = vmatprep.subr.bf16.mxu0 0
      %1316 = vmatpush1.bf16.msra.mxu0 %v543
      %1317 = vmatprep.subr.bf16.mxu0 0
      %1318 = vmatpush1.bf16.msra.mxu0 %v544
      %1319 = vmatprep.subr.bf16.mxu0 0
      %1320 = vmatpush1.bf16.msra.mxu0 %v545
      %1321 = vmatprep.subr.bf16.mxu0 0
      %1322 = vmatpush1.bf16.msra.mxu0 %v598
      %1323 = vmatprep.subr.bf16.mxu0 0
      %1324 = vmatpush1.bf16.msra.mxu0 0
      %1325 = vmatprep.subr.bf16.mxu0 0
      %1326 = vmatpush1.bf16.msra.mxu0 0
      %1327 = vmatprep.subr.bf16.mxu0 0
      %1328 = vmatpush1.bf16.msra.mxu0 0
      %1329 = vmatprep.subr.bf16.mxu0 0
      %1330 = vmatpush1.bf16.msra.mxu0 0
      %1331 = vmatprep.subr.bf16.mxu0 0
      %1332 = vmatpush1.bf16.msra.mxu0 0
      %1333 = vmatprep.subr.bf16.mxu0 0
      %1334 = vmatpush1.bf16.msra.mxu0 0
      %1335 = vmatprep.mubr.bf16.mxu0 %v1265
      %1336 = vmatmul.mubr.bf16.gmra.mrb[0].mxu0 %v1225
      %v1337 = vpop.f32.mrb[0].mxu0
      %v1338 = vadd.f32 %v383, %v1337
      %v1339 = vpop.f32.mrb[0].mxu0
      %v1340 = vpop.f32.mrb[0].mxu0
      %v1341 = vadd.f32 %v383, %v1340
      %v1342 = vpop.f32.mrb[0].mxu0
      %1343 = vmatprep.mubr.bf16.mxu0 %v1268
      %1344 = vmatmul.mubr.bf16.gmra.mrb[0].mxu0 %v1227
      %v1345 = vpop.f32.mrb[0].mxu0
      %v1346 = vadd.f32 %v383, %v1345
      %v1347 = vpop.f32.mrb[0].mxu0
      %v1348 = vpop.f32.mrb[0].mxu0
      %v1349 = vadd.f32 %v383, %v1348
      %v1350 = vpop.f32.mrb[0].mxu0
      %1351 = vmatprep.mubr.bf16.mxu0 %v1271
      %1352 = vmatmul.mubr.bf16.gmra.mrb[0].mxu0 %v1229
      %v1353 = vpop.f32.mrb[0].mxu0
      %v1354 = vadd.f32 %v383, %v1353
      %v1355 = vpop.f32.mrb[0].mxu0
      %v1356 = vpop.f32.mrb[0].mxu0
      %v1357 = vadd.f32 %v383, %v1356
      %v1358 = vpop.f32.mrb[0].mxu0
      %1359 = vmatprep.mubr.bf16.mxu0 %v1274
      %1360 = vmatmul.mubr.bf16.gmra.mrb[0].mxu0 %v1231
      %v1361 = vpop.f32.mrb[0].mxu0
      %v1362 = vadd.f32 %v383, %v1361
      %v1363 = vpop.f32.mrb[0].mxu0
      %v1364 = vpop.f32.mrb[0].mxu0
      %v1365 = vadd.f32 %v383, %v1364
      %v1366 = vpop.f32.mrb[0].mxu0
      %1367 = vmatprep.mubr.bf16.mxu0 %v1277
      %1368 = vmatmul.mubr.bf16.gmra.mrb[0].mxu0 %v1233
      %v1369 = vpop.f32.mrb[0].mxu0
      %v1370 = vadd.f32 %v383, %v1369
      %v1371 = vpop.f32.mrb[0].mxu0
      %v1372 = vpop.f32.mrb[0].mxu0
      %v1373 = vadd.f32 %v383, %v1372
      %v1374 = vpop.f32.mrb[0].mxu0
      %1375 = vmatprep.mubr.bf16.mxu0 %v1280
      %1376 = vmatmul.mubr.bf16.gmra.mrb[0].mxu0 %v1235
      %v1377 = vpop.f32.mrb[0].mxu0
      %v1378 = vadd.f32 %v383, %v1377
      %v1379 = vpop.f32.mrb[0].mxu0
      %v1380 = vpop.f32.mrb[0].mxu0
      %v1381 = vadd.f32 %v383, %v1380
      %v1382 = vpop.f32.mrb[0].mxu0
      %1383 = vmatprep.mubr.bf16.mxu0 %v1283
      %1384 = vmatmul.mubr.bf16.gmra.mrb[0].mxu0 %v1237
      %v1385 = vpop.f32.mrb[0].mxu0
      %v1386 = vadd.f32 %v383, %v1385
      %v1387 = vpop.f32.mrb[0].mxu0
      %v1388 = vpop.f32.mrb[0].mxu0
      %v1389 = vadd.f32 %v383, %v1388
      %v1390 = vpop.f32.mrb[0].mxu0
      %1391 = vmatprep.mubr.bf16.mxu0 %v1286
      %1392 = vmatmul.mubr.bf16.gmra.mrb[0].mxu0 %v1239
      %v1393 = vpop.f32.mrb[0].mxu0
      %v1394 = vadd.f32 %v383, %v1393
      %v1395 = vpop.f32.mrb[0].mxu0
      %v1396 = vpop.f32.mrb[0].mxu0
      %v1397 = vadd.f32 %v383, %v1396
      %v1398 = vpop.f32.mrb[0].mxu0
      %1399 = vmatprep.mubr.bf16.mxu0 %v1289
      %1400 = vmatmul.mubr.bf16.gmra.mrb[0].mxu0 %v1241
      %v1401 = vpop.f32.mrb[0].mxu0
      %v1402 = vadd.f32 %v383, %v1401
      %v1403 = vpop.f32.mrb[0].mxu0
      %v1404 = vpop.f32.mrb[0].mxu0
      %v1405 = vadd.f32 %v383, %v1404
      %v1406 = vpop.f32.mrb[0].mxu0
      %1407 = vmatprep.mubr.bf16.mxu0 %v1292
      %1408 = vmatmul.mubr.bf16.gmra.mrb[0].mxu0 %v1243
      %v1409 = vpop.f32.mrb[0].mxu0
      %v1410 = vadd.f32 %v383, %v1409
      %v1411 = vpop.f32.mrb[0].mxu0
      %v1412 = vpop.f32.mrb[0].mxu0
      %v1413 = vadd.f32 %v383, %v1412
      %v1414 = vpop.f32.mrb[0].mxu0
      %1415 = vmatprep.mubr.bf16.mxu0 %v1295
      %1416 = vmatmul.mubr.bf16.gmra.mrb[0].mxu0 %v1245
      %v1417 = vpop.f32.mrb[0].mxu0
      %v1418 = vadd.f32 %v383, %v1417
      %v1419 = vpop.f32.mrb[0].mxu0
      %v1420 = vpop.f32.mrb[0].mxu0
      %v1421 = vadd.f32 %v383, %v1420
      %v1422 = vpop.f32.mrb[0].mxu0
      %1423 = vmatprep.mubr.bf16.mxu0 %v1298
      %1424 = vmatmul.mubr.bf16.gmra.mrb[0].mxu0 %v1247
      %v1425 = vpop.f32.mrb[0].mxu0
      %v1426 = vadd.f32 %v383, %v1425
      %v1427 = vpop.f32.mrb[0].mxu0
      %v1428 = vpop.f32.mrb[0].mxu0
      %v1429 = vadd.f32 %v383, %v1428
      %v1430 = vpop.f32.mrb[0].mxu0
      %1431 = vmatprep.mubr.bf16.mxu0 %v1301
      %1432 = vmatmul.mubr.bf16.gmra.mrb[0].mxu0 %v1249
      %v1433 = vpop.f32.mrb[0].mxu0
      %v1434 = vadd.f32 %v383, %v1433
      %v1435 = vpop.f32.mrb[0].mxu0
      %v1436 = vpop.f32.mrb[0].mxu0
      %v1437 = vpop.f32.mrb[0].mxu0
      %1438 = vdwg.mxu0
      %v1439 = vmax.f32 %v1338, 0.0
      %v1440 = vmax.f32 %v1341, 0.0
      %v1441 = vmax.f32 %v1346, 0.0
      %v1442 = vmax.f32 %v1349, 0.0
      %v1443 = vmax.f32 %v1354, 0.0
      %v1444 = vmax.f32 %v1357, 0.0
      %v1445 = vmax.f32 %v1362, 0.0
      %v1446 = vmax.f32 %v1365, 0.0
      %v1447 = vmax.f32 %v1370, 0.0
      %v1448 = vmax.f32 %v1373, 0.0
      %v1449 = vmax.f32 %v1378, 0.0
      %v1450 = vmax.f32 %v1381, 0.0
      %v1451 = vmax.f32 %v1386, 0.0
      %v1452 = vmax.f32 %v1389, 0.0
      %v1453 = vmax.f32 %v1394, 0.0
      %v1454 = vmax.f32 %v1397, 0.0
      %v1455 = vmax.f32 %v1402, 0.0
      %v1456 = vmax.f32 %v1405, 0.0
      %v1457 = vmax.f32 %v1410, 0.0
      %v1458 = vmax.f32 %v1413, 0.0
      %v1459 = vmax.f32 %v1418, 0.0
      %v1460 = vmax.f32 %v1421, 0.0
      %v1461 = vmax.f32 %v1426, 0.0
      %v1462 = vmax.f32 %v1429, 0.0
      %v1463 = vmax.f32 %v1434, 0.0
      %v1464 = vadd.f32 %v1100, %v1439
      %v1465 = vadd.f32 %v1101, %v1440
      %v1466 = vadd.f32 %v1102, %v1441
      %v1467 = vadd.f32 %v1103, %v1442
      %v1468 = vadd.f32 %v1104, %v1443
      %v1469 = vadd.f32 %v1105, %v1444
      %v1470 = vadd.f32 %v1106, %v1445
      %v1471 = vadd.f32 %v1107, %v1446
      %v1472 = vadd.f32 %v1108, %v1447
      %v1473 = vadd.f32 %v1109, %v1448
      %v1474 = vadd.f32 %v1110, %v1449
      %v1475 = vadd.f32 %v1111, %v1450
      %v1476 = vadd.f32 %v1112, %v1451
      %v1477 = vadd.f32 %v1113, %v1452
      %v1478 = vadd.f32 %v1114, %v1453
      %v1479 = vadd.f32 %v1115, %v1454
      %v1480 = vadd.f32 %v1116, %v1455
      %v1481 = vadd.f32 %v1117, %v1456
      %v1482 = vadd.f32 %v1118, %v1457
      %v1483 = vadd.f32 %v1119, %v1458
      %v1484 = vadd.f32 %v1120, %v1459
      %v1485 = vadd.f32 %v1121, %v1460
      %v1486 = vadd.f32 %v1122, %v1461
      %v1487 = vadd.f32 %v1123, %v1462
      %v1488 = vadd.f32 %v1124, %v1463
      %v1489 = vld [vmem:[%s325] sm:$0xff]
      %v1490 = vld [vmem:[%s325 + $0x8] sm:$0xff]
      %v1491 = vld [vmem:[%s325 + $0x10] sm:$0xff]
      %v1492 = vld [vmem:[%s325 + $0x18] sm:$0xff]
      %v1493 = vld [vmem:[%s325 + $0x20] sm:$0xff]
      %v1494 = vld [vmem:[%s325 + $0x28] sm:$0xff]
      %v1495 = vld [vmem:[%s325 + $0x30] sm:$0xff]
      %v1496 = vld [vmem:[%s325 + $0x38] sm:$0xff]
      %v1497 = vld [vmem:[%s325 + $0x40] sm:$0xff]
      %v1498 = vld [vmem:[%s325 + $0x48] sm:$0xff]
      %v1499 = vld [vmem:[%s325 + $0x50] sm:$0xff]
      %v1500 = vld [vmem:[%s325 + $0x58] sm:$0xff]
      %v1501 = vld [vmem:[%s325 + $0x60] sm:$0xff]
      %v1502 = vld [vmem:[%s325 + $0x68] sm:$0xff]
      %v1503 = vld [vmem:[%s325 + $0x70] sm:$0xff]
      %v1504 = vld [vmem:[%s325 + $0x78] sm:$0xff]
      %v1505 = vld [vmem:[%s325 + $0x80] sm:$0xff]
      %v1506 = vld [vmem:[%s325 + $0x88] sm:$0xff]
      %v1507 = vld [vmem:[%s325 + $0x90] sm:$0xff]
      %v1508 = vld [vmem:[%s325 + $0x98] sm:$0xff]
      %v1509 = vld [vmem:[%s325 + $0xa0] sm:$0xff]
      %v1510 = vld [vmem:[%s325 + $0xa8] sm:$0xff]
      %v1511 = vld [vmem:[%s325 + $0xb0] sm:$0xff]
      %v1512 = vld [vmem:[%s325 + $0xb8] sm:$0xff]
      %v1513 = vld [vmem:[%s325 + $0xc0] sm:$0xff]
      %v1539 = vunpack.c.l.b16 %v1489
      %v1540 = vunpack.c.h.b16 %v1489
      %v1541 = vunpack.c.l.b16 %v1490
      %v1542 = vunpack.c.h.b16 %v1490
      %v1543 = vunpack.c.l.b16 %v1491
      %v1544 = vunpack.c.h.b16 %v1491
      %v1545 = vunpack.c.l.b16 %v1492
      %v1546 = vunpack.c.h.b16 %v1492
      %v1547 = vunpack.c.l.b16 %v1493
      %v1548 = vunpack.c.h.b16 %v1493
      %v1549 = vunpack.c.l.b16 %v1494
      %v1550 = vunpack.c.h.b16 %v1494
      %v1551 = vunpack.c.l.b16 %v1495
      %v1552 = vunpack.c.h.b16 %v1495
      %v1553 = vunpack.c.l.b16 %v1496
      %v1554 = vunpack.c.h.b16 %v1496
      %v1555 = vunpack.c.l.b16 %v1497
      %v1556 = vunpack.c.h.b16 %v1497
      %v1557 = vunpack.c.l.b16 %v1498
      %v1558 = vunpack.c.h.b16 %v1498
      %v1559 = vunpack.c.l.b16 %v1499
      %v1560 = vunpack.c.h.b16 %v1499
      %v1561 = vunpack.c.l.b16 %v1500
      %v1562 = vunpack.c.h.b16 %v1500
      %v1563 = vunpack.c.l.b16 %v1501
      %v1564 = vunpack.c.h.b16 %v1501
      %v1565 = vunpack.c.l.b16 %v1502
      %v1566 = vunpack.c.h.b16 %v1502
      %v1567 = vunpack.c.l.b16 %v1503
      %v1568 = vunpack.c.h.b16 %v1503
      %v1569 = vunpack.c.l.b16 %v1504
      %v1570 = vunpack.c.h.b16 %v1504
      %v1571 = vunpack.c.l.b16 %v1505
      %v1572 = vunpack.c.h.b16 %v1505
      %v1573 = vunpack.c.l.b16 %v1506
      %v1574 = vunpack.c.h.b16 %v1506
      %v1575 = vunpack.c.l.b16 %v1507
      %v1576 = vunpack.c.h.b16 %v1507
      %v1577 = vunpack.c.l.b16 %v1508
      %v1578 = vunpack.c.h.b16 %v1508
      %v1579 = vunpack.c.l.b16 %v1509
      %v1580 = vunpack.c.h.b16 %v1509
      %v1581 = vunpack.c.l.b16 %v1510
      %v1582 = vunpack.c.h.b16 %v1510
      %v1583 = vunpack.c.l.b16 %v1511
      %v1584 = vunpack.c.h.b16 %v1511
      %v1585 = vunpack.c.l.b16 %v1512
      %v1586 = vunpack.c.h.b16 %v1512
      %v1587 = vunpack.c.l.b16 %v1513
      %v1588 = vunpack.c.h.b16 %v1513
      %v1589 = vpack.c.b16 %v1541, %v1539
      %v1590 = vpack.c.b16 %v1542, %v1540
      %v1591 = vpack.c.b16 %v1545, %v1543
      %v1592 = vpack.c.b16 %v1546, %v1544
      %v1593 = vpack.c.b16 %v1549, %v1547
      %v1594 = vpack.c.b16 %v1550, %v1548
      %v1595 = vpack.c.b16 %v1553, %v1551
      %v1596 = vpack.c.b16 %v1554, %v1552
      %v1597 = vpack.c.b16 %v1557, %v1555
      %v1598 = vpack.c.b16 %v1558, %v1556
      %v1599 = vpack.c.b16 %v1561, %v1559
      %v1600 = vpack.c.b16 %v1562, %v1560
      %v1601 = vpack.c.b16 %v1565, %v1563
      %v1602 = vpack.c.b16 %v1566, %v1564
      %v1603 = vpack.c.b16 %v1569, %v1567
      %v1604 = vpack.c.b16 %v1570, %v1568
      %v1605 = vpack.c.b16 %v1573, %v1571
      %v1606 = vpack.c.b16 %v1574, %v1572
      %v1607 = vpack.c.b16 %v1577, %v1575
      %v1608 = vpack.c.b16 %v1578, %v1576
      %v1609 = vpack.c.b16 %v1581, %v1579
      %v1610 = vpack.c.b16 %v1582, %v1580
      %v1611 = vpack.c.b16 %v1585, %v1583
      %v1612 = vpack.c.b16 %v1586, %v1584
      %v1613 = vpack.c.b16 %v1587, %v1587
      %v1614 = vpack.c.b16 %v1588, %v1588
      %v1629 = vsel %vm556, %v1590, 0
      %v1632 = vsel %vm556, %v1592, 0
      %v1635 = vsel %vm556, %v1594, 0
      %v1638 = vsel %vm556, %v1596, 0
      %v1641 = vsel %vm556, %v1598, 0
      %v1644 = vsel %vm556, %v1600, 0
      %v1647 = vsel %vm556, %v1602, 0
      %v1650 = vsel %vm556, %v1604, 0
      %v1653 = vsel %vm556, %v1606, 0
      %v1656 = vsel %vm556, %v1608, 0
      %v1659 = vsel %vm556, %v1610, 0
      %v1662 = vsel %vm556, %v1612, 0
      %v1665 = vsel %vm556, %v1614, 0
      %1667 = vmatprep.subr.bf16.mxu0 0
      %1668 = vmatpush1.bf16.msra.mxu0 %v537
      %1669 = vmatprep.subr.bf16.mxu0 0
      %1670 = vmatpush1.bf16.msra.mxu0 %v538
      %1671 = vmatprep.subr.bf16.mxu0 0
      %1672 = vmatpush1.bf16.msra.mxu0 %v539
      %1673 = vmatprep.subr.bf16.mxu0 0
      %1674 = vmatpush1.bf16.msra.mxu0 %v540
      %1675 = vmatprep.subr.bf16.mxu0 0
      %1676 = vmatpush1.bf16.msra.mxu0 %v541
      %1677 = vmatprep.subr.bf16.mxu0 0
      %1678 = vmatpush1.bf16.msra.mxu0 %v542
      %1679 = vmatprep.subr.bf16.mxu0 0
      %1680 = vmatpush1.bf16.msra.mxu0 %v543
      %1681 = vmatprep.subr.bf16.mxu0 0
      %1682 = vmatpush1.bf16.msra.mxu0 %v544
      %1683 = vmatprep.subr.bf16.mxu0 0
      %1684 = vmatpush1.bf16.msra.mxu0 %v545
      %1685 = vmatprep.subr.bf16.mxu0 0
      %1686 = vmatpush1.bf16.msra.mxu0 %v598
      %1687 = vmatprep.subr.bf16.mxu0 0
      %1688 = vmatpush1.bf16.msra.mxu0 0
      %1689 = vmatprep.subr.bf16.mxu0 0
      %1690 = vmatpush1.bf16.msra.mxu0 0
      %1691 = vmatprep.subr.bf16.mxu0 0
      %1692 = vmatpush1.bf16.msra.mxu0 0
      %1693 = vmatprep.subr.bf16.mxu0 0
      %1694 = vmatpush1.bf16.msra.mxu0 0
      %1695 = vmatprep.subr.bf16.mxu0 0
      %1696 = vmatpush1.bf16.msra.mxu0 0
      %1697 = vmatprep.subr.bf16.mxu0 0
      %1698 = vmatpush1.bf16.msra.mxu0 0
      %1699 = vmatprep.mubr.bf16.mxu0 %v1629
      %1700 = vmatmul.mubr.bf16.gmra.mrb[0].mxu0 %v1589
      %v1701 = vpop.f32.mrb[0].mxu0
      %v1702 = vadd.f32 %v383, %v1701
      %v1703 = vpop.f32.mrb[0].mxu0
      %v1704 = vpop.f32.mrb[0].mxu0
      %v1705 = vadd.f32 %v383, %v1704
      %v1706 = vpop.f32.mrb[0].mxu0
      %1707 = vmatprep.mubr.bf16.mxu0 %v1632
      %1708 = vmatmul.mubr.bf16.gmra.mrb[0].mxu0 %v1591
      %v1709 = vpop.f32.mrb[0].mxu0
      %v1710 = vadd.f32 %v383, %v1709
      %v1711 = vpop.f32.mrb[0].mxu0
      %v1712 = vpop.f32.mrb[0].mxu0
      %v1713 = vadd.f32 %v383, %v1712
      %v1714 = vpop.f32.mrb[0].mxu0
      %1715 = vmatprep.mubr.bf16.mxu0 %v1635
      %1716 = vmatmul.mubr.bf16.gmra.mrb[0].mxu0 %v1593
      %v1717 = vpop.f32.mrb[0].mxu0
      %v1718 = vadd.f32 %v383, %v1717
      %v1719 = vpop.f32.mrb[0].mxu0
      %v1720 = vpop.f32.mrb[0].mxu0
      %v1721 = vadd.f32 %v383, %v1720
      %v1722 = vpop.f32.mrb[0].mxu0
      %1723 = vmatprep.mubr.bf16.mxu0 %v1638
      %1724 = vmatmul.mubr.bf16.gmra.mrb[0].mxu0 %v1595
      %v1725 = vpop.f32.mrb[0].mxu0
      %v1726 = vadd.f32 %v383, %v1725
      %v1727 = vpop.f32.mrb[0].mxu0
      %v1728 = vpop.f32.mrb[0].mxu0
      %v1729 = vadd.f32 %v383, %v1728
      %v1730 = vpop.f32.mrb[0].mxu0
      %1731 = vmatprep.mubr.bf16.mxu0 %v1641
      %1732 = vmatmul.mubr.bf16.gmra.mrb[0].mxu0 %v1597
      %v1733 = vpop.f32.mrb[0].mxu0
      %v1734 = vadd.f32 %v383, %v1733
      %v1735 = vpop.f32.mrb[0].mxu0
      %v1736 = vpop.f32.mrb[0].mxu0
      %v1737 = vadd.f32 %v383, %v1736
      %v1738 = vpop.f32.mrb[0].mxu0
      %1739 = vmatprep.mubr.bf16.mxu0 %v1644
      %1740 = vmatmul.mubr.bf16.gmra.mrb[0].mxu0 %v1599
      %v1741 = vpop.f32.mrb[0].mxu0
      %v1742 = vadd.f32 %v383, %v1741
      %v1743 = vpop.f32.mrb[0].mxu0
      %v1744 = vpop.f32.mrb[0].mxu0
      %v1745 = vadd.f32 %v383, %v1744
      %v1746 = vpop.f32.mrb[0].mxu0
      %1747 = vmatprep.mubr.bf16.mxu0 %v1647
      %1748 = vmatmul.mubr.bf16.gmra.mrb[0].mxu0 %v1601
      %v1749 = vpop.f32.mrb[0].mxu0
      %v1750 = vadd.f32 %v383, %v1749
      %v1751 = vpop.f32.mrb[0].mxu0
      %v1752 = vpop.f32.mrb[0].mxu0
      %v1753 = vadd.f32 %v383, %v1752
      %v1754 = vpop.f32.mrb[0].mxu0
      %1755 = vmatprep.mubr.bf16.mxu0 %v1650
      %1756 = vmatmul.mubr.bf16.gmra.mrb[0].mxu0 %v1603
      %v1757 = vpop.f32.mrb[0].mxu0
      %v1758 = vadd.f32 %v383, %v1757
      %v1759 = vpop.f32.mrb[0].mxu0
      %v1760 = vpop.f32.mrb[0].mxu0
      %v1761 = vadd.f32 %v383, %v1760
      %v1762 = vpop.f32.mrb[0].mxu0
      %1763 = vmatprep.mubr.bf16.mxu0 %v1653
      %1764 = vmatmul.mubr.bf16.gmra.mrb[0].mxu0 %v1605
      %v1765 = vpop.f32.mrb[0].mxu0
      %v1766 = vadd.f32 %v383, %v1765
      %v1767 = vpop.f32.mrb[0].mxu0
      %v1768 = vpop.f32.mrb[0].mxu0
      %v1769 = vadd.f32 %v383, %v1768
      %v1770 = vpop.f32.mrb[0].mxu0
      %1771 = vmatprep.mubr.bf16.mxu0 %v1656
      %1772 = vmatmul.mubr.bf16.gmra.mrb[0].mxu0 %v1607
      %v1773 = vpop.f32.mrb[0].mxu0
      %v1774 = vadd.f32 %v383, %v1773
      %v1775 = vpop.f32.mrb[0].mxu0
      %v1776 = vpop.f32.mrb[0].mxu0
      %v1777 = vadd.f32 %v383, %v1776
      %v1778 = vpop.f32.mrb[0].mxu0
      %1779 = vmatprep.mubr.bf16.mxu0 %v1659
      %1780 = vmatmul.mubr.bf16.gmra.mrb[0].mxu0 %v1609
      %v1781 = vpop.f32.mrb[0].mxu0
      %v1782 = vadd.f32 %v383, %v1781
      %v1783 = vpop.f32.mrb[0].mxu0
      %v1784 = vpop.f32.mrb[0].mxu0
      %v1785 = vadd.f32 %v383, %v1784
      %v1786 = vpop.f32.mrb[0].mxu0
      %1787 = vmatprep.mubr.bf16.mxu0 %v1662
      %1788 = vmatmul.mubr.bf16.gmra.mrb[0].mxu0 %v1611
      %v1789 = vpop.f32.mrb[0].mxu0
      %v1790 = vadd.f32 %v383, %v1789
      %v1791 = vpop.f32.mrb[0].mxu0
      %v1792 = vpop.f32.mrb[0].mxu0
      %v1793 = vadd.f32 %v383, %v1792
      %v1794 = vpop.f32.mrb[0].mxu0
      %1795 = vmatprep.mubr.bf16.mxu0 %v1665
      %1796 = vmatmul.mubr.bf16.gmra.mrb[0].mxu0 %v1613
      %v1797 = vpop.f32.mrb[0].mxu0
      %v1798 = vadd.f32 %v383, %v1797
      %v1799 = vpop.f32.mrb[0].mxu0
      %v1800 = vpop.f32.mrb[0].mxu0
      %v1801 = vpop.f32.mrb[0].mxu0
      %1802 = vdwg.mxu0
      %v1803 = vmax.f32 %v1702, 0.0
      %v1804 = vmax.f32 %v1705, 0.0
      %v1805 = vmax.f32 %v1710, 0.0
      %v1806 = vmax.f32 %v1713, 0.0
      %v1807 = vmax.f32 %v1718, 0.0
      %v1808 = vmax.f32 %v1721, 0.0
      %v1809 = vmax.f32 %v1726, 0.0
      %v1810 = vmax.f32 %v1729, 0.0
      %v1811 = vmax.f32 %v1734, 0.0
      %v1812 = vmax.f32 %v1737, 0.0
      %v1813 = vmax.f32 %v1742, 0.0
      %v1814 = vmax.f32 %v1745, 0.0
      %v1815 = vmax.f32 %v1750, 0.0
      %v1816 = vmax.f32 %v1753, 0.0
      %v1817 = vmax.f32 %v1758, 0.0
      %v1818 = vmax.f32 %v1761, 0.0
      %v1819 = vmax.f32 %v1766, 0.0
      %v1820 = vmax.f32 %v1769, 0.0
      %v1821 = vmax.f32 %v1774, 0.0
      %v1822 = vmax.f32 %v1777, 0.0
      %v1823 = vmax.f32 %v1782, 0.0
      %v1824 = vmax.f32 %v1785, 0.0
      %v1825 = vmax.f32 %v1790, 0.0
      %v1826 = vmax.f32 %v1793, 0.0
      %v1827 = vmax.f32 %v1798, 0.0
      %v1828 = vadd.f32 %v1464, %v1803
      %v1829 = vadd.f32 %v1465, %v1804
      %v1830 = vadd.f32 %v1466, %v1805
      %v1831 = vadd.f32 %v1467, %v1806
      %v1832 = vadd.f32 %v1468, %v1807
      %v1833 = vadd.f32 %v1469, %v1808
      %v1834 = vadd.f32 %v1470, %v1809
      %v1835 = vadd.f32 %v1471, %v1810
      %v1836 = vadd.f32 %v1472, %v1811
      %v1837 = vadd.f32 %v1473, %v1812
      %v1838 = vadd.f32 %v1474, %v1813
      %v1839 = vadd.f32 %v1475, %v1814
      %v1840 = vadd.f32 %v1476, %v1815
      %v1841 = vadd.f32 %v1477, %v1816
      %v1842 = vadd.f32 %v1478, %v1817
      %v1843 = vadd.f32 %v1479, %v1818
      %v1844 = vadd.f32 %v1480, %v1819
      %v1845 = vadd.f32 %v1481, %v1820
      %v1846 = vadd.f32 %v1482, %v1821
      %v1847 = vadd.f32 %v1483, %v1822
      %v1848 = vadd.f32 %v1484, %v1823
      %v1849 = vadd.f32 %v1485, %v1824
      %v1850 = vadd.f32 %v1486, %v1825
      %v1851 = vadd.f32 %v1487, %v1826
      %v1852 = vadd.f32 %v1488, %v1827
      %v1853 = vmul.f32 %v1828, 0.25
      %v1854 = vmul.f32 %v1829, 0.25
      %v1855 = vmul.f32 %v1830, 0.25
      %v1856 = vmul.f32 %v1831, 0.25
      %v1857 = vmul.f32 %v1832, 0.25
      %v1858 = vmul.f32 %v1833, 0.25
      %v1859 = vmul.f32 %v1834, 0.25
      %v1860 = vmul.f32 %v1835, 0.25
      %v1861 = vmul.f32 %v1836, 0.25
      %v1862 = vmul.f32 %v1837, 0.25
      %v1863 = vmul.f32 %v1838, 0.25
      %v1864 = vmul.f32 %v1839, 0.25
      %v1865 = vmul.f32 %v1840, 0.25
      %v1866 = vmul.f32 %v1841, 0.25
      %v1867 = vmul.f32 %v1842, 0.25
      %v1868 = vmul.f32 %v1843, 0.25
      %v1869 = vmul.f32 %v1844, 0.25
      %v1870 = vmul.f32 %v1845, 0.25
      %v1871 = vmul.f32 %v1846, 0.25
      %v1872 = vmul.f32 %v1847, 0.25
      %v1873 = vmul.f32 %v1848, 0.25
      %v1874 = vmul.f32 %v1849, 0.25
      %v1875 = vmul.f32 %v1850, 0.25
      %v1876 = vmul.f32 %v1851, 0.25
      %v1877 = vmul.f32 %v1852, 0.25
      %v1878 = vpack.c.bf16 %v1854, %v1853
      %v1879 = vpack.c.bf16 %v1856, %v1855
      %v1880 = vpack.c.bf16 %v1858, %v1857
      %v1881 = vpack.c.bf16 %v1860, %v1859
      %v1882 = vpack.c.bf16 %v1862, %v1861
      %v1883 = vpack.c.bf16 %v1864, %v1863
      %v1884 = vpack.c.bf16 %v1866, %v1865
      %v1885 = vpack.c.bf16 %v1868, %v1867
      %v1886 = vpack.c.bf16 %v1870, %v1869
      %v1887 = vpack.c.bf16 %v1872, %v1871
      %v1888 = vpack.c.bf16 %v1874, %v1873
      %v1889 = vpack.c.bf16 %v1876, %v1875
      %v1890 = vpack.c.bf16 %v1877, %v1877
      %v1904 = vunpack.c.l.b16 %v1878
      %v1905 = vunpack.c.h.b16 %v1878
      %v1906 = vunpack.c.l.b16 %v1879
      %v1907 = vunpack.c.h.b16 %v1879
      %v1908 = vunpack.c.l.b16 %v1880
      %v1909 = vunpack.c.h.b16 %v1880
      %v1910 = vunpack.c.l.b16 %v1881
      %v1911 = vunpack.c.h.b16 %v1881
      %v1912 = vunpack.c.l.b16 %v1882
      %v1913 = vunpack.c.h.b16 %v1882
      %v1914 = vunpack.c.l.b16 %v1883
      %v1915 = vunpack.c.h.b16 %v1883
      %v1916 = vunpack.c.l.b16 %v1884
      %v1917 = vunpack.c.h.b16 %v1884
      %v1918 = vunpack.c.l.b16 %v1885
      %v1919 = vunpack.c.h.b16 %v1885
      %v1920 = vunpack.c.l.b16 %v1886
      %v1921 = vunpack.c.h.b16 %v1886
      %v1922 = vunpack.c.l.b16 %v1887
      %v1923 = vunpack.c.h.b16 %v1887
      %v1924 = vunpack.c.l.b16 %v1888
      %v1925 = vunpack.c.h.b16 %v1888
      %v1926 = vunpack.c.l.b16 %v1889
      %v1927 = vunpack.c.h.b16 %v1889
      %v1928 = vunpack.c.l.b16 %v1890
      %v1929 = vpack.c.b16 %v1904, %v1904
      %v1930 = vpack.c.b16 %v1905, %v1905
      %v1931 = vpack.c.b16 %v1906, %v1906
      %v1932 = vpack.c.b16 %v1907, %v1907
      %v1933 = vpack.c.b16 %v1908, %v1908
      %v1934 = vpack.c.b16 %v1909, %v1909
      %v1935 = vpack.c.b16 %v1910, %v1910
      %v1936 = vpack.c.b16 %v1911, %v1911
      %v1937 = vpack.c.b16 %v1912, %v1912
      %v1938 = vpack.c.b16 %v1913, %v1913
      %v1939 = vpack.c.b16 %v1914, %v1914
      %v1940 = vpack.c.b16 %v1915, %v1915
      %v1941 = vpack.c.b16 %v1916, %v1916
      %v1942 = vpack.c.b16 %v1917, %v1917
      %v1943 = vpack.c.b16 %v1918, %v1918
      %v1944 = vpack.c.b16 %v1919, %v1919
      %v1945 = vpack.c.b16 %v1920, %v1920
      %v1946 = vpack.c.b16 %v1921, %v1921
      %v1947 = vpack.c.b16 %v1922, %v1922
      %v1948 = vpack.c.b16 %v1923, %v1923
      %v1949 = vpack.c.b16 %v1924, %v1924
      %v1950 = vpack.c.b16 %v1925, %v1925
      %v1951 = vpack.c.b16 %v1926, %v1926
      %v1952 = vpack.c.b16 %v1927, %v1927
      %v1953 = vpack.c.b16 %v1928, %v1928
      %1979 = vst [vmem:[%s331] sm:$0xf] %v1929
      %1980 = vst [vmem:[%s331 + $0x4] sm:$0xf] %v1930
      %1981 = vst [vmem:[%s331 + $0x8] sm:$0xf] %v1931
      %1982 = vst [vmem:[%s331 + $0xc] sm:$0xf] %v1932
      %1983 = vst [vmem:[%s331 + $0x10] sm:$0xf] %v1933
      %1984 = vst [vmem:[%s331 + $0x14] sm:$0xf] %v1934
      %1985 = vst [vmem:[%s331 + $0x18] sm:$0xf] %v1935
      %1986 = vst [vmem:[%s331 + $0x1c] sm:$0xf] %v1936
      %1987 = vst [vmem:[%s331 + $0x20] sm:$0xf] %v1937
      %1988 = vst [vmem:[%s331 + $0x24] sm:$0xf] %v1938
      %1989 = vst [vmem:[%s331 + $0x28] sm:$0xf] %v1939
      %1990 = vst [vmem:[%s331 + $0x2c] sm:$0xf] %v1940
      %1991 = vst [vmem:[%s331 + $0x30] sm:$0xf] %v1941
      %1992 = vst [vmem:[%s331 + $0x34] sm:$0xf] %v1942
      %1993 = vst [vmem:[%s331 + $0x38] sm:$0xf] %v1943
      %1994 = vst [vmem:[%s331 + $0x3c] sm:$0xf] %v1944
      %1995 = vst [vmem:[%s331 + $0x40] sm:$0xf] %v1945
      %1996 = vst [vmem:[%s331 + $0x44] sm:$0xf] %v1946
      %1997 = vst [vmem:[%s331 + $0x48] sm:$0xf] %v1947
      %1998 = vst [vmem:[%s331 + $0x4c] sm:$0xf] %v1948
      %1999 = vst [vmem:[%s331 + $0x50] sm:$0xf] %v1949
      %2000 = vst [vmem:[%s331 + $0x54] sm:$0xf] %v1950
      %2001 = vst [vmem:[%s331 + $0x58] sm:$0xf] %v1951
      %2002 = vst [vmem:[%s331 + $0x5c] sm:$0xf] %v1952
      %2003 = vst [vmem:[%s331 + $0x60] sm:$0xf] %v1953
      %s2004 = smul.u32 25, %s17
      %p2005 = scmp.lt.s32.totalorder %s2004, 49
      %s2006 = scalar_select %p2005, %s2004, 49
      %s2007 = smul.addr %s2006, 4
      %s2008 = scalar_lea.vmem %s6, %s2007
      // Predicated region
      $region45: #{lenet5_forward.4} parent=43 // pred_check
        %p2009 = pneg %p181
      $region46: #{lenet5_forward.4} parent=43 // pred_check_branch
        %2011 = sbr.rel (%p2009) target = $region48
      $region47: #{lenet5_forward.4} parent=43 // pred_region
        %s2012 = smul.u32 25, %s17
      $region48: #{lenet5_forward.4} parent=43 // pred_fallthru
        _
    $region44: #{lenet5_forward.4} parent=5 // pred_fallthru
      _
    %p2013 = scmp.le.s32.totalorder 2, %s12
    // Predicated region
    $region49: #{lenet5_forward.4} parent=5 // pred_check
      %p2014 = pneg %p2013
    $region50: #{lenet5_forward.4} parent=5 // pred_check_branch
      %2016 = sbr.rel (%p2014) target = $region52
    $region51: #{lenet5_forward.4} parent=5 // pred_region
      %s2017 = ssub.s32 %s12, 2
      // Predicated region
      $region53: #{lenet5_forward.4} parent=51 // pred_check
        %p2018 = pneg %p187
      $region54: #{lenet5_forward.4} parent=51 // pred_check_branch
        %2020 = sbr.rel (%p2018) target = $region56
      $region55: #{lenet5_forward.4} parent=51 // pred_region
        %s2021 = smul.u32 25, %s18
        %p2022 = scmp.lt.s32.totalorder %s2021, 49
        %s2023 = scalar_select %p2022, %s2021, 49
        %s2024 = smul.addr %s2023, 4
        %s2025 = scalar_lea.vmem %s6, %s2024
      $region56: #{lenet5_forward.4} parent=51 // pred_fallthru
        _
    $region52: #{lenet5_forward.4} parent=5 // pred_fallthru
      _
  $region6: #{lenet5_forward.4} parent=0 // loop_footer
    %s16 = sadd.s32 1, %s12
  $region7: #{lenet5_forward.4} parent=0 // loop_footer_branch
    %11 = sbr.rel target = $region3
  $region8: #{lenet5_forward.4} parent=0 // loop_exit
    _

// kernel: lenet5_forward.5
$region0: #{lenet5_forward.5}
  #allocation0 [shape = 'u32[]', space=smem, size = 0x4, offset = 0x4, fixed_abs, tag = 'smem constant byte address 0x4 - core index']
  #allocation1 [shape = 'u32[144,128]{1,0:T(1,128)}', space=vmem, size = 0x12000, scoped, tag = 'internal scratch']
  %s0 = inlined_call_operand.vmem [shape: bf16[16,512], index: 0, kind: input, shape index: {}]
  %s1 = inlined_call_operand.vmem [shape: bf16[512,128], index: 1, kind: input, shape index: {}]
  %s2 = inlined_call_operand.vmem [shape: f32[1,128], index: 2, kind: input, shape index: {}]
  %s3 = inlined_call_operand.vmem [shape: bf16[128,128], index: 3, kind: input, shape index: {}]
  %s4 = inlined_call_operand.vmem [shape: f32[1,128], index: 4, kind: input, shape index: {}]
  %s5 = inlined_call_operand.vmem [shape: bf16[128,128], index: 5, kind: input, shape index: {}]
  %s6 = inlined_call_operand.vmem [shape: f32[1,128], index: 6, kind: input, shape index: {}]
  %s7 = inlined_call_operand.vmem [shape: f32[16,128], index: 7, kind: output, shape index: {}]
  %s8 = sld [smem:[#allocation0]]
  $region61: #{lenet5_forward.5} parent=0
    _
  %s10 = ssub.s32 1, %s8
  %s11 = scalar_select 0, %s10, %s8
  loop: start=0, step=1, limit=4
  $region2: #{lenet5_forward.5} parent=0 // loop_pre_header
    _
  $region3: #{lenet5_forward.5} parent=0 // loop_header
    %s13 = sphi 0, %s17
    %p14 = scmp.ge.s32.totalorder %s13, 4
    %s23 = sphi 0, %s25
    %s26 = sphi 0, %s23
    %s27 = sphi 0, %s26
    %s43 = sphi 0, %s27
    %s47 = sphi 0, %s47
    %s49 = sphi 0, %s47
    %s50 = sphi 0, %s49
    %s64 = sphi 0, %s50
    %s68 = sphi 0, %s68
    %s70 = sphi 0, %s68
    %s71 = sphi 0, %s70
    %s85 = sphi 0, %s71
    %s89 = sphi 0, %s89
    %s91 = sphi 0, %s89
    %s92 = sphi 0, %s91
    %s106 = sphi 0, %s92
    %s110 = sphi 0, %s110
    %s112 = sphi 0, %s110
    %s113 = sphi 0, %s112
    %s127 = sphi 0, %s113
    %s131 = sphi 0, %s131
    %s133 = sphi 0, %s131
    %s134 = sphi 0, %s133
    %s148 = sphi 0, %s134
    %s152 = sphi 0, %s152
    %s154 = sphi 0, %s152
    %s155 = sphi 0, %s154
    %s169 = sphi 0, %s155
    %s175 = sphi 0, %s177
    %s178 = sphi 0, %s175
    %s179 = sphi 0, %s178
    %s195 = sphi 0, %s179
  $region4: #{lenet5_forward.5} parent=0 // loop_header_branch
    %16 = sbr.rel (%p14) target = $region8
  $region5: #{lenet5_forward.5} parent=0 // loop_body
    %s18 = ssub.s32 %s13, 1
    %s19 = ssub.s32 %s13, 2
    %s20 = sadd.s32 %s13, 1
    %s21 = ssub.s32 %s13, %s20
    %p22 = scmp.eq.s32.totalorder %s21, 0
    %s24 = sadd.s32 %s23, 1
    %s25 = scalar_select %p22, %s23, %s24
    %p28 = pneg %p22
    %p29 = scmp.eq.s32.totalorder %s13, 1
    %p30 = por %p28, %p29
    %p31 = scmp.ne.s32.totalorder %s23, %s26
    %p32 = scmp.eq.s32.totalorder %s13, 0
    %p33 = por %p31, %p32
    %p34 = scmp.ne.s32.totalorder %s23, %s26
    %p35 = scmp.eq.s32.totalorder %s18, 1
    %p36 = por %p34, %p35
    %p37 = scmp.ne.s32.totalorder %s26, %s27
    %p38 = scmp.eq.s32.totalorder %s18, 0
    %p39 = por %p37, %p38
    %p40 = scmp.ne.s32.totalorder %s26, %s27
    %p41 = scmp.eq.s32.totalorder %s19, 1
    %p42 = por %p40, %p41
    %p44 = scmp.ne.s32.totalorder %s27, %s43
    %p45 = scmp.eq.s32.totalorder %s19, 0
    %p46 = por %p44, %p45
    %s48 = sadd.s32 %s47, 1
    %p51 = scmp.eq.s32.totalorder %s13, 1
    %p52 = scmp.ne.s32.totalorder %s47, %s49
    %p53 = scmp.eq.s32.totalorder %s13, 0
    %p54 = por %p52, %p53
    %p55 = scmp.ne.s32.totalorder %s47, %s49
    %p56 = scmp.eq.s32.totalorder %s18, 1
    %p57 = por %p55, %p56
    %p58 = scmp.ne.s32.totalorder %s49, %s50
    %p59 = scmp.eq.s32.totalorder %s18, 0
    %p60 = por %p58, %p59
    %p61 = scmp.ne.s32.totalorder %s49, %s50
    %p62 = scmp.eq.s32.totalorder %s19, 1
    %p63 = por %p61, %p62
    %p65 = scmp.ne.s32.totalorder %s50, %s64
    %p66 = scmp.eq.s32.totalorder %s19, 0
    %p67 = por %p65, %p66
    %s69 = sadd.s32 %s68, 1
    %p72 = scmp.eq.s32.totalorder %s13, 1
    %p73 = scmp.ne.s32.totalorder %s68, %s70
    %p74 = scmp.eq.s32.totalorder %s13, 0
    %p75 = por %p73, %p74
    %p76 = scmp.ne.s32.totalorder %s68, %s70
    %p77 = scmp.eq.s32.totalorder %s18, 1
    %p78 = por %p76, %p77
    %p79 = scmp.ne.s32.totalorder %s70, %s71
    %p80 = scmp.eq.s32.totalorder %s18, 0
    %p81 = por %p79, %p80
    %p82 = scmp.ne.s32.totalorder %s70, %s71
    %p83 = scmp.eq.s32.totalorder %s19, 1
    %p84 = por %p82, %p83
    %p86 = scmp.ne.s32.totalorder %s71, %s85
    %p87 = scmp.eq.s32.totalorder %s19, 0
    %p88 = por %p86, %p87
    %s90 = sadd.s32 %s89, 1
    %p93 = scmp.eq.s32.totalorder %s13, 1
    %p94 = scmp.ne.s32.totalorder %s89, %s91
    %p95 = scmp.eq.s32.totalorder %s13, 0
    %p96 = por %p94, %p95
    %p97 = scmp.ne.s32.totalorder %s89, %s91
    %p98 = scmp.eq.s32.totalorder %s18, 1
    %p99 = por %p97, %p98
    %p100 = scmp.ne.s32.totalorder %s91, %s92
    %p101 = scmp.eq.s32.totalorder %s18, 0
    %p102 = por %p100, %p101
    %p103 = scmp.ne.s32.totalorder %s91, %s92
    %p104 = scmp.eq.s32.totalorder %s19, 1
    %p105 = por %p103, %p104
    %p107 = scmp.ne.s32.totalorder %s92, %s106
    %p108 = scmp.eq.s32.totalorder %s19, 0
    %p109 = por %p107, %p108
    %s111 = sadd.s32 %s110, 1
    %p114 = scmp.eq.s32.totalorder %s13, 1
    %p115 = scmp.ne.s32.totalorder %s110, %s112
    %p116 = scmp.eq.s32.totalorder %s13, 0
    %p117 = por %p115, %p116
    %p118 = scmp.ne.s32.totalorder %s110, %s112
    %p119 = scmp.eq.s32.totalorder %s18, 1
    %p120 = por %p118, %p119
    %p121 = scmp.ne.s32.totalorder %s112, %s113
    %p122 = scmp.eq.s32.totalorder %s18, 0
    %p123 = por %p121, %p122
    %p124 = scmp.ne.s32.totalorder %s112, %s113
    %p125 = scmp.eq.s32.totalorder %s19, 1
    %p126 = por %p124, %p125
    %p128 = scmp.ne.s32.totalorder %s113, %s127
    %p129 = scmp.eq.s32.totalorder %s19, 0
    %p130 = por %p128, %p129
    %s132 = sadd.s32 %s131, 1
    %p135 = scmp.eq.s32.totalorder %s13, 1
    %p136 = scmp.ne.s32.totalorder %s131, %s133
    %p137 = scmp.eq.s32.totalorder %s13, 0
    %p138 = por %p136, %p137
    %p139 = scmp.ne.s32.totalorder %s131, %s133
    %p140 = scmp.eq.s32.totalorder %s18, 1
    %p141 = por %p139, %p140
    %p142 = scmp.ne.s32.totalorder %s133, %s134
    %p143 = scmp.eq.s32.totalorder %s18, 0
    %p144 = por %p142, %p143
    %p145 = scmp.ne.s32.totalorder %s133, %s134
    %p146 = scmp.eq.s32.totalorder %s19, 1
    %p147 = por %p145, %p146
    %p149 = scmp.ne.s32.totalorder %s134, %s148
    %p150 = scmp.eq.s32.totalorder %s19, 0
    %p151 = por %p149, %p150
    %s153 = sadd.s32 %s152, 1
    %p156 = scmp.eq.s32.totalorder %s13, 1
    %p157 = scmp.ne.s32.totalorder %s152, %s154
    %p158 = scmp.eq.s32.totalorder %s13, 0
    %p159 = por %p157, %p158
    %p160 = scmp.ne.s32.totalorder %s152, %s154
    %p161 = scmp.eq.s32.totalorder %s18, 1
    %p162 = por %p160, %p161
    %p163 = scmp.ne.s32.totalorder %s154, %s155
    %p164 = scmp.eq.s32.totalorder %s18, 0
    %p165 = por %p163, %p164
    %p166 = scmp.ne.s32.totalorder %s154, %s155
    %p167 = scmp.eq.s32.totalorder %s19, 1
    %p168 = por %p166, %p167
    %p170 = scmp.ne.s32.totalorder %s155, %s169
    %p171 = scmp.eq.s32.totalorder %s19, 0
    %p172 = por %p170, %p171
    %s173 = ssub.s32 %s13, %s20
    %p174 = scmp.eq.s32.totalorder %s173, 0
    %s176 = sadd.s32 %s175, 1
    %s177 = scalar_select %p174, %s175, %s176
    %p180 = pneg %p174
    %p181 = scmp.eq.s32.totalorder %s13, 1
    %p182 = por %p180, %p181
    %p183 = scmp.ne.s32.totalorder %s175, %s178
    %p184 = scmp.eq.s32.totalorder %s13, 0
    %p185 = por %p183, %p184
    %p186 = scmp.ne.s32.totalorder %s175, %s178
    %p187 = scmp.eq.s32.totalorder %s18, 1
    %p188 = por %p186, %p187
    %p189 = scmp.ne.s32.totalorder %s178, %s179
    %p190 = scmp.eq.s32.totalorder %s18, 0
    %p191 = por %p189, %p190
    %p192 = scmp.ne.s32.totalorder %s178, %s179
    %p193 = scmp.eq.s32.totalorder %s19, 1
    %p194 = por %p192, %p193
    %p196 = scmp.ne.s32.totalorder %s179, %s195
    %p197 = scmp.eq.s32.totalorder %s19, 0
    %p198 = por %p196, %p197
    %p199 = scmp.le.s32.totalorder 1, %s13
    %p200 = scmp.lt.s32.totalorder %s13, 3
    %p201 = pnand %p199, %p200
    %p202 = pneg %p201
    // Predicated region
    $region9: #{lenet5_forward.5} parent=5 // pred_check
      _
    $region10: #{lenet5_forward.5} parent=5 // pred_check_branch
      %204 = sbr.rel (%p201) target = $region12
    $region11: #{lenet5_forward.5} parent=5 // pred_region
      %s205 = ssub.s32 %s13, 1
      // Predicated region
      $region13: #{lenet5_forward.5} parent=11 // pred_check
        %p206 = pneg %p60
      $region14: #{lenet5_forward.5} parent=11 // pred_check_branch
        %208 = sbr.rel (%p206) target = $region16
      $region15: #{lenet5_forward.5} parent=11 // pred_region
        _
      $region16: #{lenet5_forward.5} parent=11 // pred_fallthru
        _
      // Predicated region
      $region17: #{lenet5_forward.5} parent=11 // pred_check
        %p209 = pneg %p81
      $region18: #{lenet5_forward.5} parent=11 // pred_check_branch
        %211 = sbr.rel (%p209) target = $region20
      $region19: #{lenet5_forward.5} parent=11 // pred_region
        _
      $region20: #{lenet5_forward.5} parent=11 // pred_fallthru
        _
      // Predicated region
      $region21: #{lenet5_forward.5} parent=11 // pred_check
        %p212 = pneg %p102
      $region22: #{lenet5_forward.5} parent=11 // pred_check_branch
        %214 = sbr.rel (%p212) target = $region24
      $region23: #{lenet5_forward.5} parent=11 // pred_region
        _
      $region24: #{lenet5_forward.5} parent=11 // pred_fallthru
        _
      // Predicated region
      $region25: #{lenet5_forward.5} parent=11 // pred_check
        %p215 = pneg %p123
      $region26: #{lenet5_forward.5} parent=11 // pred_check_branch
        %217 = sbr.rel (%p215) target = $region28
      $region27: #{lenet5_forward.5} parent=11 // pred_region
        _
      $region28: #{lenet5_forward.5} parent=11 // pred_fallthru
        _
      // Predicated region
      $region29: #{lenet5_forward.5} parent=11 // pred_check
        %p218 = pneg %p144
      $region30: #{lenet5_forward.5} parent=11 // pred_check_branch
        %220 = sbr.rel (%p218) target = $region32
      $region31: #{lenet5_forward.5} parent=11 // pred_region
        _
      $region32: #{lenet5_forward.5} parent=11 // pred_fallthru
        _
      // Predicated region
      $region33: #{lenet5_forward.5} parent=11 // pred_check
        %p221 = pneg %p165
      $region34: #{lenet5_forward.5} parent=11 // pred_check_branch
        %223 = sbr.rel (%p221) target = $region36
      $region35: #{lenet5_forward.5} parent=11 // pred_region
        _
      $region36: #{lenet5_forward.5} parent=11 // pred_fallthru
        _
    $region12: #{lenet5_forward.5} parent=5 // pred_fallthru
      _
    %p224 = scmp.lt.s32.totalorder %s13, 2
    // Predicated region
    $region37: #{lenet5_forward.5} parent=5 // pred_check
      %p225 = pneg %p224
    $region38: #{lenet5_forward.5} parent=5 // pred_check_branch
      %227 = sbr.rel (%p225) target = $region40
    $region39: #{lenet5_forward.5} parent=5 // pred_region
      // Predicated region
      $region41: #{lenet5_forward.5} parent=39 // pred_check
        %p228 = pneg %p33
      $region42: #{lenet5_forward.5} parent=39 // pred_check_branch
        %230 = sbr.rel (%p228) target = $region44
      $region43: #{lenet5_forward.5} parent=39 // pred_region
        %p231 = scmp.lt.s32.totalorder %s13, 1
        %s232 = scalar_select %p231, %s13, 1
        %s233 = smul.addr %s232, 4
        %s234 = smul.addr %s233, 4
        %s235 = scalar_lea.vmem %s0, %s234
      $region44: #{lenet5_forward.5} parent=39 // pred_fallthru
        _
    $region40: #{lenet5_forward.5} parent=5 // pred_fallthru
      _
    %p236 = scmp.le.s32.totalorder 1, %s13
    %p237 = scmp.lt.s32.totalorder %s13, 3
    %p238 = pnand %p236, %p237
    %p239 = pneg %p238
    // Predicated region
    $region45: #{lenet5_forward.5} parent=5 // pred_check
      _
    $region46: #{lenet5_forward.5} parent=5 // pred_check_branch
      %241 = sbr.rel (%p238) target = $region48
    $region47: #{lenet5_forward.5} parent=5 // pred_region
      %s242 = ssub.s32 %s13, 1
      %p243 = scmp.lt.s32.totalorder %s18, 1
      %s244 = scalar_select %p243, %s18, 1
      %s245 = smul.addr %s244, 4
      %s246 = smul.addr %s245, 4
      %s247 = scalar_lea.vmem %s0, %s246
      %p248 = pneg %p39
      %p249 = pneg %p36
      %p250 = pneg %p60
      %p251 = pneg %p57
      %p252 = pneg %p81
      %p253 = pneg %p78
      %p254 = pneg %p102
      %p255 = pneg %p99
      %p256 = pneg %p123
      %p257 = pneg %p120
      %p258 = pneg %p144
      %p259 = pneg %p141
      %p260 = pneg %p165
      %p261 = pneg %p162
      %p262 = pneg %p191
      %p263 = pneg %p188
      %p264 = scmp.lt.s32.totalorder %s18, 1
      %s265 = scalar_select %p264, %s18, 1
      %s266 = smul.addr %s265, 8
      %s267 = scalar_lea.vmem %s7, %s266
      %p268 = scmp.lt.s32.totalorder %s18, 1
      %s269 = scalar_select %p268, %s18, 1
      %s270 = smul.addr %s269, 4
      %s271 = smul.addr %s270, 4
      %s272 = scalar_lea.vmem %s0, %s271
      %p273 = scmp.lt.s32.totalorder %s18, 1
      %s274 = scalar_select %p273, %s18, 1
      %s275 = smul.addr %s274, 8
      %s276 = scalar_lea.vmem %s7, %s275
      %v278 = vld [vmem:[%s272] sm:$0xff]
      %v279 = vld [vmem:[%s272 + $0x8] sm:$0xff]
      %v280 = vld [vmem:[%s1] sm:$0xf]
      %v281 = vld [vmem:[%s1 + $0x4] sm:$0xf]
      %v282 = vld [vmem:[%s1 + $0x8] sm:$0xf]
      %v283 = vld [vmem:[%s1 + $0xc] sm:$0xf]
      %v284 = vld [vmem:[%s1 + $0x10] sm:$0xf]
      %v285 = vld [vmem:[%s1 + $0x14] sm:$0xf]
      %v286 = vld [vmem:[%s1 + $0x18] sm:$0xf]
      %v287 = vld [vmem:[%s1 + $0x1c] sm:$0xf]
      %v288 = vld [vmem:[%s1 + $0x20] sm:$0xf]
      %v289 = vld [vmem:[%s1 + $0x24] sm:$0xf]
      %v290 = vld [vmem:[%s1 + $0x28] sm:$0xf]
      %v291 = vld [vmem:[%s1 + $0x2c] sm:$0xf]
      %v292 = vld [vmem:[%s1 + $0x30] sm:$0xf]
      %v293 = vld [vmem:[%s1 + $0x34] sm:$0xf]
      %v294 = vld [vmem:[%s1 + $0x38] sm:$0xf]
      %v295 = vld [vmem:[%s1 + $0x3c] sm:$0xf]
      %v296 = vld [vmem:[%s1 + $0x40] sm:$0xf]
      %v297 = vld [vmem:[%s1 + $0x44] sm:$0xf]
      %v298 = vld [vmem:[%s1 + $0x48] sm:$0xf]
      %v299 = vld [vmem:[%s1 + $0x4c] sm:$0xf]
      %v300 = vld [vmem:[%s1 + $0x50] sm:$0xf]
      %v301 = vld [vmem:[%s1 + $0x54] sm:$0xf]
      %v302 = vld [vmem:[%s1 + $0x58] sm:$0xf]
      %v303 = vld [vmem:[%s1 + $0x5c] sm:$0xf]
      %v304 = vld [vmem:[%s1 + $0x60] sm:$0xf]
      %v305 = vld [vmem:[%s1 + $0x64] sm:$0xf]
      %v306 = vld [vmem:[%s1 + $0x68] sm:$0xf]
      %v307 = vld [vmem:[%s1 + $0x6c] sm:$0xf]
      %v308 = vld [vmem:[%s1 + $0x70] sm:$0xf]
      %v309 = vld [vmem:[%s1 + $0x74] sm:$0xf]
      %v310 = vld [vmem:[%s1 + $0x78] sm:$0xf]
      %v311 = vld [vmem:[%s1 + $0x7c] sm:$0xf]
      %v312 = vld [vmem:[%s1 + $0x80] sm:$0xf]
      %v313 = vld [vmem:[%s1 + $0x84] sm:$0xf]
      %v314 = vld [vmem:[%s1 + $0x88] sm:$0xf]
      %v315 = vld [vmem:[%s1 + $0x8c] sm:$0xf]
      %v316 = vld [vmem:[%s1 + $0x90] sm:$0xf]
      %v317 = vld [vmem:[%s1 + $0x94] sm:$0xf]
      %v318 = vld [vmem:[%s1 + $0x98] sm:$0xf]
      %v319 = vld [vmem:[%s1 + $0x9c] sm:$0xf]
      %v320 = vld [vmem:[%s1 + $0xa0] sm:$0xf]
      %v321 = vld [vmem:[%s1 + $0xa4] sm:$0xf]
      %v322 = vld [vmem:[%s1 + $0xa8] sm:$0xf]
      %v323 = vld [vmem:[%s1 + $0xac] sm:$0xf]
      %v324 = vld [vmem:[%s1 + $0xb0] sm:$0xf]
      %v325 = vld [vmem:[%s1 + $0xb4] sm:$0xf]
      %v326 = vld [vmem:[%s1 + $0xb8] sm:$0xf]
      %v327 = vld [vmem:[%s1 + $0xbc] sm:$0xf]
      %v328 = vld [vmem:[%s1 + $0xc0] sm:$0xf]
      %v329 = vld [vmem:[%s1 + $0xc4] sm:$0xf]
      %v330 = vld [vmem:[%s1 + $0xc8] sm:$0xf]
      %v331 = vld [vmem:[%s1 + $0xcc] sm:$0xf]
      %v332 = vld [vmem:[%s1 + $0xd0] sm:$0xf]
      %v333 = vld [vmem:[%s1 + $0xd4] sm:$0xf]
      %v334 = vld [vmem:[%s1 + $0xd8] sm:$0xf]
      %v335 = vld [vmem:[%s1 + $0xdc] sm:$0xf]
      %v336 = vld [vmem:[%s1 + $0xe0] sm:$0xf]
      %v337 = vld [vmem:[%s1 + $0xe4] sm:$0xf]
      %v338 = vld [vmem:[%s1 + $0xe8] sm:$0xf]
      %v339 = vld [vmem:[%s1 + $0xec] sm:$0xf]
      %v340 = vld [vmem:[%s1 + $0xf0] sm:$0xf]
      %v341 = vld [vmem:[%s1 + $0xf4] sm:$0xf]
      %v342 = vld [vmem:[%s1 + $0xf8] sm:$0xf]
      %v343 = vld [vmem:[%s1 + $0xfc] sm:$0xf]
      %v344 = vld [vmem:[%s2] sm:$0x1]
      %v346 = vlaneseq
      %v347 = vshrl.u32 %v346, 7
      %v348 = vsub.s32 0, %v347
      %v349 = vrot.slane %v344, %v348
      %v353 = vunpack.c.l.b16 %v278
      %v354 = vunpack.c.h.b16 %v278
      %v355 = vunpack.c.l.b16 %v279
      %v356 = vunpack.c.h.b16 %v279
      %v357 = vpack.c.b16 %v353, %v353
      %v358 = vpack.c.b16 %v354, %v354
      %v359 = vpack.c.b16 %v355, %v355
      %v360 = vpack.c.b16 %v356, %v356
      %v429 = vunpack.c.l.b16 %v280
      %v430 = vunpack.c.l.b16 %v281
      %v431 = vunpack.c.l.b16 %v282
      %v432 = vunpack.c.l.b16 %v283
      %v433 = vunpack.c.l.b16 %v284
      %v434 = vunpack.c.l.b16 %v285
      %v435 = vunpack.c.l.b16 %v286
      %v436 = vunpack.c.l.b16 %v287
      %v437 = vunpack.c.l.b16 %v288
      %v438 = vunpack.c.l.b16 %v289
      %v439 = vunpack.c.l.b16 %v290
      %v440 = vunpack.c.l.b16 %v291
      %v441 = vunpack.c.l.b16 %v292
      %v442 = vunpack.c.l.b16 %v293
      %v443 = vunpack.c.l.b16 %v294
      %v444 = vunpack.c.l.b16 %v295
      %v445 = vunpack.c.l.b16 %v296
      %v446 = vunpack.c.l.b16 %v297
      %v447 = vunpack.c.l.b16 %v298
      %v448 = vunpack.c.l.b16 %v299
      %v449 = vunpack.c.l.b16 %v300
      %v450 = vunpack.c.l.b16 %v301
      %v451 = vunpack.c.l.b16 %v302
      %v452 = vunpack.c.l.b16 %v303
      %v453 = vunpack.c.l.b16 %v304
      %v454 = vunpack.c.l.b16 %v305
      %v455 = vunpack.c.l.b16 %v306
      %v456 = vunpack.c.l.b16 %v307
      %v457 = vunpack.c.l.b16 %v308
      %v458 = vunpack.c.l.b16 %v309
      %v459 = vunpack.c.l.b16 %v310
      %v460 = vunpack.c.l.b16 %v311
      %v461 = vunpack.c.l.b16 %v312
      %v462 = vunpack.c.l.b16 %v313
      %v463 = vunpack.c.l.b16 %v314
      %v464 = vunpack.c.l.b16 %v315
      %v465 = vunpack.c.l.b16 %v316
      %v466 = vunpack.c.l.b16 %v317
      %v467 = vunpack.c.l.b16 %v318
      %v468 = vunpack.c.l.b16 %v319
      %v469 = vunpack.c.l.b16 %v320
      %v470 = vunpack.c.l.b16 %v321
      %v471 = vunpack.c.l.b16 %v322
      %v472 = vunpack.c.l.b16 %v323
      %v473 = vunpack.c.l.b16 %v324
      %v474 = vunpack.c.l.b16 %v325
      %v475 = vunpack.c.l.b16 %v326
      %v476 = vunpack.c.l.b16 %v327
      %v477 = vunpack.c.l.b16 %v328
      %v478 = vunpack.c.l.b16 %v329
      %v479 = vunpack.c.l.b16 %v330
      %v480 = vunpack.c.l.b16 %v331
      %v481 = vunpack.c.l.b16 %v332
      %v482 = vunpack.c.l.b16 %v333
      %v483 = vunpack.c.l.b16 %v334
      %v484 = vunpack.c.l.b16 %v335
      %v485 = vunpack.c.l.b16 %v336
      %v486 = vunpack.c.l.b16 %v337
      %v487 = vunpack.c.l.b16 %v338
      %v488 = vunpack.c.l.b16 %v339
      %v489 = vunpack.c.l.b16 %v340
      %v490 = vunpack.c.l.b16 %v341
      %v491 = vunpack.c.l.b16 %v342
      %v492 = vunpack.c.l.b16 %v343
      %v493 = vpack.c.b16 %v430, %v429
      %v494 = vpack.c.b16 %v432, %v431
      %v495 = vpack.c.b16 %v434, %v433
      %v496 = vpack.c.b16 %v436, %v435
      %v497 = vpack.c.b16 %v438, %v437
      %v498 = vpack.c.b16 %v440, %v439
      %v499 = vpack.c.b16 %v442, %v441
      %v500 = vpack.c.b16 %v444, %v443
      %v501 = vpack.c.b16 %v446, %v445
      %v502 = vpack.c.b16 %v448, %v447
      %v503 = vpack.c.b16 %v450, %v449
      %v504 = vpack.c.b16 %v452, %v451
      %v505 = vpack.c.b16 %v454, %v453
      %v506 = vpack.c.b16 %v456, %v455
      %v507 = vpack.c.b16 %v458, %v457
      %v508 = vpack.c.b16 %v460, %v459
      %v509 = vpack.c.b16 %v462, %v461
      %v510 = vpack.c.b16 %v464, %v463
      %v511 = vpack.c.b16 %v466, %v465
      %v512 = vpack.c.b16 %v468, %v467
      %v513 = vpack.c.b16 %v470, %v469
      %v514 = vpack.c.b16 %v472, %v471
      %v515 = vpack.c.b16 %v474, %v473
      %v516 = vpack.c.b16 %v476, %v475
      %v517 = vpack.c.b16 %v478, %v477
      %v518 = vpack.c.b16 %v480, %v479
      %v519 = vpack.c.b16 %v482, %v481
      %v520 = vpack.c.b16 %v484, %v483
      %v521 = vpack.c.b16 %v486, %v485
      %v522 = vpack.c.b16 %v488, %v487
      %v523 = vpack.c.b16 %v490, %v489
      %v524 = vpack.c.b16 %v492, %v491
      %557 = vmatprep.subr.bf16.mxu0 0
      %558 = vmatpush1.bf16.msra.mxu0 %v493
      %559 = vmatprep.subr.bf16.mxu0 0
      %560 = vmatpush1.bf16.msra.mxu0 %v494
      %561 = vmatprep.subr.bf16.mxu0 0
      %562 = vmatpush1.bf16.msra.mxu0 %v495
      %563 = vmatprep.subr.bf16.mxu0 0
      %564 = vmatpush1.bf16.msra.mxu0 %v496
      %565 = vmatprep.subr.bf16.mxu0 0
      %566 = vmatpush1.bf16.msra.mxu0 %v497
      %567 = vmatprep.subr.bf16.mxu0 0
      %568 = vmatpush1.bf16.msra.mxu0 %v498
      %569 = vmatprep.subr.bf16.mxu0 0
      %570 = vmatpush1.bf16.msra.mxu0 %v499
      %571 = vmatprep.subr.bf16.mxu0 0
      %572 = vmatpush1.bf16.msra.mxu0 %v500
      %573 = vmatprep.subr.bf16.mxu0 0
      %574 = vmatpush1.bf16.msra.mxu0 %v501
      %575 = vmatprep.subr.bf16.mxu0 0
      %576 = vmatpush1.bf16.msra.mxu0 %v502
      %577 = vmatprep.subr.bf16.mxu0 0
      %578 = vmatpush1.bf16.msra.mxu0 %v503
      %579 = vmatprep.subr.bf16.mxu0 0
      %580 = vmatpush1.bf16.msra.mxu0 %v504
      %581 = vmatprep.subr.bf16.mxu0 0
      %582 = vmatpush1.bf16.msra.mxu0 %v505
      %583 = vmatprep.subr.bf16.mxu0 0
      %584 = vmatpush1.bf16.msra.mxu0 %v506
      %585 = vmatprep.subr.bf16.mxu0 0
      %586 = vmatpush1.bf16.msra.mxu0 %v507
      %587 = vmatprep.subr.bf16.mxu0 0
      %588 = vmatpush1.bf16.msra.mxu0 %v508
      %589 = vmatprep.mubr.bf16.mxu0 %v358
      %590 = vmatmul.mubr.bf16.gmra.mrb[0].mxu0 %v357
      %v591 = vpop.f32.mrb[0].mxu0
      %v592 = vadd.f32 %v349, %v591
      %v593 = vpop.f32.mrb[0].mxu0
      %v594 = vpop.f32.mrb[0].mxu0
      %v595 = vpop.f32.mrb[0].mxu0
      %596 = vdwg.mxu0
      %597 = vmatprep.subr.bf16.mxu0 0
      %598 = vmatpush1.bf16.msra.mxu0 %v509
      %599 = vmatprep.subr.bf16.mxu0 0
      %600 = vmatpush1.bf16.msra.mxu0 %v510
      %601 = vmatprep.subr.bf16.mxu0 0
      %602 = vmatpush1.bf16.msra.mxu0 %v511
      %603 = vmatprep.subr.bf16.mxu0 0
      %604 = vmatpush1.bf16.msra.mxu0 %v512
      %605 = vmatprep.subr.bf16.mxu0 0
      %606 = vmatpush1.bf16.msra.mxu0 %v513
      %607 = vmatprep.subr.bf16.mxu0 0
      %608 = vmatpush1.bf16.msra.mxu0 %v514
      %609 = vmatprep.subr.bf16.mxu0 0
      %610 = vmatpush1.bf16.msra.mxu0 %v515
      %611 = vmatprep.subr.bf16.mxu0 0
      %612 = vmatpush1.bf16.msra.mxu0 %v516
      %613 = vmatprep.subr.bf16.mxu0 0
      %614 = vmatpush1.bf16.msra.mxu0 %v517
      %615 = vmatprep.subr.bf16.mxu0 0
      %616 = vmatpush1.bf16.msra.mxu0 %v518
      %617 = vmatprep.subr.bf16.mxu0 0
      %618 = vmatpush1.bf16.msra.mxu0 %v519
      %619 = vmatprep.subr.bf16.mxu0 0
      %620 = vmatpush1.bf16.msra.mxu0 %v520
      %621 = vmatprep.subr.bf16.mxu0 0
      %622 = vmatpush1.bf16.msra.mxu0 %v521
      %623 = vmatprep.subr.bf16.mxu0 0
      %624 = vmatpush1.bf16.msra.mxu0 %v522
      %625 = vmatprep.subr.bf16.mxu0 0
      %626 = vmatpush1.bf16.msra.mxu0 %v523
      %627 = vmatprep.subr.bf16.mxu0 0
      %628 = vmatpush1.bf16.msra.mxu0 %v524
      %629 = vmatprep.mubr.bf16.mxu0 %v360
      %630 = vmatmul.mubr.bf16.gmra.mrb[0].mxu0 %v359
      %v631 = vpop.f32.mrb[0].mxu0
      %v632 = vadd.f32 %v592, %v631
      %v633 = vpop.f32.mrb[0].mxu0
      %v634 = vpop.f32.mrb[0].mxu0
      %v635 = vpop.f32.mrb[0].mxu0
      %636 = vdwg.mxu0
      %v637 = vmax.f32 %v632, 0.0
      %v638 = vpack.c.bf16 %v637, %v637
      %v639 = vld [vmem:[%s3] sm:$0xf]
      %v640 = vld [vmem:[%s3 + $0x4] sm:$0xf]
      %v641 = vld [vmem:[%s3 + $0x8] sm:$0xf]
      %v642 = vld [vmem:[%s3 + $0xc] sm:$0xf]
      %v643 = vld [vmem:[%s3 + $0x10] sm:$0xf]
      %v644 = vld [vmem:[%s3 + $0x14] sm:$0xf]
      %v645 = vld [vmem:[%s3 + $0x18] sm:$0xf]
      %v646 = vld [vmem:[%s3 + $0x1c] sm:$0xf]
      %v647 = vld [vmem:[%s3 + $0x20] sm:$0xf]
      %v648 = vld [vmem:[%s3 + $0x24] sm:$0xf]
      %v649 = vld [vmem:[%s3 + $0x28] sm:$0xf]
      %v650 = vld [vmem:[%s3 + $0x2c] sm:$0xf]
      %v651 = vld [vmem:[%s3 + $0x30] sm:$0xf]
      %v652 = vld [vmem:[%s3 + $0x34] sm:$0xf]
      %v653 = vld [vmem:[%s3 + $0x38] sm:$0xf]
      %v654 = vld [vmem:[%s3 + $0x3c] sm:$0xf]
      %v655 = vld [vmem:[%s4] sm:$0x1]
      %v657 = vlaneseq
      %v658 = vshrl.u32 %v657, 7
      %v659 = vsub.s32 0, %v658
      %v660 = vrot.slane %v655, %v659
      %v678 = vunpack.c.l.b16 %v639
      %v679 = vunpack.c.l.b16 %v640
      %v680 = vunpack.c.l.b16 %v641
      %v681 = vunpack.c.l.b16 %v642
      %v682 = vunpack.c.l.b16 %v643
      %v683 = vunpack.c.l.b16 %v644
      %v684 = vunpack.c.l.b16 %v645
      %v685 = vunpack.c.l.b16 %v646
      %v686 = vunpack.c.l.b16 %v647
      %v687 = vunpack.c.l.b16 %v648
      %v688 = vunpack.c.l.b16 %v649
      %v689 = vunpack.c.l.b16 %v650
      %v690 = vunpack.c.l.b16 %v651
      %v691 = vunpack.c.l.b16 %v652
      %v692 = vunpack.c.l.b16 %v653
      %v693 = vunpack.c.l.b16 %v654
      %v694 = vpack.c.b16 %v679, %v678
      %v695 = vpack.c.b16 %v681, %v680
      %v696 = vpack.c.b16 %v683, %v682
      %v697 = vpack.c.b16 %v685, %v684
      %v698 = vpack.c.b16 %v687, %v686
      %v699 = vpack.c.b16 %v689, %v688
      %v700 = vpack.c.b16 %v691, %v690
      %v701 = vpack.c.b16 %v693, %v692
      %710 = vmatprep.subr.bf16.mxu0 0
      %711 = vmatpush1.bf16.msra.mxu0 %v694
      %712 = vmatprep.subr.bf16.mxu0 0
      %713 = vmatpush1.bf16.msra.mxu0 %v695
      %714 = vmatprep.subr.bf16.mxu0 0
      %715 = vmatpush1.bf16.msra.mxu0 %v696
      %716 = vmatprep.subr.bf16.mxu0 0
      %717 = vmatpush1.bf16.msra.mxu0 %v697
      %718 = vmatprep.subr.bf16.mxu0 0
      %719 = vmatpush1.bf16.msra.mxu0 %v698
      %720 = vmatprep.subr.bf16.mxu0 0
      %721 = vmatpush1.bf16.msra.mxu0 %v699
      %722 = vmatprep.subr.bf16.mxu0 0
      %723 = vmatpush1.bf16.msra.mxu0 %v700
      %724 = vmatprep.subr.bf16.mxu0 0
      %725 = vmatpush1.bf16.msra.mxu0 %v701
      %726 = vmatprep.subr.bf16.mxu0 0
      %727 = vmatpush1.bf16.msra.mxu0 0
      %728 = vmatprep.subr.bf16.mxu0 0
      %729 = vmatpush1.bf16.msra.mxu0 0
      %730 = vmatprep.subr.bf16.mxu0 0
      %731 = vmatpush1.bf16.msra.mxu0 0
      %732 = vmatprep.subr.bf16.mxu0 0
      %733 = vmatpush1.bf16.msra.mxu0 0
      %734 = vmatprep.subr.bf16.mxu0 0
      %735 = vmatpush1.bf16.msra.mxu0 0
      %736 = vmatprep.subr.bf16.mxu0 0
      %737 = vmatpush1.bf16.msra.mxu0 0
      %738 = vmatprep.subr.bf16.mxu0 0
      %739 = vmatpush1.bf16.msra.mxu0 0
      %740 = vmatprep.subr.bf16.mxu0 0
      %741 = vmatpush1.bf16.msra.mxu0 0
      %742 = vmatprep.mubr.bf16.mxu0 0
      %743 = vmatmul.mubr.bf16.gmra.mrb[0].mxu0 %v638
      %v744 = vpop.f32.mrb[0].mxu0
      %v745 = vadd.f32 %v660, %v744
      %v746 = vpop.f32.mrb[0].mxu0
      %v747 = vpop.f32.mrb[0].mxu0
      %v748 = vpop.f32.mrb[0].mxu0
      %749 = vdwg.mxu0
      %v750 = vmax.f32 %v745, 0.0
      %v751 = vpack.c.bf16 %v750, %v750
      %v752 = vld [vmem:[%s5] sm:$0xf]
      %v753 = vld [vmem:[%s5 + $0x4] sm:$0xf]
      %v754 = vld [vmem:[%s5 + $0x8] sm:$0xf]
      %v755 = vld [vmem:[%s5 + $0xc] sm:$0xf]
      %v756 = vld [vmem:[%s5 + $0x10] sm:$0xf]
      %v757 = vld [vmem:[%s5 + $0x14] sm:$0xf]
      %v758 = vld [vmem:[%s5 + $0x18] sm:$0xf]
      %v759 = vld [vmem:[%s5 + $0x1c] sm:$0xf]
      %v760 = vld [vmem:[%s5 + $0x20] sm:$0xf]
      %v761 = vld [vmem:[%s5 + $0x24] sm:$0xf]
      %v762 = vld [vmem:[%s5 + $0x28] sm:$0xf]
      %v763 = vld [vmem:[%s5 + $0x2c] sm:$0xf]
      %v764 = vld [vmem:[%s5 + $0x30] sm:$0xf]
      %v765 = vld [vmem:[%s5 + $0x34] sm:$0xf]
      %v766 = vld [vmem:[%s5 + $0x38] sm:$0xf]
      %v767 = vld [vmem:[%s5 + $0x3c] sm:$0xf]
      %v768 = vld [vmem:[%s6] sm:$0x1]
      %v770 = vlaneseq
      %v771 = vshrl.u32 %v770, 7
      %v772 = vsub.s32 0, %v771
      %v773 = vrot.slane %v768, %v772
      %v791 = vunpack.c.l.b16 %v752
      %v792 = vunpack.c.l.b16 %v753
      %v793 = vunpack.c.l.b16 %v754
      %v794 = vunpack.c.l.b16 %v755
      %v795 = vunpack.c.l.b16 %v756
      %v796 = vunpack.c.l.b16 %v757
      %v797 = vunpack.c.l.b16 %v758
      %v798 = vunpack.c.l.b16 %v759
      %v799 = vunpack.c.l.b16 %v760
      %v800 = vunpack.c.l.b16 %v761
      %v801 = vunpack.c.l.b16 %v762
      %v802 = vunpack.c.l.b16 %v763
      %v803 = vunpack.c.l.b16 %v764
      %v804 = vunpack.c.l.b16 %v765
      %v805 = vunpack.c.l.b16 %v766
      %v806 = vunpack.c.l.b16 %v767
      %v807 = vpack.c.b16 %v792, %v791
      %v808 = vpack.c.b16 %v794, %v793
      %v809 = vpack.c.b16 %v796, %v795
      %v810 = vpack.c.b16 %v798, %v797
      %v811 = vpack.c.b16 %v800, %v799
      %v812 = vpack.c.b16 %v802, %v801
      %v813 = vpack.c.b16 %v804, %v803
      %v814 = vpack.c.b16 %v806, %v805
      %823 = vmatprep.subr.bf16.mxu0 0
      %824 = vmatpush1.bf16.msra.mxu0 %v807
      %825 = vmatprep.subr.bf16.mxu0 0
      %826 = vmatpush1.bf16.msra.mxu0 %v808
      %827 = vmatprep.subr.bf16.mxu0 0
      %828 = vmatpush1.bf16.msra.mxu0 %v809
      %829 = vmatprep.subr.bf16.mxu0 0
      %830 = vmatpush1.bf16.msra.mxu0 %v810
      %831 = vmatprep.subr.bf16.mxu0 0
      %832 = vmatpush1.bf16.msra.mxu0 %v811
      %833 = vmatprep.subr.bf16.mxu0 0
      %834 = vmatpush1.bf16.msra.mxu0 %v812
      %835 = vmatprep.subr.bf16.mxu0 0
      %836 = vmatpush1.bf16.msra.mxu0 %v813
      %837 = vmatprep.subr.bf16.mxu0 0
      %838 = vmatpush1.bf16.msra.mxu0 %v814
      %839 = vmatprep.subr.bf16.mxu0 0
      %840 = vmatpush1.bf16.msra.mxu0 0
      %841 = vmatprep.subr.bf16.mxu0 0
      %842 = vmatpush1.bf16.msra.mxu0 0
      %843 = vmatprep.subr.bf16.mxu0 0
      %844 = vmatpush1.bf16.msra.mxu0 0
      %845 = vmatprep.subr.bf16.mxu0 0
      %846 = vmatpush1.bf16.msra.mxu0 0
      %847 = vmatprep.subr.bf16.mxu0 0
      %848 = vmatpush1.bf16.msra.mxu0 0
      %849 = vmatprep.subr.bf16.mxu0 0
      %850 = vmatpush1.bf16.msra.mxu0 0
      %851 = vmatprep.subr.bf16.mxu0 0
      %852 = vmatpush1.bf16.msra.mxu0 0
      %853 = vmatprep.subr.bf16.mxu0 0
      %854 = vmatpush1.bf16.msra.mxu0 0
      %855 = vmatprep.mubr.bf16.mxu0 0
      %856 = vmatmul.mubr.bf16.gmra.mrb[0].mxu0 %v751
      %v857 = vpop.f32.mrb[0].mxu0
      %v858 = vadd.f32 %v773, %v857
      %v859 = vpop.f32.mrb[0].mxu0
      %v860 = vpop.f32.mrb[0].mxu0
      %v861 = vpop.f32.mrb[0].mxu0
      %862 = vdwg.mxu0
      %863 = vst [vmem:[%s276] sm:$0xff] %v858
      %p864 = scmp.lt.s32.totalorder %s18, 1
      %s865 = scalar_select %p864, %s18, 1
      %s866 = smul.addr %s865, 8
      %s867 = scalar_lea.vmem %s7, %s866
      // Predicated region
      $region49: #{lenet5_forward.5} parent=47 // pred_check
        %p868 = pneg %p188
      $region50: #{lenet5_forward.5} parent=47 // pred_check_branch
        %870 = sbr.rel (%p868) target = $region52
      $region51: #{lenet5_forward.5} parent=47 // pred_region
        _
      $region52: #{lenet5_forward.5} parent=47 // pred_fallthru
        _
    $region48: #{lenet5_forward.5} parent=5 // pred_fallthru
      _
    %p871 = scmp.le.s32.totalorder 2, %s13
    // Predicated region
    $region53: #{lenet5_forward.5} parent=5 // pred_check
      %p872 = pneg %p871
    $region54: #{lenet5_forward.5} parent=5 // pred_check_branch
      %874 = sbr.rel (%p872) target = $region56
    $region55: #{lenet5_forward.5} parent=5 // pred_region
      %s875 = ssub.s32 %s13, 2
      // Predicated region
      $region57: #{lenet5_forward.5} parent=55 // pred_check
        %p876 = pneg %p194
      $region58: #{lenet5_forward.5} parent=55 // pred_check_branch
        %878 = sbr.rel (%p876) target = $region60
      $region59: #{lenet5_forward.5} parent=55 // pred_region
        %p879 = scmp.lt.s32.totalorder %s19, 1
        %s880 = scalar_select %p879, %s19, 1
        %s881 = smul.addr %s880, 8
        %s882 = scalar_lea.vmem %s7, %s881
      $region60: #{lenet5_forward.5} parent=55 // pred_fallthru
        _
    $region56: #{lenet5_forward.5} parent=5 // pred_fallthru
      _
  $region6: #{lenet5_forward.5} parent=0 // loop_footer
    %s17 = sadd.s32 1, %s13
  $region7: #{lenet5_forward.5} parent=0 // loop_footer_branch
    %12 = sbr.rel target = $region3
  $region8: #{lenet5_forward.5} parent=0 // loop_exit
    _

</llo_original>
